<compile_context>
chip_gen: v6e
topology: v6e:2x2x1
jax: 0.10.0
libtpu: 0.0.40
codegen_flags: <defaults>
</compile_context>

<pallas_src>
import jax
import jax.numpy as jnp
from jax.experimental import pallas as pl
from jax.experimental.pallas import tpu as pltpu

SEGMENTS = 4
CODE_DIM = 4 + 2 ** 8 + (SEGMENTS - 1) * 2 ** 6             # 452
DIMS = [4, 2 ** 8, 2 ** 6, 2 ** 6, 2 ** 6][:SEGMENTS + 1]   # [4, 256, 64, 64, 64]
SEG_STARTS = [sum(DIMS[:i]) for i in range(len(DIMS))]      # [0, 4, 260, 324, 388]
assert sum(DIMS) == CODE_DIM

H_PAD = ((CODE_DIM + 127) // 128) * 128                     # 512 (hidden width)
OUT_PAD = ((CODE_DIM + 127) // 128) * 128                   # 512 (decoder matmul N)
NEG = jnp.float32(-1e30)                                    # "-inf" for masked lanes
MXU_PRECISION = jax.lax.Precision.HIGHEST                   # full-f32 MXU contraction


def _round_up(x, m):
    return (x + m - 1) // m * m


def utf8_decoder_kernel(x_ref, w_in_ref, b_in_ref, w_dec_ref, b_dec_ref,
                        ind_ref, neg_ref, out_ref):
    # x_ref:     (TB, in_dim)
    # w_in_ref:  (in_dim, H_PAD)    b_in_ref:  (1, H_PAD)     zero-padded
    # w_dec_ref: (H_PAD, OUT_PAD)   b_dec_ref: (1, OUT_PAD)   compact cols, zero-padded
    # ind_ref:   (n_seg, OUT_PAD)   1.0 on that segment's lanes, 0.0 elsewhere
    # neg_ref:   (n_seg, OUT_PAD)   0.0 on that segment's lanes, -1e30 elsewhere
    # out_ref:   (TB, CODE_DIM)     compact output, written directly
    x = x_ref[...]

    # h = relu(in_linear(x)); padded hidden lanes come out exactly 0
    h = jnp.dot(x, w_in_ref[...], preferred_element_type=jnp.float32,
                precision=MXU_PRECISION)
    h = jnp.maximum(h + b_in_ref[...], 0.0)

    # all 5 decoder Linears fused into one (TB, H_PAD) x (H_PAD, OUT_PAD) matmul
    logits = jnp.dot(h, w_dec_ref[...], preferred_element_type=jnp.float32,
                     precision=MXU_PRECISION)
    logits = jnp.maximum(logits + b_dec_ref[...], 0.0)

    # Per-segment LogSoftmax over disjoint lane groups of the shared 512-lane slab.
    # For each segment: add the resident -1e30 mask (other lanes), take max and
    # sum(exp) over the full width (masked lanes give exp(-1e30) = 0), and
    # accumulate the per-lane offset  m_i + log(sum exp)  on that segment's lanes.
    off = jnp.zeros_like(logits)
    for i in range(len(DIMS)):
        neg = neg_ref[i:i + 1, :]                              # (1, OUT_PAD)
        ind = ind_ref[i:i + 1, :]                              # (1, OUT_PAD)
        masked = logits + neg
        m = jnp.max(masked, axis=-1, keepdims=True)            # segment max, (TB, 1)
        lse = jnp.log(jnp.sum(jnp.exp(masked - m), axis=-1, keepdims=True))
        off = off + ind * (m + lse)

    # log_softmax = logits - (segment max + segment lse), stored compactly (452 wide)
    out_ref[...] = (logits - off)[:, :CODE_DIM]


def pack_params(w_in, b_in, w_dec, b_dec):
    """Repack unpadded params (x @ W + b convention) into the padded layout."""
    f32 = jnp.float32
    in_dim = w_in.shape[0]
    w_in_p = jnp.zeros((in_dim, H_PAD), f32).at[:, :CODE_DIM].set(w_in.astype(f32))
    b_in_p = jnp.zeros((1, H_PAD), f32).at[:, :CODE_DIM].set(b_in.astype(f32)[None, :])

    # decoder heads stay at their compact column offsets; lanes 452:512 are dead
    w_dec_p = jnp.zeros((H_PAD, OUT_PAD), f32).at[:CODE_DIM, :CODE_DIM].set(w_dec.astype(f32))
    b_dec_p = jnp.zeros((1, OUT_PAD), f32).at[:, :CODE_DIM].set(b_dec.astype(f32)[None, :])

    ind = jnp.zeros((len(DIMS), OUT_PAD), f32)
    for i, (s, d) in enumerate(zip(SEG_STARTS, DIMS)):
        ind = ind.at[i, s:s + d].set(1.0)
    neg = jnp.where(ind > 0, jnp.float32(0.0), NEG).astype(f32)
    return w_in_p, b_in_p, w_dec_p, b_dec_p, ind, neg


def utf8_decoder(x, packed_params):
    w_in_p, b_in_p, w_dec_p, b_dec_p, ind, neg = packed_params
    B, in_dim = x.shape

    # Batch tiling: big tiles (<=512 rows) amortize per-step overhead; cdiv(B, 2)
    # keeps >= 2 grid steps whenever B > 8 so both v7x TensorCores get work.
    TB = max(8, min(512, _round_up(pl.cdiv(B, 2), 8)))
    Bp = _round_up(B, TB)
    if Bp != B:
        x = jnp.pad(x, ((0, Bp - B), (0, 0)))
    grid = (Bp // TB,)

    resident = lambda i: (0, 0)   # constant block index -> stays in VMEM, no re-DMA
    n_seg = len(DIMS)

    cost = pl.CostEstimate(
        flops=2 * Bp * (in_dim * H_PAD + H_PAD * OUT_PAD),
        transcendentals=Bp * OUT_PAD * n_seg,
        bytes_accessed=4 * (Bp * in_dim + Bp * CODE_DIM
                            + in_dim * H_PAD + H_PAD * OUT_PAD
                            + H_PAD + OUT_PAD + 2 * n_seg * OUT_PAD),
    )

    out = pl.pallas_call(
        utf8_decoder_kernel,
        out_shape=jax.ShapeDtypeStruct((Bp, CODE_DIM), jnp.float32),
        grid=grid,
        in_specs=[
            pl.BlockSpec((TB, in_dim), lambda i: (i, 0)),
            pl.BlockSpec((in_dim, H_PAD), resident),
            pl.BlockSpec((1, H_PAD), resident),
            pl.BlockSpec((H_PAD, OUT_PAD), resident),
            pl.BlockSpec((1, OUT_PAD), resident),
            pl.BlockSpec((n_seg, OUT_PAD), resident),
            pl.BlockSpec((n_seg, OUT_PAD), resident),
        ],
        out_specs=pl.BlockSpec((TB, CODE_DIM), lambda i: (i, 0)),
        compiler_params=pltpu.CompilerParams(dimension_semantics=("parallel",)),
        cost_estimate=cost,
    )(x, w_in_p, b_in_p, w_dec_p, b_dec_p, ind, neg)

    return out[:B] if Bp != B else out


def reference(x, w_in, b_in, w_dec, b_dec):
    h = jnp.maximum(jnp.dot(x, w_in, precision=MXU_PRECISION) + b_in, 0.0)
    logits = jnp.maximum(jnp.dot(h, w_dec, precision=MXU_PRECISION) + b_dec, 0.0)
    outs, start = [], 0
    for d in DIMS:
        outs.append(jax.nn.log_softmax(logits[:, start:start + d], axis=-1))
        start += d
    return jnp.concatenate(outs, axis=1)


if __name__ == "__main__":
    B, IN_DIM = 2, 32
    key = jax.random.PRNGKey(0)
    k_x, k_wi, k_bi, *k_dec = jax.random.split(key, 3 + 2 * len(DIMS))

    x = jax.random.normal(k_x, (B, IN_DIM), dtype=jnp.float32)

    # in_linear: (in_dim, code_dim) in x @ W convention
    w_in = jax.random.normal(k_wi, (IN_DIM, CODE_DIM), dtype=jnp.float32) * 0.1
    b_in = jax.random.normal(k_bi, (CODE_DIM,), dtype=jnp.float32) * 0.1

    # decoder Linears, each (code_dim, d), concatenated along the output axis
    w_parts, b_parts = [], []
    for i, d in enumerate(DIMS):
        w_parts.append(jax.random.normal(k_dec[2 * i], (CODE_DIM, d), dtype=jnp.float32) * 0.1)
        b_parts.append(jax.random.normal(k_dec[2 * i + 1], (d,), dtype=jnp.float32) * 0.1)
    w_dec = jnp.concatenate(w_parts, axis=1)   # (code_dim, code_dim)
    b_dec = jnp.concatenate(b_parts, axis=0)   # (code_dim,)

    packed = pack_params(w_in, b_in, w_dec, b_dec)
    out = utf8_decoder(x, packed)
    out = jax.block_until_ready(out)

    ref = reference(x, w_in, b_in, w_dec, b_dec)
    assert out.shape == (B, CODE_DIM)
    assert jnp.allclose(out, ref, atol=1e-4, rtol=1e-4)
    print("KERNEL_OK")
</pallas_src>

<mosaic_0001>
module attributes {stable_mosaic.version = 11 : i64} {
  func.func @utf8_decoder_kernel(%arg0: i32, %arg1: memref<8x32xf32, #tpu.memory_space<vmem>>, %arg2: memref<32x512xf32, #tpu.memory_space<vmem>>, %arg3: memref<1x512xf32, #tpu.memory_space<vmem>>, %arg4: memref<512x512xf32, #tpu.memory_space<vmem>>, %arg5: memref<1x512xf32, #tpu.memory_space<vmem>>, %arg6: memref<5x512xf32, #tpu.memory_space<vmem>>, %arg7: memref<5x512xf32, #tpu.memory_space<vmem>>, %arg8: memref<8x452xf32, #tpu.memory_space<vmem>>) attributes {dimension_semantics = [#tpu.dimension_semantics<parallel>], iteration_bounds = array<i64: 1>, scalar_prefetch = 0 : i64, scratch_operands = 0 : i64, tpu.core_type = #tpu.core_type<tc>, window_params = [{transform_indices = @transform_0, window_bounds = array<i64: 8, 32>}, {pipeline_mode = #tpu.pipeline_mode<synchronous>, transform_indices = @transform_1, window_bounds = array<i64: 32, 512>}, {pipeline_mode = #tpu.pipeline_mode<synchronous>, transform_indices = @transform_2, window_bounds = array<i64: 1, 512>}, {pipeline_mode = #tpu.pipeline_mode<synchronous>, transform_indices = @transform_3, window_bounds = array<i64: 512, 512>}, {pipeline_mode = #tpu.pipeline_mode<synchronous>, transform_indices = @transform_4, window_bounds = array<i64: 1, 512>}, {pipeline_mode = #tpu.pipeline_mode<synchronous>, transform_indices = @transform_5, window_bounds = array<i64: 5, 512>}, {pipeline_mode = #tpu.pipeline_mode<synchronous>, transform_indices = @transform_6, window_bounds = array<i64: 5, 512>}, {transform_indices = @transform_7, window_bounds = array<i64: 8, 452>}]} {
    %c0 = arith.constant 0 : index
    %c0_0 = arith.constant 0 : index
    %0 = vector.load %arg1[%c0, %c0_0] : memref<8x32xf32, #tpu.memory_space<vmem>>, vector<8x32xf32>
    %c0_1 = arith.constant 0 : index
    %c0_2 = arith.constant 0 : index
    %1 = vector.load %arg2[%c0_1, %c0_2] : memref<32x512xf32, #tpu.memory_space<vmem>>, vector<32x512xf32>
    %cst = arith.constant dense<0.000000e+00> : vector<8x512xf32>
    %2 = tpu.matmul %0, %1, %cst {dimension_numbers = #tpu.dot_dimension_numbers<[1], [0], [0], [1], [0, 0, 1, 1], [], []>, precision = #tpu.contract_precision<fp32>} : vector<8x32xf32>, vector<32x512xf32>, vector<8x512xf32> -> vector<8x512xf32>
    %c0_3 = arith.constant 0 : index
    %c0_4 = arith.constant 0 : index
    %3 = vector.load %arg3[%c0_3, %c0_4] : memref<1x512xf32, #tpu.memory_space<vmem>>, vector<1x512xf32>
    %4 = vector.broadcast %3 : vector<1x512xf32> to vector<8x512xf32>
    %5 = arith.addf %2, %4 : vector<8x512xf32>
    %cst_5 = arith.constant 0.000000e+00 : f32
    %6 = vector.broadcast %cst_5 : f32 to vector<8x512xf32>
    %7 = arith.maximumf %5, %6 : vector<8x512xf32>
    %c0_6 = arith.constant 0 : index
    %c0_7 = arith.constant 0 : index
    %8 = vector.load %arg4[%c0_6, %c0_7] : memref<512x512xf32, #tpu.memory_space<vmem>>, vector<512x512xf32>
    %cst_8 = arith.constant dense<0.000000e+00> : vector<8x512xf32>
    %9 = tpu.matmul %7, %8, %cst_8 {dimension_numbers = #tpu.dot_dimension_numbers<[1], [0], [0], [1], [0, 0, 1, 1], [], []>, precision = #tpu.contract_precision<fp32>} : vector<8x512xf32>, vector<512x512xf32>, vector<8x512xf32> -> vector<8x512xf32>
    %c0_9 = arith.constant 0 : index
    %c0_10 = arith.constant 0 : index
    %10 = vector.load %arg5[%c0_9, %c0_10] : memref<1x512xf32, #tpu.memory_space<vmem>>, vector<1x512xf32>
    %11 = vector.broadcast %10 : vector<1x512xf32> to vector<8x512xf32>
    %12 = arith.addf %9, %11 : vector<8x512xf32>
    %cst_11 = arith.constant 0.000000e+00 : f32
    %13 = vector.broadcast %cst_11 : f32 to vector<8x512xf32>
    %14 = arith.maximumf %12, %13 : vector<8x512xf32>
    %cst_12 = arith.constant 0.000000e+00 : f32
    %15 = vector.broadcast %cst_12 : f32 to vector<8x512xf32>
    %c0_13 = arith.constant 0 : index
    %c0_14 = arith.constant 0 : index
    %16 = vector.load %arg7[%c0_13, %c0_14] : memref<5x512xf32, #tpu.memory_space<vmem>>, vector<1x512xf32>
    %c0_15 = arith.constant 0 : index
    %c0_16 = arith.constant 0 : index
    %17 = vector.load %arg6[%c0_15, %c0_16] : memref<5x512xf32, #tpu.memory_space<vmem>>, vector<1x512xf32>
    %18 = vector.broadcast %16 : vector<1x512xf32> to vector<8x512xf32>
    %19 = arith.addf %14, %18 : vector<8x512xf32>
    %cst_17 = arith.constant dense<0xFF800000> : vector<8xf32>
    %20 = vector.multi_reduction <maximumf>, %19, %cst_17 [1] : vector<8x512xf32> to vector<8xf32>
    %21 = vector.shape_cast %20 : vector<8xf32> to vector<8x1xf32>
    %22 = vector.broadcast %21 : vector<8x1xf32> to vector<8x512xf32>
    %23 = arith.subf %19, %22 : vector<8x512xf32>
    %24 = math.exp %23 : vector<8x512xf32>
    %cst_18 = arith.constant dense<0.000000e+00> : vector<8xf32>
    %25 = vector.multi_reduction <add>, %24, %cst_18 [1] : vector<8x512xf32> to vector<8xf32>
    %26 = vector.shape_cast %25 : vector<8xf32> to vector<8x1xf32>
    %27 = math.log %26 : vector<8x1xf32>
    %28 = arith.addf %21, %27 : vector<8x1xf32>
    %29 = vector.broadcast %17 : vector<1x512xf32> to vector<8x512xf32>
    %30 = vector.broadcast %28 : vector<8x1xf32> to vector<8x512xf32>
    %31 = arith.mulf %29, %30 : vector<8x512xf32>
    %32 = arith.addf %15, %31 : vector<8x512xf32>
    %c1 = arith.constant 1 : index
    %c0_19 = arith.constant 0 : index
    %33 = vector.load %arg7[%c1, %c0_19] : memref<5x512xf32, #tpu.memory_space<vmem>>, vector<1x512xf32>
    %c1_20 = arith.constant 1 : index
    %c0_21 = arith.constant 0 : index
    %34 = vector.load %arg6[%c1_20, %c0_21] : memref<5x512xf32, #tpu.memory_space<vmem>>, vector<1x512xf32>
    %35 = vector.broadcast %33 : vector<1x512xf32> to vector<8x512xf32>
    %36 = arith.addf %14, %35 : vector<8x512xf32>
    %cst_22 = arith.constant dense<0xFF800000> : vector<8xf32>
    %37 = vector.multi_reduction <maximumf>, %36, %cst_22 [1] : vector<8x512xf32> to vector<8xf32>
    %38 = vector.shape_cast %37 : vector<8xf32> to vector<8x1xf32>
    %39 = vector.broadcast %38 : vector<8x1xf32> to vector<8x512xf32>
    %40 = arith.subf %36, %39 : vector<8x512xf32>
    %41 = math.exp %40 : vector<8x512xf32>
    %cst_23 = arith.constant dense<0.000000e+00> : vector<8xf32>
    %42 = vector.multi_reduction <add>, %41, %cst_23 [1] : vector<8x512xf32> to vector<8xf32>
    %43 = vector.shape_cast %42 : vector<8xf32> to vector<8x1xf32>
    %44 = math.log %43 : vector<8x1xf32>
    %45 = arith.addf %38, %44 : vector<8x1xf32>
    %46 = vector.broadcast %34 : vector<1x512xf32> to vector<8x512xf32>
    %47 = vector.broadcast %45 : vector<8x1xf32> to vector<8x512xf32>
    %48 = arith.mulf %46, %47 : vector<8x512xf32>
    %49 = arith.addf %32, %48 : vector<8x512xf32>
    %c2 = arith.constant 2 : index
    %c0_24 = arith.constant 0 : index
    %50 = vector.load %arg7[%c2, %c0_24] : memref<5x512xf32, #tpu.memory_space<vmem>>, vector<1x512xf32>
    %c2_25 = arith.constant 2 : index
    %c0_26 = arith.constant 0 : index
    %51 = vector.load %arg6[%c2_25, %c0_26] : memref<5x512xf32, #tpu.memory_space<vmem>>, vector<1x512xf32>
    %52 = vector.broadcast %50 : vector<1x512xf32> to vector<8x512xf32>
    %53 = arith.addf %14, %52 : vector<8x512xf32>
    %cst_27 = arith.constant dense<0xFF800000> : vector<8xf32>
    %54 = vector.multi_reduction <maximumf>, %53, %cst_27 [1] : vector<8x512xf32> to vector<8xf32>
    %55 = vector.shape_cast %54 : vector<8xf32> to vector<8x1xf32>
    %56 = vector.broadcast %55 : vector<8x1xf32> to vector<8x512xf32>
    %57 = arith.subf %53, %56 : vector<8x512xf32>
    %58 = math.exp %57 : vector<8x512xf32>
    %cst_28 = arith.constant dense<0.000000e+00> : vector<8xf32>
    %59 = vector.multi_reduction <add>, %58, %cst_28 [1] : vector<8x512xf32> to vector<8xf32>
    %60 = vector.shape_cast %59 : vector<8xf32> to vector<8x1xf32>
    %61 = math.log %60 : vector<8x1xf32>
    %62 = arith.addf %55, %61 : vector<8x1xf32>
    %63 = vector.broadcast %51 : vector<1x512xf32> to vector<8x512xf32>
    %64 = vector.broadcast %62 : vector<8x1xf32> to vector<8x512xf32>
    %65 = arith.mulf %63, %64 : vector<8x512xf32>
    %66 = arith.addf %49, %65 : vector<8x512xf32>
    %c3 = arith.constant 3 : index
    %c0_29 = arith.constant 0 : index
    %67 = vector.load %arg7[%c3, %c0_29] : memref<5x512xf32, #tpu.memory_space<vmem>>, vector<1x512xf32>
    %c3_30 = arith.constant 3 : index
    %c0_31 = arith.constant 0 : index
    %68 = vector.load %arg6[%c3_30, %c0_31] : memref<5x512xf32, #tpu.memory_space<vmem>>, vector<1x512xf32>
    %69 = vector.broadcast %67 : vector<1x512xf32> to vector<8x512xf32>
    %70 = arith.addf %14, %69 : vector<8x512xf32>
    %cst_32 = arith.constant dense<0xFF800000> : vector<8xf32>
    %71 = vector.multi_reduction <maximumf>, %70, %cst_32 [1] : vector<8x512xf32> to vector<8xf32>
    %72 = vector.shape_cast %71 : vector<8xf32> to vector<8x1xf32>
    %73 = vector.broadcast %72 : vector<8x1xf32> to vector<8x512xf32>
    %74 = arith.subf %70, %73 : vector<8x512xf32>
    %75 = math.exp %74 : vector<8x512xf32>
    %cst_33 = arith.constant dense<0.000000e+00> : vector<8xf32>
    %76 = vector.multi_reduction <add>, %75, %cst_33 [1] : vector<8x512xf32> to vector<8xf32>
    %77 = vector.shape_cast %76 : vector<8xf32> to vector<8x1xf32>
    %78 = math.log %77 : vector<8x1xf32>
    %79 = arith.addf %72, %78 : vector<8x1xf32>
    %80 = vector.broadcast %68 : vector<1x512xf32> to vector<8x512xf32>
    %81 = vector.broadcast %79 : vector<8x1xf32> to vector<8x512xf32>
    %82 = arith.mulf %80, %81 : vector<8x512xf32>
    %83 = arith.addf %66, %82 : vector<8x512xf32>
    %c4 = arith.constant 4 : index
    %c0_34 = arith.constant 0 : index
    %84 = vector.load %arg7[%c4, %c0_34] : memref<5x512xf32, #tpu.memory_space<vmem>>, vector<1x512xf32>
    %c4_35 = arith.constant 4 : index
    %c0_36 = arith.constant 0 : index
    %85 = vector.load %arg6[%c4_35, %c0_36] : memref<5x512xf32, #tpu.memory_space<vmem>>, vector<1x512xf32>
    %86 = vector.broadcast %84 : vector<1x512xf32> to vector<8x512xf32>
    %87 = arith.addf %14, %86 : vector<8x512xf32>
    %cst_37 = arith.constant dense<0xFF800000> : vector<8xf32>
    %88 = vector.multi_reduction <maximumf>, %87, %cst_37 [1] : vector<8x512xf32> to vector<8xf32>
    %89 = vector.shape_cast %88 : vector<8xf32> to vector<8x1xf32>
    %90 = vector.broadcast %89 : vector<8x1xf32> to vector<8x512xf32>
    %91 = arith.subf %87, %90 : vector<8x512xf32>
    %92 = math.exp %91 : vector<8x512xf32>
    %cst_38 = arith.constant dense<0.000000e+00> : vector<8xf32>
    %93 = vector.multi_reduction <add>, %92, %cst_38 [1] : vector<8x512xf32> to vector<8xf32>
    %94 = vector.shape_cast %93 : vector<8xf32> to vector<8x1xf32>
    %95 = math.log %94 : vector<8x1xf32>
    %96 = arith.addf %89, %95 : vector<8x1xf32>
    %97 = vector.broadcast %85 : vector<1x512xf32> to vector<8x512xf32>
    %98 = vector.broadcast %96 : vector<8x1xf32> to vector<8x512xf32>
    %99 = arith.mulf %97, %98 : vector<8x512xf32>
    %100 = arith.addf %83, %99 : vector<8x512xf32>
    %101 = arith.subf %14, %100 : vector<8x512xf32>
    %102 = vector.extract_strided_slice %101 {offsets = [0, 0], sizes = [8, 452], strides = [1, 1]} : vector<8x512xf32> to vector<8x452xf32>
    %c0_39 = arith.constant 0 : index
    %c0_40 = arith.constant 0 : index
    %103 = vector.load %arg8[%c0_39, %c0_40] : memref<8x452xf32, #tpu.memory_space<vmem>>, vector<8x452xf32>
    tpu.vector_store %arg8[%c0_39, %c0_40], %102 {strides = array<i32>} : memref<8x452xf32, #tpu.memory_space<vmem>>, vector<8x452xf32>,
    return
  }
  func.func @transform_0(%arg0: i32) -> (i32, i32) {
    %c0_i32 = arith.constant 0 : i32
    %c0_i32_0 = arith.constant 0 : i32
    return %arg0, %c0_i32 : i32, i32
  }
  func.func @transform_1(%arg0: i32) -> (i32, i32) {
    %c0_i32 = arith.constant 0 : i32
    %c0_i32_0 = arith.constant 0 : i32
    %c0_i32_1 = arith.constant 0 : i32
    return %c0_i32, %c0_i32_0 : i32, i32
  }
  func.func @transform_2(%arg0: i32) -> (i32, i32) {
    %c0_i32 = arith.constant 0 : i32
    %c0_i32_0 = arith.constant 0 : i32
    %c0_i32_1 = arith.constant 0 : i32
    return %c0_i32, %c0_i32_0 : i32, i32
  }
  func.func @transform_3(%arg0: i32) -> (i32, i32) {
    %c0_i32 = arith.constant 0 : i32
    %c0_i32_0 = arith.constant 0 : i32
    %c0_i32_1 = arith.constant 0 : i32
    return %c0_i32, %c0_i32_0 : i32, i32
  }
  func.func @transform_4(%arg0: i32) -> (i32, i32) {
    %c0_i32 = arith.constant 0 : i32
    %c0_i32_0 = arith.constant 0 : i32
    %c0_i32_1 = arith.constant 0 : i32
    return %c0_i32, %c0_i32_0 : i32, i32
  }
  func.func @transform_5(%arg0: i32) -> (i32, i32) {
    %c0_i32 = arith.constant 0 : i32
    %c0_i32_0 = arith.constant 0 : i32
    %c0_i32_1 = arith.constant 0 : i32
    return %c0_i32, %c0_i32_0 : i32, i32
  }
  func.func @transform_6(%arg0: i32) -> (i32, i32) {
    %c0_i32 = arith.constant 0 : i32
    %c0_i32_0 = arith.constant 0 : i32
    %c0_i32_1 = arith.constant 0 : i32
    return %c0_i32, %c0_i32_0 : i32, i32
  }
  func.func @transform_7(%arg0: i32) -> (i32, i32) {
    %c0_i32 = arith.constant 0 : i32
    %c0_i32_0 = arith.constant 0 : i32
    return %arg0, %c0_i32 : i32, i32
  }
}

</mosaic_0001>

<llo_original>
// kernel: tpu_custom_call.1
$region0: #{tpu_custom_call.1}
  #allocation0 [shape = 'u32[]', space=smem, size = 0x4, offset = 0x4, fixed_abs, tag = 'smem constant byte address 0x4 - core index']
  #allocation1 [shape = 'u32[144,128]{1,0:T(1,128)}', space=vmem, size = 0x12000, scoped, tag = 'internal scratch']
  %s0 = inlined_call_operand.hbm [shape: f32[8,32], index: 0, kind: input, shape index: {}]
  %s1 = inlined_call_operand.hbm [shape: f32[32,512], index: 1, kind: input, shape index: {}]
  %s2 = inlined_call_operand.hbm [shape: f32[1,512], index: 2, kind: input, shape index: {}]
  %s3 = inlined_call_operand.hbm [shape: f32[512,512], index: 3, kind: input, shape index: {}]
  %s4 = inlined_call_operand.vmem [shape: f32[1,512], index: 4, kind: input, shape index: {}]
  %s5 = inlined_call_operand.hbm [shape: f32[5,512], index: 5, kind: input, shape index: {}]
  %s6 = inlined_call_operand.hbm [shape: f32[5,512], index: 6, kind: input, shape index: {}]
  %s7 = inlined_call_operand.hbm [shape: f32[8,452], index: 7, kind: output, shape index: {}]
  %s8 = sld [smem:[#allocation0]]
  $region62: #{tpu_custom_call.1} parent=0
    _
  %s10 = ssub.s32 1, %s8
  %s11 = scalar_select 0, %s10, %s8
  $region1: #{tpu_custom_call.1} parent=0
    #allocation2 [shape = 'u8[4096]{0}', space=vmem, size = 0x1000, scoped, tag = 'input window, operand 0, single buffered']
    #allocation3 [shape = 's32[1]{0}', space=sflag, size = 0x4, scoped, tag = 'scoped memory for tpu_custom_call.1']
    #allocation4 [shape = 's32[1]{0}', space=sflag, size = 0x4, scoped, tag = 'scoped memory for tpu_custom_call.1']
    #allocation5 [shape = 'u8[65536]{0}', space=vmem, size = 0x10000, scoped, tag = 'input window, operand 1, single buffered']
    #allocation6 [shape = 's32[1]{0}', space=sflag, size = 0x4, scoped, tag = 'scoped memory for tpu_custom_call.1']
    #allocation7 [shape = 'u8[2048]{0}', space=vmem, size = 0x800, scoped, tag = 'input window, operand 2, single buffered']
    #allocation8 [shape = 'u8[1048576]{0}', space=vmem, size = 0x100000, scoped, tag = 'input window, operand 3, single buffered']
    #allocation9 [shape = 's32[1]{0}', space=sflag, size = 0x4, scoped, tag = 'scoped memory for tpu_custom_call.1']
    #allocation10 [shape = 'u8[16384]{0}', space=vmem, size = 0x4000, scoped, tag = 'input window, operand 5, single buffered']
    #allocation11 [shape = 'u8[16384]{0}', space=vmem, size = 0x4000, scoped, tag = 'input window, operand 6, single buffered']
    #allocation12 [shape = 's32[1]{0}', space=sflag, size = 0x4, scoped, tag = 'scoped memory for tpu_custom_call.1']
    #allocation13 [shape = 'u8[16384]{0}', space=vmem, size = 0x4000, scoped, tag = 'output window, operand 0, single buffered']
    %12 = vsyncpa [#allocation3], 0
    %13 = vsyncpa [#allocation6], 0
    %14 = vsyncpa [#allocation9], 0
    %15 = vsyncpa [#allocation12], 0
    %16 = vsyncpa [#allocation4], 0
    // Predicated region
    $region2: #{tpu_custom_call.1} parent=1 // pred_check
      _
    $region3: #{tpu_custom_call.1} parent=1 // pred_check_branch
      %18 = sbr.rel (0) target = $region5
    $region4: #{tpu_custom_call.1} parent=1 // pred_region
      %s20 = ssub.s32 128, 128
      %21 = vsyncadd [#allocation3], %s20
      %s23 = sshll.u32 [#allocation2], 4
      %s24 = int_to_ptr.vmem [resolvable:$true] %s23
      %26 = dma.hbm_to_vmem [thread:$0]  %s0, 128, %s24, [#allocation3]
    $region5: #{tpu_custom_call.1} parent=1 // pred_fallthru
      _
    // Predicated region
    $region6: #{tpu_custom_call.1} parent=1 // pred_check
      _
    $region7: #{tpu_custom_call.1} parent=1 // pred_check_branch
      %28 = sbr.rel (0) target = $region9
    $region8: #{tpu_custom_call.1} parent=1 // pred_region
      %s30 = ssub.s32 2048, 2048
      %31 = vsyncadd [#allocation6], %s30
      %s32 = sshll.u32 [#allocation5], 4
      %s33 = int_to_ptr.vmem [resolvable:$true] %s32
      %38 = dma.hbm_to_vmem [thread:$0]  %s1, 2048, %s33, [#allocation6], 512, 512, 32
    $region9: #{tpu_custom_call.1} parent=1 // pred_fallthru
      _
    // Predicated region
    $region10: #{tpu_custom_call.1} parent=1 // pred_check
      _
    $region11: #{tpu_custom_call.1} parent=1 // pred_check_branch
      %40 = sbr.rel (0) target = $region13
    $region12: #{tpu_custom_call.1} parent=1 // pred_region
      %s42 = ssub.s32 64, 64
      %43 = vsyncadd [#allocation6], %s42
      %s45 = sshll.u32 [#allocation7], 4
      %s46 = int_to_ptr.vmem [resolvable:$true] %s45
      %48 = dma.hbm_to_vmem [thread:$0]  %s2, 64, %s46, [#allocation6]
    $region13: #{tpu_custom_call.1} parent=1 // pred_fallthru
      _
    // Predicated region
    $region14: #{tpu_custom_call.1} parent=1 // pred_check
      _
    $region15: #{tpu_custom_call.1} parent=1 // pred_check_branch
      %50 = sbr.rel (0) target = $region17
    $region16: #{tpu_custom_call.1} parent=1 // pred_region
      %s52 = ssub.s32 32768, 32768
      %53 = vsyncadd [#allocation9], %s52
      %s54 = sshll.u32 [#allocation8], 4
      %s55 = int_to_ptr.vmem [resolvable:$true] %s54
      %60 = dma.hbm_to_vmem [thread:$0]  %s3, 32768, %s55, [#allocation9], 512, 512, 32
    $region17: #{tpu_custom_call.1} parent=1 // pred_fallthru
      _
    // Predicated region
    $region18: #{tpu_custom_call.1} parent=1 // pred_check
      _
    $region19: #{tpu_custom_call.1} parent=1 // pred_check_branch
      %62 = sbr.rel (0) target = $region21
    $region20: #{tpu_custom_call.1} parent=1 // pred_region
      _
    $region21: #{tpu_custom_call.1} parent=1 // pred_fallthru
      _
    // Predicated region
    $region22: #{tpu_custom_call.1} parent=1 // pred_check
      _
    $region23: #{tpu_custom_call.1} parent=1 // pred_check_branch
      %64 = sbr.rel (0) target = $region25
    $region24: #{tpu_custom_call.1} parent=1 // pred_region
      %s66 = ssub.s32 512, 512
      %67 = vsyncadd [#allocation9], %s66
      %s69 = sshll.u32 [#allocation10], 4
      %s70 = int_to_ptr.vmem [resolvable:$true] %s69
      %72 = dma.hbm_to_vmem [thread:$0]  %s5, 512, %s70, [#allocation9]
    $region25: #{tpu_custom_call.1} parent=1 // pred_fallthru
      _
    // Predicated region
    $region26: #{tpu_custom_call.1} parent=1 // pred_check
      _
    $region27: #{tpu_custom_call.1} parent=1 // pred_check_branch
      %74 = sbr.rel (0) target = $region29
    $region28: #{tpu_custom_call.1} parent=1 // pred_region
      %s76 = ssub.s32 512, 512
      %77 = vsyncadd [#allocation12], %s76
      %s79 = sshll.u32 [#allocation11], 4
      %s80 = int_to_ptr.vmem [resolvable:$true] %s79
      %82 = dma.hbm_to_vmem [thread:$0]  %s6, 512, %s80, [#allocation12]
    $region29: #{tpu_custom_call.1} parent=1 // pred_fallthru
      _
    // Predicated region
    $region30: #{tpu_custom_call.1} parent=1 // pred_check
      _
    $region31: #{tpu_custom_call.1} parent=1 // pred_check_branch
      %84 = sbr.rel (0) target = $region33
    $region32: #{tpu_custom_call.1} parent=1 // pred_region
      %85 = dma.done [#allocation3], 128
    $region33: #{tpu_custom_call.1} parent=1 // pred_fallthru
      _
    // Predicated region
    $region34: #{tpu_custom_call.1} parent=1 // pred_check
      _
    $region35: #{tpu_custom_call.1} parent=1 // pred_check_branch
      %87 = sbr.rel (0) target = $region37
    $region36: #{tpu_custom_call.1} parent=1 // pred_region
      %88 = dma.done [#allocation6], 2048
    $region37: #{tpu_custom_call.1} parent=1 // pred_fallthru
      _
    // Predicated region
    $region38: #{tpu_custom_call.1} parent=1 // pred_check
      _
    $region39: #{tpu_custom_call.1} parent=1 // pred_check_branch
      %90 = sbr.rel (0) target = $region41
    $region40: #{tpu_custom_call.1} parent=1 // pred_region
      %91 = dma.done [#allocation6], 64
    $region41: #{tpu_custom_call.1} parent=1 // pred_fallthru
      _
    // Predicated region
    $region42: #{tpu_custom_call.1} parent=1 // pred_check
      _
    $region43: #{tpu_custom_call.1} parent=1 // pred_check_branch
      %93 = sbr.rel (0) target = $region45
    $region44: #{tpu_custom_call.1} parent=1 // pred_region
      %94 = dma.done [#allocation9], 32768
    $region45: #{tpu_custom_call.1} parent=1 // pred_fallthru
      _
    // Predicated region
    $region46: #{tpu_custom_call.1} parent=1 // pred_check
      _
    $region47: #{tpu_custom_call.1} parent=1 // pred_check_branch
      %96 = sbr.rel (0) target = $region49
    $region48: #{tpu_custom_call.1} parent=1 // pred_region
      %97 = dma.done [#allocation9], 512
    $region49: #{tpu_custom_call.1} parent=1 // pred_fallthru
      _
    // Predicated region
    $region50: #{tpu_custom_call.1} parent=1 // pred_check
      _
    $region51: #{tpu_custom_call.1} parent=1 // pred_check_branch
      %99 = sbr.rel (0) target = $region53
    $region52: #{tpu_custom_call.1} parent=1 // pred_region
      %100 = dma.done [#allocation12], 512
    $region53: #{tpu_custom_call.1} parent=1 // pred_fallthru
      _
    %v101 = vld [vmem:[#allocation2] sm:$0xff]
    %v102 = vld [vmem:[#allocation5] sm:$0xff]
    %v103 = vld [vmem:[#allocation5 + $0x8] sm:$0xff]
    %v104 = vld [vmem:[#allocation5 + $0x10] sm:$0xff]
    %v105 = vld [vmem:[#allocation5 + $0x18] sm:$0xff]
    %v106 = vld [vmem:[#allocation5 + $0x20] sm:$0xff]
    %v107 = vld [vmem:[#allocation5 + $0x28] sm:$0xff]
    %v108 = vld [vmem:[#allocation5 + $0x30] sm:$0xff]
    %v109 = vld [vmem:[#allocation5 + $0x38] sm:$0xff]
    %v110 = vld [vmem:[#allocation5 + $0x40] sm:$0xff]
    %v111 = vld [vmem:[#allocation5 + $0x48] sm:$0xff]
    %v112 = vld [vmem:[#allocation5 + $0x50] sm:$0xff]
    %v113 = vld [vmem:[#allocation5 + $0x58] sm:$0xff]
    %v114 = vld [vmem:[#allocation5 + $0x60] sm:$0xff]
    %v115 = vld [vmem:[#allocation5 + $0x68] sm:$0xff]
    %v116 = vld [vmem:[#allocation5 + $0x70] sm:$0xff]
    %v117 = vld [vmem:[#allocation5 + $0x78] sm:$0xff]
    %v118 = vld [vmem:[#allocation7] sm:$0xf]
    %v120 = vlaneseq
    %v121 = vshrl.u32 %v120, 7
    %v122 = vsub.s32 0, %v121
    %v123 = vrot.slane %v118, %v122
    %v124 = vlaneseq
    %v125 = vshrl.u32 %v124, 7
    %v126 = vsub.s32 1, %v125
    %v127 = vrot.slane %v118, %v126
    %v128 = vlaneseq
    %v129 = vshrl.u32 %v128, 7
    %v130 = vsub.s32 2, %v129
    %v131 = vrot.slane %v118, %v130
    %v132 = vlaneseq
    %v133 = vshrl.u32 %v132, 7
    %v134 = vsub.s32 3, %v133
    %v135 = vrot.slane %v118, %v134
    %vm140 = vcmask 261120
    %v142 = vsel %vm140, %v101, 0
    %144 = vmatprep.subr.mxu0 0.0
    %145 = vmatpush1.msra.mxu0 0.0
    %146 = vmatprep.subr.mxu0 0.0
    %147 = vmatpush1.msra.mxu0 0.0
    %148 = vmatprep.subr.mxu0 0.0
    %149 = vmatpush1.msra.mxu0 0.0
    %150 = vmatprep.subr.mxu0 0.0
    %151 = vmatpush1.msra.mxu0 0.0
    %152 = vmatprep.subr.mxu0 0.0
    %153 = vmatpush1.msra.mxu0 0.0
    %154 = vmatprep.subr.mxu0 0.0
    %155 = vmatpush1.msra.mxu0 0.0
    %156 = vmatprep.subr.mxu0 0.0
    %157 = vmatpush1.msra.mxu0 0.0
    %158 = vmatprep.subr.mxu0 0.0
    %159 = vmatpush1.msra.mxu0 0.0
    %160 = vmatprep.subr.mxu0 0.0
    %161 = vmatpush1.msra.mxu0 0.0
    %162 = vmatprep.subr.mxu0 0.0
    %163 = vmatpush1.msra.mxu0 0.0
    %164 = vmatprep.subr.mxu0 0.0
    %165 = vmatpush1.msra.mxu0 0.0
    %166 = vmatprep.subr.mxu0 0.0
    %167 = vmatpush1.msra.mxu0 0.0
    %v168 = vand.u32 %v115, 4294901760
    %169 = vmatprep.subr.mxu0 %v168
    %v170 = vand.u32 %v114, 4294901760
    %171 = vmatpush1.msra.mxu0 %v170
    %v172 = vand.u32 %v111, 4294901760
    %173 = vmatprep.subr.mxu0 %v172
    %v174 = vand.u32 %v110, 4294901760
    %175 = vmatpush1.msra.mxu0 %v174
    %v176 = vand.u32 %v107, 4294901760
    %177 = vmatprep.subr.mxu0 %v176
    %v178 = vand.u32 %v106, 4294901760
    %179 = vmatpush1.msra.mxu0 %v178
    %v180 = vand.u32 %v103, 4294901760
    %181 = vmatprep.subr.mxu0 %v180
    %v182 = vand.u32 %v102, 4294901760
    %183 = vmatpush1.msra.mxu0 %v182
    %184 = vmatprep.subr.mxu0 0.0
    %185 = vmatpush2.msra.mxu0 0.0
    %186 = vmatprep.subr.mxu0 0.0
    %187 = vmatpush2.msra.mxu0 0.0
    %188 = vmatprep.subr.mxu0 0.0
    %189 = vmatpush2.msra.mxu0 0.0
    %190 = vmatprep.subr.mxu0 0.0
    %191 = vmatpush2.msra.mxu0 0.0
    %192 = vmatprep.subr.mxu0 0.0
    %193 = vmatpush2.msra.mxu0 0.0
    %194 = vmatprep.subr.mxu0 0.0
    %195 = vmatpush2.msra.mxu0 0.0
    %196 = vmatprep.subr.mxu0 0.0
    %197 = vmatpush2.msra.mxu0 0.0
    %198 = vmatprep.subr.mxu0 0.0
    %199 = vmatpush2.msra.mxu0 0.0
    %200 = vmatprep.subr.mxu0 0.0
    %201 = vmatpush2.msra.mxu0 0.0
    %202 = vmatprep.subr.mxu0 0.0
    %203 = vmatpush2.msra.mxu0 0.0
    %204 = vmatprep.subr.mxu0 0.0
    %205 = vmatpush2.msra.mxu0 0.0
    %206 = vmatprep.subr.mxu0 0.0
    %207 = vmatpush2.msra.mxu0 0.0
    %208 = vmatprep.subr.mxu0 0.0
    %209 = vmatpush2.msra.mxu0 0.0
    %210 = vmatprep.subr.mxu0 0.0
    %211 = vmatpush2.msra.mxu0 0.0
    %212 = vmatprep.subr.mxu0 0.0
    %213 = vmatpush2.msra.mxu0 0.0
    %214 = vmatprep.subr.mxu0 0.0
    %215 = vmatpush2.msra.mxu0 0.0
    %216 = vmatprep.mubr.f32.mxu0 0.0
    %v217 = vand.u32 %v142, 4294901760
    %v218 = vsub.f32 %v142, %v217
    %v219 = vand.u32 %v218, 4294901760
    %v220 = vsub.f32 %v218, %v219
    %v221 = vand.u32 %v220, 4294901760
    %222 = vmatmul.mubr.f32.gmra.mxu0 %v221
    %v223 = vpop.f32.mrf.mxu0
    %v224 = vadd.f32 %v123, %v223
    %v225 = vpop.f32.mrf.mxu0
    %v226 = vadd.f32 %v127, %v225
    %227 = vdwg.mxu0
    %228 = vmatprep.subr.mxu0 0.0
    %229 = vmatpush1.msra.mxu0 0.0
    %230 = vmatprep.subr.mxu0 0.0
    %231 = vmatpush1.msra.mxu0 0.0
    %232 = vmatprep.subr.mxu0 0.0
    %233 = vmatpush1.msra.mxu0 0.0
    %234 = vmatprep.subr.mxu0 0.0
    %235 = vmatpush1.msra.mxu0 0.0
    %236 = vmatprep.subr.mxu0 0.0
    %237 = vmatpush1.msra.mxu0 0.0
    %238 = vmatprep.subr.mxu0 0.0
    %239 = vmatpush1.msra.mxu0 0.0
    %240 = vmatprep.subr.mxu0 0.0
    %241 = vmatpush1.msra.mxu0 0.0
    %242 = vmatprep.subr.mxu0 0.0
    %243 = vmatpush1.msra.mxu0 0.0
    %244 = vmatprep.subr.mxu0 0.0
    %245 = vmatpush1.msra.mxu0 0.0
    %246 = vmatprep.subr.mxu0 0.0
    %247 = vmatpush1.msra.mxu0 0.0
    %248 = vmatprep.subr.mxu0 0.0
    %249 = vmatpush1.msra.mxu0 0.0
    %250 = vmatprep.subr.mxu0 0.0
    %251 = vmatpush1.msra.mxu0 0.0
    %v252 = vand.u32 %v115, 4294901760
    %v253 = vsub.f32 %v115, %v252
    %v254 = vand.u32 %v253, 4294901760
    %v255 = vsub.f32 %v253, %v254
    %v256 = vand.u32 %v255, 4294901760
    %257 = vmatprep.subr.mxu0 %v256
    %v258 = vand.u32 %v114, 4294901760
    %v259 = vsub.f32 %v114, %v258
    %v260 = vand.u32 %v259, 4294901760
    %v261 = vsub.f32 %v259, %v260
    %v262 = vand.u32 %v261, 4294901760
    %263 = vmatpush1.msra.mxu0 %v262
    %v264 = vand.u32 %v111, 4294901760
    %v265 = vsub.f32 %v111, %v264
    %v266 = vand.u32 %v265, 4294901760
    %v267 = vsub.f32 %v265, %v266
    %v268 = vand.u32 %v267, 4294901760
    %269 = vmatprep.subr.mxu0 %v268
    %v270 = vand.u32 %v110, 4294901760
    %v271 = vsub.f32 %v110, %v270
    %v272 = vand.u32 %v271, 4294901760
    %v273 = vsub.f32 %v271, %v272
    %v274 = vand.u32 %v273, 4294901760
    %275 = vmatpush1.msra.mxu0 %v274
    %v276 = vand.u32 %v107, 4294901760
    %v277 = vsub.f32 %v107, %v276
    %v278 = vand.u32 %v277, 4294901760
    %v279 = vsub.f32 %v277, %v278
    %v280 = vand.u32 %v279, 4294901760
    %281 = vmatprep.subr.mxu0 %v280
    %v282 = vand.u32 %v106, 4294901760
    %v283 = vsub.f32 %v106, %v282
    %v284 = vand.u32 %v283, 4294901760
    %v285 = vsub.f32 %v283, %v284
    %v286 = vand.u32 %v285, 4294901760
    %287 = vmatpush1.msra.mxu0 %v286
    %v288 = vand.u32 %v103, 4294901760
    %v289 = vsub.f32 %v103, %v288
    %v290 = vand.u32 %v289, 4294901760
    %v291 = vsub.f32 %v289, %v290
    %v292 = vand.u32 %v291, 4294901760
    %293 = vmatprep.subr.mxu0 %v292
    %v294 = vand.u32 %v102, 4294901760
    %v295 = vsub.f32 %v102, %v294
    %v296 = vand.u32 %v295, 4294901760
    %v297 = vsub.f32 %v295, %v296
    %v298 = vand.u32 %v297, 4294901760
    %299 = vmatpush1.msra.mxu0 %v298
    %300 = vmatprep.subr.mxu0 0.0
    %301 = vmatpush2.msra.mxu0 0.0
    %302 = vmatprep.subr.mxu0 0.0
    %303 = vmatpush2.msra.mxu0 0.0
    %304 = vmatprep.subr.mxu0 0.0
    %305 = vmatpush2.msra.mxu0 0.0
    %306 = vmatprep.subr.mxu0 0.0
    %307 = vmatpush2.msra.mxu0 0.0
    %308 = vmatprep.subr.mxu0 0.0
    %309 = vmatpush2.msra.mxu0 0.0
    %310 = vmatprep.subr.mxu0 0.0
    %311 = vmatpush2.msra.mxu0 0.0
    %312 = vmatprep.subr.mxu0 0.0
    %313 = vmatpush2.msra.mxu0 0.0
    %314 = vmatprep.subr.mxu0 0.0
    %315 = vmatpush2.msra.mxu0 0.0
    %316 = vmatprep.subr.mxu0 0.0
    %317 = vmatpush2.msra.mxu0 0.0
    %318 = vmatprep.subr.mxu0 0.0
    %319 = vmatpush2.msra.mxu0 0.0
    %320 = vmatprep.subr.mxu0 0.0
    %321 = vmatpush2.msra.mxu0 0.0
    %322 = vmatprep.subr.mxu0 0.0
    %323 = vmatpush2.msra.mxu0 0.0
    %324 = vmatprep.subr.mxu0 0.0
    %325 = vmatpush2.msra.mxu0 0.0
    %326 = vmatprep.subr.mxu0 0.0
    %327 = vmatpush2.msra.mxu0 0.0
    %328 = vmatprep.subr.mxu0 0.0
    %329 = vmatpush2.msra.mxu0 0.0
    %330 = vmatprep.subr.mxu0 0.0
    %331 = vmatpush2.msra.mxu0 0.0
    %332 = vmatprep.mubr.f32.mxu0 0.0
    %v333 = vand.u32 %v142, 4294901760
    %334 = vmatmul.mubr.f32.gmra.mxu0 %v333
    %v335 = vpop.f32.mrf.mxu0
    %v336 = vadd.f32 %v224, %v335
    %v337 = vpop.f32.mrf.mxu0
    %v338 = vadd.f32 %v226, %v337
    %339 = vdwg.mxu0
    %340 = vmatprep.subr.mxu0 0.0
    %341 = vmatpush1.msra.mxu0 0.0
    %342 = vmatprep.subr.mxu0 0.0
    %343 = vmatpush1.msra.mxu0 0.0
    %344 = vmatprep.subr.mxu0 0.0
    %345 = vmatpush1.msra.mxu0 0.0
    %346 = vmatprep.subr.mxu0 0.0
    %347 = vmatpush1.msra.mxu0 0.0
    %348 = vmatprep.subr.mxu0 0.0
    %349 = vmatpush1.msra.mxu0 0.0
    %350 = vmatprep.subr.mxu0 0.0
    %351 = vmatpush1.msra.mxu0 0.0
    %352 = vmatprep.subr.mxu0 0.0
    %353 = vmatpush1.msra.mxu0 0.0
    %354 = vmatprep.subr.mxu0 0.0
    %355 = vmatpush1.msra.mxu0 0.0
    %356 = vmatprep.subr.mxu0 0.0
    %357 = vmatpush1.msra.mxu0 0.0
    %358 = vmatprep.subr.mxu0 0.0
    %359 = vmatpush1.msra.mxu0 0.0
    %360 = vmatprep.subr.mxu0 0.0
    %361 = vmatpush1.msra.mxu0 0.0
    %362 = vmatprep.subr.mxu0 0.0
    %363 = vmatpush1.msra.mxu0 0.0
    %v364 = vand.u32 %v115, 4294901760
    %v365 = vsub.f32 %v115, %v364
    %366 = vmatprep.subr.mxu0 %v365
    %v367 = vand.u32 %v114, 4294901760
    %v368 = vsub.f32 %v114, %v367
    %369 = vmatpush1.msra.mxu0 %v368
    %v370 = vand.u32 %v111, 4294901760
    %v371 = vsub.f32 %v111, %v370
    %372 = vmatprep.subr.mxu0 %v371
    %v373 = vand.u32 %v110, 4294901760
    %v374 = vsub.f32 %v110, %v373
    %375 = vmatpush1.msra.mxu0 %v374
    %v376 = vand.u32 %v107, 4294901760
    %v377 = vsub.f32 %v107, %v376
    %378 = vmatprep.subr.mxu0 %v377
    %v379 = vand.u32 %v106, 4294901760
    %v380 = vsub.f32 %v106, %v379
    %381 = vmatpush1.msra.mxu0 %v380
    %v382 = vand.u32 %v103, 4294901760
    %v383 = vsub.f32 %v103, %v382
    %384 = vmatprep.subr.mxu0 %v383
    %v385 = vand.u32 %v102, 4294901760
    %v386 = vsub.f32 %v102, %v385
    %387 = vmatpush1.msra.mxu0 %v386
    %388 = vmatprep.subr.mxu0 0.0
    %389 = vmatpush2.msra.mxu0 0.0
    %390 = vmatprep.subr.mxu0 0.0
    %391 = vmatpush2.msra.mxu0 0.0
    %392 = vmatprep.subr.mxu0 0.0
    %393 = vmatpush2.msra.mxu0 0.0
    %394 = vmatprep.subr.mxu0 0.0
    %395 = vmatpush2.msra.mxu0 0.0
    %396 = vmatprep.subr.mxu0 0.0
    %397 = vmatpush2.msra.mxu0 0.0
    %398 = vmatprep.subr.mxu0 0.0
    %399 = vmatpush2.msra.mxu0 0.0
    %400 = vmatprep.subr.mxu0 0.0
    %401 = vmatpush2.msra.mxu0 0.0
    %402 = vmatprep.subr.mxu0 0.0
    %403 = vmatpush2.msra.mxu0 0.0
    %404 = vmatprep.subr.mxu0 0.0
    %405 = vmatpush2.msra.mxu0 0.0
    %406 = vmatprep.subr.mxu0 0.0
    %407 = vmatpush2.msra.mxu0 0.0
    %408 = vmatprep.subr.mxu0 0.0
    %409 = vmatpush2.msra.mxu0 0.0
    %410 = vmatprep.subr.mxu0 0.0
    %411 = vmatpush2.msra.mxu0 0.0
    %412 = vmatprep.subr.mxu0 0.0
    %413 = vmatpush2.msra.mxu0 0.0
    %414 = vmatprep.subr.mxu0 0.0
    %415 = vmatpush2.msra.mxu0 0.0
    %416 = vmatprep.subr.mxu0 0.0
    %417 = vmatpush2.msra.mxu0 0.0
    %418 = vmatprep.subr.mxu0 0.0
    %419 = vmatpush2.msra.mxu0 0.0
    %420 = vmatprep.mubr.f32.mxu0 0.0
    %v421 = vand.u32 %v142, 4294901760
    %v422 = vsub.f32 %v142, %v421
    %423 = vmatmul.mubr.f32.gmra.mxu0 %v422
    %v424 = vpop.f32.mrf.mxu0
    %v425 = vadd.f32 %v336, %v424
    %v426 = vpop.f32.mrf.mxu0
    %v427 = vadd.f32 %v338, %v426
    %428 = vdwg.mxu0
    %429 = vmatprep.subr.mxu0 0.0
    %430 = vmatpush1.msra.mxu0 0.0
    %431 = vmatprep.subr.mxu0 0.0
    %432 = vmatpush1.msra.mxu0 0.0
    %433 = vmatprep.subr.mxu0 0.0
    %434 = vmatpush1.msra.mxu0 0.0
    %435 = vmatprep.subr.mxu0 0.0
    %436 = vmatpush1.msra.mxu0 0.0
    %437 = vmatprep.subr.mxu0 0.0
    %438 = vmatpush1.msra.mxu0 0.0
    %439 = vmatprep.subr.mxu0 0.0
    %440 = vmatpush1.msra.mxu0 0.0
    %441 = vmatprep.subr.mxu0 0.0
    %442 = vmatpush1.msra.mxu0 0.0
    %443 = vmatprep.subr.mxu0 0.0
    %444 = vmatpush1.msra.mxu0 0.0
    %445 = vmatprep.subr.mxu0 0.0
    %446 = vmatpush1.msra.mxu0 0.0
    %447 = vmatprep.subr.mxu0 0.0
    %448 = vmatpush1.msra.mxu0 0.0
    %449 = vmatprep.subr.mxu0 0.0
    %450 = vmatpush1.msra.mxu0 0.0
    %451 = vmatprep.subr.mxu0 0.0
    %452 = vmatpush1.msra.mxu0 0.0
    %v453 = vand.u32 %v115, 4294901760
    %454 = vmatprep.subr.mxu0 %v453
    %v455 = vand.u32 %v114, 4294901760
    %456 = vmatpush1.msra.mxu0 %v455
    %v457 = vand.u32 %v111, 4294901760
    %458 = vmatprep.subr.mxu0 %v457
    %v459 = vand.u32 %v110, 4294901760
    %460 = vmatpush1.msra.mxu0 %v459
    %v461 = vand.u32 %v107, 4294901760
    %462 = vmatprep.subr.mxu0 %v461
    %v463 = vand.u32 %v106, 4294901760
    %464 = vmatpush1.msra.mxu0 %v463
    %v465 = vand.u32 %v103, 4294901760
    %466 = vmatprep.subr.mxu0 %v465
    %v467 = vand.u32 %v102, 4294901760
    %468 = vmatpush1.msra.mxu0 %v467
    %469 = vmatprep.subr.mxu0 0.0
    %470 = vmatpush2.msra.mxu0 0.0
    %471 = vmatprep.subr.mxu0 0.0
    %472 = vmatpush2.msra.mxu0 0.0
    %473 = vmatprep.subr.mxu0 0.0
    %474 = vmatpush2.msra.mxu0 0.0
    %475 = vmatprep.subr.mxu0 0.0
    %476 = vmatpush2.msra.mxu0 0.0
    %477 = vmatprep.subr.mxu0 0.0
    %478 = vmatpush2.msra.mxu0 0.0
    %479 = vmatprep.subr.mxu0 0.0
    %480 = vmatpush2.msra.mxu0 0.0
    %481 = vmatprep.subr.mxu0 0.0
    %482 = vmatpush2.msra.mxu0 0.0
    %483 = vmatprep.subr.mxu0 0.0
    %484 = vmatpush2.msra.mxu0 0.0
    %485 = vmatprep.subr.mxu0 0.0
    %486 = vmatpush2.msra.mxu0 0.0
    %487 = vmatprep.subr.mxu0 0.0
    %488 = vmatpush2.msra.mxu0 0.0
    %489 = vmatprep.subr.mxu0 0.0
    %490 = vmatpush2.msra.mxu0 0.0
    %491 = vmatprep.subr.mxu0 0.0
    %492 = vmatpush2.msra.mxu0 0.0
    %493 = vmatprep.subr.mxu0 0.0
    %494 = vmatpush2.msra.mxu0 0.0
    %495 = vmatprep.subr.mxu0 0.0
    %496 = vmatpush2.msra.mxu0 0.0
    %497 = vmatprep.subr.mxu0 0.0
    %498 = vmatpush2.msra.mxu0 0.0
    %499 = vmatprep.subr.mxu0 0.0
    %500 = vmatpush2.msra.mxu0 0.0
    %501 = vmatprep.mubr.f32.mxu0 0.0
    %v502 = vand.u32 %v142, 4294901760
    %v503 = vsub.f32 %v142, %v502
    %v504 = vand.u32 %v503, 4294901760
    %505 = vmatmul.mubr.f32.gmra.mxu0 %v504
    %v506 = vpop.f32.mrf.mxu0
    %v507 = vadd.f32 %v425, %v506
    %v508 = vpop.f32.mrf.mxu0
    %v509 = vadd.f32 %v427, %v508
    %510 = vdwg.mxu0
    %511 = vmatprep.subr.mxu0 0.0
    %512 = vmatpush1.msra.mxu0 0.0
    %513 = vmatprep.subr.mxu0 0.0
    %514 = vmatpush1.msra.mxu0 0.0
    %515 = vmatprep.subr.mxu0 0.0
    %516 = vmatpush1.msra.mxu0 0.0
    %517 = vmatprep.subr.mxu0 0.0
    %518 = vmatpush1.msra.mxu0 0.0
    %519 = vmatprep.subr.mxu0 0.0
    %520 = vmatpush1.msra.mxu0 0.0
    %521 = vmatprep.subr.mxu0 0.0
    %522 = vmatpush1.msra.mxu0 0.0
    %523 = vmatprep.subr.mxu0 0.0
    %524 = vmatpush1.msra.mxu0 0.0
    %525 = vmatprep.subr.mxu0 0.0
    %526 = vmatpush1.msra.mxu0 0.0
    %527 = vmatprep.subr.mxu0 0.0
    %528 = vmatpush1.msra.mxu0 0.0
    %529 = vmatprep.subr.mxu0 0.0
    %530 = vmatpush1.msra.mxu0 0.0
    %531 = vmatprep.subr.mxu0 0.0
    %532 = vmatpush1.msra.mxu0 0.0
    %533 = vmatprep.subr.mxu0 0.0
    %534 = vmatpush1.msra.mxu0 0.0
    %v535 = vand.u32 %v115, 4294901760
    %v536 = vsub.f32 %v115, %v535
    %v537 = vand.u32 %v536, 4294901760
    %538 = vmatprep.subr.mxu0 %v537
    %v539 = vand.u32 %v114, 4294901760
    %v540 = vsub.f32 %v114, %v539
    %v541 = vand.u32 %v540, 4294901760
    %542 = vmatpush1.msra.mxu0 %v541
    %v543 = vand.u32 %v111, 4294901760
    %v544 = vsub.f32 %v111, %v543
    %v545 = vand.u32 %v544, 4294901760
    %546 = vmatprep.subr.mxu0 %v545
    %v547 = vand.u32 %v110, 4294901760
    %v548 = vsub.f32 %v110, %v547
    %v549 = vand.u32 %v548, 4294901760
    %550 = vmatpush1.msra.mxu0 %v549
    %v551 = vand.u32 %v107, 4294901760
    %v552 = vsub.f32 %v107, %v551
    %v553 = vand.u32 %v552, 4294901760
    %554 = vmatprep.subr.mxu0 %v553
    %v555 = vand.u32 %v106, 4294901760
    %v556 = vsub.f32 %v106, %v555
    %v557 = vand.u32 %v556, 4294901760
    %558 = vmatpush1.msra.mxu0 %v557
    %v559 = vand.u32 %v103, 4294901760
    %v560 = vsub.f32 %v103, %v559
    %v561 = vand.u32 %v560, 4294901760
    %562 = vmatprep.subr.mxu0 %v561
    %v563 = vand.u32 %v102, 4294901760
    %v564 = vsub.f32 %v102, %v563
    %v565 = vand.u32 %v564, 4294901760
    %566 = vmatpush1.msra.mxu0 %v565
    %567 = vmatprep.subr.mxu0 0.0
    %568 = vmatpush2.msra.mxu0 0.0
    %569 = vmatprep.subr.mxu0 0.0
    %570 = vmatpush2.msra.mxu0 0.0
    %571 = vmatprep.subr.mxu0 0.0
    %572 = vmatpush2.msra.mxu0 0.0
    %573 = vmatprep.subr.mxu0 0.0
    %574 = vmatpush2.msra.mxu0 0.0
    %575 = vmatprep.subr.mxu0 0.0
    %576 = vmatpush2.msra.mxu0 0.0
    %577 = vmatprep.subr.mxu0 0.0
    %578 = vmatpush2.msra.mxu0 0.0
    %579 = vmatprep.subr.mxu0 0.0
    %580 = vmatpush2.msra.mxu0 0.0
    %581 = vmatprep.subr.mxu0 0.0
    %582 = vmatpush2.msra.mxu0 0.0
    %583 = vmatprep.subr.mxu0 0.0
    %584 = vmatpush2.msra.mxu0 0.0
    %585 = vmatprep.subr.mxu0 0.0
    %586 = vmatpush2.msra.mxu0 0.0
    %587 = vmatprep.subr.mxu0 0.0
    %588 = vmatpush2.msra.mxu0 0.0
    %589 = vmatprep.subr.mxu0 0.0
    %590 = vmatpush2.msra.mxu0 0.0
    %591 = vmatprep.subr.mxu0 0.0
    %592 = vmatpush2.msra.mxu0 0.0
    %593 = vmatprep.subr.mxu0 0.0
    %594 = vmatpush2.msra.mxu0 0.0
    %595 = vmatprep.subr.mxu0 0.0
    %596 = vmatpush2.msra.mxu0 0.0
    %597 = vmatprep.subr.mxu0 0.0
    %598 = vmatpush2.msra.mxu0 0.0
    %599 = vmatprep.mubr.f32.mxu0 0.0
    %v600 = vand.u32 %v142, 4294901760
    %601 = vmatmul.mubr.f32.gmra.mxu0 %v600
    %v602 = vpop.f32.mrf.mxu0
    %v603 = vadd.f32 %v507, %v602
    %v604 = vpop.f32.mrf.mxu0
    %v605 = vadd.f32 %v509, %v604
    %606 = vdwg.mxu0
    %607 = vmatprep.subr.mxu0 0.0
    %608 = vmatpush1.msra.mxu0 0.0
    %609 = vmatprep.subr.mxu0 0.0
    %610 = vmatpush1.msra.mxu0 0.0
    %611 = vmatprep.subr.mxu0 0.0
    %612 = vmatpush1.msra.mxu0 0.0
    %613 = vmatprep.subr.mxu0 0.0
    %614 = vmatpush1.msra.mxu0 0.0
    %615 = vmatprep.subr.mxu0 0.0
    %616 = vmatpush1.msra.mxu0 0.0
    %617 = vmatprep.subr.mxu0 0.0
    %618 = vmatpush1.msra.mxu0 0.0
    %619 = vmatprep.subr.mxu0 0.0
    %620 = vmatpush1.msra.mxu0 0.0
    %621 = vmatprep.subr.mxu0 0.0
    %622 = vmatpush1.msra.mxu0 0.0
    %623 = vmatprep.subr.mxu0 0.0
    %624 = vmatpush1.msra.mxu0 0.0
    %625 = vmatprep.subr.mxu0 0.0
    %626 = vmatpush1.msra.mxu0 0.0
    %627 = vmatprep.subr.mxu0 0.0
    %628 = vmatpush1.msra.mxu0 0.0
    %629 = vmatprep.subr.mxu0 0.0
    %630 = vmatpush1.msra.mxu0 0.0
    %v631 = vand.u32 %v115, 4294901760
    %632 = vmatprep.subr.mxu0 %v631
    %v633 = vand.u32 %v114, 4294901760
    %634 = vmatpush1.msra.mxu0 %v633
    %v635 = vand.u32 %v111, 4294901760
    %636 = vmatprep.subr.mxu0 %v635
    %v637 = vand.u32 %v110, 4294901760
    %638 = vmatpush1.msra.mxu0 %v637
    %v639 = vand.u32 %v107, 4294901760
    %640 = vmatprep.subr.mxu0 %v639
    %v641 = vand.u32 %v106, 4294901760
    %642 = vmatpush1.msra.mxu0 %v641
    %v643 = vand.u32 %v103, 4294901760
    %644 = vmatprep.subr.mxu0 %v643
    %v645 = vand.u32 %v102, 4294901760
    %646 = vmatpush1.msra.mxu0 %v645
    %647 = vmatprep.subr.mxu0 0.0
    %648 = vmatpush2.msra.mxu0 0.0
    %649 = vmatprep.subr.mxu0 0.0
    %650 = vmatpush2.msra.mxu0 0.0
    %651 = vmatprep.subr.mxu0 0.0
    %652 = vmatpush2.msra.mxu0 0.0
    %653 = vmatprep.subr.mxu0 0.0
    %654 = vmatpush2.msra.mxu0 0.0
    %655 = vmatprep.subr.mxu0 0.0
    %656 = vmatpush2.msra.mxu0 0.0
    %657 = vmatprep.subr.mxu0 0.0
    %658 = vmatpush2.msra.mxu0 0.0
    %659 = vmatprep.subr.mxu0 0.0
    %660 = vmatpush2.msra.mxu0 0.0
    %661 = vmatprep.subr.mxu0 0.0
    %662 = vmatpush2.msra.mxu0 0.0
    %663 = vmatprep.subr.mxu0 0.0
    %664 = vmatpush2.msra.mxu0 0.0
    %665 = vmatprep.subr.mxu0 0.0
    %666 = vmatpush2.msra.mxu0 0.0
    %667 = vmatprep.subr.mxu0 0.0
    %668 = vmatpush2.msra.mxu0 0.0
    %669 = vmatprep.subr.mxu0 0.0
    %670 = vmatpush2.msra.mxu0 0.0
    %671 = vmatprep.subr.mxu0 0.0
    %672 = vmatpush2.msra.mxu0 0.0
    %673 = vmatprep.subr.mxu0 0.0
    %674 = vmatpush2.msra.mxu0 0.0
    %675 = vmatprep.subr.mxu0 0.0
    %676 = vmatpush2.msra.mxu0 0.0
    %677 = vmatprep.subr.mxu0 0.0
    %678 = vmatpush2.msra.mxu0 0.0
    %679 = vmatprep.mubr.f32.mxu0 0.0
    %v680 = vand.u32 %v142, 4294901760
    %681 = vmatmul.mubr.f32.gmra.mxu0 %v680
    %v682 = vpop.f32.mrf.mxu0
    %v683 = vadd.f32 %v603, %v682
    %v684 = vpop.f32.mrf.mxu0
    %v685 = vadd.f32 %v605, %v684
    %686 = vdwg.mxu0
    %687 = vmatprep.subr.mxu0 0.0
    %688 = vmatpush1.msra.mxu0 0.0
    %689 = vmatprep.subr.mxu0 0.0
    %690 = vmatpush1.msra.mxu0 0.0
    %691 = vmatprep.subr.mxu0 0.0
    %692 = vmatpush1.msra.mxu0 0.0
    %693 = vmatprep.subr.mxu0 0.0
    %694 = vmatpush1.msra.mxu0 0.0
    %695 = vmatprep.subr.mxu0 0.0
    %696 = vmatpush1.msra.mxu0 0.0
    %697 = vmatprep.subr.mxu0 0.0
    %698 = vmatpush1.msra.mxu0 0.0
    %699 = vmatprep.subr.mxu0 0.0
    %700 = vmatpush1.msra.mxu0 0.0
    %701 = vmatprep.subr.mxu0 0.0
    %702 = vmatpush1.msra.mxu0 0.0
    %703 = vmatprep.subr.mxu0 0.0
    %704 = vmatpush1.msra.mxu0 0.0
    %705 = vmatprep.subr.mxu0 0.0
    %706 = vmatpush1.msra.mxu0 0.0
    %707 = vmatprep.subr.mxu0 0.0
    %708 = vmatpush1.msra.mxu0 0.0
    %709 = vmatprep.subr.mxu0 0.0
    %710 = vmatpush1.msra.mxu0 0.0
    %v711 = vand.u32 %v117, 4294901760
    %712 = vmatprep.subr.mxu0 %v711
    %v713 = vand.u32 %v116, 4294901760
    %714 = vmatpush1.msra.mxu0 %v713
    %v715 = vand.u32 %v113, 4294901760
    %716 = vmatprep.subr.mxu0 %v715
    %v717 = vand.u32 %v112, 4294901760
    %718 = vmatpush1.msra.mxu0 %v717
    %v719 = vand.u32 %v109, 4294901760
    %720 = vmatprep.subr.mxu0 %v719
    %v721 = vand.u32 %v108, 4294901760
    %722 = vmatpush1.msra.mxu0 %v721
    %v723 = vand.u32 %v105, 4294901760
    %724 = vmatprep.subr.mxu0 %v723
    %v725 = vand.u32 %v104, 4294901760
    %726 = vmatpush1.msra.mxu0 %v725
    %727 = vmatprep.subr.mxu0 0.0
    %728 = vmatpush2.msra.mxu0 0.0
    %729 = vmatprep.subr.mxu0 0.0
    %730 = vmatpush2.msra.mxu0 0.0
    %731 = vmatprep.subr.mxu0 0.0
    %732 = vmatpush2.msra.mxu0 0.0
    %733 = vmatprep.subr.mxu0 0.0
    %734 = vmatpush2.msra.mxu0 0.0
    %735 = vmatprep.subr.mxu0 0.0
    %736 = vmatpush2.msra.mxu0 0.0
    %737 = vmatprep.subr.mxu0 0.0
    %738 = vmatpush2.msra.mxu0 0.0
    %739 = vmatprep.subr.mxu0 0.0
    %740 = vmatpush2.msra.mxu0 0.0
    %741 = vmatprep.subr.mxu0 0.0
    %742 = vmatpush2.msra.mxu0 0.0
    %743 = vmatprep.subr.mxu0 0.0
    %744 = vmatpush2.msra.mxu0 0.0
    %745 = vmatprep.subr.mxu0 0.0
    %746 = vmatpush2.msra.mxu0 0.0
    %747 = vmatprep.subr.mxu0 0.0
    %748 = vmatpush2.msra.mxu0 0.0
    %749 = vmatprep.subr.mxu0 0.0
    %750 = vmatpush2.msra.mxu0 0.0
    %751 = vmatprep.subr.mxu0 0.0
    %752 = vmatpush2.msra.mxu0 0.0
    %753 = vmatprep.subr.mxu0 0.0
    %754 = vmatpush2.msra.mxu0 0.0
    %755 = vmatprep.subr.mxu0 0.0
    %756 = vmatpush2.msra.mxu0 0.0
    %757 = vmatprep.subr.mxu0 0.0
    %758 = vmatpush2.msra.mxu0 0.0
    %759 = vmatprep.mubr.f32.mxu0 0.0
    %v760 = vand.u32 %v142, 4294901760
    %v761 = vsub.f32 %v142, %v760
    %v762 = vand.u32 %v761, 4294901760
    %v763 = vsub.f32 %v761, %v762
    %v764 = vand.u32 %v763, 4294901760
    %765 = vmatmul.mubr.f32.gmra.mxu0 %v764
    %v766 = vpop.f32.mrf.mxu0
    %v767 = vadd.f32 %v131, %v766
    %v768 = vpop.f32.mrf.mxu0
    %v769 = vadd.f32 %v135, %v768
    %770 = vdwg.mxu0
    %771 = vmatprep.subr.mxu0 0.0
    %772 = vmatpush1.msra.mxu0 0.0
    %773 = vmatprep.subr.mxu0 0.0
    %774 = vmatpush1.msra.mxu0 0.0
    %775 = vmatprep.subr.mxu0 0.0
    %776 = vmatpush1.msra.mxu0 0.0
    %777 = vmatprep.subr.mxu0 0.0
    %778 = vmatpush1.msra.mxu0 0.0
    %779 = vmatprep.subr.mxu0 0.0
    %780 = vmatpush1.msra.mxu0 0.0
    %781 = vmatprep.subr.mxu0 0.0
    %782 = vmatpush1.msra.mxu0 0.0
    %783 = vmatprep.subr.mxu0 0.0
    %784 = vmatpush1.msra.mxu0 0.0
    %785 = vmatprep.subr.mxu0 0.0
    %786 = vmatpush1.msra.mxu0 0.0
    %787 = vmatprep.subr.mxu0 0.0
    %788 = vmatpush1.msra.mxu0 0.0
    %789 = vmatprep.subr.mxu0 0.0
    %790 = vmatpush1.msra.mxu0 0.0
    %791 = vmatprep.subr.mxu0 0.0
    %792 = vmatpush1.msra.mxu0 0.0
    %793 = vmatprep.subr.mxu0 0.0
    %794 = vmatpush1.msra.mxu0 0.0
    %v795 = vand.u32 %v117, 4294901760
    %v796 = vsub.f32 %v117, %v795
    %v797 = vand.u32 %v796, 4294901760
    %v798 = vsub.f32 %v796, %v797
    %v799 = vand.u32 %v798, 4294901760
    %800 = vmatprep.subr.mxu0 %v799
    %v801 = vand.u32 %v116, 4294901760
    %v802 = vsub.f32 %v116, %v801
    %v803 = vand.u32 %v802, 4294901760
    %v804 = vsub.f32 %v802, %v803
    %v805 = vand.u32 %v804, 4294901760
    %806 = vmatpush1.msra.mxu0 %v805
    %v807 = vand.u32 %v113, 4294901760
    %v808 = vsub.f32 %v113, %v807
    %v809 = vand.u32 %v808, 4294901760
    %v810 = vsub.f32 %v808, %v809
    %v811 = vand.u32 %v810, 4294901760
    %812 = vmatprep.subr.mxu0 %v811
    %v813 = vand.u32 %v112, 4294901760
    %v814 = vsub.f32 %v112, %v813
    %v815 = vand.u32 %v814, 4294901760
    %v816 = vsub.f32 %v814, %v815
    %v817 = vand.u32 %v816, 4294901760
    %818 = vmatpush1.msra.mxu0 %v817
    %v819 = vand.u32 %v109, 4294901760
    %v820 = vsub.f32 %v109, %v819
    %v821 = vand.u32 %v820, 4294901760
    %v822 = vsub.f32 %v820, %v821
    %v823 = vand.u32 %v822, 4294901760
    %824 = vmatprep.subr.mxu0 %v823
    %v825 = vand.u32 %v108, 4294901760
    %v826 = vsub.f32 %v108, %v825
    %v827 = vand.u32 %v826, 4294901760
    %v828 = vsub.f32 %v826, %v827
    %v829 = vand.u32 %v828, 4294901760
    %830 = vmatpush1.msra.mxu0 %v829
    %v831 = vand.u32 %v105, 4294901760
    %v832 = vsub.f32 %v105, %v831
    %v833 = vand.u32 %v832, 4294901760
    %v834 = vsub.f32 %v832, %v833
    %v835 = vand.u32 %v834, 4294901760
    %836 = vmatprep.subr.mxu0 %v835
    %v837 = vand.u32 %v104, 4294901760
    %v838 = vsub.f32 %v104, %v837
    %v839 = vand.u32 %v838, 4294901760
    %v840 = vsub.f32 %v838, %v839
    %v841 = vand.u32 %v840, 4294901760
    %842 = vmatpush1.msra.mxu0 %v841
    %843 = vmatprep.subr.mxu0 0.0
    %844 = vmatpush2.msra.mxu0 0.0
    %845 = vmatprep.subr.mxu0 0.0
    %846 = vmatpush2.msra.mxu0 0.0
    %847 = vmatprep.subr.mxu0 0.0
    %848 = vmatpush2.msra.mxu0 0.0
    %849 = vmatprep.subr.mxu0 0.0
    %850 = vmatpush2.msra.mxu0 0.0
    %851 = vmatprep.subr.mxu0 0.0
    %852 = vmatpush2.msra.mxu0 0.0
    %853 = vmatprep.subr.mxu0 0.0
    %854 = vmatpush2.msra.mxu0 0.0
    %855 = vmatprep.subr.mxu0 0.0
    %856 = vmatpush2.msra.mxu0 0.0
    %857 = vmatprep.subr.mxu0 0.0
    %858 = vmatpush2.msra.mxu0 0.0
    %859 = vmatprep.subr.mxu0 0.0
    %860 = vmatpush2.msra.mxu0 0.0
    %861 = vmatprep.subr.mxu0 0.0
    %862 = vmatpush2.msra.mxu0 0.0
    %863 = vmatprep.subr.mxu0 0.0
    %864 = vmatpush2.msra.mxu0 0.0
    %865 = vmatprep.subr.mxu0 0.0
    %866 = vmatpush2.msra.mxu0 0.0
    %867 = vmatprep.subr.mxu0 0.0
    %868 = vmatpush2.msra.mxu0 0.0
    %869 = vmatprep.subr.mxu0 0.0
    %870 = vmatpush2.msra.mxu0 0.0
    %871 = vmatprep.subr.mxu0 0.0
    %872 = vmatpush2.msra.mxu0 0.0
    %873 = vmatprep.subr.mxu0 0.0
    %874 = vmatpush2.msra.mxu0 0.0
    %875 = vmatprep.mubr.f32.mxu0 0.0
    %v876 = vand.u32 %v142, 4294901760
    %877 = vmatmul.mubr.f32.gmra.mxu0 %v876
    %v878 = vpop.f32.mrf.mxu0
    %v879 = vadd.f32 %v767, %v878
    %v880 = vpop.f32.mrf.mxu0
    %v881 = vadd.f32 %v769, %v880
    %882 = vdwg.mxu0
    %883 = vmatprep.subr.mxu0 0.0
    %884 = vmatpush1.msra.mxu0 0.0
    %885 = vmatprep.subr.mxu0 0.0
    %886 = vmatpush1.msra.mxu0 0.0
    %887 = vmatprep.subr.mxu0 0.0
    %888 = vmatpush1.msra.mxu0 0.0
    %889 = vmatprep.subr.mxu0 0.0
    %890 = vmatpush1.msra.mxu0 0.0
    %891 = vmatprep.subr.mxu0 0.0
    %892 = vmatpush1.msra.mxu0 0.0
    %893 = vmatprep.subr.mxu0 0.0
    %894 = vmatpush1.msra.mxu0 0.0
    %895 = vmatprep.subr.mxu0 0.0
    %896 = vmatpush1.msra.mxu0 0.0
    %897 = vmatprep.subr.mxu0 0.0
    %898 = vmatpush1.msra.mxu0 0.0
    %899 = vmatprep.subr.mxu0 0.0
    %900 = vmatpush1.msra.mxu0 0.0
    %901 = vmatprep.subr.mxu0 0.0
    %902 = vmatpush1.msra.mxu0 0.0
    %903 = vmatprep.subr.mxu0 0.0
    %904 = vmatpush1.msra.mxu0 0.0
    %905 = vmatprep.subr.mxu0 0.0
    %906 = vmatpush1.msra.mxu0 0.0
    %v907 = vand.u32 %v117, 4294901760
    %v908 = vsub.f32 %v117, %v907
    %909 = vmatprep.subr.mxu0 %v908
    %v910 = vand.u32 %v116, 4294901760
    %v911 = vsub.f32 %v116, %v910
    %912 = vmatpush1.msra.mxu0 %v911
    %v913 = vand.u32 %v113, 4294901760
    %v914 = vsub.f32 %v113, %v913
    %915 = vmatprep.subr.mxu0 %v914
    %v916 = vand.u32 %v112, 4294901760
    %v917 = vsub.f32 %v112, %v916
    %918 = vmatpush1.msra.mxu0 %v917
    %v919 = vand.u32 %v109, 4294901760
    %v920 = vsub.f32 %v109, %v919
    %921 = vmatprep.subr.mxu0 %v920
    %v922 = vand.u32 %v108, 4294901760
    %v923 = vsub.f32 %v108, %v922
    %924 = vmatpush1.msra.mxu0 %v923
    %v925 = vand.u32 %v105, 4294901760
    %v926 = vsub.f32 %v105, %v925
    %927 = vmatprep.subr.mxu0 %v926
    %v928 = vand.u32 %v104, 4294901760
    %v929 = vsub.f32 %v104, %v928
    %930 = vmatpush1.msra.mxu0 %v929
    %931 = vmatprep.subr.mxu0 0.0
    %932 = vmatpush2.msra.mxu0 0.0
    %933 = vmatprep.subr.mxu0 0.0
    %934 = vmatpush2.msra.mxu0 0.0
    %935 = vmatprep.subr.mxu0 0.0
    %936 = vmatpush2.msra.mxu0 0.0
    %937 = vmatprep.subr.mxu0 0.0
    %938 = vmatpush2.msra.mxu0 0.0
    %939 = vmatprep.subr.mxu0 0.0
    %940 = vmatpush2.msra.mxu0 0.0
    %941 = vmatprep.subr.mxu0 0.0
    %942 = vmatpush2.msra.mxu0 0.0
    %943 = vmatprep.subr.mxu0 0.0
    %944 = vmatpush2.msra.mxu0 0.0
    %945 = vmatprep.subr.mxu0 0.0
    %946 = vmatpush2.msra.mxu0 0.0
    %947 = vmatprep.subr.mxu0 0.0
    %948 = vmatpush2.msra.mxu0 0.0
    %949 = vmatprep.subr.mxu0 0.0
    %950 = vmatpush2.msra.mxu0 0.0
    %951 = vmatprep.subr.mxu0 0.0
    %952 = vmatpush2.msra.mxu0 0.0
    %953 = vmatprep.subr.mxu0 0.0
    %954 = vmatpush2.msra.mxu0 0.0
    %955 = vmatprep.subr.mxu0 0.0
    %956 = vmatpush2.msra.mxu0 0.0
    %957 = vmatprep.subr.mxu0 0.0
    %958 = vmatpush2.msra.mxu0 0.0
    %959 = vmatprep.subr.mxu0 0.0
    %960 = vmatpush2.msra.mxu0 0.0
    %961 = vmatprep.subr.mxu0 0.0
    %962 = vmatpush2.msra.mxu0 0.0
    %963 = vmatprep.mubr.f32.mxu0 0.0
    %v964 = vand.u32 %v142, 4294901760
    %v965 = vsub.f32 %v142, %v964
    %966 = vmatmul.mubr.f32.gmra.mxu0 %v965
    %v967 = vpop.f32.mrf.mxu0
    %v968 = vadd.f32 %v879, %v967
    %v969 = vpop.f32.mrf.mxu0
    %v970 = vadd.f32 %v881, %v969
    %971 = vdwg.mxu0
    %972 = vmatprep.subr.mxu0 0.0
    %973 = vmatpush1.msra.mxu0 0.0
    %974 = vmatprep.subr.mxu0 0.0
    %975 = vmatpush1.msra.mxu0 0.0
    %976 = vmatprep.subr.mxu0 0.0
    %977 = vmatpush1.msra.mxu0 0.0
    %978 = vmatprep.subr.mxu0 0.0
    %979 = vmatpush1.msra.mxu0 0.0
    %980 = vmatprep.subr.mxu0 0.0
    %981 = vmatpush1.msra.mxu0 0.0
    %982 = vmatprep.subr.mxu0 0.0
    %983 = vmatpush1.msra.mxu0 0.0
    %984 = vmatprep.subr.mxu0 0.0
    %985 = vmatpush1.msra.mxu0 0.0
    %986 = vmatprep.subr.mxu0 0.0
    %987 = vmatpush1.msra.mxu0 0.0
    %988 = vmatprep.subr.mxu0 0.0
    %989 = vmatpush1.msra.mxu0 0.0
    %990 = vmatprep.subr.mxu0 0.0
    %991 = vmatpush1.msra.mxu0 0.0
    %992 = vmatprep.subr.mxu0 0.0
    %993 = vmatpush1.msra.mxu0 0.0
    %994 = vmatprep.subr.mxu0 0.0
    %995 = vmatpush1.msra.mxu0 0.0
    %v996 = vand.u32 %v117, 4294901760
    %997 = vmatprep.subr.mxu0 %v996
    %v998 = vand.u32 %v116, 4294901760
    %999 = vmatpush1.msra.mxu0 %v998
    %v1000 = vand.u32 %v113, 4294901760
    %1001 = vmatprep.subr.mxu0 %v1000
    %v1002 = vand.u32 %v112, 4294901760
    %1003 = vmatpush1.msra.mxu0 %v1002
    %v1004 = vand.u32 %v109, 4294901760
    %1005 = vmatprep.subr.mxu0 %v1004
    %v1006 = vand.u32 %v108, 4294901760
    %1007 = vmatpush1.msra.mxu0 %v1006
    %v1008 = vand.u32 %v105, 4294901760
    %1009 = vmatprep.subr.mxu0 %v1008
    %v1010 = vand.u32 %v104, 4294901760
    %1011 = vmatpush1.msra.mxu0 %v1010
    %1012 = vmatprep.subr.mxu0 0.0
    %1013 = vmatpush2.msra.mxu0 0.0
    %1014 = vmatprep.subr.mxu0 0.0
    %1015 = vmatpush2.msra.mxu0 0.0
    %1016 = vmatprep.subr.mxu0 0.0
    %1017 = vmatpush2.msra.mxu0 0.0
    %1018 = vmatprep.subr.mxu0 0.0
    %1019 = vmatpush2.msra.mxu0 0.0
    %1020 = vmatprep.subr.mxu0 0.0
    %1021 = vmatpush2.msra.mxu0 0.0
    %1022 = vmatprep.subr.mxu0 0.0
    %1023 = vmatpush2.msra.mxu0 0.0
    %1024 = vmatprep.subr.mxu0 0.0
    %1025 = vmatpush2.msra.mxu0 0.0
    %1026 = vmatprep.subr.mxu0 0.0
    %1027 = vmatpush2.msra.mxu0 0.0
    %1028 = vmatprep.subr.mxu0 0.0
    %1029 = vmatpush2.msra.mxu0 0.0
    %1030 = vmatprep.subr.mxu0 0.0
    %1031 = vmatpush2.msra.mxu0 0.0
    %1032 = vmatprep.subr.mxu0 0.0
    %1033 = vmatpush2.msra.mxu0 0.0
    %1034 = vmatprep.subr.mxu0 0.0
    %1035 = vmatpush2.msra.mxu0 0.0
    %1036 = vmatprep.subr.mxu0 0.0
    %1037 = vmatpush2.msra.mxu0 0.0
    %1038 = vmatprep.subr.mxu0 0.0
    %1039 = vmatpush2.msra.mxu0 0.0
    %1040 = vmatprep.subr.mxu0 0.0
    %1041 = vmatpush2.msra.mxu0 0.0
    %1042 = vmatprep.subr.mxu0 0.0
    %1043 = vmatpush2.msra.mxu0 0.0
    %1044 = vmatprep.mubr.f32.mxu0 0.0
    %v1045 = vand.u32 %v142, 4294901760
    %v1046 = vsub.f32 %v142, %v1045
    %v1047 = vand.u32 %v1046, 4294901760
    %1048 = vmatmul.mubr.f32.gmra.mxu0 %v1047
    %v1049 = vpop.f32.mrf.mxu0
    %v1050 = vadd.f32 %v968, %v1049
    %v1051 = vpop.f32.mrf.mxu0
    %v1052 = vadd.f32 %v970, %v1051
    %1053 = vdwg.mxu0
    %1054 = vmatprep.subr.mxu0 0.0
    %1055 = vmatpush1.msra.mxu0 0.0
    %1056 = vmatprep.subr.mxu0 0.0
    %1057 = vmatpush1.msra.mxu0 0.0
    %1058 = vmatprep.subr.mxu0 0.0
    %1059 = vmatpush1.msra.mxu0 0.0
    %1060 = vmatprep.subr.mxu0 0.0
    %1061 = vmatpush1.msra.mxu0 0.0
    %1062 = vmatprep.subr.mxu0 0.0
    %1063 = vmatpush1.msra.mxu0 0.0
    %1064 = vmatprep.subr.mxu0 0.0
    %1065 = vmatpush1.msra.mxu0 0.0
    %1066 = vmatprep.subr.mxu0 0.0
    %1067 = vmatpush1.msra.mxu0 0.0
    %1068 = vmatprep.subr.mxu0 0.0
    %1069 = vmatpush1.msra.mxu0 0.0
    %1070 = vmatprep.subr.mxu0 0.0
    %1071 = vmatpush1.msra.mxu0 0.0
    %1072 = vmatprep.subr.mxu0 0.0
    %1073 = vmatpush1.msra.mxu0 0.0
    %1074 = vmatprep.subr.mxu0 0.0
    %1075 = vmatpush1.msra.mxu0 0.0
    %1076 = vmatprep.subr.mxu0 0.0
    %1077 = vmatpush1.msra.mxu0 0.0
    %v1078 = vand.u32 %v117, 4294901760
    %v1079 = vsub.f32 %v117, %v1078
    %v1080 = vand.u32 %v1079, 4294901760
    %1081 = vmatprep.subr.mxu0 %v1080
    %v1082 = vand.u32 %v116, 4294901760
    %v1083 = vsub.f32 %v116, %v1082
    %v1084 = vand.u32 %v1083, 4294901760
    %1085 = vmatpush1.msra.mxu0 %v1084
    %v1086 = vand.u32 %v113, 4294901760
    %v1087 = vsub.f32 %v113, %v1086
    %v1088 = vand.u32 %v1087, 4294901760
    %1089 = vmatprep.subr.mxu0 %v1088
    %v1090 = vand.u32 %v112, 4294901760
    %v1091 = vsub.f32 %v112, %v1090
    %v1092 = vand.u32 %v1091, 4294901760
    %1093 = vmatpush1.msra.mxu0 %v1092
    %v1094 = vand.u32 %v109, 4294901760
    %v1095 = vsub.f32 %v109, %v1094
    %v1096 = vand.u32 %v1095, 4294901760
    %1097 = vmatprep.subr.mxu0 %v1096
    %v1098 = vand.u32 %v108, 4294901760
    %v1099 = vsub.f32 %v108, %v1098
    %v1100 = vand.u32 %v1099, 4294901760
    %1101 = vmatpush1.msra.mxu0 %v1100
    %v1102 = vand.u32 %v105, 4294901760
    %v1103 = vsub.f32 %v105, %v1102
    %v1104 = vand.u32 %v1103, 4294901760
    %1105 = vmatprep.subr.mxu0 %v1104
    %v1106 = vand.u32 %v104, 4294901760
    %v1107 = vsub.f32 %v104, %v1106
    %v1108 = vand.u32 %v1107, 4294901760
    %1109 = vmatpush1.msra.mxu0 %v1108
    %1110 = vmatprep.subr.mxu0 0.0
    %1111 = vmatpush2.msra.mxu0 0.0
    %1112 = vmatprep.subr.mxu0 0.0
    %1113 = vmatpush2.msra.mxu0 0.0
    %1114 = vmatprep.subr.mxu0 0.0
    %1115 = vmatpush2.msra.mxu0 0.0
    %1116 = vmatprep.subr.mxu0 0.0
    %1117 = vmatpush2.msra.mxu0 0.0
    %1118 = vmatprep.subr.mxu0 0.0
    %1119 = vmatpush2.msra.mxu0 0.0
    %1120 = vmatprep.subr.mxu0 0.0
    %1121 = vmatpush2.msra.mxu0 0.0
    %1122 = vmatprep.subr.mxu0 0.0
    %1123 = vmatpush2.msra.mxu0 0.0
    %1124 = vmatprep.subr.mxu0 0.0
    %1125 = vmatpush2.msra.mxu0 0.0
    %1126 = vmatprep.subr.mxu0 0.0
    %1127 = vmatpush2.msra.mxu0 0.0
    %1128 = vmatprep.subr.mxu0 0.0
    %1129 = vmatpush2.msra.mxu0 0.0
    %1130 = vmatprep.subr.mxu0 0.0
    %1131 = vmatpush2.msra.mxu0 0.0
    %1132 = vmatprep.subr.mxu0 0.0
    %1133 = vmatpush2.msra.mxu0 0.0
    %1134 = vmatprep.subr.mxu0 0.0
    %1135 = vmatpush2.msra.mxu0 0.0
    %1136 = vmatprep.subr.mxu0 0.0
    %1137 = vmatpush2.msra.mxu0 0.0
    %1138 = vmatprep.subr.mxu0 0.0
    %1139 = vmatpush2.msra.mxu0 0.0
    %1140 = vmatprep.subr.mxu0 0.0
    %1141 = vmatpush2.msra.mxu0 0.0
    %1142 = vmatprep.mubr.f32.mxu0 0.0
    %v1143 = vand.u32 %v142, 4294901760
    %1144 = vmatmul.mubr.f32.gmra.mxu0 %v1143
    %v1145 = vpop.f32.mrf.mxu0
    %v1146 = vadd.f32 %v1050, %v1145
    %v1147 = vpop.f32.mrf.mxu0
    %v1148 = vadd.f32 %v1052, %v1147
    %1149 = vdwg.mxu0
    %1150 = vmatprep.subr.mxu0 0.0
    %1151 = vmatpush1.msra.mxu0 0.0
    %1152 = vmatprep.subr.mxu0 0.0
    %1153 = vmatpush1.msra.mxu0 0.0
    %1154 = vmatprep.subr.mxu0 0.0
    %1155 = vmatpush1.msra.mxu0 0.0
    %1156 = vmatprep.subr.mxu0 0.0
    %1157 = vmatpush1.msra.mxu0 0.0
    %1158 = vmatprep.subr.mxu0 0.0
    %1159 = vmatpush1.msra.mxu0 0.0
    %1160 = vmatprep.subr.mxu0 0.0
    %1161 = vmatpush1.msra.mxu0 0.0
    %1162 = vmatprep.subr.mxu0 0.0
    %1163 = vmatpush1.msra.mxu0 0.0
    %1164 = vmatprep.subr.mxu0 0.0
    %1165 = vmatpush1.msra.mxu0 0.0
    %1166 = vmatprep.subr.mxu0 0.0
    %1167 = vmatpush1.msra.mxu0 0.0
    %1168 = vmatprep.subr.mxu0 0.0
    %1169 = vmatpush1.msra.mxu0 0.0
    %1170 = vmatprep.subr.mxu0 0.0
    %1171 = vmatpush1.msra.mxu0 0.0
    %1172 = vmatprep.subr.mxu0 0.0
    %1173 = vmatpush1.msra.mxu0 0.0
    %v1174 = vand.u32 %v117, 4294901760
    %1175 = vmatprep.subr.mxu0 %v1174
    %v1176 = vand.u32 %v116, 4294901760
    %1177 = vmatpush1.msra.mxu0 %v1176
    %v1178 = vand.u32 %v113, 4294901760
    %1179 = vmatprep.subr.mxu0 %v1178
    %v1180 = vand.u32 %v112, 4294901760
    %1181 = vmatpush1.msra.mxu0 %v1180
    %v1182 = vand.u32 %v109, 4294901760
    %1183 = vmatprep.subr.mxu0 %v1182
    %v1184 = vand.u32 %v108, 4294901760
    %1185 = vmatpush1.msra.mxu0 %v1184
    %v1186 = vand.u32 %v105, 4294901760
    %1187 = vmatprep.subr.mxu0 %v1186
    %v1188 = vand.u32 %v104, 4294901760
    %1189 = vmatpush1.msra.mxu0 %v1188
    %1190 = vmatprep.subr.mxu0 0.0
    %1191 = vmatpush2.msra.mxu0 0.0
    %1192 = vmatprep.subr.mxu0 0.0
    %1193 = vmatpush2.msra.mxu0 0.0
    %1194 = vmatprep.subr.mxu0 0.0
    %1195 = vmatpush2.msra.mxu0 0.0
    %1196 = vmatprep.subr.mxu0 0.0
    %1197 = vmatpush2.msra.mxu0 0.0
    %1198 = vmatprep.subr.mxu0 0.0
    %1199 = vmatpush2.msra.mxu0 0.0
    %1200 = vmatprep.subr.mxu0 0.0
    %1201 = vmatpush2.msra.mxu0 0.0
    %1202 = vmatprep.subr.mxu0 0.0
    %1203 = vmatpush2.msra.mxu0 0.0
    %1204 = vmatprep.subr.mxu0 0.0
    %1205 = vmatpush2.msra.mxu0 0.0
    %1206 = vmatprep.subr.mxu0 0.0
    %1207 = vmatpush2.msra.mxu0 0.0
    %1208 = vmatprep.subr.mxu0 0.0
    %1209 = vmatpush2.msra.mxu0 0.0
    %1210 = vmatprep.subr.mxu0 0.0
    %1211 = vmatpush2.msra.mxu0 0.0
    %1212 = vmatprep.subr.mxu0 0.0
    %1213 = vmatpush2.msra.mxu0 0.0
    %1214 = vmatprep.subr.mxu0 0.0
    %1215 = vmatpush2.msra.mxu0 0.0
    %1216 = vmatprep.subr.mxu0 0.0
    %1217 = vmatpush2.msra.mxu0 0.0
    %1218 = vmatprep.subr.mxu0 0.0
    %1219 = vmatpush2.msra.mxu0 0.0
    %1220 = vmatprep.subr.mxu0 0.0
    %1221 = vmatpush2.msra.mxu0 0.0
    %1222 = vmatprep.mubr.f32.mxu0 0.0
    %v1223 = vand.u32 %v142, 4294901760
    %1224 = vmatmul.mubr.f32.gmra.mxu0 %v1223
    %v1225 = vpop.f32.mrf.mxu0
    %v1226 = vadd.f32 %v1146, %v1225
    %v1227 = vpop.f32.mrf.mxu0
    %v1228 = vadd.f32 %v1148, %v1227
    %1229 = vdwg.mxu0
    %v1230 = vmax.f32 %v683, 0.0
    %v1231 = vmax.f32 %v685, 0.0
    %v1232 = vmax.f32 %v1226, 0.0
    %v1233 = vmax.f32 %v1228, 0.0
    %v1234 = vld [vmem:[#allocation8] sm:$0xff]
    %v1235 = vld [vmem:[#allocation8 + $0x8] sm:$0xff]
    %v1236 = vld [vmem:[#allocation8 + $0x10] sm:$0xff]
    %v1237 = vld [vmem:[#allocation8 + $0x18] sm:$0xff]
    %v1238 = vld [vmem:[#allocation8 + $0x20] sm:$0xff]
    %v1239 = vld [vmem:[#allocation8 + $0x28] sm:$0xff]
    %v1240 = vld [vmem:[#allocation8 + $0x30] sm:$0xff]
    %v1241 = vld [vmem:[#allocation8 + $0x38] sm:$0xff]
    %v1242 = vld [vmem:[#allocation8 + $0x40] sm:$0xff]
    %v1243 = vld [vmem:[#allocation8 + $0x48] sm:$0xff]
    %v1244 = vld [vmem:[#allocation8 + $0x50] sm:$0xff]
    %v1245 = vld [vmem:[#allocation8 + $0x58] sm:$0xff]
    %v1246 = vld [vmem:[#allocation8 + $0x60] sm:$0xff]
    %v1247 = vld [vmem:[#allocation8 + $0x68] sm:$0xff]
    %v1248 = vld [vmem:[#allocation8 + $0x70] sm:$0xff]
    %v1249 = vld [vmem:[#allocation8 + $0x78] sm:$0xff]
    %v1250 = vld [vmem:[#allocation8 + $0x80] sm:$0xff]
    %v1251 = vld [vmem:[#allocation8 + $0x88] sm:$0xff]
    %v1252 = vld [vmem:[#allocation8 + $0x90] sm:$0xff]
    %v1253 = vld [vmem:[#allocation8 + $0x98] sm:$0xff]
    %v1254 = vld [vmem:[#allocation8 + $0xa0] sm:$0xff]
    %v1255 = vld [vmem:[#allocation8 + $0xa8] sm:$0xff]
    %v1256 = vld [vmem:[#allocation8 + $0xb0] sm:$0xff]
    %v1257 = vld [vmem:[#allocation8 + $0xb8] sm:$0xff]
    %v1258 = vld [vmem:[#allocation8 + $0xc0] sm:$0xff]
    %v1259 = vld [vmem:[#allocation8 + $0xc8] sm:$0xff]
    %v1260 = vld [vmem:[#allocation8 + $0xd0] sm:$0xff]
    %v1261 = vld [vmem:[#allocation8 + $0xd8] sm:$0xff]
    %v1262 = vld [vmem:[#allocation8 + $0xe0] sm:$0xff]
    %v1263 = vld [vmem:[#allocation8 + $0xe8] sm:$0xff]
    %v1264 = vld [vmem:[#allocation8 + $0xf0] sm:$0xff]
    %v1265 = vld [vmem:[#allocation8 + $0xf8] sm:$0xff]
    %v1266 = vld [vmem:[#allocation8 + $0x100] sm:$0xff]
    %v1267 = vld [vmem:[#allocation8 + $0x108] sm:$0xff]
    %v1268 = vld [vmem:[#allocation8 + $0x110] sm:$0xff]
    %v1269 = vld [vmem:[#allocation8 + $0x118] sm:$0xff]
    %v1270 = vld [vmem:[#allocation8 + $0x120] sm:$0xff]
    %v1271 = vld [vmem:[#allocation8 + $0x128] sm:$0xff]
    %v1272 = vld [vmem:[#allocation8 + $0x130] sm:$0xff]
    %v1273 = vld [vmem:[#allocation8 + $0x138] sm:$0xff]
    %v1274 = vld [vmem:[#allocation8 + $0x140] sm:$0xff]
    %v1275 = vld [vmem:[#allocation8 + $0x148] sm:$0xff]
    %v1276 = vld [vmem:[#allocation8 + $0x150] sm:$0xff]
    %v1277 = vld [vmem:[#allocation8 + $0x158] sm:$0xff]
    %v1278 = vld [vmem:[#allocation8 + $0x160] sm:$0xff]
    %v1279 = vld [vmem:[#allocation8 + $0x168] sm:$0xff]
    %v1280 = vld [vmem:[#allocation8 + $0x170] sm:$0xff]
    %v1281 = vld [vmem:[#allocation8 + $0x178] sm:$0xff]
    %v1282 = vld [vmem:[#allocation8 + $0x180] sm:$0xff]
    %v1283 = vld [vmem:[#allocation8 + $0x188] sm:$0xff]
    %v1284 = vld [vmem:[#allocation8 + $0x190] sm:$0xff]
    %v1285 = vld [vmem:[#allocation8 + $0x198] sm:$0xff]
    %v1286 = vld [vmem:[#allocation8 + $0x1a0] sm:$0xff]
    %v1287 = vld [vmem:[#allocation8 + $0x1a8] sm:$0xff]
    %v1288 = vld [vmem:[#allocation8 + $0x1b0] sm:$0xff]
    %v1289 = vld [vmem:[#allocation8 + $0x1b8] sm:$0xff]
    %v1290 = vld [vmem:[#allocation8 + $0x1c0] sm:$0xff]
    %v1291 = vld [vmem:[#allocation8 + $0x1c8] sm:$0xff]
    %v1292 = vld [vmem:[#allocation8 + $0x1d0] sm:$0xff]
    %v1293 = vld [vmem:[#allocation8 + $0x1d8] sm:$0xff]
    %v1294 = vld [vmem:[#allocation8 + $0x1e0] sm:$0xff]
    %v1295 = vld [vmem:[#allocation8 + $0x1e8] sm:$0xff]
    %v1296 = vld [vmem:[#allocation8 + $0x1f0] sm:$0xff]
    %v1297 = vld [vmem:[#allocation8 + $0x1f8] sm:$0xff]
    %v1298 = vld [vmem:[#allocation8 + $0x200] sm:$0xff]
    %v1299 = vld [vmem:[#allocation8 + $0x208] sm:$0xff]
    %v1300 = vld [vmem:[#allocation8 + $0x210] sm:$0xff]
    %v1301 = vld [vmem:[#allocation8 + $0x218] sm:$0xff]
    %v1302 = vld [vmem:[#allocation8 + $0x220] sm:$0xff]
    %v1303 = vld [vmem:[#allocation8 + $0x228] sm:$0xff]
    %v1304 = vld [vmem:[#allocation8 + $0x230] sm:$0xff]
    %v1305 = vld [vmem:[#allocation8 + $0x238] sm:$0xff]
    %v1306 = vld [vmem:[#allocation8 + $0x240] sm:$0xff]
    %v1307 = vld [vmem:[#allocation8 + $0x248] sm:$0xff]
    %v1308 = vld [vmem:[#allocation8 + $0x250] sm:$0xff]
    %v1309 = vld [vmem:[#allocation8 + $0x258] sm:$0xff]
    %v1310 = vld [vmem:[#allocation8 + $0x260] sm:$0xff]
    %v1311 = vld [vmem:[#allocation8 + $0x268] sm:$0xff]
    %v1312 = vld [vmem:[#allocation8 + $0x270] sm:$0xff]
    %v1313 = vld [vmem:[#allocation8 + $0x278] sm:$0xff]
    %v1314 = vld [vmem:[#allocation8 + $0x280] sm:$0xff]
    %v1315 = vld [vmem:[#allocation8 + $0x288] sm:$0xff]
    %v1316 = vld [vmem:[#allocation8 + $0x290] sm:$0xff]
    %v1317 = vld [vmem:[#allocation8 + $0x298] sm:$0xff]
    %v1318 = vld [vmem:[#allocation8 + $0x2a0] sm:$0xff]
    %v1319 = vld [vmem:[#allocation8 + $0x2a8] sm:$0xff]
    %v1320 = vld [vmem:[#allocation8 + $0x2b0] sm:$0xff]
    %v1321 = vld [vmem:[#allocation8 + $0x2b8] sm:$0xff]
    %v1322 = vld [vmem:[#allocation8 + $0x2c0] sm:$0xff]
    %v1323 = vld [vmem:[#allocation8 + $0x2c8] sm:$0xff]
    %v1324 = vld [vmem:[#allocation8 + $0x2d0] sm:$0xff]
    %v1325 = vld [vmem:[#allocation8 + $0x2d8] sm:$0xff]
    %v1326 = vld [vmem:[#allocation8 + $0x2e0] sm:$0xff]
    %v1327 = vld [vmem:[#allocation8 + $0x2e8] sm:$0xff]
    %v1328 = vld [vmem:[#allocation8 + $0x2f0] sm:$0xff]
    %v1329 = vld [vmem:[#allocation8 + $0x2f8] sm:$0xff]
    %v1330 = vld [vmem:[#allocation8 + $0x300] sm:$0xff]
    %v1331 = vld [vmem:[#allocation8 + $0x308] sm:$0xff]
    %v1332 = vld [vmem:[#allocation8 + $0x310] sm:$0xff]
    %v1333 = vld [vmem:[#allocation8 + $0x318] sm:$0xff]
    %v1334 = vld [vmem:[#allocation8 + $0x320] sm:$0xff]
    %v1335 = vld [vmem:[#allocation8 + $0x328] sm:$0xff]
    %v1336 = vld [vmem:[#allocation8 + $0x330] sm:$0xff]
    %v1337 = vld [vmem:[#allocation8 + $0x338] sm:$0xff]
    %v1338 = vld [vmem:[#allocation8 + $0x340] sm:$0xff]
    %v1339 = vld [vmem:[#allocation8 + $0x348] sm:$0xff]
    %v1340 = vld [vmem:[#allocation8 + $0x350] sm:$0xff]
    %v1341 = vld [vmem:[#allocation8 + $0x358] sm:$0xff]
    %v1342 = vld [vmem:[#allocation8 + $0x360] sm:$0xff]
    %v1343 = vld [vmem:[#allocation8 + $0x368] sm:$0xff]
    %v1344 = vld [vmem:[#allocation8 + $0x370] sm:$0xff]
    %v1345 = vld [vmem:[#allocation8 + $0x378] sm:$0xff]
    %v1346 = vld [vmem:[#allocation8 + $0x380] sm:$0xff]
    %v1347 = vld [vmem:[#allocation8 + $0x388] sm:$0xff]
    %v1348 = vld [vmem:[#allocation8 + $0x390] sm:$0xff]
    %v1349 = vld [vmem:[#allocation8 + $0x398] sm:$0xff]
    %v1350 = vld [vmem:[#allocation8 + $0x3a0] sm:$0xff]
    %v1351 = vld [vmem:[#allocation8 + $0x3a8] sm:$0xff]
    %v1352 = vld [vmem:[#allocation8 + $0x3b0] sm:$0xff]
    %v1353 = vld [vmem:[#allocation8 + $0x3b8] sm:$0xff]
    %v1354 = vld [vmem:[#allocation8 + $0x3c0] sm:$0xff]
    %v1355 = vld [vmem:[#allocation8 + $0x3c8] sm:$0xff]
    %v1356 = vld [vmem:[#allocation8 + $0x3d0] sm:$0xff]
    %v1357 = vld [vmem:[#allocation8 + $0x3d8] sm:$0xff]
    %v1358 = vld [vmem:[#allocation8 + $0x3e0] sm:$0xff]
    %v1359 = vld [vmem:[#allocation8 + $0x3e8] sm:$0xff]
    %v1360 = vld [vmem:[#allocation8 + $0x3f0] sm:$0xff]
    %v1361 = vld [vmem:[#allocation8 + $0x3f8] sm:$0xff]
    %v1362 = vld [vmem:[#allocation8 + $0x400] sm:$0xff]
    %v1363 = vld [vmem:[#allocation8 + $0x408] sm:$0xff]
    %v1364 = vld [vmem:[#allocation8 + $0x410] sm:$0xff]
    %v1365 = vld [vmem:[#allocation8 + $0x418] sm:$0xff]
    %v1366 = vld [vmem:[#allocation8 + $0x420] sm:$0xff]
    %v1367 = vld [vmem:[#allocation8 + $0x428] sm:$0xff]
    %v1368 = vld [vmem:[#allocation8 + $0x430] sm:$0xff]
    %v1369 = vld [vmem:[#allocation8 + $0x438] sm:$0xff]
    %v1370 = vld [vmem:[#allocation8 + $0x440] sm:$0xff]
    %v1371 = vld [vmem:[#allocation8 + $0x448] sm:$0xff]
    %v1372 = vld [vmem:[#allocation8 + $0x450] sm:$0xff]
    %v1373 = vld [vmem:[#allocation8 + $0x458] sm:$0xff]
    %v1374 = vld [vmem:[#allocation8 + $0x460] sm:$0xff]
    %v1375 = vld [vmem:[#allocation8 + $0x468] sm:$0xff]
    %v1376 = vld [vmem:[#allocation8 + $0x470] sm:$0xff]
    %v1377 = vld [vmem:[#allocation8 + $0x478] sm:$0xff]
    %v1378 = vld [vmem:[#allocation8 + $0x480] sm:$0xff]
    %v1379 = vld [vmem:[#allocation8 + $0x488] sm:$0xff]
    %v1380 = vld [vmem:[#allocation8 + $0x490] sm:$0xff]
    %v1381 = vld [vmem:[#allocation8 + $0x498] sm:$0xff]
    %v1382 = vld [vmem:[#allocation8 + $0x4a0] sm:$0xff]
    %v1383 = vld [vmem:[#allocation8 + $0x4a8] sm:$0xff]
    %v1384 = vld [vmem:[#allocation8 + $0x4b0] sm:$0xff]
    %v1385 = vld [vmem:[#allocation8 + $0x4b8] sm:$0xff]
    %v1386 = vld [vmem:[#allocation8 + $0x4c0] sm:$0xff]
    %v1387 = vld [vmem:[#allocation8 + $0x4c8] sm:$0xff]
    %v1388 = vld [vmem:[#allocation8 + $0x4d0] sm:$0xff]
    %v1389 = vld [vmem:[#allocation8 + $0x4d8] sm:$0xff]
    %v1390 = vld [vmem:[#allocation8 + $0x4e0] sm:$0xff]
    %v1391 = vld [vmem:[#allocation8 + $0x4e8] sm:$0xff]
    %v1392 = vld [vmem:[#allocation8 + $0x4f0] sm:$0xff]
    %v1393 = vld [vmem:[#allocation8 + $0x4f8] sm:$0xff]
    %v1394 = vld [vmem:[#allocation8 + $0x500] sm:$0xff]
    %v1395 = vld [vmem:[#allocation8 + $0x508] sm:$0xff]
    %v1396 = vld [vmem:[#allocation8 + $0x510] sm:$0xff]
    %v1397 = vld [vmem:[#allocation8 + $0x518] sm:$0xff]
    %v1398 = vld [vmem:[#allocation8 + $0x520] sm:$0xff]
    %v1399 = vld [vmem:[#allocation8 + $0x528] sm:$0xff]
    %v1400 = vld [vmem:[#allocation8 + $0x530] sm:$0xff]
    %v1401 = vld [vmem:[#allocation8 + $0x538] sm:$0xff]
    %v1402 = vld [vmem:[#allocation8 + $0x540] sm:$0xff]
    %v1403 = vld [vmem:[#allocation8 + $0x548] sm:$0xff]
    %v1404 = vld [vmem:[#allocation8 + $0x550] sm:$0xff]
    %v1405 = vld [vmem:[#allocation8 + $0x558] sm:$0xff]
    %v1406 = vld [vmem:[#allocation8 + $0x560] sm:$0xff]
    %v1407 = vld [vmem:[#allocation8 + $0x568] sm:$0xff]
    %v1408 = vld [vmem:[#allocation8 + $0x570] sm:$0xff]
    %v1409 = vld [vmem:[#allocation8 + $0x578] sm:$0xff]
    %v1410 = vld [vmem:[#allocation8 + $0x580] sm:$0xff]
    %v1411 = vld [vmem:[#allocation8 + $0x588] sm:$0xff]
    %v1412 = vld [vmem:[#allocation8 + $0x590] sm:$0xff]
    %v1413 = vld [vmem:[#allocation8 + $0x598] sm:$0xff]
    %v1414 = vld [vmem:[#allocation8 + $0x5a0] sm:$0xff]
    %v1415 = vld [vmem:[#allocation8 + $0x5a8] sm:$0xff]
    %v1416 = vld [vmem:[#allocation8 + $0x5b0] sm:$0xff]
    %v1417 = vld [vmem:[#allocation8 + $0x5b8] sm:$0xff]
    %v1418 = vld [vmem:[#allocation8 + $0x5c0] sm:$0xff]
    %v1419 = vld [vmem:[#allocation8 + $0x5c8] sm:$0xff]
    %v1420 = vld [vmem:[#allocation8 + $0x5d0] sm:$0xff]
    %v1421 = vld [vmem:[#allocation8 + $0x5d8] sm:$0xff]
    %v1422 = vld [vmem:[#allocation8 + $0x5e0] sm:$0xff]
    %v1423 = vld [vmem:[#allocation8 + $0x5e8] sm:$0xff]
    %v1424 = vld [vmem:[#allocation8 + $0x5f0] sm:$0xff]
    %v1425 = vld [vmem:[#allocation8 + $0x5f8] sm:$0xff]
    %v1426 = vld [vmem:[#allocation8 + $0x600] sm:$0xff]
    %v1427 = vld [vmem:[#allocation8 + $0x608] sm:$0xff]
    %v1428 = vld [vmem:[#allocation8 + $0x610] sm:$0xff]
    %v1429 = vld [vmem:[#allocation8 + $0x618] sm:$0xff]
    %v1430 = vld [vmem:[#allocation8 + $0x620] sm:$0xff]
    %v1431 = vld [vmem:[#allocation8 + $0x628] sm:$0xff]
    %v1432 = vld [vmem:[#allocation8 + $0x630] sm:$0xff]
    %v1433 = vld [vmem:[#allocation8 + $0x638] sm:$0xff]
    %v1434 = vld [vmem:[#allocation8 + $0x640] sm:$0xff]
    %v1435 = vld [vmem:[#allocation8 + $0x648] sm:$0xff]
    %v1436 = vld [vmem:[#allocation8 + $0x650] sm:$0xff]
    %v1437 = vld [vmem:[#allocation8 + $0x658] sm:$0xff]
    %v1438 = vld [vmem:[#allocation8 + $0x660] sm:$0xff]
    %v1439 = vld [vmem:[#allocation8 + $0x668] sm:$0xff]
    %v1440 = vld [vmem:[#allocation8 + $0x670] sm:$0xff]
    %v1441 = vld [vmem:[#allocation8 + $0x678] sm:$0xff]
    %v1442 = vld [vmem:[#allocation8 + $0x680] sm:$0xff]
    %v1443 = vld [vmem:[#allocation8 + $0x688] sm:$0xff]
    %v1444 = vld [vmem:[#allocation8 + $0x690] sm:$0xff]
    %v1445 = vld [vmem:[#allocation8 + $0x698] sm:$0xff]
    %v1446 = vld [vmem:[#allocation8 + $0x6a0] sm:$0xff]
    %v1447 = vld [vmem:[#allocation8 + $0x6a8] sm:$0xff]
    %v1448 = vld [vmem:[#allocation8 + $0x6b0] sm:$0xff]
    %v1449 = vld [vmem:[#allocation8 + $0x6b8] sm:$0xff]
    %v1450 = vld [vmem:[#allocation8 + $0x6c0] sm:$0xff]
    %v1451 = vld [vmem:[#allocation8 + $0x6c8] sm:$0xff]
    %v1452 = vld [vmem:[#allocation8 + $0x6d0] sm:$0xff]
    %v1453 = vld [vmem:[#allocation8 + $0x6d8] sm:$0xff]
    %v1454 = vld [vmem:[#allocation8 + $0x6e0] sm:$0xff]
    %v1455 = vld [vmem:[#allocation8 + $0x6e8] sm:$0xff]
    %v1456 = vld [vmem:[#allocation8 + $0x6f0] sm:$0xff]
    %v1457 = vld [vmem:[#allocation8 + $0x6f8] sm:$0xff]
    %v1458 = vld [vmem:[#allocation8 + $0x700] sm:$0xff]
    %v1459 = vld [vmem:[#allocation8 + $0x708] sm:$0xff]
    %v1460 = vld [vmem:[#allocation8 + $0x710] sm:$0xff]
    %v1461 = vld [vmem:[#allocation8 + $0x718] sm:$0xff]
    %v1462 = vld [vmem:[#allocation8 + $0x720] sm:$0xff]
    %v1463 = vld [vmem:[#allocation8 + $0x728] sm:$0xff]
    %v1464 = vld [vmem:[#allocation8 + $0x730] sm:$0xff]
    %v1465 = vld [vmem:[#allocation8 + $0x738] sm:$0xff]
    %v1466 = vld [vmem:[#allocation8 + $0x740] sm:$0xff]
    %v1467 = vld [vmem:[#allocation8 + $0x748] sm:$0xff]
    %v1468 = vld [vmem:[#allocation8 + $0x750] sm:$0xff]
    %v1469 = vld [vmem:[#allocation8 + $0x758] sm:$0xff]
    %v1470 = vld [vmem:[#allocation8 + $0x760] sm:$0xff]
    %v1471 = vld [vmem:[#allocation8 + $0x768] sm:$0xff]
    %v1472 = vld [vmem:[#allocation8 + $0x770] sm:$0xff]
    %v1473 = vld [vmem:[#allocation8 + $0x778] sm:$0xff]
    %v1474 = vld [vmem:[#allocation8 + $0x780] sm:$0xff]
    %v1475 = vld [vmem:[#allocation8 + $0x788] sm:$0xff]
    %v1476 = vld [vmem:[#allocation8 + $0x790] sm:$0xff]
    %v1477 = vld [vmem:[#allocation8 + $0x798] sm:$0xff]
    %v1478 = vld [vmem:[#allocation8 + $0x7a0] sm:$0xff]
    %v1479 = vld [vmem:[#allocation8 + $0x7a8] sm:$0xff]
    %v1480 = vld [vmem:[#allocation8 + $0x7b0] sm:$0xff]
    %v1481 = vld [vmem:[#allocation8 + $0x7b8] sm:$0xff]
    %v1482 = vld [vmem:[#allocation8 + $0x7c0] sm:$0xff]
    %v1483 = vld [vmem:[#allocation8 + $0x7c8] sm:$0xff]
    %v1484 = vld [vmem:[#allocation8 + $0x7d0] sm:$0xff]
    %v1485 = vld [vmem:[#allocation8 + $0x7d8] sm:$0xff]
    %v1486 = vld [vmem:[#allocation8 + $0x7e0] sm:$0xff]
    %v1487 = vld [vmem:[#allocation8 + $0x7e8] sm:$0xff]
    %v1488 = vld [vmem:[#allocation8 + $0x7f0] sm:$0xff]
    %v1489 = vld [vmem:[#allocation8 + $0x7f8] sm:$0xff]
    %v1490 = vld [vmem:[%s4] sm:$0xf]
    %v1492 = vlaneseq
    %v1493 = vshrl.u32 %v1492, 7
    %v1494 = vsub.s32 0, %v1493
    %v1495 = vrot.slane %v1490, %v1494
    %v1496 = vlaneseq
    %v1497 = vshrl.u32 %v1496, 7
    %v1498 = vsub.s32 1, %v1497
    %v1499 = vrot.slane %v1490, %v1498
    %v1500 = vlaneseq
    %v1501 = vshrl.u32 %v1500, 7
    %v1502 = vsub.s32 2, %v1501
    %v1503 = vrot.slane %v1490, %v1502
    %v1504 = vlaneseq
    %v1505 = vshrl.u32 %v1504, 7
    %v1506 = vsub.s32 3, %v1505
    %v1507 = vrot.slane %v1490, %v1506
    %v1512 = vand.u32 %v1295, 4294901760
    %1513 = vmatprep.subr.mxu0 %v1512
    %v1514 = vand.u32 %v1294, 4294901760
    %1515 = vmatpush1.msra.mxu0 %v1514
    %v1516 = vand.u32 %v1291, 4294901760
    %1517 = vmatprep.subr.mxu0 %v1516
    %v1518 = vand.u32 %v1290, 4294901760
    %1519 = vmatpush1.msra.mxu0 %v1518
    %v1520 = vand.u32 %v1287, 4294901760
    %1521 = vmatprep.subr.mxu0 %v1520
    %v1522 = vand.u32 %v1286, 4294901760
    %1523 = vmatpush1.msra.mxu0 %v1522
    %v1524 = vand.u32 %v1283, 4294901760
    %1525 = vmatprep.subr.mxu0 %v1524
    %v1526 = vand.u32 %v1282, 4294901760
    %1527 = vmatpush1.msra.mxu0 %v1526
    %v1528 = vand.u32 %v1279, 4294901760
    %1529 = vmatprep.subr.mxu0 %v1528
    %v1530 = vand.u32 %v1278, 4294901760
    %1531 = vmatpush1.msra.mxu0 %v1530
    %v1532 = vand.u32 %v1275, 4294901760
    %1533 = vmatprep.subr.mxu0 %v1532
    %v1534 = vand.u32 %v1274, 4294901760
    %1535 = vmatpush1.msra.mxu0 %v1534
    %v1536 = vand.u32 %v1271, 4294901760
    %1537 = vmatprep.subr.mxu0 %v1536
    %v1538 = vand.u32 %v1270, 4294901760
    %1539 = vmatpush1.msra.mxu0 %v1538
    %v1540 = vand.u32 %v1267, 4294901760
    %1541 = vmatprep.subr.mxu0 %v1540
    %v1542 = vand.u32 %v1266, 4294901760
    %1543 = vmatpush1.msra.mxu0 %v1542
    %v1544 = vand.u32 %v1263, 4294901760
    %1545 = vmatprep.subr.mxu0 %v1544
    %v1546 = vand.u32 %v1262, 4294901760
    %1547 = vmatpush1.msra.mxu0 %v1546
    %v1548 = vand.u32 %v1259, 4294901760
    %1549 = vmatprep.subr.mxu0 %v1548
    %v1550 = vand.u32 %v1258, 4294901760
    %1551 = vmatpush1.msra.mxu0 %v1550
    %v1552 = vand.u32 %v1255, 4294901760
    %1553 = vmatprep.subr.mxu0 %v1552
    %v1554 = vand.u32 %v1254, 4294901760
    %1555 = vmatpush1.msra.mxu0 %v1554
    %v1556 = vand.u32 %v1251, 4294901760
    %1557 = vmatprep.subr.mxu0 %v1556
    %v1558 = vand.u32 %v1250, 4294901760
    %1559 = vmatpush1.msra.mxu0 %v1558
    %v1560 = vand.u32 %v1247, 4294901760
    %1561 = vmatprep.subr.mxu0 %v1560
    %v1562 = vand.u32 %v1246, 4294901760
    %1563 = vmatpush1.msra.mxu0 %v1562
    %v1564 = vand.u32 %v1243, 4294901760
    %1565 = vmatprep.subr.mxu0 %v1564
    %v1566 = vand.u32 %v1242, 4294901760
    %1567 = vmatpush1.msra.mxu0 %v1566
    %v1568 = vand.u32 %v1239, 4294901760
    %1569 = vmatprep.subr.mxu0 %v1568
    %v1570 = vand.u32 %v1238, 4294901760
    %1571 = vmatpush1.msra.mxu0 %v1570
    %v1572 = vand.u32 %v1235, 4294901760
    %1573 = vmatprep.subr.mxu0 %v1572
    %v1574 = vand.u32 %v1234, 4294901760
    %1575 = vmatpush1.msra.mxu0 %v1574
    %v1576 = vand.u32 %v1359, 4294901760
    %1577 = vmatprep.subr.mxu0 %v1576
    %v1578 = vand.u32 %v1358, 4294901760
    %1579 = vmatpush2.msra.mxu0 %v1578
    %v1580 = vand.u32 %v1355, 4294901760
    %1581 = vmatprep.subr.mxu0 %v1580
    %v1582 = vand.u32 %v1354, 4294901760
    %1583 = vmatpush2.msra.mxu0 %v1582
    %v1584 = vand.u32 %v1351, 4294901760
    %1585 = vmatprep.subr.mxu0 %v1584
    %v1586 = vand.u32 %v1350, 4294901760
    %1587 = vmatpush2.msra.mxu0 %v1586
    %v1588 = vand.u32 %v1347, 4294901760
    %1589 = vmatprep.subr.mxu0 %v1588
    %v1590 = vand.u32 %v1346, 4294901760
    %1591 = vmatpush2.msra.mxu0 %v1590
    %v1592 = vand.u32 %v1343, 4294901760
    %1593 = vmatprep.subr.mxu0 %v1592
    %v1594 = vand.u32 %v1342, 4294901760
    %1595 = vmatpush2.msra.mxu0 %v1594
    %v1596 = vand.u32 %v1339, 4294901760
    %1597 = vmatprep.subr.mxu0 %v1596
    %v1598 = vand.u32 %v1338, 4294901760
    %1599 = vmatpush2.msra.mxu0 %v1598
    %v1600 = vand.u32 %v1335, 4294901760
    %1601 = vmatprep.subr.mxu0 %v1600
    %v1602 = vand.u32 %v1334, 4294901760
    %1603 = vmatpush2.msra.mxu0 %v1602
    %v1604 = vand.u32 %v1331, 4294901760
    %1605 = vmatprep.subr.mxu0 %v1604
    %v1606 = vand.u32 %v1330, 4294901760
    %1607 = vmatpush2.msra.mxu0 %v1606
    %v1608 = vand.u32 %v1327, 4294901760
    %1609 = vmatprep.subr.mxu0 %v1608
    %v1610 = vand.u32 %v1326, 4294901760
    %1611 = vmatpush2.msra.mxu0 %v1610
    %v1612 = vand.u32 %v1323, 4294901760
    %1613 = vmatprep.subr.mxu0 %v1612
    %v1614 = vand.u32 %v1322, 4294901760
    %1615 = vmatpush2.msra.mxu0 %v1614
    %v1616 = vand.u32 %v1319, 4294901760
    %1617 = vmatprep.subr.mxu0 %v1616
    %v1618 = vand.u32 %v1318, 4294901760
    %1619 = vmatpush2.msra.mxu0 %v1618
    %v1620 = vand.u32 %v1315, 4294901760
    %1621 = vmatprep.subr.mxu0 %v1620
    %v1622 = vand.u32 %v1314, 4294901760
    %1623 = vmatpush2.msra.mxu0 %v1622
    %v1624 = vand.u32 %v1311, 4294901760
    %1625 = vmatprep.subr.mxu0 %v1624
    %v1626 = vand.u32 %v1310, 4294901760
    %1627 = vmatpush2.msra.mxu0 %v1626
    %v1628 = vand.u32 %v1307, 4294901760
    %1629 = vmatprep.subr.mxu0 %v1628
    %v1630 = vand.u32 %v1306, 4294901760
    %1631 = vmatpush2.msra.mxu0 %v1630
    %v1632 = vand.u32 %v1303, 4294901760
    %1633 = vmatprep.subr.mxu0 %v1632
    %v1634 = vand.u32 %v1302, 4294901760
    %1635 = vmatpush2.msra.mxu0 %v1634
    %v1636 = vand.u32 %v1299, 4294901760
    %1637 = vmatprep.subr.mxu0 %v1636
    %v1638 = vand.u32 %v1298, 4294901760
    %1639 = vmatpush2.msra.mxu0 %v1638
    %v1640 = vand.u32 %v1231, 4294901760
    %v1641 = vsub.f32 %v1231, %v1640
    %v1642 = vand.u32 %v1641, 4294901760
    %v1643 = vsub.f32 %v1641, %v1642
    %v1644 = vand.u32 %v1643, 4294901760
    %1645 = vmatprep.mubr.f32.mxu0 %v1644
    %v1646 = vand.u32 %v1230, 4294901760
    %v1647 = vsub.f32 %v1230, %v1646
    %v1648 = vand.u32 %v1647, 4294901760
    %v1649 = vsub.f32 %v1647, %v1648
    %v1650 = vand.u32 %v1649, 4294901760
    %1651 = vmatmul.mubr.f32.gmra.mxu0 %v1650
    %v1652 = vpop.f32.mrf.mxu0
    %v1653 = vadd.f32 %v1495, %v1652
    %v1654 = vpop.f32.mrf.mxu0
    %v1655 = vadd.f32 %v1499, %v1654
    %1656 = vdwg.mxu0
    %v1657 = vand.u32 %v1295, 4294901760
    %v1658 = vsub.f32 %v1295, %v1657
    %v1659 = vand.u32 %v1658, 4294901760
    %v1660 = vsub.f32 %v1658, %v1659
    %v1661 = vand.u32 %v1660, 4294901760
    %1662 = vmatprep.subr.mxu0 %v1661
    %v1663 = vand.u32 %v1294, 4294901760
    %v1664 = vsub.f32 %v1294, %v1663
    %v1665 = vand.u32 %v1664, 4294901760
    %v1666 = vsub.f32 %v1664, %v1665
    %v1667 = vand.u32 %v1666, 4294901760
    %1668 = vmatpush1.msra.mxu0 %v1667
    %v1669 = vand.u32 %v1291, 4294901760
    %v1670 = vsub.f32 %v1291, %v1669
    %v1671 = vand.u32 %v1670, 4294901760
    %v1672 = vsub.f32 %v1670, %v1671
    %v1673 = vand.u32 %v1672, 4294901760
    %1674 = vmatprep.subr.mxu0 %v1673
    %v1675 = vand.u32 %v1290, 4294901760
    %v1676 = vsub.f32 %v1290, %v1675
    %v1677 = vand.u32 %v1676, 4294901760
    %v1678 = vsub.f32 %v1676, %v1677
    %v1679 = vand.u32 %v1678, 4294901760
    %1680 = vmatpush1.msra.mxu0 %v1679
    %v1681 = vand.u32 %v1287, 4294901760
    %v1682 = vsub.f32 %v1287, %v1681
    %v1683 = vand.u32 %v1682, 4294901760
    %v1684 = vsub.f32 %v1682, %v1683
    %v1685 = vand.u32 %v1684, 4294901760
    %1686 = vmatprep.subr.mxu0 %v1685
    %v1687 = vand.u32 %v1286, 4294901760
    %v1688 = vsub.f32 %v1286, %v1687
    %v1689 = vand.u32 %v1688, 4294901760
    %v1690 = vsub.f32 %v1688, %v1689
    %v1691 = vand.u32 %v1690, 4294901760
    %1692 = vmatpush1.msra.mxu0 %v1691
    %v1693 = vand.u32 %v1283, 4294901760
    %v1694 = vsub.f32 %v1283, %v1693
    %v1695 = vand.u32 %v1694, 4294901760
    %v1696 = vsub.f32 %v1694, %v1695
    %v1697 = vand.u32 %v1696, 4294901760
    %1698 = vmatprep.subr.mxu0 %v1697
    %v1699 = vand.u32 %v1282, 4294901760
    %v1700 = vsub.f32 %v1282, %v1699
    %v1701 = vand.u32 %v1700, 4294901760
    %v1702 = vsub.f32 %v1700, %v1701
    %v1703 = vand.u32 %v1702, 4294901760
    %1704 = vmatpush1.msra.mxu0 %v1703
    %v1705 = vand.u32 %v1279, 4294901760
    %v1706 = vsub.f32 %v1279, %v1705
    %v1707 = vand.u32 %v1706, 4294901760
    %v1708 = vsub.f32 %v1706, %v1707
    %v1709 = vand.u32 %v1708, 4294901760
    %1710 = vmatprep.subr.mxu0 %v1709
    %v1711 = vand.u32 %v1278, 4294901760
    %v1712 = vsub.f32 %v1278, %v1711
    %v1713 = vand.u32 %v1712, 4294901760
    %v1714 = vsub.f32 %v1712, %v1713
    %v1715 = vand.u32 %v1714, 4294901760
    %1716 = vmatpush1.msra.mxu0 %v1715
    %v1717 = vand.u32 %v1275, 4294901760
    %v1718 = vsub.f32 %v1275, %v1717
    %v1719 = vand.u32 %v1718, 4294901760
    %v1720 = vsub.f32 %v1718, %v1719
    %v1721 = vand.u32 %v1720, 4294901760
    %1722 = vmatprep.subr.mxu0 %v1721
    %v1723 = vand.u32 %v1274, 4294901760
    %v1724 = vsub.f32 %v1274, %v1723
    %v1725 = vand.u32 %v1724, 4294901760
    %v1726 = vsub.f32 %v1724, %v1725
    %v1727 = vand.u32 %v1726, 4294901760
    %1728 = vmatpush1.msra.mxu0 %v1727
    %v1729 = vand.u32 %v1271, 4294901760
    %v1730 = vsub.f32 %v1271, %v1729
    %v1731 = vand.u32 %v1730, 4294901760
    %v1732 = vsub.f32 %v1730, %v1731
    %v1733 = vand.u32 %v1732, 4294901760
    %1734 = vmatprep.subr.mxu0 %v1733
    %v1735 = vand.u32 %v1270, 4294901760
    %v1736 = vsub.f32 %v1270, %v1735
    %v1737 = vand.u32 %v1736, 4294901760
    %v1738 = vsub.f32 %v1736, %v1737
    %v1739 = vand.u32 %v1738, 4294901760
    %1740 = vmatpush1.msra.mxu0 %v1739
    %v1741 = vand.u32 %v1267, 4294901760
    %v1742 = vsub.f32 %v1267, %v1741
    %v1743 = vand.u32 %v1742, 4294901760
    %v1744 = vsub.f32 %v1742, %v1743
    %v1745 = vand.u32 %v1744, 4294901760
    %1746 = vmatprep.subr.mxu0 %v1745
    %v1747 = vand.u32 %v1266, 4294901760
    %v1748 = vsub.f32 %v1266, %v1747
    %v1749 = vand.u32 %v1748, 4294901760
    %v1750 = vsub.f32 %v1748, %v1749
    %v1751 = vand.u32 %v1750, 4294901760
    %1752 = vmatpush1.msra.mxu0 %v1751
    %v1753 = vand.u32 %v1263, 4294901760
    %v1754 = vsub.f32 %v1263, %v1753
    %v1755 = vand.u32 %v1754, 4294901760
    %v1756 = vsub.f32 %v1754, %v1755
    %v1757 = vand.u32 %v1756, 4294901760
    %1758 = vmatprep.subr.mxu0 %v1757
    %v1759 = vand.u32 %v1262, 4294901760
    %v1760 = vsub.f32 %v1262, %v1759
    %v1761 = vand.u32 %v1760, 4294901760
    %v1762 = vsub.f32 %v1760, %v1761
    %v1763 = vand.u32 %v1762, 4294901760
    %1764 = vmatpush1.msra.mxu0 %v1763
    %v1765 = vand.u32 %v1259, 4294901760
    %v1766 = vsub.f32 %v1259, %v1765
    %v1767 = vand.u32 %v1766, 4294901760
    %v1768 = vsub.f32 %v1766, %v1767
    %v1769 = vand.u32 %v1768, 4294901760
    %1770 = vmatprep.subr.mxu0 %v1769
    %v1771 = vand.u32 %v1258, 4294901760
    %v1772 = vsub.f32 %v1258, %v1771
    %v1773 = vand.u32 %v1772, 4294901760
    %v1774 = vsub.f32 %v1772, %v1773
    %v1775 = vand.u32 %v1774, 4294901760
    %1776 = vmatpush1.msra.mxu0 %v1775
    %v1777 = vand.u32 %v1255, 4294901760
    %v1778 = vsub.f32 %v1255, %v1777
    %v1779 = vand.u32 %v1778, 4294901760
    %v1780 = vsub.f32 %v1778, %v1779
    %v1781 = vand.u32 %v1780, 4294901760
    %1782 = vmatprep.subr.mxu0 %v1781
    %v1783 = vand.u32 %v1254, 4294901760
    %v1784 = vsub.f32 %v1254, %v1783
    %v1785 = vand.u32 %v1784, 4294901760
    %v1786 = vsub.f32 %v1784, %v1785
    %v1787 = vand.u32 %v1786, 4294901760
    %1788 = vmatpush1.msra.mxu0 %v1787
    %v1789 = vand.u32 %v1251, 4294901760
    %v1790 = vsub.f32 %v1251, %v1789
    %v1791 = vand.u32 %v1790, 4294901760
    %v1792 = vsub.f32 %v1790, %v1791
    %v1793 = vand.u32 %v1792, 4294901760
    %1794 = vmatprep.subr.mxu0 %v1793
    %v1795 = vand.u32 %v1250, 4294901760
    %v1796 = vsub.f32 %v1250, %v1795
    %v1797 = vand.u32 %v1796, 4294901760
    %v1798 = vsub.f32 %v1796, %v1797
    %v1799 = vand.u32 %v1798, 4294901760
    %1800 = vmatpush1.msra.mxu0 %v1799
    %v1801 = vand.u32 %v1247, 4294901760
    %v1802 = vsub.f32 %v1247, %v1801
    %v1803 = vand.u32 %v1802, 4294901760
    %v1804 = vsub.f32 %v1802, %v1803
    %v1805 = vand.u32 %v1804, 4294901760
    %1806 = vmatprep.subr.mxu0 %v1805
    %v1807 = vand.u32 %v1246, 4294901760
    %v1808 = vsub.f32 %v1246, %v1807
    %v1809 = vand.u32 %v1808, 4294901760
    %v1810 = vsub.f32 %v1808, %v1809
    %v1811 = vand.u32 %v1810, 4294901760
    %1812 = vmatpush1.msra.mxu0 %v1811
    %v1813 = vand.u32 %v1243, 4294901760
    %v1814 = vsub.f32 %v1243, %v1813
    %v1815 = vand.u32 %v1814, 4294901760
    %v1816 = vsub.f32 %v1814, %v1815
    %v1817 = vand.u32 %v1816, 4294901760
    %1818 = vmatprep.subr.mxu0 %v1817
    %v1819 = vand.u32 %v1242, 4294901760
    %v1820 = vsub.f32 %v1242, %v1819
    %v1821 = vand.u32 %v1820, 4294901760
    %v1822 = vsub.f32 %v1820, %v1821
    %v1823 = vand.u32 %v1822, 4294901760
    %1824 = vmatpush1.msra.mxu0 %v1823
    %v1825 = vand.u32 %v1239, 4294901760
    %v1826 = vsub.f32 %v1239, %v1825
    %v1827 = vand.u32 %v1826, 4294901760
    %v1828 = vsub.f32 %v1826, %v1827
    %v1829 = vand.u32 %v1828, 4294901760
    %1830 = vmatprep.subr.mxu0 %v1829
    %v1831 = vand.u32 %v1238, 4294901760
    %v1832 = vsub.f32 %v1238, %v1831
    %v1833 = vand.u32 %v1832, 4294901760
    %v1834 = vsub.f32 %v1832, %v1833
    %v1835 = vand.u32 %v1834, 4294901760
    %1836 = vmatpush1.msra.mxu0 %v1835
    %v1837 = vand.u32 %v1235, 4294901760
    %v1838 = vsub.f32 %v1235, %v1837
    %v1839 = vand.u32 %v1838, 4294901760
    %v1840 = vsub.f32 %v1838, %v1839
    %v1841 = vand.u32 %v1840, 4294901760
    %1842 = vmatprep.subr.mxu0 %v1841
    %v1843 = vand.u32 %v1234, 4294901760
    %v1844 = vsub.f32 %v1234, %v1843
    %v1845 = vand.u32 %v1844, 4294901760
    %v1846 = vsub.f32 %v1844, %v1845
    %v1847 = vand.u32 %v1846, 4294901760
    %1848 = vmatpush1.msra.mxu0 %v1847
    %v1849 = vand.u32 %v1359, 4294901760
    %v1850 = vsub.f32 %v1359, %v1849
    %v1851 = vand.u32 %v1850, 4294901760
    %v1852 = vsub.f32 %v1850, %v1851
    %v1853 = vand.u32 %v1852, 4294901760
    %1854 = vmatprep.subr.mxu0 %v1853
    %v1855 = vand.u32 %v1358, 4294901760
    %v1856 = vsub.f32 %v1358, %v1855
    %v1857 = vand.u32 %v1856, 4294901760
    %v1858 = vsub.f32 %v1856, %v1857
    %v1859 = vand.u32 %v1858, 4294901760
    %1860 = vmatpush2.msra.mxu0 %v1859
    %v1861 = vand.u32 %v1355, 4294901760
    %v1862 = vsub.f32 %v1355, %v1861
    %v1863 = vand.u32 %v1862, 4294901760
    %v1864 = vsub.f32 %v1862, %v1863
    %v1865 = vand.u32 %v1864, 4294901760
    %1866 = vmatprep.subr.mxu0 %v1865
    %v1867 = vand.u32 %v1354, 4294901760
    %v1868 = vsub.f32 %v1354, %v1867
    %v1869 = vand.u32 %v1868, 4294901760
    %v1870 = vsub.f32 %v1868, %v1869
    %v1871 = vand.u32 %v1870, 4294901760
    %1872 = vmatpush2.msra.mxu0 %v1871
    %v1873 = vand.u32 %v1351, 4294901760
    %v1874 = vsub.f32 %v1351, %v1873
    %v1875 = vand.u32 %v1874, 4294901760
    %v1876 = vsub.f32 %v1874, %v1875
    %v1877 = vand.u32 %v1876, 4294901760
    %1878 = vmatprep.subr.mxu0 %v1877
    %v1879 = vand.u32 %v1350, 4294901760
    %v1880 = vsub.f32 %v1350, %v1879
    %v1881 = vand.u32 %v1880, 4294901760
    %v1882 = vsub.f32 %v1880, %v1881
    %v1883 = vand.u32 %v1882, 4294901760
    %1884 = vmatpush2.msra.mxu0 %v1883
    %v1885 = vand.u32 %v1347, 4294901760
    %v1886 = vsub.f32 %v1347, %v1885
    %v1887 = vand.u32 %v1886, 4294901760
    %v1888 = vsub.f32 %v1886, %v1887
    %v1889 = vand.u32 %v1888, 4294901760
    %1890 = vmatprep.subr.mxu0 %v1889
    %v1891 = vand.u32 %v1346, 4294901760
    %v1892 = vsub.f32 %v1346, %v1891
    %v1893 = vand.u32 %v1892, 4294901760
    %v1894 = vsub.f32 %v1892, %v1893
    %v1895 = vand.u32 %v1894, 4294901760
    %1896 = vmatpush2.msra.mxu0 %v1895
    %v1897 = vand.u32 %v1343, 4294901760
    %v1898 = vsub.f32 %v1343, %v1897
    %v1899 = vand.u32 %v1898, 4294901760
    %v1900 = vsub.f32 %v1898, %v1899
    %v1901 = vand.u32 %v1900, 4294901760
    %1902 = vmatprep.subr.mxu0 %v1901
    %v1903 = vand.u32 %v1342, 4294901760
    %v1904 = vsub.f32 %v1342, %v1903
    %v1905 = vand.u32 %v1904, 4294901760
    %v1906 = vsub.f32 %v1904, %v1905
    %v1907 = vand.u32 %v1906, 4294901760
    %1908 = vmatpush2.msra.mxu0 %v1907
    %v1909 = vand.u32 %v1339, 4294901760
    %v1910 = vsub.f32 %v1339, %v1909
    %v1911 = vand.u32 %v1910, 4294901760
    %v1912 = vsub.f32 %v1910, %v1911
    %v1913 = vand.u32 %v1912, 4294901760
    %1914 = vmatprep.subr.mxu0 %v1913
    %v1915 = vand.u32 %v1338, 4294901760
    %v1916 = vsub.f32 %v1338, %v1915
    %v1917 = vand.u32 %v1916, 4294901760
    %v1918 = vsub.f32 %v1916, %v1917
    %v1919 = vand.u32 %v1918, 4294901760
    %1920 = vmatpush2.msra.mxu0 %v1919
    %v1921 = vand.u32 %v1335, 4294901760
    %v1922 = vsub.f32 %v1335, %v1921
    %v1923 = vand.u32 %v1922, 4294901760
    %v1924 = vsub.f32 %v1922, %v1923
    %v1925 = vand.u32 %v1924, 4294901760
    %1926 = vmatprep.subr.mxu0 %v1925
    %v1927 = vand.u32 %v1334, 4294901760
    %v1928 = vsub.f32 %v1334, %v1927
    %v1929 = vand.u32 %v1928, 4294901760
    %v1930 = vsub.f32 %v1928, %v1929
    %v1931 = vand.u32 %v1930, 4294901760
    %1932 = vmatpush2.msra.mxu0 %v1931
    %v1933 = vand.u32 %v1331, 4294901760
    %v1934 = vsub.f32 %v1331, %v1933
    %v1935 = vand.u32 %v1934, 4294901760
    %v1936 = vsub.f32 %v1934, %v1935
    %v1937 = vand.u32 %v1936, 4294901760
    %1938 = vmatprep.subr.mxu0 %v1937
    %v1939 = vand.u32 %v1330, 4294901760
    %v1940 = vsub.f32 %v1330, %v1939
    %v1941 = vand.u32 %v1940, 4294901760
    %v1942 = vsub.f32 %v1940, %v1941
    %v1943 = vand.u32 %v1942, 4294901760
    %1944 = vmatpush2.msra.mxu0 %v1943
    %v1945 = vand.u32 %v1327, 4294901760
    %v1946 = vsub.f32 %v1327, %v1945
    %v1947 = vand.u32 %v1946, 4294901760
    %v1948 = vsub.f32 %v1946, %v1947
    %v1949 = vand.u32 %v1948, 4294901760
    %1950 = vmatprep.subr.mxu0 %v1949
    %v1951 = vand.u32 %v1326, 4294901760
    %v1952 = vsub.f32 %v1326, %v1951
    %v1953 = vand.u32 %v1952, 4294901760
    %v1954 = vsub.f32 %v1952, %v1953
    %v1955 = vand.u32 %v1954, 4294901760
    %1956 = vmatpush2.msra.mxu0 %v1955
    %v1957 = vand.u32 %v1323, 4294901760
    %v1958 = vsub.f32 %v1323, %v1957
    %v1959 = vand.u32 %v1958, 4294901760
    %v1960 = vsub.f32 %v1958, %v1959
    %v1961 = vand.u32 %v1960, 4294901760
    %1962 = vmatprep.subr.mxu0 %v1961
    %v1963 = vand.u32 %v1322, 4294901760
    %v1964 = vsub.f32 %v1322, %v1963
    %v1965 = vand.u32 %v1964, 4294901760
    %v1966 = vsub.f32 %v1964, %v1965
    %v1967 = vand.u32 %v1966, 4294901760
    %1968 = vmatpush2.msra.mxu0 %v1967
    %v1969 = vand.u32 %v1319, 4294901760
    %v1970 = vsub.f32 %v1319, %v1969
    %v1971 = vand.u32 %v1970, 4294901760
    %v1972 = vsub.f32 %v1970, %v1971
    %v1973 = vand.u32 %v1972, 4294901760
    %1974 = vmatprep.subr.mxu0 %v1973
    %v1975 = vand.u32 %v1318, 4294901760
    %v1976 = vsub.f32 %v1318, %v1975
    %v1977 = vand.u32 %v1976, 4294901760
    %v1978 = vsub.f32 %v1976, %v1977
    %v1979 = vand.u32 %v1978, 4294901760
    %1980 = vmatpush2.msra.mxu0 %v1979
    %v1981 = vand.u32 %v1315, 4294901760
    %v1982 = vsub.f32 %v1315, %v1981
    %v1983 = vand.u32 %v1982, 4294901760
    %v1984 = vsub.f32 %v1982, %v1983
    %v1985 = vand.u32 %v1984, 4294901760
    %1986 = vmatprep.subr.mxu0 %v1985
    %v1987 = vand.u32 %v1314, 4294901760
    %v1988 = vsub.f32 %v1314, %v1987
    %v1989 = vand.u32 %v1988, 4294901760
    %v1990 = vsub.f32 %v1988, %v1989
    %v1991 = vand.u32 %v1990, 4294901760
    %1992 = vmatpush2.msra.mxu0 %v1991
    %v1993 = vand.u32 %v1311, 4294901760
    %v1994 = vsub.f32 %v1311, %v1993
    %v1995 = vand.u32 %v1994, 4294901760
    %v1996 = vsub.f32 %v1994, %v1995
    %v1997 = vand.u32 %v1996, 4294901760
    %1998 = vmatprep.subr.mxu0 %v1997
    %v1999 = vand.u32 %v1310, 4294901760
    %v2000 = vsub.f32 %v1310, %v1999
    %v2001 = vand.u32 %v2000, 4294901760
    %v2002 = vsub.f32 %v2000, %v2001
    %v2003 = vand.u32 %v2002, 4294901760
    %2004 = vmatpush2.msra.mxu0 %v2003
    %v2005 = vand.u32 %v1307, 4294901760
    %v2006 = vsub.f32 %v1307, %v2005
    %v2007 = vand.u32 %v2006, 4294901760
    %v2008 = vsub.f32 %v2006, %v2007
    %v2009 = vand.u32 %v2008, 4294901760
    %2010 = vmatprep.subr.mxu0 %v2009
    %v2011 = vand.u32 %v1306, 4294901760
    %v2012 = vsub.f32 %v1306, %v2011
    %v2013 = vand.u32 %v2012, 4294901760
    %v2014 = vsub.f32 %v2012, %v2013
    %v2015 = vand.u32 %v2014, 4294901760
    %2016 = vmatpush2.msra.mxu0 %v2015
    %v2017 = vand.u32 %v1303, 4294901760
    %v2018 = vsub.f32 %v1303, %v2017
    %v2019 = vand.u32 %v2018, 4294901760
    %v2020 = vsub.f32 %v2018, %v2019
    %v2021 = vand.u32 %v2020, 4294901760
    %2022 = vmatprep.subr.mxu0 %v2021
    %v2023 = vand.u32 %v1302, 4294901760
    %v2024 = vsub.f32 %v1302, %v2023
    %v2025 = vand.u32 %v2024, 4294901760
    %v2026 = vsub.f32 %v2024, %v2025
    %v2027 = vand.u32 %v2026, 4294901760
    %2028 = vmatpush2.msra.mxu0 %v2027
    %v2029 = vand.u32 %v1299, 4294901760
    %v2030 = vsub.f32 %v1299, %v2029
    %v2031 = vand.u32 %v2030, 4294901760
    %v2032 = vsub.f32 %v2030, %v2031
    %v2033 = vand.u32 %v2032, 4294901760
    %2034 = vmatprep.subr.mxu0 %v2033
    %v2035 = vand.u32 %v1298, 4294901760
    %v2036 = vsub.f32 %v1298, %v2035
    %v2037 = vand.u32 %v2036, 4294901760
    %v2038 = vsub.f32 %v2036, %v2037
    %v2039 = vand.u32 %v2038, 4294901760
    %2040 = vmatpush2.msra.mxu0 %v2039
    %v2041 = vand.u32 %v1231, 4294901760
    %2042 = vmatprep.mubr.f32.mxu0 %v2041
    %v2043 = vand.u32 %v1230, 4294901760
    %2044 = vmatmul.mubr.f32.gmra.mxu0 %v2043
    %v2045 = vpop.f32.mrf.mxu0
    %v2046 = vadd.f32 %v1653, %v2045
    %v2047 = vpop.f32.mrf.mxu0
    %v2048 = vadd.f32 %v1655, %v2047
    %2049 = vdwg.mxu0
    %v2050 = vand.u32 %v1295, 4294901760
    %v2051 = vsub.f32 %v1295, %v2050
    %2052 = vmatprep.subr.mxu0 %v2051
    %v2053 = vand.u32 %v1294, 4294901760
    %v2054 = vsub.f32 %v1294, %v2053
    %2055 = vmatpush1.msra.mxu0 %v2054
    %v2056 = vand.u32 %v1291, 4294901760
    %v2057 = vsub.f32 %v1291, %v2056
    %2058 = vmatprep.subr.mxu0 %v2057
    %v2059 = vand.u32 %v1290, 4294901760
    %v2060 = vsub.f32 %v1290, %v2059
    %2061 = vmatpush1.msra.mxu0 %v2060
    %v2062 = vand.u32 %v1287, 4294901760
    %v2063 = vsub.f32 %v1287, %v2062
    %2064 = vmatprep.subr.mxu0 %v2063
    %v2065 = vand.u32 %v1286, 4294901760
    %v2066 = vsub.f32 %v1286, %v2065
    %2067 = vmatpush1.msra.mxu0 %v2066
    %v2068 = vand.u32 %v1283, 4294901760
    %v2069 = vsub.f32 %v1283, %v2068
    %2070 = vmatprep.subr.mxu0 %v2069
    %v2071 = vand.u32 %v1282, 4294901760
    %v2072 = vsub.f32 %v1282, %v2071
    %2073 = vmatpush1.msra.mxu0 %v2072
    %v2074 = vand.u32 %v1279, 4294901760
    %v2075 = vsub.f32 %v1279, %v2074
    %2076 = vmatprep.subr.mxu0 %v2075
    %v2077 = vand.u32 %v1278, 4294901760
    %v2078 = vsub.f32 %v1278, %v2077
    %2079 = vmatpush1.msra.mxu0 %v2078
    %v2080 = vand.u32 %v1275, 4294901760
    %v2081 = vsub.f32 %v1275, %v2080
    %2082 = vmatprep.subr.mxu0 %v2081
    %v2083 = vand.u32 %v1274, 4294901760
    %v2084 = vsub.f32 %v1274, %v2083
    %2085 = vmatpush1.msra.mxu0 %v2084
    %v2086 = vand.u32 %v1271, 4294901760
    %v2087 = vsub.f32 %v1271, %v2086
    %2088 = vmatprep.subr.mxu0 %v2087
    %v2089 = vand.u32 %v1270, 4294901760
    %v2090 = vsub.f32 %v1270, %v2089
    %2091 = vmatpush1.msra.mxu0 %v2090
    %v2092 = vand.u32 %v1267, 4294901760
    %v2093 = vsub.f32 %v1267, %v2092
    %2094 = vmatprep.subr.mxu0 %v2093
    %v2095 = vand.u32 %v1266, 4294901760
    %v2096 = vsub.f32 %v1266, %v2095
    %2097 = vmatpush1.msra.mxu0 %v2096
    %v2098 = vand.u32 %v1263, 4294901760
    %v2099 = vsub.f32 %v1263, %v2098
    %2100 = vmatprep.subr.mxu0 %v2099
    %v2101 = vand.u32 %v1262, 4294901760
    %v2102 = vsub.f32 %v1262, %v2101
    %2103 = vmatpush1.msra.mxu0 %v2102
    %v2104 = vand.u32 %v1259, 4294901760
    %v2105 = vsub.f32 %v1259, %v2104
    %2106 = vmatprep.subr.mxu0 %v2105
    %v2107 = vand.u32 %v1258, 4294901760
    %v2108 = vsub.f32 %v1258, %v2107
    %2109 = vmatpush1.msra.mxu0 %v2108
    %v2110 = vand.u32 %v1255, 4294901760
    %v2111 = vsub.f32 %v1255, %v2110
    %2112 = vmatprep.subr.mxu0 %v2111
    %v2113 = vand.u32 %v1254, 4294901760
    %v2114 = vsub.f32 %v1254, %v2113
    %2115 = vmatpush1.msra.mxu0 %v2114
    %v2116 = vand.u32 %v1251, 4294901760
    %v2117 = vsub.f32 %v1251, %v2116
    %2118 = vmatprep.subr.mxu0 %v2117
    %v2119 = vand.u32 %v1250, 4294901760
    %v2120 = vsub.f32 %v1250, %v2119
    %2121 = vmatpush1.msra.mxu0 %v2120
    %v2122 = vand.u32 %v1247, 4294901760
    %v2123 = vsub.f32 %v1247, %v2122
    %2124 = vmatprep.subr.mxu0 %v2123
    %v2125 = vand.u32 %v1246, 4294901760
    %v2126 = vsub.f32 %v1246, %v2125
    %2127 = vmatpush1.msra.mxu0 %v2126
    %v2128 = vand.u32 %v1243, 4294901760
    %v2129 = vsub.f32 %v1243, %v2128
    %2130 = vmatprep.subr.mxu0 %v2129
    %v2131 = vand.u32 %v1242, 4294901760
    %v2132 = vsub.f32 %v1242, %v2131
    %2133 = vmatpush1.msra.mxu0 %v2132
    %v2134 = vand.u32 %v1239, 4294901760
    %v2135 = vsub.f32 %v1239, %v2134
    %2136 = vmatprep.subr.mxu0 %v2135
    %v2137 = vand.u32 %v1238, 4294901760
    %v2138 = vsub.f32 %v1238, %v2137
    %2139 = vmatpush1.msra.mxu0 %v2138
    %v2140 = vand.u32 %v1235, 4294901760
    %v2141 = vsub.f32 %v1235, %v2140
    %2142 = vmatprep.subr.mxu0 %v2141
    %v2143 = vand.u32 %v1234, 4294901760
    %v2144 = vsub.f32 %v1234, %v2143
    %2145 = vmatpush1.msra.mxu0 %v2144
    %v2146 = vand.u32 %v1359, 4294901760
    %v2147 = vsub.f32 %v1359, %v2146
    %2148 = vmatprep.subr.mxu0 %v2147
    %v2149 = vand.u32 %v1358, 4294901760
    %v2150 = vsub.f32 %v1358, %v2149
    %2151 = vmatpush2.msra.mxu0 %v2150
    %v2152 = vand.u32 %v1355, 4294901760
    %v2153 = vsub.f32 %v1355, %v2152
    %2154 = vmatprep.subr.mxu0 %v2153
    %v2155 = vand.u32 %v1354, 4294901760
    %v2156 = vsub.f32 %v1354, %v2155
    %2157 = vmatpush2.msra.mxu0 %v2156
    %v2158 = vand.u32 %v1351, 4294901760
    %v2159 = vsub.f32 %v1351, %v2158
    %2160 = vmatprep.subr.mxu0 %v2159
    %v2161 = vand.u32 %v1350, 4294901760
    %v2162 = vsub.f32 %v1350, %v2161
    %2163 = vmatpush2.msra.mxu0 %v2162
    %v2164 = vand.u32 %v1347, 4294901760
    %v2165 = vsub.f32 %v1347, %v2164
    %2166 = vmatprep.subr.mxu0 %v2165
    %v2167 = vand.u32 %v1346, 4294901760
    %v2168 = vsub.f32 %v1346, %v2167
    %2169 = vmatpush2.msra.mxu0 %v2168
    %v2170 = vand.u32 %v1343, 4294901760
    %v2171 = vsub.f32 %v1343, %v2170
    %2172 = vmatprep.subr.mxu0 %v2171
    %v2173 = vand.u32 %v1342, 4294901760
    %v2174 = vsub.f32 %v1342, %v2173
    %2175 = vmatpush2.msra.mxu0 %v2174
    %v2176 = vand.u32 %v1339, 4294901760
    %v2177 = vsub.f32 %v1339, %v2176
    %2178 = vmatprep.subr.mxu0 %v2177
    %v2179 = vand.u32 %v1338, 4294901760
    %v2180 = vsub.f32 %v1338, %v2179
    %2181 = vmatpush2.msra.mxu0 %v2180
    %v2182 = vand.u32 %v1335, 4294901760
    %v2183 = vsub.f32 %v1335, %v2182
    %2184 = vmatprep.subr.mxu0 %v2183
    %v2185 = vand.u32 %v1334, 4294901760
    %v2186 = vsub.f32 %v1334, %v2185
    %2187 = vmatpush2.msra.mxu0 %v2186
    %v2188 = vand.u32 %v1331, 4294901760
    %v2189 = vsub.f32 %v1331, %v2188
    %2190 = vmatprep.subr.mxu0 %v2189
    %v2191 = vand.u32 %v1330, 4294901760
    %v2192 = vsub.f32 %v1330, %v2191
    %2193 = vmatpush2.msra.mxu0 %v2192
    %v2194 = vand.u32 %v1327, 4294901760
    %v2195 = vsub.f32 %v1327, %v2194
    %2196 = vmatprep.subr.mxu0 %v2195
    %v2197 = vand.u32 %v1326, 4294901760
    %v2198 = vsub.f32 %v1326, %v2197
    %2199 = vmatpush2.msra.mxu0 %v2198
    %v2200 = vand.u32 %v1323, 4294901760
    %v2201 = vsub.f32 %v1323, %v2200
    %2202 = vmatprep.subr.mxu0 %v2201
    %v2203 = vand.u32 %v1322, 4294901760
    %v2204 = vsub.f32 %v1322, %v2203
    %2205 = vmatpush2.msra.mxu0 %v2204
    %v2206 = vand.u32 %v1319, 4294901760
    %v2207 = vsub.f32 %v1319, %v2206
    %2208 = vmatprep.subr.mxu0 %v2207
    %v2209 = vand.u32 %v1318, 4294901760
    %v2210 = vsub.f32 %v1318, %v2209
    %2211 = vmatpush2.msra.mxu0 %v2210
    %v2212 = vand.u32 %v1315, 4294901760
    %v2213 = vsub.f32 %v1315, %v2212
    %2214 = vmatprep.subr.mxu0 %v2213
    %v2215 = vand.u32 %v1314, 4294901760
    %v2216 = vsub.f32 %v1314, %v2215
    %2217 = vmatpush2.msra.mxu0 %v2216
    %v2218 = vand.u32 %v1311, 4294901760
    %v2219 = vsub.f32 %v1311, %v2218
    %2220 = vmatprep.subr.mxu0 %v2219
    %v2221 = vand.u32 %v1310, 4294901760
    %v2222 = vsub.f32 %v1310, %v2221
    %2223 = vmatpush2.msra.mxu0 %v2222
    %v2224 = vand.u32 %v1307, 4294901760
    %v2225 = vsub.f32 %v1307, %v2224
    %2226 = vmatprep.subr.mxu0 %v2225
    %v2227 = vand.u32 %v1306, 4294901760
    %v2228 = vsub.f32 %v1306, %v2227
    %2229 = vmatpush2.msra.mxu0 %v2228
    %v2230 = vand.u32 %v1303, 4294901760
    %v2231 = vsub.f32 %v1303, %v2230
    %2232 = vmatprep.subr.mxu0 %v2231
    %v2233 = vand.u32 %v1302, 4294901760
    %v2234 = vsub.f32 %v1302, %v2233
    %2235 = vmatpush2.msra.mxu0 %v2234
    %v2236 = vand.u32 %v1299, 4294901760
    %v2237 = vsub.f32 %v1299, %v2236
    %2238 = vmatprep.subr.mxu0 %v2237
    %v2239 = vand.u32 %v1298, 4294901760
    %v2240 = vsub.f32 %v1298, %v2239
    %2241 = vmatpush2.msra.mxu0 %v2240
    %v2242 = vand.u32 %v1231, 4294901760
    %v2243 = vsub.f32 %v1231, %v2242
    %2244 = vmatprep.mubr.f32.mxu0 %v2243
    %v2245 = vand.u32 %v1230, 4294901760
    %v2246 = vsub.f32 %v1230, %v2245
    %2247 = vmatmul.mubr.f32.gmra.mxu0 %v2246
    %v2248 = vpop.f32.mrf.mxu0
    %v2249 = vadd.f32 %v2046, %v2248
    %v2250 = vpop.f32.mrf.mxu0
    %v2251 = vadd.f32 %v2048, %v2250
    %2252 = vdwg.mxu0
    %v2253 = vand.u32 %v1295, 4294901760
    %2254 = vmatprep.subr.mxu0 %v2253
    %v2255 = vand.u32 %v1294, 4294901760
    %2256 = vmatpush1.msra.mxu0 %v2255
    %v2257 = vand.u32 %v1291, 4294901760
    %2258 = vmatprep.subr.mxu0 %v2257
    %v2259 = vand.u32 %v1290, 4294901760
    %2260 = vmatpush1.msra.mxu0 %v2259
    %v2261 = vand.u32 %v1287, 4294901760
    %2262 = vmatprep.subr.mxu0 %v2261
    %v2263 = vand.u32 %v1286, 4294901760
    %2264 = vmatpush1.msra.mxu0 %v2263
    %v2265 = vand.u32 %v1283, 4294901760
    %2266 = vmatprep.subr.mxu0 %v2265
    %v2267 = vand.u32 %v1282, 4294901760
    %2268 = vmatpush1.msra.mxu0 %v2267
    %v2269 = vand.u32 %v1279, 4294901760
    %2270 = vmatprep.subr.mxu0 %v2269
    %v2271 = vand.u32 %v1278, 4294901760
    %2272 = vmatpush1.msra.mxu0 %v2271
    %v2273 = vand.u32 %v1275, 4294901760
    %2274 = vmatprep.subr.mxu0 %v2273
    %v2275 = vand.u32 %v1274, 4294901760
    %2276 = vmatpush1.msra.mxu0 %v2275
    %v2277 = vand.u32 %v1271, 4294901760
    %2278 = vmatprep.subr.mxu0 %v2277
    %v2279 = vand.u32 %v1270, 4294901760
    %2280 = vmatpush1.msra.mxu0 %v2279
    %v2281 = vand.u32 %v1267, 4294901760
    %2282 = vmatprep.subr.mxu0 %v2281
    %v2283 = vand.u32 %v1266, 4294901760
    %2284 = vmatpush1.msra.mxu0 %v2283
    %v2285 = vand.u32 %v1263, 4294901760
    %2286 = vmatprep.subr.mxu0 %v2285
    %v2287 = vand.u32 %v1262, 4294901760
    %2288 = vmatpush1.msra.mxu0 %v2287
    %v2289 = vand.u32 %v1259, 4294901760
    %2290 = vmatprep.subr.mxu0 %v2289
    %v2291 = vand.u32 %v1258, 4294901760
    %2292 = vmatpush1.msra.mxu0 %v2291
    %v2293 = vand.u32 %v1255, 4294901760
    %2294 = vmatprep.subr.mxu0 %v2293
    %v2295 = vand.u32 %v1254, 4294901760
    %2296 = vmatpush1.msra.mxu0 %v2295
    %v2297 = vand.u32 %v1251, 4294901760
    %2298 = vmatprep.subr.mxu0 %v2297
    %v2299 = vand.u32 %v1250, 4294901760
    %2300 = vmatpush1.msra.mxu0 %v2299
    %v2301 = vand.u32 %v1247, 4294901760
    %2302 = vmatprep.subr.mxu0 %v2301
    %v2303 = vand.u32 %v1246, 4294901760
    %2304 = vmatpush1.msra.mxu0 %v2303
    %v2305 = vand.u32 %v1243, 4294901760
    %2306 = vmatprep.subr.mxu0 %v2305
    %v2307 = vand.u32 %v1242, 4294901760
    %2308 = vmatpush1.msra.mxu0 %v2307
    %v2309 = vand.u32 %v1239, 4294901760
    %2310 = vmatprep.subr.mxu0 %v2309
    %v2311 = vand.u32 %v1238, 4294901760
    %2312 = vmatpush1.msra.mxu0 %v2311
    %v2313 = vand.u32 %v1235, 4294901760
    %2314 = vmatprep.subr.mxu0 %v2313
    %v2315 = vand.u32 %v1234, 4294901760
    %2316 = vmatpush1.msra.mxu0 %v2315
    %v2317 = vand.u32 %v1359, 4294901760
    %2318 = vmatprep.subr.mxu0 %v2317
    %v2319 = vand.u32 %v1358, 4294901760
    %2320 = vmatpush2.msra.mxu0 %v2319
    %v2321 = vand.u32 %v1355, 4294901760
    %2322 = vmatprep.subr.mxu0 %v2321
    %v2323 = vand.u32 %v1354, 4294901760
    %2324 = vmatpush2.msra.mxu0 %v2323
    %v2325 = vand.u32 %v1351, 4294901760
    %2326 = vmatprep.subr.mxu0 %v2325
    %v2327 = vand.u32 %v1350, 4294901760
    %2328 = vmatpush2.msra.mxu0 %v2327
    %v2329 = vand.u32 %v1347, 4294901760
    %2330 = vmatprep.subr.mxu0 %v2329
    %v2331 = vand.u32 %v1346, 4294901760
    %2332 = vmatpush2.msra.mxu0 %v2331
    %v2333 = vand.u32 %v1343, 4294901760
    %2334 = vmatprep.subr.mxu0 %v2333
    %v2335 = vand.u32 %v1342, 4294901760
    %2336 = vmatpush2.msra.mxu0 %v2335
    %v2337 = vand.u32 %v1339, 4294901760
    %2338 = vmatprep.subr.mxu0 %v2337
    %v2339 = vand.u32 %v1338, 4294901760
    %2340 = vmatpush2.msra.mxu0 %v2339
    %v2341 = vand.u32 %v1335, 4294901760
    %2342 = vmatprep.subr.mxu0 %v2341
    %v2343 = vand.u32 %v1334, 4294901760
    %2344 = vmatpush2.msra.mxu0 %v2343
    %v2345 = vand.u32 %v1331, 4294901760
    %2346 = vmatprep.subr.mxu0 %v2345
    %v2347 = vand.u32 %v1330, 4294901760
    %2348 = vmatpush2.msra.mxu0 %v2347
    %v2349 = vand.u32 %v1327, 4294901760
    %2350 = vmatprep.subr.mxu0 %v2349
    %v2351 = vand.u32 %v1326, 4294901760
    %2352 = vmatpush2.msra.mxu0 %v2351
    %v2353 = vand.u32 %v1323, 4294901760
    %2354 = vmatprep.subr.mxu0 %v2353
    %v2355 = vand.u32 %v1322, 4294901760
    %2356 = vmatpush2.msra.mxu0 %v2355
    %v2357 = vand.u32 %v1319, 4294901760
    %2358 = vmatprep.subr.mxu0 %v2357
    %v2359 = vand.u32 %v1318, 4294901760
    %2360 = vmatpush2.msra.mxu0 %v2359
    %v2361 = vand.u32 %v1315, 4294901760
    %2362 = vmatprep.subr.mxu0 %v2361
    %v2363 = vand.u32 %v1314, 4294901760
    %2364 = vmatpush2.msra.mxu0 %v2363
    %v2365 = vand.u32 %v1311, 4294901760
    %2366 = vmatprep.subr.mxu0 %v2365
    %v2367 = vand.u32 %v1310, 4294901760
    %2368 = vmatpush2.msra.mxu0 %v2367
    %v2369 = vand.u32 %v1307, 4294901760
    %2370 = vmatprep.subr.mxu0 %v2369
    %v2371 = vand.u32 %v1306, 4294901760
    %2372 = vmatpush2.msra.mxu0 %v2371
    %v2373 = vand.u32 %v1303, 4294901760
    %2374 = vmatprep.subr.mxu0 %v2373
    %v2375 = vand.u32 %v1302, 4294901760
    %2376 = vmatpush2.msra.mxu0 %v2375
    %v2377 = vand.u32 %v1299, 4294901760
    %2378 = vmatprep.subr.mxu0 %v2377
    %v2379 = vand.u32 %v1298, 4294901760
    %2380 = vmatpush2.msra.mxu0 %v2379
    %v2381 = vand.u32 %v1231, 4294901760
    %v2382 = vsub.f32 %v1231, %v2381
    %v2383 = vand.u32 %v2382, 4294901760
    %2384 = vmatprep.mubr.f32.mxu0 %v2383
    %v2385 = vand.u32 %v1230, 4294901760
    %v2386 = vsub.f32 %v1230, %v2385
    %v2387 = vand.u32 %v2386, 4294901760
    %2388 = vmatmul.mubr.f32.gmra.mxu0 %v2387
    %v2389 = vpop.f32.mrf.mxu0
    %v2390 = vadd.f32 %v2249, %v2389
    %v2391 = vpop.f32.mrf.mxu0
    %v2392 = vadd.f32 %v2251, %v2391
    %2393 = vdwg.mxu0
    %v2394 = vand.u32 %v1295, 4294901760
    %v2395 = vsub.f32 %v1295, %v2394
    %v2396 = vand.u32 %v2395, 4294901760
    %2397 = vmatprep.subr.mxu0 %v2396
    %v2398 = vand.u32 %v1294, 4294901760
    %v2399 = vsub.f32 %v1294, %v2398
    %v2400 = vand.u32 %v2399, 4294901760
    %2401 = vmatpush1.msra.mxu0 %v2400
    %v2402 = vand.u32 %v1291, 4294901760
    %v2403 = vsub.f32 %v1291, %v2402
    %v2404 = vand.u32 %v2403, 4294901760
    %2405 = vmatprep.subr.mxu0 %v2404
    %v2406 = vand.u32 %v1290, 4294901760
    %v2407 = vsub.f32 %v1290, %v2406
    %v2408 = vand.u32 %v2407, 4294901760
    %2409 = vmatpush1.msra.mxu0 %v2408
    %v2410 = vand.u32 %v1287, 4294901760
    %v2411 = vsub.f32 %v1287, %v2410
    %v2412 = vand.u32 %v2411, 4294901760
    %2413 = vmatprep.subr.mxu0 %v2412
    %v2414 = vand.u32 %v1286, 4294901760
    %v2415 = vsub.f32 %v1286, %v2414
    %v2416 = vand.u32 %v2415, 4294901760
    %2417 = vmatpush1.msra.mxu0 %v2416
    %v2418 = vand.u32 %v1283, 4294901760
    %v2419 = vsub.f32 %v1283, %v2418
    %v2420 = vand.u32 %v2419, 4294901760
    %2421 = vmatprep.subr.mxu0 %v2420
    %v2422 = vand.u32 %v1282, 4294901760
    %v2423 = vsub.f32 %v1282, %v2422
    %v2424 = vand.u32 %v2423, 4294901760
    %2425 = vmatpush1.msra.mxu0 %v2424
    %v2426 = vand.u32 %v1279, 4294901760
    %v2427 = vsub.f32 %v1279, %v2426
    %v2428 = vand.u32 %v2427, 4294901760
    %2429 = vmatprep.subr.mxu0 %v2428
    %v2430 = vand.u32 %v1278, 4294901760
    %v2431 = vsub.f32 %v1278, %v2430
    %v2432 = vand.u32 %v2431, 4294901760
    %2433 = vmatpush1.msra.mxu0 %v2432
    %v2434 = vand.u32 %v1275, 4294901760
    %v2435 = vsub.f32 %v1275, %v2434
    %v2436 = vand.u32 %v2435, 4294901760
    %2437 = vmatprep.subr.mxu0 %v2436
    %v2438 = vand.u32 %v1274, 4294901760
    %v2439 = vsub.f32 %v1274, %v2438
    %v2440 = vand.u32 %v2439, 4294901760
    %2441 = vmatpush1.msra.mxu0 %v2440
    %v2442 = vand.u32 %v1271, 4294901760
    %v2443 = vsub.f32 %v1271, %v2442
    %v2444 = vand.u32 %v2443, 4294901760
    %2445 = vmatprep.subr.mxu0 %v2444
    %v2446 = vand.u32 %v1270, 4294901760
    %v2447 = vsub.f32 %v1270, %v2446
    %v2448 = vand.u32 %v2447, 4294901760
    %2449 = vmatpush1.msra.mxu0 %v2448
    %v2450 = vand.u32 %v1267, 4294901760
    %v2451 = vsub.f32 %v1267, %v2450
    %v2452 = vand.u32 %v2451, 4294901760
    %2453 = vmatprep.subr.mxu0 %v2452
    %v2454 = vand.u32 %v1266, 4294901760
    %v2455 = vsub.f32 %v1266, %v2454
    %v2456 = vand.u32 %v2455, 4294901760
    %2457 = vmatpush1.msra.mxu0 %v2456
    %v2458 = vand.u32 %v1263, 4294901760
    %v2459 = vsub.f32 %v1263, %v2458
    %v2460 = vand.u32 %v2459, 4294901760
    %2461 = vmatprep.subr.mxu0 %v2460
    %v2462 = vand.u32 %v1262, 4294901760
    %v2463 = vsub.f32 %v1262, %v2462
    %v2464 = vand.u32 %v2463, 4294901760
    %2465 = vmatpush1.msra.mxu0 %v2464
    %v2466 = vand.u32 %v1259, 4294901760
    %v2467 = vsub.f32 %v1259, %v2466
    %v2468 = vand.u32 %v2467, 4294901760
    %2469 = vmatprep.subr.mxu0 %v2468
    %v2470 = vand.u32 %v1258, 4294901760
    %v2471 = vsub.f32 %v1258, %v2470
    %v2472 = vand.u32 %v2471, 4294901760
    %2473 = vmatpush1.msra.mxu0 %v2472
    %v2474 = vand.u32 %v1255, 4294901760
    %v2475 = vsub.f32 %v1255, %v2474
    %v2476 = vand.u32 %v2475, 4294901760
    %2477 = vmatprep.subr.mxu0 %v2476
    %v2478 = vand.u32 %v1254, 4294901760
    %v2479 = vsub.f32 %v1254, %v2478
    %v2480 = vand.u32 %v2479, 4294901760
    %2481 = vmatpush1.msra.mxu0 %v2480
    %v2482 = vand.u32 %v1251, 4294901760
    %v2483 = vsub.f32 %v1251, %v2482
    %v2484 = vand.u32 %v2483, 4294901760
    %2485 = vmatprep.subr.mxu0 %v2484
    %v2486 = vand.u32 %v1250, 4294901760
    %v2487 = vsub.f32 %v1250, %v2486
    %v2488 = vand.u32 %v2487, 4294901760
    %2489 = vmatpush1.msra.mxu0 %v2488
    %v2490 = vand.u32 %v1247, 4294901760
    %v2491 = vsub.f32 %v1247, %v2490
    %v2492 = vand.u32 %v2491, 4294901760
    %2493 = vmatprep.subr.mxu0 %v2492
    %v2494 = vand.u32 %v1246, 4294901760
    %v2495 = vsub.f32 %v1246, %v2494
    %v2496 = vand.u32 %v2495, 4294901760
    %2497 = vmatpush1.msra.mxu0 %v2496
    %v2498 = vand.u32 %v1243, 4294901760
    %v2499 = vsub.f32 %v1243, %v2498
    %v2500 = vand.u32 %v2499, 4294901760
    %2501 = vmatprep.subr.mxu0 %v2500
    %v2502 = vand.u32 %v1242, 4294901760
    %v2503 = vsub.f32 %v1242, %v2502
    %v2504 = vand.u32 %v2503, 4294901760
    %2505 = vmatpush1.msra.mxu0 %v2504
    %v2506 = vand.u32 %v1239, 4294901760
    %v2507 = vsub.f32 %v1239, %v2506
    %v2508 = vand.u32 %v2507, 4294901760
    %2509 = vmatprep.subr.mxu0 %v2508
    %v2510 = vand.u32 %v1238, 4294901760
    %v2511 = vsub.f32 %v1238, %v2510
    %v2512 = vand.u32 %v2511, 4294901760
    %2513 = vmatpush1.msra.mxu0 %v2512
    %v2514 = vand.u32 %v1235, 4294901760
    %v2515 = vsub.f32 %v1235, %v2514
    %v2516 = vand.u32 %v2515, 4294901760
    %2517 = vmatprep.subr.mxu0 %v2516
    %v2518 = vand.u32 %v1234, 4294901760
    %v2519 = vsub.f32 %v1234, %v2518
    %v2520 = vand.u32 %v2519, 4294901760
    %2521 = vmatpush1.msra.mxu0 %v2520
    %v2522 = vand.u32 %v1359, 4294901760
    %v2523 = vsub.f32 %v1359, %v2522
    %v2524 = vand.u32 %v2523, 4294901760
    %2525 = vmatprep.subr.mxu0 %v2524
    %v2526 = vand.u32 %v1358, 4294901760
    %v2527 = vsub.f32 %v1358, %v2526
    %v2528 = vand.u32 %v2527, 4294901760
    %2529 = vmatpush2.msra.mxu0 %v2528
    %v2530 = vand.u32 %v1355, 4294901760
    %v2531 = vsub.f32 %v1355, %v2530
    %v2532 = vand.u32 %v2531, 4294901760
    %2533 = vmatprep.subr.mxu0 %v2532
    %v2534 = vand.u32 %v1354, 4294901760
    %v2535 = vsub.f32 %v1354, %v2534
    %v2536 = vand.u32 %v2535, 4294901760
    %2537 = vmatpush2.msra.mxu0 %v2536
    %v2538 = vand.u32 %v1351, 4294901760
    %v2539 = vsub.f32 %v1351, %v2538
    %v2540 = vand.u32 %v2539, 4294901760
    %2541 = vmatprep.subr.mxu0 %v2540
    %v2542 = vand.u32 %v1350, 4294901760
    %v2543 = vsub.f32 %v1350, %v2542
    %v2544 = vand.u32 %v2543, 4294901760
    %2545 = vmatpush2.msra.mxu0 %v2544
    %v2546 = vand.u32 %v1347, 4294901760
    %v2547 = vsub.f32 %v1347, %v2546
    %v2548 = vand.u32 %v2547, 4294901760
    %2549 = vmatprep.subr.mxu0 %v2548
    %v2550 = vand.u32 %v1346, 4294901760
    %v2551 = vsub.f32 %v1346, %v2550
    %v2552 = vand.u32 %v2551, 4294901760
    %2553 = vmatpush2.msra.mxu0 %v2552
    %v2554 = vand.u32 %v1343, 4294901760
    %v2555 = vsub.f32 %v1343, %v2554
    %v2556 = vand.u32 %v2555, 4294901760
    %2557 = vmatprep.subr.mxu0 %v2556
    %v2558 = vand.u32 %v1342, 4294901760
    %v2559 = vsub.f32 %v1342, %v2558
    %v2560 = vand.u32 %v2559, 4294901760
    %2561 = vmatpush2.msra.mxu0 %v2560
    %v2562 = vand.u32 %v1339, 4294901760
    %v2563 = vsub.f32 %v1339, %v2562
    %v2564 = vand.u32 %v2563, 4294901760
    %2565 = vmatprep.subr.mxu0 %v2564
    %v2566 = vand.u32 %v1338, 4294901760
    %v2567 = vsub.f32 %v1338, %v2566
    %v2568 = vand.u32 %v2567, 4294901760
    %2569 = vmatpush2.msra.mxu0 %v2568
    %v2570 = vand.u32 %v1335, 4294901760
    %v2571 = vsub.f32 %v1335, %v2570
    %v2572 = vand.u32 %v2571, 4294901760
    %2573 = vmatprep.subr.mxu0 %v2572
    %v2574 = vand.u32 %v1334, 4294901760
    %v2575 = vsub.f32 %v1334, %v2574
    %v2576 = vand.u32 %v2575, 4294901760
    %2577 = vmatpush2.msra.mxu0 %v2576
    %v2578 = vand.u32 %v1331, 4294901760
    %v2579 = vsub.f32 %v1331, %v2578
    %v2580 = vand.u32 %v2579, 4294901760
    %2581 = vmatprep.subr.mxu0 %v2580
    %v2582 = vand.u32 %v1330, 4294901760
    %v2583 = vsub.f32 %v1330, %v2582
    %v2584 = vand.u32 %v2583, 4294901760
    %2585 = vmatpush2.msra.mxu0 %v2584
    %v2586 = vand.u32 %v1327, 4294901760
    %v2587 = vsub.f32 %v1327, %v2586
    %v2588 = vand.u32 %v2587, 4294901760
    %2589 = vmatprep.subr.mxu0 %v2588
    %v2590 = vand.u32 %v1326, 4294901760
    %v2591 = vsub.f32 %v1326, %v2590
    %v2592 = vand.u32 %v2591, 4294901760
    %2593 = vmatpush2.msra.mxu0 %v2592
    %v2594 = vand.u32 %v1323, 4294901760
    %v2595 = vsub.f32 %v1323, %v2594
    %v2596 = vand.u32 %v2595, 4294901760
    %2597 = vmatprep.subr.mxu0 %v2596
    %v2598 = vand.u32 %v1322, 4294901760
    %v2599 = vsub.f32 %v1322, %v2598
    %v2600 = vand.u32 %v2599, 4294901760
    %2601 = vmatpush2.msra.mxu0 %v2600
    %v2602 = vand.u32 %v1319, 4294901760
    %v2603 = vsub.f32 %v1319, %v2602
    %v2604 = vand.u32 %v2603, 4294901760
    %2605 = vmatprep.subr.mxu0 %v2604
    %v2606 = vand.u32 %v1318, 4294901760
    %v2607 = vsub.f32 %v1318, %v2606
    %v2608 = vand.u32 %v2607, 4294901760
    %2609 = vmatpush2.msra.mxu0 %v2608
    %v2610 = vand.u32 %v1315, 4294901760
    %v2611 = vsub.f32 %v1315, %v2610
    %v2612 = vand.u32 %v2611, 4294901760
    %2613 = vmatprep.subr.mxu0 %v2612
    %v2614 = vand.u32 %v1314, 4294901760
    %v2615 = vsub.f32 %v1314, %v2614
    %v2616 = vand.u32 %v2615, 4294901760
    %2617 = vmatpush2.msra.mxu0 %v2616
    %v2618 = vand.u32 %v1311, 4294901760
    %v2619 = vsub.f32 %v1311, %v2618
    %v2620 = vand.u32 %v2619, 4294901760
    %2621 = vmatprep.subr.mxu0 %v2620
    %v2622 = vand.u32 %v1310, 4294901760
    %v2623 = vsub.f32 %v1310, %v2622
    %v2624 = vand.u32 %v2623, 4294901760
    %2625 = vmatpush2.msra.mxu0 %v2624
    %v2626 = vand.u32 %v1307, 4294901760
    %v2627 = vsub.f32 %v1307, %v2626
    %v2628 = vand.u32 %v2627, 4294901760
    %2629 = vmatprep.subr.mxu0 %v2628
    %v2630 = vand.u32 %v1306, 4294901760
    %v2631 = vsub.f32 %v1306, %v2630
    %v2632 = vand.u32 %v2631, 4294901760
    %2633 = vmatpush2.msra.mxu0 %v2632
    %v2634 = vand.u32 %v1303, 4294901760
    %v2635 = vsub.f32 %v1303, %v2634
    %v2636 = vand.u32 %v2635, 4294901760
    %2637 = vmatprep.subr.mxu0 %v2636
    %v2638 = vand.u32 %v1302, 4294901760
    %v2639 = vsub.f32 %v1302, %v2638
    %v2640 = vand.u32 %v2639, 4294901760
    %2641 = vmatpush2.msra.mxu0 %v2640
    %v2642 = vand.u32 %v1299, 4294901760
    %v2643 = vsub.f32 %v1299, %v2642
    %v2644 = vand.u32 %v2643, 4294901760
    %2645 = vmatprep.subr.mxu0 %v2644
    %v2646 = vand.u32 %v1298, 4294901760
    %v2647 = vsub.f32 %v1298, %v2646
    %v2648 = vand.u32 %v2647, 4294901760
    %2649 = vmatpush2.msra.mxu0 %v2648
    %v2650 = vand.u32 %v1231, 4294901760
    %2651 = vmatprep.mubr.f32.mxu0 %v2650
    %v2652 = vand.u32 %v1230, 4294901760
    %2653 = vmatmul.mubr.f32.gmra.mxu0 %v2652
    %v2654 = vpop.f32.mrf.mxu0
    %v2655 = vadd.f32 %v2390, %v2654
    %v2656 = vpop.f32.mrf.mxu0
    %v2657 = vadd.f32 %v2392, %v2656
    %2658 = vdwg.mxu0
    %v2659 = vand.u32 %v1295, 4294901760
    %2660 = vmatprep.subr.mxu0 %v2659
    %v2661 = vand.u32 %v1294, 4294901760
    %2662 = vmatpush1.msra.mxu0 %v2661
    %v2663 = vand.u32 %v1291, 4294901760
    %2664 = vmatprep.subr.mxu0 %v2663
    %v2665 = vand.u32 %v1290, 4294901760
    %2666 = vmatpush1.msra.mxu0 %v2665
    %v2667 = vand.u32 %v1287, 4294901760
    %2668 = vmatprep.subr.mxu0 %v2667
    %v2669 = vand.u32 %v1286, 4294901760
    %2670 = vmatpush1.msra.mxu0 %v2669
    %v2671 = vand.u32 %v1283, 4294901760
    %2672 = vmatprep.subr.mxu0 %v2671
    %v2673 = vand.u32 %v1282, 4294901760
    %2674 = vmatpush1.msra.mxu0 %v2673
    %v2675 = vand.u32 %v1279, 4294901760
    %2676 = vmatprep.subr.mxu0 %v2675
    %v2677 = vand.u32 %v1278, 4294901760
    %2678 = vmatpush1.msra.mxu0 %v2677
    %v2679 = vand.u32 %v1275, 4294901760
    %2680 = vmatprep.subr.mxu0 %v2679
    %v2681 = vand.u32 %v1274, 4294901760
    %2682 = vmatpush1.msra.mxu0 %v2681
    %v2683 = vand.u32 %v1271, 4294901760
    %2684 = vmatprep.subr.mxu0 %v2683
    %v2685 = vand.u32 %v1270, 4294901760
    %2686 = vmatpush1.msra.mxu0 %v2685
    %v2687 = vand.u32 %v1267, 4294901760
    %2688 = vmatprep.subr.mxu0 %v2687
    %v2689 = vand.u32 %v1266, 4294901760
    %2690 = vmatpush1.msra.mxu0 %v2689
    %v2691 = vand.u32 %v1263, 4294901760
    %2692 = vmatprep.subr.mxu0 %v2691
    %v2693 = vand.u32 %v1262, 4294901760
    %2694 = vmatpush1.msra.mxu0 %v2693
    %v2695 = vand.u32 %v1259, 4294901760
    %2696 = vmatprep.subr.mxu0 %v2695
    %v2697 = vand.u32 %v1258, 4294901760
    %2698 = vmatpush1.msra.mxu0 %v2697
    %v2699 = vand.u32 %v1255, 4294901760
    %2700 = vmatprep.subr.mxu0 %v2699
    %v2701 = vand.u32 %v1254, 4294901760
    %2702 = vmatpush1.msra.mxu0 %v2701
    %v2703 = vand.u32 %v1251, 4294901760
    %2704 = vmatprep.subr.mxu0 %v2703
    %v2705 = vand.u32 %v1250, 4294901760
    %2706 = vmatpush1.msra.mxu0 %v2705
    %v2707 = vand.u32 %v1247, 4294901760
    %2708 = vmatprep.subr.mxu0 %v2707
    %v2709 = vand.u32 %v1246, 4294901760
    %2710 = vmatpush1.msra.mxu0 %v2709
    %v2711 = vand.u32 %v1243, 4294901760
    %2712 = vmatprep.subr.mxu0 %v2711
    %v2713 = vand.u32 %v1242, 4294901760
    %2714 = vmatpush1.msra.mxu0 %v2713
    %v2715 = vand.u32 %v1239, 4294901760
    %2716 = vmatprep.subr.mxu0 %v2715
    %v2717 = vand.u32 %v1238, 4294901760
    %2718 = vmatpush1.msra.mxu0 %v2717
    %v2719 = vand.u32 %v1235, 4294901760
    %2720 = vmatprep.subr.mxu0 %v2719
    %v2721 = vand.u32 %v1234, 4294901760
    %2722 = vmatpush1.msra.mxu0 %v2721
    %v2723 = vand.u32 %v1359, 4294901760
    %2724 = vmatprep.subr.mxu0 %v2723
    %v2725 = vand.u32 %v1358, 4294901760
    %2726 = vmatpush2.msra.mxu0 %v2725
    %v2727 = vand.u32 %v1355, 4294901760
    %2728 = vmatprep.subr.mxu0 %v2727
    %v2729 = vand.u32 %v1354, 4294901760
    %2730 = vmatpush2.msra.mxu0 %v2729
    %v2731 = vand.u32 %v1351, 4294901760
    %2732 = vmatprep.subr.mxu0 %v2731
    %v2733 = vand.u32 %v1350, 4294901760
    %2734 = vmatpush2.msra.mxu0 %v2733
    %v2735 = vand.u32 %v1347, 4294901760
    %2736 = vmatprep.subr.mxu0 %v2735
    %v2737 = vand.u32 %v1346, 4294901760
    %2738 = vmatpush2.msra.mxu0 %v2737
    %v2739 = vand.u32 %v1343, 4294901760
    %2740 = vmatprep.subr.mxu0 %v2739
    %v2741 = vand.u32 %v1342, 4294901760
    %2742 = vmatpush2.msra.mxu0 %v2741
    %v2743 = vand.u32 %v1339, 4294901760
    %2744 = vmatprep.subr.mxu0 %v2743
    %v2745 = vand.u32 %v1338, 4294901760
    %2746 = vmatpush2.msra.mxu0 %v2745
    %v2747 = vand.u32 %v1335, 4294901760
    %2748 = vmatprep.subr.mxu0 %v2747
    %v2749 = vand.u32 %v1334, 4294901760
    %2750 = vmatpush2.msra.mxu0 %v2749
    %v2751 = vand.u32 %v1331, 4294901760
    %2752 = vmatprep.subr.mxu0 %v2751
    %v2753 = vand.u32 %v1330, 4294901760
    %2754 = vmatpush2.msra.mxu0 %v2753
    %v2755 = vand.u32 %v1327, 4294901760
    %2756 = vmatprep.subr.mxu0 %v2755
    %v2757 = vand.u32 %v1326, 4294901760
    %2758 = vmatpush2.msra.mxu0 %v2757
    %v2759 = vand.u32 %v1323, 4294901760
    %2760 = vmatprep.subr.mxu0 %v2759
    %v2761 = vand.u32 %v1322, 4294901760
    %2762 = vmatpush2.msra.mxu0 %v2761
    %v2763 = vand.u32 %v1319, 4294901760
    %2764 = vmatprep.subr.mxu0 %v2763
    %v2765 = vand.u32 %v1318, 4294901760
    %2766 = vmatpush2.msra.mxu0 %v2765
    %v2767 = vand.u32 %v1315, 4294901760
    %2768 = vmatprep.subr.mxu0 %v2767
    %v2769 = vand.u32 %v1314, 4294901760
    %2770 = vmatpush2.msra.mxu0 %v2769
    %v2771 = vand.u32 %v1311, 4294901760
    %2772 = vmatprep.subr.mxu0 %v2771
    %v2773 = vand.u32 %v1310, 4294901760
    %2774 = vmatpush2.msra.mxu0 %v2773
    %v2775 = vand.u32 %v1307, 4294901760
    %2776 = vmatprep.subr.mxu0 %v2775
    %v2777 = vand.u32 %v1306, 4294901760
    %2778 = vmatpush2.msra.mxu0 %v2777
    %v2779 = vand.u32 %v1303, 4294901760
    %2780 = vmatprep.subr.mxu0 %v2779
    %v2781 = vand.u32 %v1302, 4294901760
    %2782 = vmatpush2.msra.mxu0 %v2781
    %v2783 = vand.u32 %v1299, 4294901760
    %2784 = vmatprep.subr.mxu0 %v2783
    %v2785 = vand.u32 %v1298, 4294901760
    %2786 = vmatpush2.msra.mxu0 %v2785
    %v2787 = vand.u32 %v1231, 4294901760
    %2788 = vmatprep.mubr.f32.mxu0 %v2787
    %v2789 = vand.u32 %v1230, 4294901760
    %2790 = vmatmul.mubr.f32.gmra.mxu0 %v2789
    %v2791 = vpop.f32.mrf.mxu0
    %v2792 = vadd.f32 %v2655, %v2791
    %v2793 = vpop.f32.mrf.mxu0
    %v2794 = vadd.f32 %v2657, %v2793
    %2795 = vdwg.mxu0
    %v2796 = vand.u32 %v1423, 4294901760
    %2797 = vmatprep.subr.mxu0 %v2796
    %v2798 = vand.u32 %v1422, 4294901760
    %2799 = vmatpush1.msra.mxu0 %v2798
    %v2800 = vand.u32 %v1419, 4294901760
    %2801 = vmatprep.subr.mxu0 %v2800
    %v2802 = vand.u32 %v1418, 4294901760
    %2803 = vmatpush1.msra.mxu0 %v2802
    %v2804 = vand.u32 %v1415, 4294901760
    %2805 = vmatprep.subr.mxu0 %v2804
    %v2806 = vand.u32 %v1414, 4294901760
    %2807 = vmatpush1.msra.mxu0 %v2806
    %v2808 = vand.u32 %v1411, 4294901760
    %2809 = vmatprep.subr.mxu0 %v2808
    %v2810 = vand.u32 %v1410, 4294901760
    %2811 = vmatpush1.msra.mxu0 %v2810
    %v2812 = vand.u32 %v1407, 4294901760
    %2813 = vmatprep.subr.mxu0 %v2812
    %v2814 = vand.u32 %v1406, 4294901760
    %2815 = vmatpush1.msra.mxu0 %v2814
    %v2816 = vand.u32 %v1403, 4294901760
    %2817 = vmatprep.subr.mxu0 %v2816
    %v2818 = vand.u32 %v1402, 4294901760
    %2819 = vmatpush1.msra.mxu0 %v2818
    %v2820 = vand.u32 %v1399, 4294901760
    %2821 = vmatprep.subr.mxu0 %v2820
    %v2822 = vand.u32 %v1398, 4294901760
    %2823 = vmatpush1.msra.mxu0 %v2822
    %v2824 = vand.u32 %v1395, 4294901760
    %2825 = vmatprep.subr.mxu0 %v2824
    %v2826 = vand.u32 %v1394, 4294901760
    %2827 = vmatpush1.msra.mxu0 %v2826
    %v2828 = vand.u32 %v1391, 4294901760
    %2829 = vmatprep.subr.mxu0 %v2828
    %v2830 = vand.u32 %v1390, 4294901760
    %2831 = vmatpush1.msra.mxu0 %v2830
    %v2832 = vand.u32 %v1387, 4294901760
    %2833 = vmatprep.subr.mxu0 %v2832
    %v2834 = vand.u32 %v1386, 4294901760
    %2835 = vmatpush1.msra.mxu0 %v2834
    %v2836 = vand.u32 %v1383, 4294901760
    %2837 = vmatprep.subr.mxu0 %v2836
    %v2838 = vand.u32 %v1382, 4294901760
    %2839 = vmatpush1.msra.mxu0 %v2838
    %v2840 = vand.u32 %v1379, 4294901760
    %2841 = vmatprep.subr.mxu0 %v2840
    %v2842 = vand.u32 %v1378, 4294901760
    %2843 = vmatpush1.msra.mxu0 %v2842
    %v2844 = vand.u32 %v1375, 4294901760
    %2845 = vmatprep.subr.mxu0 %v2844
    %v2846 = vand.u32 %v1374, 4294901760
    %2847 = vmatpush1.msra.mxu0 %v2846
    %v2848 = vand.u32 %v1371, 4294901760
    %2849 = vmatprep.subr.mxu0 %v2848
    %v2850 = vand.u32 %v1370, 4294901760
    %2851 = vmatpush1.msra.mxu0 %v2850
    %v2852 = vand.u32 %v1367, 4294901760
    %2853 = vmatprep.subr.mxu0 %v2852
    %v2854 = vand.u32 %v1366, 4294901760
    %2855 = vmatpush1.msra.mxu0 %v2854
    %v2856 = vand.u32 %v1363, 4294901760
    %2857 = vmatprep.subr.mxu0 %v2856
    %v2858 = vand.u32 %v1362, 4294901760
    %2859 = vmatpush1.msra.mxu0 %v2858
    %v2860 = vand.u32 %v1487, 4294901760
    %2861 = vmatprep.subr.mxu0 %v2860
    %v2862 = vand.u32 %v1486, 4294901760
    %2863 = vmatpush2.msra.mxu0 %v2862
    %v2864 = vand.u32 %v1483, 4294901760
    %2865 = vmatprep.subr.mxu0 %v2864
    %v2866 = vand.u32 %v1482, 4294901760
    %2867 = vmatpush2.msra.mxu0 %v2866
    %v2868 = vand.u32 %v1479, 4294901760
    %2869 = vmatprep.subr.mxu0 %v2868
    %v2870 = vand.u32 %v1478, 4294901760
    %2871 = vmatpush2.msra.mxu0 %v2870
    %v2872 = vand.u32 %v1475, 4294901760
    %2873 = vmatprep.subr.mxu0 %v2872
    %v2874 = vand.u32 %v1474, 4294901760
    %2875 = vmatpush2.msra.mxu0 %v2874
    %v2876 = vand.u32 %v1471, 4294901760
    %2877 = vmatprep.subr.mxu0 %v2876
    %v2878 = vand.u32 %v1470, 4294901760
    %2879 = vmatpush2.msra.mxu0 %v2878
    %v2880 = vand.u32 %v1467, 4294901760
    %2881 = vmatprep.subr.mxu0 %v2880
    %v2882 = vand.u32 %v1466, 4294901760
    %2883 = vmatpush2.msra.mxu0 %v2882
    %v2884 = vand.u32 %v1463, 4294901760
    %2885 = vmatprep.subr.mxu0 %v2884
    %v2886 = vand.u32 %v1462, 4294901760
    %2887 = vmatpush2.msra.mxu0 %v2886
    %v2888 = vand.u32 %v1459, 4294901760
    %2889 = vmatprep.subr.mxu0 %v2888
    %v2890 = vand.u32 %v1458, 4294901760
    %2891 = vmatpush2.msra.mxu0 %v2890
    %v2892 = vand.u32 %v1455, 4294901760
    %2893 = vmatprep.subr.mxu0 %v2892
    %v2894 = vand.u32 %v1454, 4294901760
    %2895 = vmatpush2.msra.mxu0 %v2894
    %v2896 = vand.u32 %v1451, 4294901760
    %2897 = vmatprep.subr.mxu0 %v2896
    %v2898 = vand.u32 %v1450, 4294901760
    %2899 = vmatpush2.msra.mxu0 %v2898
    %v2900 = vand.u32 %v1447, 4294901760
    %2901 = vmatprep.subr.mxu0 %v2900
    %v2902 = vand.u32 %v1446, 4294901760
    %2903 = vmatpush2.msra.mxu0 %v2902
    %v2904 = vand.u32 %v1443, 4294901760
    %2905 = vmatprep.subr.mxu0 %v2904
    %v2906 = vand.u32 %v1442, 4294901760
    %2907 = vmatpush2.msra.mxu0 %v2906
    %v2908 = vand.u32 %v1439, 4294901760
    %2909 = vmatprep.subr.mxu0 %v2908
    %v2910 = vand.u32 %v1438, 4294901760
    %2911 = vmatpush2.msra.mxu0 %v2910
    %v2912 = vand.u32 %v1435, 4294901760
    %2913 = vmatprep.subr.mxu0 %v2912
    %v2914 = vand.u32 %v1434, 4294901760
    %2915 = vmatpush2.msra.mxu0 %v2914
    %v2916 = vand.u32 %v1431, 4294901760
    %2917 = vmatprep.subr.mxu0 %v2916
    %v2918 = vand.u32 %v1430, 4294901760
    %2919 = vmatpush2.msra.mxu0 %v2918
    %v2920 = vand.u32 %v1427, 4294901760
    %2921 = vmatprep.subr.mxu0 %v2920
    %v2922 = vand.u32 %v1426, 4294901760
    %2923 = vmatpush2.msra.mxu0 %v2922
    %v2924 = vand.u32 %v1233, 4294901760
    %v2925 = vsub.f32 %v1233, %v2924
    %v2926 = vand.u32 %v2925, 4294901760
    %v2927 = vsub.f32 %v2925, %v2926
    %v2928 = vand.u32 %v2927, 4294901760
    %2929 = vmatprep.mubr.f32.mxu0 %v2928
    %v2930 = vand.u32 %v1232, 4294901760
    %v2931 = vsub.f32 %v1232, %v2930
    %v2932 = vand.u32 %v2931, 4294901760
    %v2933 = vsub.f32 %v2931, %v2932
    %v2934 = vand.u32 %v2933, 4294901760
    %2935 = vmatmul.mubr.f32.gmra.mxu0 %v2934
    %v2936 = vpop.f32.mrf.mxu0
    %v2937 = vadd.f32 %v2792, %v2936
    %v2938 = vpop.f32.mrf.mxu0
    %v2939 = vadd.f32 %v2794, %v2938
    %2940 = vdwg.mxu0
    %v2941 = vand.u32 %v1423, 4294901760
    %v2942 = vsub.f32 %v1423, %v2941
    %v2943 = vand.u32 %v2942, 4294901760
    %v2944 = vsub.f32 %v2942, %v2943
    %v2945 = vand.u32 %v2944, 4294901760
    %2946 = vmatprep.subr.mxu0 %v2945
    %v2947 = vand.u32 %v1422, 4294901760
    %v2948 = vsub.f32 %v1422, %v2947
    %v2949 = vand.u32 %v2948, 4294901760
    %v2950 = vsub.f32 %v2948, %v2949
    %v2951 = vand.u32 %v2950, 4294901760
    %2952 = vmatpush1.msra.mxu0 %v2951
    %v2953 = vand.u32 %v1419, 4294901760
    %v2954 = vsub.f32 %v1419, %v2953
    %v2955 = vand.u32 %v2954, 4294901760
    %v2956 = vsub.f32 %v2954, %v2955
    %v2957 = vand.u32 %v2956, 4294901760
    %2958 = vmatprep.subr.mxu0 %v2957
    %v2959 = vand.u32 %v1418, 4294901760
    %v2960 = vsub.f32 %v1418, %v2959
    %v2961 = vand.u32 %v2960, 4294901760
    %v2962 = vsub.f32 %v2960, %v2961
    %v2963 = vand.u32 %v2962, 4294901760
    %2964 = vmatpush1.msra.mxu0 %v2963
    %v2965 = vand.u32 %v1415, 4294901760
    %v2966 = vsub.f32 %v1415, %v2965
    %v2967 = vand.u32 %v2966, 4294901760
    %v2968 = vsub.f32 %v2966, %v2967
    %v2969 = vand.u32 %v2968, 4294901760
    %2970 = vmatprep.subr.mxu0 %v2969
    %v2971 = vand.u32 %v1414, 4294901760
    %v2972 = vsub.f32 %v1414, %v2971
    %v2973 = vand.u32 %v2972, 4294901760
    %v2974 = vsub.f32 %v2972, %v2973
    %v2975 = vand.u32 %v2974, 4294901760
    %2976 = vmatpush1.msra.mxu0 %v2975
    %v2977 = vand.u32 %v1411, 4294901760
    %v2978 = vsub.f32 %v1411, %v2977
    %v2979 = vand.u32 %v2978, 4294901760
    %v2980 = vsub.f32 %v2978, %v2979
    %v2981 = vand.u32 %v2980, 4294901760
    %2982 = vmatprep.subr.mxu0 %v2981
    %v2983 = vand.u32 %v1410, 4294901760
    %v2984 = vsub.f32 %v1410, %v2983
    %v2985 = vand.u32 %v2984, 4294901760
    %v2986 = vsub.f32 %v2984, %v2985
    %v2987 = vand.u32 %v2986, 4294901760
    %2988 = vmatpush1.msra.mxu0 %v2987
    %v2989 = vand.u32 %v1407, 4294901760
    %v2990 = vsub.f32 %v1407, %v2989
    %v2991 = vand.u32 %v2990, 4294901760
    %v2992 = vsub.f32 %v2990, %v2991
    %v2993 = vand.u32 %v2992, 4294901760
    %2994 = vmatprep.subr.mxu0 %v2993
    %v2995 = vand.u32 %v1406, 4294901760
    %v2996 = vsub.f32 %v1406, %v2995
    %v2997 = vand.u32 %v2996, 4294901760
    %v2998 = vsub.f32 %v2996, %v2997
    %v2999 = vand.u32 %v2998, 4294901760
    %3000 = vmatpush1.msra.mxu0 %v2999
    %v3001 = vand.u32 %v1403, 4294901760
    %v3002 = vsub.f32 %v1403, %v3001
    %v3003 = vand.u32 %v3002, 4294901760
    %v3004 = vsub.f32 %v3002, %v3003
    %v3005 = vand.u32 %v3004, 4294901760
    %3006 = vmatprep.subr.mxu0 %v3005
    %v3007 = vand.u32 %v1402, 4294901760
    %v3008 = vsub.f32 %v1402, %v3007
    %v3009 = vand.u32 %v3008, 4294901760
    %v3010 = vsub.f32 %v3008, %v3009
    %v3011 = vand.u32 %v3010, 4294901760
    %3012 = vmatpush1.msra.mxu0 %v3011
    %v3013 = vand.u32 %v1399, 4294901760
    %v3014 = vsub.f32 %v1399, %v3013
    %v3015 = vand.u32 %v3014, 4294901760
    %v3016 = vsub.f32 %v3014, %v3015
    %v3017 = vand.u32 %v3016, 4294901760
    %3018 = vmatprep.subr.mxu0 %v3017
    %v3019 = vand.u32 %v1398, 4294901760
    %v3020 = vsub.f32 %v1398, %v3019
    %v3021 = vand.u32 %v3020, 4294901760
    %v3022 = vsub.f32 %v3020, %v3021
    %v3023 = vand.u32 %v3022, 4294901760
    %3024 = vmatpush1.msra.mxu0 %v3023
    %v3025 = vand.u32 %v1395, 4294901760
    %v3026 = vsub.f32 %v1395, %v3025
    %v3027 = vand.u32 %v3026, 4294901760
    %v3028 = vsub.f32 %v3026, %v3027
    %v3029 = vand.u32 %v3028, 4294901760
    %3030 = vmatprep.subr.mxu0 %v3029
    %v3031 = vand.u32 %v1394, 4294901760
    %v3032 = vsub.f32 %v1394, %v3031
    %v3033 = vand.u32 %v3032, 4294901760
    %v3034 = vsub.f32 %v3032, %v3033
    %v3035 = vand.u32 %v3034, 4294901760
    %3036 = vmatpush1.msra.mxu0 %v3035
    %v3037 = vand.u32 %v1391, 4294901760
    %v3038 = vsub.f32 %v1391, %v3037
    %v3039 = vand.u32 %v3038, 4294901760
    %v3040 = vsub.f32 %v3038, %v3039
    %v3041 = vand.u32 %v3040, 4294901760
    %3042 = vmatprep.subr.mxu0 %v3041
    %v3043 = vand.u32 %v1390, 4294901760
    %v3044 = vsub.f32 %v1390, %v3043
    %v3045 = vand.u32 %v3044, 4294901760
    %v3046 = vsub.f32 %v3044, %v3045
    %v3047 = vand.u32 %v3046, 4294901760
    %3048 = vmatpush1.msra.mxu0 %v3047
    %v3049 = vand.u32 %v1387, 4294901760
    %v3050 = vsub.f32 %v1387, %v3049
    %v3051 = vand.u32 %v3050, 4294901760
    %v3052 = vsub.f32 %v3050, %v3051
    %v3053 = vand.u32 %v3052, 4294901760
    %3054 = vmatprep.subr.mxu0 %v3053
    %v3055 = vand.u32 %v1386, 4294901760
    %v3056 = vsub.f32 %v1386, %v3055
    %v3057 = vand.u32 %v3056, 4294901760
    %v3058 = vsub.f32 %v3056, %v3057
    %v3059 = vand.u32 %v3058, 4294901760
    %3060 = vmatpush1.msra.mxu0 %v3059
    %v3061 = vand.u32 %v1383, 4294901760
    %v3062 = vsub.f32 %v1383, %v3061
    %v3063 = vand.u32 %v3062, 4294901760
    %v3064 = vsub.f32 %v3062, %v3063
    %v3065 = vand.u32 %v3064, 4294901760
    %3066 = vmatprep.subr.mxu0 %v3065
    %v3067 = vand.u32 %v1382, 4294901760
    %v3068 = vsub.f32 %v1382, %v3067
    %v3069 = vand.u32 %v3068, 4294901760
    %v3070 = vsub.f32 %v3068, %v3069
    %v3071 = vand.u32 %v3070, 4294901760
    %3072 = vmatpush1.msra.mxu0 %v3071
    %v3073 = vand.u32 %v1379, 4294901760
    %v3074 = vsub.f32 %v1379, %v3073
    %v3075 = vand.u32 %v3074, 4294901760
    %v3076 = vsub.f32 %v3074, %v3075
    %v3077 = vand.u32 %v3076, 4294901760
    %3078 = vmatprep.subr.mxu0 %v3077
    %v3079 = vand.u32 %v1378, 4294901760
    %v3080 = vsub.f32 %v1378, %v3079
    %v3081 = vand.u32 %v3080, 4294901760
    %v3082 = vsub.f32 %v3080, %v3081
    %v3083 = vand.u32 %v3082, 4294901760
    %3084 = vmatpush1.msra.mxu0 %v3083
    %v3085 = vand.u32 %v1375, 4294901760
    %v3086 = vsub.f32 %v1375, %v3085
    %v3087 = vand.u32 %v3086, 4294901760
    %v3088 = vsub.f32 %v3086, %v3087
    %v3089 = vand.u32 %v3088, 4294901760
    %3090 = vmatprep.subr.mxu0 %v3089
    %v3091 = vand.u32 %v1374, 4294901760
    %v3092 = vsub.f32 %v1374, %v3091
    %v3093 = vand.u32 %v3092, 4294901760
    %v3094 = vsub.f32 %v3092, %v3093
    %v3095 = vand.u32 %v3094, 4294901760
    %3096 = vmatpush1.msra.mxu0 %v3095
    %v3097 = vand.u32 %v1371, 4294901760
    %v3098 = vsub.f32 %v1371, %v3097
    %v3099 = vand.u32 %v3098, 4294901760
    %v3100 = vsub.f32 %v3098, %v3099
    %v3101 = vand.u32 %v3100, 4294901760
    %3102 = vmatprep.subr.mxu0 %v3101
    %v3103 = vand.u32 %v1370, 4294901760
    %v3104 = vsub.f32 %v1370, %v3103
    %v3105 = vand.u32 %v3104, 4294901760
    %v3106 = vsub.f32 %v3104, %v3105
    %v3107 = vand.u32 %v3106, 4294901760
    %3108 = vmatpush1.msra.mxu0 %v3107
    %v3109 = vand.u32 %v1367, 4294901760
    %v3110 = vsub.f32 %v1367, %v3109
    %v3111 = vand.u32 %v3110, 4294901760
    %v3112 = vsub.f32 %v3110, %v3111
    %v3113 = vand.u32 %v3112, 4294901760
    %3114 = vmatprep.subr.mxu0 %v3113
    %v3115 = vand.u32 %v1366, 4294901760
    %v3116 = vsub.f32 %v1366, %v3115
    %v3117 = vand.u32 %v3116, 4294901760
    %v3118 = vsub.f32 %v3116, %v3117
    %v3119 = vand.u32 %v3118, 4294901760
    %3120 = vmatpush1.msra.mxu0 %v3119
    %v3121 = vand.u32 %v1363, 4294901760
    %v3122 = vsub.f32 %v1363, %v3121
    %v3123 = vand.u32 %v3122, 4294901760
    %v3124 = vsub.f32 %v3122, %v3123
    %v3125 = vand.u32 %v3124, 4294901760
    %3126 = vmatprep.subr.mxu0 %v3125
    %v3127 = vand.u32 %v1362, 4294901760
    %v3128 = vsub.f32 %v1362, %v3127
    %v3129 = vand.u32 %v3128, 4294901760
    %v3130 = vsub.f32 %v3128, %v3129
    %v3131 = vand.u32 %v3130, 4294901760
    %3132 = vmatpush1.msra.mxu0 %v3131
    %v3133 = vand.u32 %v1487, 4294901760
    %v3134 = vsub.f32 %v1487, %v3133
    %v3135 = vand.u32 %v3134, 4294901760
    %v3136 = vsub.f32 %v3134, %v3135
    %v3137 = vand.u32 %v3136, 4294901760
    %3138 = vmatprep.subr.mxu0 %v3137
    %v3139 = vand.u32 %v1486, 4294901760
    %v3140 = vsub.f32 %v1486, %v3139
    %v3141 = vand.u32 %v3140, 4294901760
    %v3142 = vsub.f32 %v3140, %v3141
    %v3143 = vand.u32 %v3142, 4294901760
    %3144 = vmatpush2.msra.mxu0 %v3143
    %v3145 = vand.u32 %v1483, 4294901760
    %v3146 = vsub.f32 %v1483, %v3145
    %v3147 = vand.u32 %v3146, 4294901760
    %v3148 = vsub.f32 %v3146, %v3147
    %v3149 = vand.u32 %v3148, 4294901760
    %3150 = vmatprep.subr.mxu0 %v3149
    %v3151 = vand.u32 %v1482, 4294901760
    %v3152 = vsub.f32 %v1482, %v3151
    %v3153 = vand.u32 %v3152, 4294901760
    %v3154 = vsub.f32 %v3152, %v3153
    %v3155 = vand.u32 %v3154, 4294901760
    %3156 = vmatpush2.msra.mxu0 %v3155
    %v3157 = vand.u32 %v1479, 4294901760
    %v3158 = vsub.f32 %v1479, %v3157
    %v3159 = vand.u32 %v3158, 4294901760
    %v3160 = vsub.f32 %v3158, %v3159
    %v3161 = vand.u32 %v3160, 4294901760
    %3162 = vmatprep.subr.mxu0 %v3161
    %v3163 = vand.u32 %v1478, 4294901760
    %v3164 = vsub.f32 %v1478, %v3163
    %v3165 = vand.u32 %v3164, 4294901760
    %v3166 = vsub.f32 %v3164, %v3165
    %v3167 = vand.u32 %v3166, 4294901760
    %3168 = vmatpush2.msra.mxu0 %v3167
    %v3169 = vand.u32 %v1475, 4294901760
    %v3170 = vsub.f32 %v1475, %v3169
    %v3171 = vand.u32 %v3170, 4294901760
    %v3172 = vsub.f32 %v3170, %v3171
    %v3173 = vand.u32 %v3172, 4294901760
    %3174 = vmatprep.subr.mxu0 %v3173
    %v3175 = vand.u32 %v1474, 4294901760
    %v3176 = vsub.f32 %v1474, %v3175
    %v3177 = vand.u32 %v3176, 4294901760
    %v3178 = vsub.f32 %v3176, %v3177
    %v3179 = vand.u32 %v3178, 4294901760
    %3180 = vmatpush2.msra.mxu0 %v3179
    %v3181 = vand.u32 %v1471, 4294901760
    %v3182 = vsub.f32 %v1471, %v3181
    %v3183 = vand.u32 %v3182, 4294901760
    %v3184 = vsub.f32 %v3182, %v3183
    %v3185 = vand.u32 %v3184, 4294901760
    %3186 = vmatprep.subr.mxu0 %v3185
    %v3187 = vand.u32 %v1470, 4294901760
    %v3188 = vsub.f32 %v1470, %v3187
    %v3189 = vand.u32 %v3188, 4294901760
    %v3190 = vsub.f32 %v3188, %v3189
    %v3191 = vand.u32 %v3190, 4294901760
    %3192 = vmatpush2.msra.mxu0 %v3191
    %v3193 = vand.u32 %v1467, 4294901760
    %v3194 = vsub.f32 %v1467, %v3193
    %v3195 = vand.u32 %v3194, 4294901760
    %v3196 = vsub.f32 %v3194, %v3195
    %v3197 = vand.u32 %v3196, 4294901760
    %3198 = vmatprep.subr.mxu0 %v3197
    %v3199 = vand.u32 %v1466, 4294901760
    %v3200 = vsub.f32 %v1466, %v3199
    %v3201 = vand.u32 %v3200, 4294901760
    %v3202 = vsub.f32 %v3200, %v3201
    %v3203 = vand.u32 %v3202, 4294901760
    %3204 = vmatpush2.msra.mxu0 %v3203
    %v3205 = vand.u32 %v1463, 4294901760
    %v3206 = vsub.f32 %v1463, %v3205
    %v3207 = vand.u32 %v3206, 4294901760
    %v3208 = vsub.f32 %v3206, %v3207
    %v3209 = vand.u32 %v3208, 4294901760
    %3210 = vmatprep.subr.mxu0 %v3209
    %v3211 = vand.u32 %v1462, 4294901760
    %v3212 = vsub.f32 %v1462, %v3211
    %v3213 = vand.u32 %v3212, 4294901760
    %v3214 = vsub.f32 %v3212, %v3213
    %v3215 = vand.u32 %v3214, 4294901760
    %3216 = vmatpush2.msra.mxu0 %v3215
    %v3217 = vand.u32 %v1459, 4294901760
    %v3218 = vsub.f32 %v1459, %v3217
    %v3219 = vand.u32 %v3218, 4294901760
    %v3220 = vsub.f32 %v3218, %v3219
    %v3221 = vand.u32 %v3220, 4294901760
    %3222 = vmatprep.subr.mxu0 %v3221
    %v3223 = vand.u32 %v1458, 4294901760
    %v3224 = vsub.f32 %v1458, %v3223
    %v3225 = vand.u32 %v3224, 4294901760
    %v3226 = vsub.f32 %v3224, %v3225
    %v3227 = vand.u32 %v3226, 4294901760
    %3228 = vmatpush2.msra.mxu0 %v3227
    %v3229 = vand.u32 %v1455, 4294901760
    %v3230 = vsub.f32 %v1455, %v3229
    %v3231 = vand.u32 %v3230, 4294901760
    %v3232 = vsub.f32 %v3230, %v3231
    %v3233 = vand.u32 %v3232, 4294901760
    %3234 = vmatprep.subr.mxu0 %v3233
    %v3235 = vand.u32 %v1454, 4294901760
    %v3236 = vsub.f32 %v1454, %v3235
    %v3237 = vand.u32 %v3236, 4294901760
    %v3238 = vsub.f32 %v3236, %v3237
    %v3239 = vand.u32 %v3238, 4294901760
    %3240 = vmatpush2.msra.mxu0 %v3239
    %v3241 = vand.u32 %v1451, 4294901760
    %v3242 = vsub.f32 %v1451, %v3241
    %v3243 = vand.u32 %v3242, 4294901760
    %v3244 = vsub.f32 %v3242, %v3243
    %v3245 = vand.u32 %v3244, 4294901760
    %3246 = vmatprep.subr.mxu0 %v3245
    %v3247 = vand.u32 %v1450, 4294901760
    %v3248 = vsub.f32 %v1450, %v3247
    %v3249 = vand.u32 %v3248, 4294901760
    %v3250 = vsub.f32 %v3248, %v3249
    %v3251 = vand.u32 %v3250, 4294901760
    %3252 = vmatpush2.msra.mxu0 %v3251
    %v3253 = vand.u32 %v1447, 4294901760
    %v3254 = vsub.f32 %v1447, %v3253
    %v3255 = vand.u32 %v3254, 4294901760
    %v3256 = vsub.f32 %v3254, %v3255
    %v3257 = vand.u32 %v3256, 4294901760
    %3258 = vmatprep.subr.mxu0 %v3257
    %v3259 = vand.u32 %v1446, 4294901760
    %v3260 = vsub.f32 %v1446, %v3259
    %v3261 = vand.u32 %v3260, 4294901760
    %v3262 = vsub.f32 %v3260, %v3261
    %v3263 = vand.u32 %v3262, 4294901760
    %3264 = vmatpush2.msra.mxu0 %v3263
    %v3265 = vand.u32 %v1443, 4294901760
    %v3266 = vsub.f32 %v1443, %v3265
    %v3267 = vand.u32 %v3266, 4294901760
    %v3268 = vsub.f32 %v3266, %v3267
    %v3269 = vand.u32 %v3268, 4294901760
    %3270 = vmatprep.subr.mxu0 %v3269
    %v3271 = vand.u32 %v1442, 4294901760
    %v3272 = vsub.f32 %v1442, %v3271
    %v3273 = vand.u32 %v3272, 4294901760
    %v3274 = vsub.f32 %v3272, %v3273
    %v3275 = vand.u32 %v3274, 4294901760
    %3276 = vmatpush2.msra.mxu0 %v3275
    %v3277 = vand.u32 %v1439, 4294901760
    %v3278 = vsub.f32 %v1439, %v3277
    %v3279 = vand.u32 %v3278, 4294901760
    %v3280 = vsub.f32 %v3278, %v3279
    %v3281 = vand.u32 %v3280, 4294901760
    %3282 = vmatprep.subr.mxu0 %v3281
    %v3283 = vand.u32 %v1438, 4294901760
    %v3284 = vsub.f32 %v1438, %v3283
    %v3285 = vand.u32 %v3284, 4294901760
    %v3286 = vsub.f32 %v3284, %v3285
    %v3287 = vand.u32 %v3286, 4294901760
    %3288 = vmatpush2.msra.mxu0 %v3287
    %v3289 = vand.u32 %v1435, 4294901760
    %v3290 = vsub.f32 %v1435, %v3289
    %v3291 = vand.u32 %v3290, 4294901760
    %v3292 = vsub.f32 %v3290, %v3291
    %v3293 = vand.u32 %v3292, 4294901760
    %3294 = vmatprep.subr.mxu0 %v3293
    %v3295 = vand.u32 %v1434, 4294901760
    %v3296 = vsub.f32 %v1434, %v3295
    %v3297 = vand.u32 %v3296, 4294901760
    %v3298 = vsub.f32 %v3296, %v3297
    %v3299 = vand.u32 %v3298, 4294901760
    %3300 = vmatpush2.msra.mxu0 %v3299
    %v3301 = vand.u32 %v1431, 4294901760
    %v3302 = vsub.f32 %v1431, %v3301
    %v3303 = vand.u32 %v3302, 4294901760
    %v3304 = vsub.f32 %v3302, %v3303
    %v3305 = vand.u32 %v3304, 4294901760
    %3306 = vmatprep.subr.mxu0 %v3305
    %v3307 = vand.u32 %v1430, 4294901760
    %v3308 = vsub.f32 %v1430, %v3307
    %v3309 = vand.u32 %v3308, 4294901760
    %v3310 = vsub.f32 %v3308, %v3309
    %v3311 = vand.u32 %v3310, 4294901760
    %3312 = vmatpush2.msra.mxu0 %v3311
    %v3313 = vand.u32 %v1427, 4294901760
    %v3314 = vsub.f32 %v1427, %v3313
    %v3315 = vand.u32 %v3314, 4294901760
    %v3316 = vsub.f32 %v3314, %v3315
    %v3317 = vand.u32 %v3316, 4294901760
    %3318 = vmatprep.subr.mxu0 %v3317
    %v3319 = vand.u32 %v1426, 4294901760
    %v3320 = vsub.f32 %v1426, %v3319
    %v3321 = vand.u32 %v3320, 4294901760
    %v3322 = vsub.f32 %v3320, %v3321
    %v3323 = vand.u32 %v3322, 4294901760
    %3324 = vmatpush2.msra.mxu0 %v3323
    %v3325 = vand.u32 %v1233, 4294901760
    %3326 = vmatprep.mubr.f32.mxu0 %v3325
    %v3327 = vand.u32 %v1232, 4294901760
    %3328 = vmatmul.mubr.f32.gmra.mxu0 %v3327
    %v3329 = vpop.f32.mrf.mxu0
    %v3330 = vadd.f32 %v2937, %v3329
    %v3331 = vpop.f32.mrf.mxu0
    %v3332 = vadd.f32 %v2939, %v3331
    %3333 = vdwg.mxu0
    %v3334 = vand.u32 %v1423, 4294901760
    %v3335 = vsub.f32 %v1423, %v3334
    %3336 = vmatprep.subr.mxu0 %v3335
    %v3337 = vand.u32 %v1422, 4294901760
    %v3338 = vsub.f32 %v1422, %v3337
    %3339 = vmatpush1.msra.mxu0 %v3338
    %v3340 = vand.u32 %v1419, 4294901760
    %v3341 = vsub.f32 %v1419, %v3340
    %3342 = vmatprep.subr.mxu0 %v3341
    %v3343 = vand.u32 %v1418, 4294901760
    %v3344 = vsub.f32 %v1418, %v3343
    %3345 = vmatpush1.msra.mxu0 %v3344
    %v3346 = vand.u32 %v1415, 4294901760
    %v3347 = vsub.f32 %v1415, %v3346
    %3348 = vmatprep.subr.mxu0 %v3347
    %v3349 = vand.u32 %v1414, 4294901760
    %v3350 = vsub.f32 %v1414, %v3349
    %3351 = vmatpush1.msra.mxu0 %v3350
    %v3352 = vand.u32 %v1411, 4294901760
    %v3353 = vsub.f32 %v1411, %v3352
    %3354 = vmatprep.subr.mxu0 %v3353
    %v3355 = vand.u32 %v1410, 4294901760
    %v3356 = vsub.f32 %v1410, %v3355
    %3357 = vmatpush1.msra.mxu0 %v3356
    %v3358 = vand.u32 %v1407, 4294901760
    %v3359 = vsub.f32 %v1407, %v3358
    %3360 = vmatprep.subr.mxu0 %v3359
    %v3361 = vand.u32 %v1406, 4294901760
    %v3362 = vsub.f32 %v1406, %v3361
    %3363 = vmatpush1.msra.mxu0 %v3362
    %v3364 = vand.u32 %v1403, 4294901760
    %v3365 = vsub.f32 %v1403, %v3364
    %3366 = vmatprep.subr.mxu0 %v3365
    %v3367 = vand.u32 %v1402, 4294901760
    %v3368 = vsub.f32 %v1402, %v3367
    %3369 = vmatpush1.msra.mxu0 %v3368
    %v3370 = vand.u32 %v1399, 4294901760
    %v3371 = vsub.f32 %v1399, %v3370
    %3372 = vmatprep.subr.mxu0 %v3371
    %v3373 = vand.u32 %v1398, 4294901760
    %v3374 = vsub.f32 %v1398, %v3373
    %3375 = vmatpush1.msra.mxu0 %v3374
    %v3376 = vand.u32 %v1395, 4294901760
    %v3377 = vsub.f32 %v1395, %v3376
    %3378 = vmatprep.subr.mxu0 %v3377
    %v3379 = vand.u32 %v1394, 4294901760
    %v3380 = vsub.f32 %v1394, %v3379
    %3381 = vmatpush1.msra.mxu0 %v3380
    %v3382 = vand.u32 %v1391, 4294901760
    %v3383 = vsub.f32 %v1391, %v3382
    %3384 = vmatprep.subr.mxu0 %v3383
    %v3385 = vand.u32 %v1390, 4294901760
    %v3386 = vsub.f32 %v1390, %v3385
    %3387 = vmatpush1.msra.mxu0 %v3386
    %v3388 = vand.u32 %v1387, 4294901760
    %v3389 = vsub.f32 %v1387, %v3388
    %3390 = vmatprep.subr.mxu0 %v3389
    %v3391 = vand.u32 %v1386, 4294901760
    %v3392 = vsub.f32 %v1386, %v3391
    %3393 = vmatpush1.msra.mxu0 %v3392
    %v3394 = vand.u32 %v1383, 4294901760
    %v3395 = vsub.f32 %v1383, %v3394
    %3396 = vmatprep.subr.mxu0 %v3395
    %v3397 = vand.u32 %v1382, 4294901760
    %v3398 = vsub.f32 %v1382, %v3397
    %3399 = vmatpush1.msra.mxu0 %v3398
    %v3400 = vand.u32 %v1379, 4294901760
    %v3401 = vsub.f32 %v1379, %v3400
    %3402 = vmatprep.subr.mxu0 %v3401
    %v3403 = vand.u32 %v1378, 4294901760
    %v3404 = vsub.f32 %v1378, %v3403
    %3405 = vmatpush1.msra.mxu0 %v3404
    %v3406 = vand.u32 %v1375, 4294901760
    %v3407 = vsub.f32 %v1375, %v3406
    %3408 = vmatprep.subr.mxu0 %v3407
    %v3409 = vand.u32 %v1374, 4294901760
    %v3410 = vsub.f32 %v1374, %v3409
    %3411 = vmatpush1.msra.mxu0 %v3410
    %v3412 = vand.u32 %v1371, 4294901760
    %v3413 = vsub.f32 %v1371, %v3412
    %3414 = vmatprep.subr.mxu0 %v3413
    %v3415 = vand.u32 %v1370, 4294901760
    %v3416 = vsub.f32 %v1370, %v3415
    %3417 = vmatpush1.msra.mxu0 %v3416
    %v3418 = vand.u32 %v1367, 4294901760
    %v3419 = vsub.f32 %v1367, %v3418
    %3420 = vmatprep.subr.mxu0 %v3419
    %v3421 = vand.u32 %v1366, 4294901760
    %v3422 = vsub.f32 %v1366, %v3421
    %3423 = vmatpush1.msra.mxu0 %v3422
    %v3424 = vand.u32 %v1363, 4294901760
    %v3425 = vsub.f32 %v1363, %v3424
    %3426 = vmatprep.subr.mxu0 %v3425
    %v3427 = vand.u32 %v1362, 4294901760
    %v3428 = vsub.f32 %v1362, %v3427
    %3429 = vmatpush1.msra.mxu0 %v3428
    %v3430 = vand.u32 %v1487, 4294901760
    %v3431 = vsub.f32 %v1487, %v3430
    %3432 = vmatprep.subr.mxu0 %v3431
    %v3433 = vand.u32 %v1486, 4294901760
    %v3434 = vsub.f32 %v1486, %v3433
    %3435 = vmatpush2.msra.mxu0 %v3434
    %v3436 = vand.u32 %v1483, 4294901760
    %v3437 = vsub.f32 %v1483, %v3436
    %3438 = vmatprep.subr.mxu0 %v3437
    %v3439 = vand.u32 %v1482, 4294901760
    %v3440 = vsub.f32 %v1482, %v3439
    %3441 = vmatpush2.msra.mxu0 %v3440
    %v3442 = vand.u32 %v1479, 4294901760
    %v3443 = vsub.f32 %v1479, %v3442
    %3444 = vmatprep.subr.mxu0 %v3443
    %v3445 = vand.u32 %v1478, 4294901760
    %v3446 = vsub.f32 %v1478, %v3445
    %3447 = vmatpush2.msra.mxu0 %v3446
    %v3448 = vand.u32 %v1475, 4294901760
    %v3449 = vsub.f32 %v1475, %v3448
    %3450 = vmatprep.subr.mxu0 %v3449
    %v3451 = vand.u32 %v1474, 4294901760
    %v3452 = vsub.f32 %v1474, %v3451
    %3453 = vmatpush2.msra.mxu0 %v3452
    %v3454 = vand.u32 %v1471, 4294901760
    %v3455 = vsub.f32 %v1471, %v3454
    %3456 = vmatprep.subr.mxu0 %v3455
    %v3457 = vand.u32 %v1470, 4294901760
    %v3458 = vsub.f32 %v1470, %v3457
    %3459 = vmatpush2.msra.mxu0 %v3458
    %v3460 = vand.u32 %v1467, 4294901760
    %v3461 = vsub.f32 %v1467, %v3460
    %3462 = vmatprep.subr.mxu0 %v3461
    %v3463 = vand.u32 %v1466, 4294901760
    %v3464 = vsub.f32 %v1466, %v3463
    %3465 = vmatpush2.msra.mxu0 %v3464
    %v3466 = vand.u32 %v1463, 4294901760
    %v3467 = vsub.f32 %v1463, %v3466
    %3468 = vmatprep.subr.mxu0 %v3467
    %v3469 = vand.u32 %v1462, 4294901760
    %v3470 = vsub.f32 %v1462, %v3469
    %3471 = vmatpush2.msra.mxu0 %v3470
    %v3472 = vand.u32 %v1459, 4294901760
    %v3473 = vsub.f32 %v1459, %v3472
    %3474 = vmatprep.subr.mxu0 %v3473
    %v3475 = vand.u32 %v1458, 4294901760
    %v3476 = vsub.f32 %v1458, %v3475
    %3477 = vmatpush2.msra.mxu0 %v3476
    %v3478 = vand.u32 %v1455, 4294901760
    %v3479 = vsub.f32 %v1455, %v3478
    %3480 = vmatprep.subr.mxu0 %v3479
    %v3481 = vand.u32 %v1454, 4294901760
    %v3482 = vsub.f32 %v1454, %v3481
    %3483 = vmatpush2.msra.mxu0 %v3482
    %v3484 = vand.u32 %v1451, 4294901760
    %v3485 = vsub.f32 %v1451, %v3484
    %3486 = vmatprep.subr.mxu0 %v3485
    %v3487 = vand.u32 %v1450, 4294901760
    %v3488 = vsub.f32 %v1450, %v3487
    %3489 = vmatpush2.msra.mxu0 %v3488
    %v3490 = vand.u32 %v1447, 4294901760
    %v3491 = vsub.f32 %v1447, %v3490
    %3492 = vmatprep.subr.mxu0 %v3491
    %v3493 = vand.u32 %v1446, 4294901760
    %v3494 = vsub.f32 %v1446, %v3493
    %3495 = vmatpush2.msra.mxu0 %v3494
    %v3496 = vand.u32 %v1443, 4294901760
    %v3497 = vsub.f32 %v1443, %v3496
    %3498 = vmatprep.subr.mxu0 %v3497
    %v3499 = vand.u32 %v1442, 4294901760
    %v3500 = vsub.f32 %v1442, %v3499
    %3501 = vmatpush2.msra.mxu0 %v3500
    %v3502 = vand.u32 %v1439, 4294901760
    %v3503 = vsub.f32 %v1439, %v3502
    %3504 = vmatprep.subr.mxu0 %v3503
    %v3505 = vand.u32 %v1438, 4294901760
    %v3506 = vsub.f32 %v1438, %v3505
    %3507 = vmatpush2.msra.mxu0 %v3506
    %v3508 = vand.u32 %v1435, 4294901760
    %v3509 = vsub.f32 %v1435, %v3508
    %3510 = vmatprep.subr.mxu0 %v3509
    %v3511 = vand.u32 %v1434, 4294901760
    %v3512 = vsub.f32 %v1434, %v3511
    %3513 = vmatpush2.msra.mxu0 %v3512
    %v3514 = vand.u32 %v1431, 4294901760
    %v3515 = vsub.f32 %v1431, %v3514
    %3516 = vmatprep.subr.mxu0 %v3515
    %v3517 = vand.u32 %v1430, 4294901760
    %v3518 = vsub.f32 %v1430, %v3517
    %3519 = vmatpush2.msra.mxu0 %v3518
    %v3520 = vand.u32 %v1427, 4294901760
    %v3521 = vsub.f32 %v1427, %v3520
    %3522 = vmatprep.subr.mxu0 %v3521
    %v3523 = vand.u32 %v1426, 4294901760
    %v3524 = vsub.f32 %v1426, %v3523
    %3525 = vmatpush2.msra.mxu0 %v3524
    %v3526 = vand.u32 %v1233, 4294901760
    %v3527 = vsub.f32 %v1233, %v3526
    %3528 = vmatprep.mubr.f32.mxu0 %v3527
    %v3529 = vand.u32 %v1232, 4294901760
    %v3530 = vsub.f32 %v1232, %v3529
    %3531 = vmatmul.mubr.f32.gmra.mxu0 %v3530
    %v3532 = vpop.f32.mrf.mxu0
    %v3533 = vadd.f32 %v3330, %v3532
    %v3534 = vpop.f32.mrf.mxu0
    %v3535 = vadd.f32 %v3332, %v3534
    %3536 = vdwg.mxu0
    %v3537 = vand.u32 %v1423, 4294901760
    %3538 = vmatprep.subr.mxu0 %v3537
    %v3539 = vand.u32 %v1422, 4294901760
    %3540 = vmatpush1.msra.mxu0 %v3539
    %v3541 = vand.u32 %v1419, 4294901760
    %3542 = vmatprep.subr.mxu0 %v3541
    %v3543 = vand.u32 %v1418, 4294901760
    %3544 = vmatpush1.msra.mxu0 %v3543
    %v3545 = vand.u32 %v1415, 4294901760
    %3546 = vmatprep.subr.mxu0 %v3545
    %v3547 = vand.u32 %v1414, 4294901760
    %3548 = vmatpush1.msra.mxu0 %v3547
    %v3549 = vand.u32 %v1411, 4294901760
    %3550 = vmatprep.subr.mxu0 %v3549
    %v3551 = vand.u32 %v1410, 4294901760
    %3552 = vmatpush1.msra.mxu0 %v3551
    %v3553 = vand.u32 %v1407, 4294901760
    %3554 = vmatprep.subr.mxu0 %v3553
    %v3555 = vand.u32 %v1406, 4294901760
    %3556 = vmatpush1.msra.mxu0 %v3555
    %v3557 = vand.u32 %v1403, 4294901760
    %3558 = vmatprep.subr.mxu0 %v3557
    %v3559 = vand.u32 %v1402, 4294901760
    %3560 = vmatpush1.msra.mxu0 %v3559
    %v3561 = vand.u32 %v1399, 4294901760
    %3562 = vmatprep.subr.mxu0 %v3561
    %v3563 = vand.u32 %v1398, 4294901760
    %3564 = vmatpush1.msra.mxu0 %v3563
    %v3565 = vand.u32 %v1395, 4294901760
    %3566 = vmatprep.subr.mxu0 %v3565
    %v3567 = vand.u32 %v1394, 4294901760
    %3568 = vmatpush1.msra.mxu0 %v3567
    %v3569 = vand.u32 %v1391, 4294901760
    %3570 = vmatprep.subr.mxu0 %v3569
    %v3571 = vand.u32 %v1390, 4294901760
    %3572 = vmatpush1.msra.mxu0 %v3571
    %v3573 = vand.u32 %v1387, 4294901760
    %3574 = vmatprep.subr.mxu0 %v3573
    %v3575 = vand.u32 %v1386, 4294901760
    %3576 = vmatpush1.msra.mxu0 %v3575
    %v3577 = vand.u32 %v1383, 4294901760
    %3578 = vmatprep.subr.mxu0 %v3577
    %v3579 = vand.u32 %v1382, 4294901760
    %3580 = vmatpush1.msra.mxu0 %v3579
    %v3581 = vand.u32 %v1379, 4294901760
    %3582 = vmatprep.subr.mxu0 %v3581
    %v3583 = vand.u32 %v1378, 4294901760
    %3584 = vmatpush1.msra.mxu0 %v3583
    %v3585 = vand.u32 %v1375, 4294901760
    %3586 = vmatprep.subr.mxu0 %v3585
    %v3587 = vand.u32 %v1374, 4294901760
    %3588 = vmatpush1.msra.mxu0 %v3587
    %v3589 = vand.u32 %v1371, 4294901760
    %3590 = vmatprep.subr.mxu0 %v3589
    %v3591 = vand.u32 %v1370, 4294901760
    %3592 = vmatpush1.msra.mxu0 %v3591
    %v3593 = vand.u32 %v1367, 4294901760
    %3594 = vmatprep.subr.mxu0 %v3593
    %v3595 = vand.u32 %v1366, 4294901760
    %3596 = vmatpush1.msra.mxu0 %v3595
    %v3597 = vand.u32 %v1363, 4294901760
    %3598 = vmatprep.subr.mxu0 %v3597
    %v3599 = vand.u32 %v1362, 4294901760
    %3600 = vmatpush1.msra.mxu0 %v3599
    %v3601 = vand.u32 %v1487, 4294901760
    %3602 = vmatprep.subr.mxu0 %v3601
    %v3603 = vand.u32 %v1486, 4294901760
    %3604 = vmatpush2.msra.mxu0 %v3603
    %v3605 = vand.u32 %v1483, 4294901760
    %3606 = vmatprep.subr.mxu0 %v3605
    %v3607 = vand.u32 %v1482, 4294901760
    %3608 = vmatpush2.msra.mxu0 %v3607
    %v3609 = vand.u32 %v1479, 4294901760
    %3610 = vmatprep.subr.mxu0 %v3609
    %v3611 = vand.u32 %v1478, 4294901760
    %3612 = vmatpush2.msra.mxu0 %v3611
    %v3613 = vand.u32 %v1475, 4294901760
    %3614 = vmatprep.subr.mxu0 %v3613
    %v3615 = vand.u32 %v1474, 4294901760
    %3616 = vmatpush2.msra.mxu0 %v3615
    %v3617 = vand.u32 %v1471, 4294901760
    %3618 = vmatprep.subr.mxu0 %v3617
    %v3619 = vand.u32 %v1470, 4294901760
    %3620 = vmatpush2.msra.mxu0 %v3619
    %v3621 = vand.u32 %v1467, 4294901760
    %3622 = vmatprep.subr.mxu0 %v3621
    %v3623 = vand.u32 %v1466, 4294901760
    %3624 = vmatpush2.msra.mxu0 %v3623
    %v3625 = vand.u32 %v1463, 4294901760
    %3626 = vmatprep.subr.mxu0 %v3625
    %v3627 = vand.u32 %v1462, 4294901760
    %3628 = vmatpush2.msra.mxu0 %v3627
    %v3629 = vand.u32 %v1459, 4294901760
    %3630 = vmatprep.subr.mxu0 %v3629
    %v3631 = vand.u32 %v1458, 4294901760
    %3632 = vmatpush2.msra.mxu0 %v3631
    %v3633 = vand.u32 %v1455, 4294901760
    %3634 = vmatprep.subr.mxu0 %v3633
    %v3635 = vand.u32 %v1454, 4294901760
    %3636 = vmatpush2.msra.mxu0 %v3635
    %v3637 = vand.u32 %v1451, 4294901760
    %3638 = vmatprep.subr.mxu0 %v3637
    %v3639 = vand.u32 %v1450, 4294901760
    %3640 = vmatpush2.msra.mxu0 %v3639
    %v3641 = vand.u32 %v1447, 4294901760
    %3642 = vmatprep.subr.mxu0 %v3641
    %v3643 = vand.u32 %v1446, 4294901760
    %3644 = vmatpush2.msra.mxu0 %v3643
    %v3645 = vand.u32 %v1443, 4294901760
    %3646 = vmatprep.subr.mxu0 %v3645
    %v3647 = vand.u32 %v1442, 4294901760
    %3648 = vmatpush2.msra.mxu0 %v3647
    %v3649 = vand.u32 %v1439, 4294901760
    %3650 = vmatprep.subr.mxu0 %v3649
    %v3651 = vand.u32 %v1438, 4294901760
    %3652 = vmatpush2.msra.mxu0 %v3651
    %v3653 = vand.u32 %v1435, 4294901760
    %3654 = vmatprep.subr.mxu0 %v3653
    %v3655 = vand.u32 %v1434, 4294901760
    %3656 = vmatpush2.msra.mxu0 %v3655
    %v3657 = vand.u32 %v1431, 4294901760
    %3658 = vmatprep.subr.mxu0 %v3657
    %v3659 = vand.u32 %v1430, 4294901760
    %3660 = vmatpush2.msra.mxu0 %v3659
    %v3661 = vand.u32 %v1427, 4294901760
    %3662 = vmatprep.subr.mxu0 %v3661
    %v3663 = vand.u32 %v1426, 4294901760
    %3664 = vmatpush2.msra.mxu0 %v3663
    %v3665 = vand.u32 %v1233, 4294901760
    %v3666 = vsub.f32 %v1233, %v3665
    %v3667 = vand.u32 %v3666, 4294901760
    %3668 = vmatprep.mubr.f32.mxu0 %v3667
    %v3669 = vand.u32 %v1232, 4294901760
    %v3670 = vsub.f32 %v1232, %v3669
    %v3671 = vand.u32 %v3670, 4294901760
    %3672 = vmatmul.mubr.f32.gmra.mxu0 %v3671
    %v3673 = vpop.f32.mrf.mxu0
    %v3674 = vadd.f32 %v3533, %v3673
    %v3675 = vpop.f32.mrf.mxu0
    %v3676 = vadd.f32 %v3535, %v3675
    %3677 = vdwg.mxu0
    %v3678 = vand.u32 %v1423, 4294901760
    %v3679 = vsub.f32 %v1423, %v3678
    %v3680 = vand.u32 %v3679, 4294901760
    %3681 = vmatprep.subr.mxu0 %v3680
    %v3682 = vand.u32 %v1422, 4294901760
    %v3683 = vsub.f32 %v1422, %v3682
    %v3684 = vand.u32 %v3683, 4294901760
    %3685 = vmatpush1.msra.mxu0 %v3684
    %v3686 = vand.u32 %v1419, 4294901760
    %v3687 = vsub.f32 %v1419, %v3686
    %v3688 = vand.u32 %v3687, 4294901760
    %3689 = vmatprep.subr.mxu0 %v3688
    %v3690 = vand.u32 %v1418, 4294901760
    %v3691 = vsub.f32 %v1418, %v3690
    %v3692 = vand.u32 %v3691, 4294901760
    %3693 = vmatpush1.msra.mxu0 %v3692
    %v3694 = vand.u32 %v1415, 4294901760
    %v3695 = vsub.f32 %v1415, %v3694
    %v3696 = vand.u32 %v3695, 4294901760
    %3697 = vmatprep.subr.mxu0 %v3696
    %v3698 = vand.u32 %v1414, 4294901760
    %v3699 = vsub.f32 %v1414, %v3698
    %v3700 = vand.u32 %v3699, 4294901760
    %3701 = vmatpush1.msra.mxu0 %v3700
    %v3702 = vand.u32 %v1411, 4294901760
    %v3703 = vsub.f32 %v1411, %v3702
    %v3704 = vand.u32 %v3703, 4294901760
    %3705 = vmatprep.subr.mxu0 %v3704
    %v3706 = vand.u32 %v1410, 4294901760
    %v3707 = vsub.f32 %v1410, %v3706
    %v3708 = vand.u32 %v3707, 4294901760
    %3709 = vmatpush1.msra.mxu0 %v3708
    %v3710 = vand.u32 %v1407, 4294901760
    %v3711 = vsub.f32 %v1407, %v3710
    %v3712 = vand.u32 %v3711, 4294901760
    %3713 = vmatprep.subr.mxu0 %v3712
    %v3714 = vand.u32 %v1406, 4294901760
    %v3715 = vsub.f32 %v1406, %v3714
    %v3716 = vand.u32 %v3715, 4294901760
    %3717 = vmatpush1.msra.mxu0 %v3716
    %v3718 = vand.u32 %v1403, 4294901760
    %v3719 = vsub.f32 %v1403, %v3718
    %v3720 = vand.u32 %v3719, 4294901760
    %3721 = vmatprep.subr.mxu0 %v3720
    %v3722 = vand.u32 %v1402, 4294901760
    %v3723 = vsub.f32 %v1402, %v3722
    %v3724 = vand.u32 %v3723, 4294901760
    %3725 = vmatpush1.msra.mxu0 %v3724
    %v3726 = vand.u32 %v1399, 4294901760
    %v3727 = vsub.f32 %v1399, %v3726
    %v3728 = vand.u32 %v3727, 4294901760
    %3729 = vmatprep.subr.mxu0 %v3728
    %v3730 = vand.u32 %v1398, 4294901760
    %v3731 = vsub.f32 %v1398, %v3730
    %v3732 = vand.u32 %v3731, 4294901760
    %3733 = vmatpush1.msra.mxu0 %v3732
    %v3734 = vand.u32 %v1395, 4294901760
    %v3735 = vsub.f32 %v1395, %v3734
    %v3736 = vand.u32 %v3735, 4294901760
    %3737 = vmatprep.subr.mxu0 %v3736
    %v3738 = vand.u32 %v1394, 4294901760
    %v3739 = vsub.f32 %v1394, %v3738
    %v3740 = vand.u32 %v3739, 4294901760
    %3741 = vmatpush1.msra.mxu0 %v3740
    %v3742 = vand.u32 %v1391, 4294901760
    %v3743 = vsub.f32 %v1391, %v3742
    %v3744 = vand.u32 %v3743, 4294901760
    %3745 = vmatprep.subr.mxu0 %v3744
    %v3746 = vand.u32 %v1390, 4294901760
    %v3747 = vsub.f32 %v1390, %v3746
    %v3748 = vand.u32 %v3747, 4294901760
    %3749 = vmatpush1.msra.mxu0 %v3748
    %v3750 = vand.u32 %v1387, 4294901760
    %v3751 = vsub.f32 %v1387, %v3750
    %v3752 = vand.u32 %v3751, 4294901760
    %3753 = vmatprep.subr.mxu0 %v3752
    %v3754 = vand.u32 %v1386, 4294901760
    %v3755 = vsub.f32 %v1386, %v3754
    %v3756 = vand.u32 %v3755, 4294901760
    %3757 = vmatpush1.msra.mxu0 %v3756
    %v3758 = vand.u32 %v1383, 4294901760
    %v3759 = vsub.f32 %v1383, %v3758
    %v3760 = vand.u32 %v3759, 4294901760
    %3761 = vmatprep.subr.mxu0 %v3760
    %v3762 = vand.u32 %v1382, 4294901760
    %v3763 = vsub.f32 %v1382, %v3762
    %v3764 = vand.u32 %v3763, 4294901760
    %3765 = vmatpush1.msra.mxu0 %v3764
    %v3766 = vand.u32 %v1379, 4294901760
    %v3767 = vsub.f32 %v1379, %v3766
    %v3768 = vand.u32 %v3767, 4294901760
    %3769 = vmatprep.subr.mxu0 %v3768
    %v3770 = vand.u32 %v1378, 4294901760
    %v3771 = vsub.f32 %v1378, %v3770
    %v3772 = vand.u32 %v3771, 4294901760
    %3773 = vmatpush1.msra.mxu0 %v3772
    %v3774 = vand.u32 %v1375, 4294901760
    %v3775 = vsub.f32 %v1375, %v3774
    %v3776 = vand.u32 %v3775, 4294901760
    %3777 = vmatprep.subr.mxu0 %v3776
    %v3778 = vand.u32 %v1374, 4294901760
    %v3779 = vsub.f32 %v1374, %v3778
    %v3780 = vand.u32 %v3779, 4294901760
    %3781 = vmatpush1.msra.mxu0 %v3780
    %v3782 = vand.u32 %v1371, 4294901760
    %v3783 = vsub.f32 %v1371, %v3782
    %v3784 = vand.u32 %v3783, 4294901760
    %3785 = vmatprep.subr.mxu0 %v3784
    %v3786 = vand.u32 %v1370, 4294901760
    %v3787 = vsub.f32 %v1370, %v3786
    %v3788 = vand.u32 %v3787, 4294901760
    %3789 = vmatpush1.msra.mxu0 %v3788
    %v3790 = vand.u32 %v1367, 4294901760
    %v3791 = vsub.f32 %v1367, %v3790
    %v3792 = vand.u32 %v3791, 4294901760
    %3793 = vmatprep.subr.mxu0 %v3792
    %v3794 = vand.u32 %v1366, 4294901760
    %v3795 = vsub.f32 %v1366, %v3794
    %v3796 = vand.u32 %v3795, 4294901760
    %3797 = vmatpush1.msra.mxu0 %v3796
    %v3798 = vand.u32 %v1363, 4294901760
    %v3799 = vsub.f32 %v1363, %v3798
    %v3800 = vand.u32 %v3799, 4294901760
    %3801 = vmatprep.subr.mxu0 %v3800
    %v3802 = vand.u32 %v1362, 4294901760
    %v3803 = vsub.f32 %v1362, %v3802
    %v3804 = vand.u32 %v3803, 4294901760
    %3805 = vmatpush1.msra.mxu0 %v3804
    %v3806 = vand.u32 %v1487, 4294901760
    %v3807 = vsub.f32 %v1487, %v3806
    %v3808 = vand.u32 %v3807, 4294901760
    %3809 = vmatprep.subr.mxu0 %v3808
    %v3810 = vand.u32 %v1486, 4294901760
    %v3811 = vsub.f32 %v1486, %v3810
    %v3812 = vand.u32 %v3811, 4294901760
    %3813 = vmatpush2.msra.mxu0 %v3812
    %v3814 = vand.u32 %v1483, 4294901760
    %v3815 = vsub.f32 %v1483, %v3814
    %v3816 = vand.u32 %v3815, 4294901760
    %3817 = vmatprep.subr.mxu0 %v3816
    %v3818 = vand.u32 %v1482, 4294901760
    %v3819 = vsub.f32 %v1482, %v3818
    %v3820 = vand.u32 %v3819, 4294901760
    %3821 = vmatpush2.msra.mxu0 %v3820
    %v3822 = vand.u32 %v1479, 4294901760
    %v3823 = vsub.f32 %v1479, %v3822
    %v3824 = vand.u32 %v3823, 4294901760
    %3825 = vmatprep.subr.mxu0 %v3824
    %v3826 = vand.u32 %v1478, 4294901760
    %v3827 = vsub.f32 %v1478, %v3826
    %v3828 = vand.u32 %v3827, 4294901760
    %3829 = vmatpush2.msra.mxu0 %v3828
    %v3830 = vand.u32 %v1475, 4294901760
    %v3831 = vsub.f32 %v1475, %v3830
    %v3832 = vand.u32 %v3831, 4294901760
    %3833 = vmatprep.subr.mxu0 %v3832
    %v3834 = vand.u32 %v1474, 4294901760
    %v3835 = vsub.f32 %v1474, %v3834
    %v3836 = vand.u32 %v3835, 4294901760
    %3837 = vmatpush2.msra.mxu0 %v3836
    %v3838 = vand.u32 %v1471, 4294901760
    %v3839 = vsub.f32 %v1471, %v3838
    %v3840 = vand.u32 %v3839, 4294901760
    %3841 = vmatprep.subr.mxu0 %v3840
    %v3842 = vand.u32 %v1470, 4294901760
    %v3843 = vsub.f32 %v1470, %v3842
    %v3844 = vand.u32 %v3843, 4294901760
    %3845 = vmatpush2.msra.mxu0 %v3844
    %v3846 = vand.u32 %v1467, 4294901760
    %v3847 = vsub.f32 %v1467, %v3846
    %v3848 = vand.u32 %v3847, 4294901760
    %3849 = vmatprep.subr.mxu0 %v3848
    %v3850 = vand.u32 %v1466, 4294901760
    %v3851 = vsub.f32 %v1466, %v3850
    %v3852 = vand.u32 %v3851, 4294901760
    %3853 = vmatpush2.msra.mxu0 %v3852
    %v3854 = vand.u32 %v1463, 4294901760
    %v3855 = vsub.f32 %v1463, %v3854
    %v3856 = vand.u32 %v3855, 4294901760
    %3857 = vmatprep.subr.mxu0 %v3856
    %v3858 = vand.u32 %v1462, 4294901760
    %v3859 = vsub.f32 %v1462, %v3858
    %v3860 = vand.u32 %v3859, 4294901760
    %3861 = vmatpush2.msra.mxu0 %v3860
    %v3862 = vand.u32 %v1459, 4294901760
    %v3863 = vsub.f32 %v1459, %v3862
    %v3864 = vand.u32 %v3863, 4294901760
    %3865 = vmatprep.subr.mxu0 %v3864
    %v3866 = vand.u32 %v1458, 4294901760
    %v3867 = vsub.f32 %v1458, %v3866
    %v3868 = vand.u32 %v3867, 4294901760
    %3869 = vmatpush2.msra.mxu0 %v3868
    %v3870 = vand.u32 %v1455, 4294901760
    %v3871 = vsub.f32 %v1455, %v3870
    %v3872 = vand.u32 %v3871, 4294901760
    %3873 = vmatprep.subr.mxu0 %v3872
    %v3874 = vand.u32 %v1454, 4294901760
    %v3875 = vsub.f32 %v1454, %v3874
    %v3876 = vand.u32 %v3875, 4294901760
    %3877 = vmatpush2.msra.mxu0 %v3876
    %v3878 = vand.u32 %v1451, 4294901760
    %v3879 = vsub.f32 %v1451, %v3878
    %v3880 = vand.u32 %v3879, 4294901760
    %3881 = vmatprep.subr.mxu0 %v3880
    %v3882 = vand.u32 %v1450, 4294901760
    %v3883 = vsub.f32 %v1450, %v3882
    %v3884 = vand.u32 %v3883, 4294901760
    %3885 = vmatpush2.msra.mxu0 %v3884
    %v3886 = vand.u32 %v1447, 4294901760
    %v3887 = vsub.f32 %v1447, %v3886
    %v3888 = vand.u32 %v3887, 4294901760
    %3889 = vmatprep.subr.mxu0 %v3888
    %v3890 = vand.u32 %v1446, 4294901760
    %v3891 = vsub.f32 %v1446, %v3890
    %v3892 = vand.u32 %v3891, 4294901760
    %3893 = vmatpush2.msra.mxu0 %v3892
    %v3894 = vand.u32 %v1443, 4294901760
    %v3895 = vsub.f32 %v1443, %v3894
    %v3896 = vand.u32 %v3895, 4294901760
    %3897 = vmatprep.subr.mxu0 %v3896
    %v3898 = vand.u32 %v1442, 4294901760
    %v3899 = vsub.f32 %v1442, %v3898
    %v3900 = vand.u32 %v3899, 4294901760
    %3901 = vmatpush2.msra.mxu0 %v3900
    %v3902 = vand.u32 %v1439, 4294901760
    %v3903 = vsub.f32 %v1439, %v3902
    %v3904 = vand.u32 %v3903, 4294901760
    %3905 = vmatprep.subr.mxu0 %v3904
    %v3906 = vand.u32 %v1438, 4294901760
    %v3907 = vsub.f32 %v1438, %v3906
    %v3908 = vand.u32 %v3907, 4294901760
    %3909 = vmatpush2.msra.mxu0 %v3908
    %v3910 = vand.u32 %v1435, 4294901760
    %v3911 = vsub.f32 %v1435, %v3910
    %v3912 = vand.u32 %v3911, 4294901760
    %3913 = vmatprep.subr.mxu0 %v3912
    %v3914 = vand.u32 %v1434, 4294901760
    %v3915 = vsub.f32 %v1434, %v3914
    %v3916 = vand.u32 %v3915, 4294901760
    %3917 = vmatpush2.msra.mxu0 %v3916
    %v3918 = vand.u32 %v1431, 4294901760
    %v3919 = vsub.f32 %v1431, %v3918
    %v3920 = vand.u32 %v3919, 4294901760
    %3921 = vmatprep.subr.mxu0 %v3920
    %v3922 = vand.u32 %v1430, 4294901760
    %v3923 = vsub.f32 %v1430, %v3922
    %v3924 = vand.u32 %v3923, 4294901760
    %3925 = vmatpush2.msra.mxu0 %v3924
    %v3926 = vand.u32 %v1427, 4294901760
    %v3927 = vsub.f32 %v1427, %v3926
    %v3928 = vand.u32 %v3927, 4294901760
    %3929 = vmatprep.subr.mxu0 %v3928
    %v3930 = vand.u32 %v1426, 4294901760
    %v3931 = vsub.f32 %v1426, %v3930
    %v3932 = vand.u32 %v3931, 4294901760
    %3933 = vmatpush2.msra.mxu0 %v3932
    %v3934 = vand.u32 %v1233, 4294901760
    %3935 = vmatprep.mubr.f32.mxu0 %v3934
    %v3936 = vand.u32 %v1232, 4294901760
    %3937 = vmatmul.mubr.f32.gmra.mxu0 %v3936
    %v3938 = vpop.f32.mrf.mxu0
    %v3939 = vadd.f32 %v3674, %v3938
    %v3940 = vpop.f32.mrf.mxu0
    %v3941 = vadd.f32 %v3676, %v3940
    %3942 = vdwg.mxu0
    %v3943 = vand.u32 %v1423, 4294901760
    %3944 = vmatprep.subr.mxu0 %v3943
    %v3945 = vand.u32 %v1422, 4294901760
    %3946 = vmatpush1.msra.mxu0 %v3945
    %v3947 = vand.u32 %v1419, 4294901760
    %3948 = vmatprep.subr.mxu0 %v3947
    %v3949 = vand.u32 %v1418, 4294901760
    %3950 = vmatpush1.msra.mxu0 %v3949
    %v3951 = vand.u32 %v1415, 4294901760
    %3952 = vmatprep.subr.mxu0 %v3951
    %v3953 = vand.u32 %v1414, 4294901760
    %3954 = vmatpush1.msra.mxu0 %v3953
    %v3955 = vand.u32 %v1411, 4294901760
    %3956 = vmatprep.subr.mxu0 %v3955
    %v3957 = vand.u32 %v1410, 4294901760
    %3958 = vmatpush1.msra.mxu0 %v3957
    %v3959 = vand.u32 %v1407, 4294901760
    %3960 = vmatprep.subr.mxu0 %v3959
    %v3961 = vand.u32 %v1406, 4294901760
    %3962 = vmatpush1.msra.mxu0 %v3961
    %v3963 = vand.u32 %v1403, 4294901760
    %3964 = vmatprep.subr.mxu0 %v3963
    %v3965 = vand.u32 %v1402, 4294901760
    %3966 = vmatpush1.msra.mxu0 %v3965
    %v3967 = vand.u32 %v1399, 4294901760
    %3968 = vmatprep.subr.mxu0 %v3967
    %v3969 = vand.u32 %v1398, 4294901760
    %3970 = vmatpush1.msra.mxu0 %v3969
    %v3971 = vand.u32 %v1395, 4294901760
    %3972 = vmatprep.subr.mxu0 %v3971
    %v3973 = vand.u32 %v1394, 4294901760
    %3974 = vmatpush1.msra.mxu0 %v3973
    %v3975 = vand.u32 %v1391, 4294901760
    %3976 = vmatprep.subr.mxu0 %v3975
    %v3977 = vand.u32 %v1390, 4294901760
    %3978 = vmatpush1.msra.mxu0 %v3977
    %v3979 = vand.u32 %v1387, 4294901760
    %3980 = vmatprep.subr.mxu0 %v3979
    %v3981 = vand.u32 %v1386, 4294901760
    %3982 = vmatpush1.msra.mxu0 %v3981
    %v3983 = vand.u32 %v1383, 4294901760
    %3984 = vmatprep.subr.mxu0 %v3983
    %v3985 = vand.u32 %v1382, 4294901760
    %3986 = vmatpush1.msra.mxu0 %v3985
    %v3987 = vand.u32 %v1379, 4294901760
    %3988 = vmatprep.subr.mxu0 %v3987
    %v3989 = vand.u32 %v1378, 4294901760
    %3990 = vmatpush1.msra.mxu0 %v3989
    %v3991 = vand.u32 %v1375, 4294901760
    %3992 = vmatprep.subr.mxu0 %v3991
    %v3993 = vand.u32 %v1374, 4294901760
    %3994 = vmatpush1.msra.mxu0 %v3993
    %v3995 = vand.u32 %v1371, 4294901760
    %3996 = vmatprep.subr.mxu0 %v3995
    %v3997 = vand.u32 %v1370, 4294901760
    %3998 = vmatpush1.msra.mxu0 %v3997
    %v3999 = vand.u32 %v1367, 4294901760
    %4000 = vmatprep.subr.mxu0 %v3999
    %v4001 = vand.u32 %v1366, 4294901760
    %4002 = vmatpush1.msra.mxu0 %v4001
    %v4003 = vand.u32 %v1363, 4294901760
    %4004 = vmatprep.subr.mxu0 %v4003
    %v4005 = vand.u32 %v1362, 4294901760
    %4006 = vmatpush1.msra.mxu0 %v4005
    %v4007 = vand.u32 %v1487, 4294901760
    %4008 = vmatprep.subr.mxu0 %v4007
    %v4009 = vand.u32 %v1486, 4294901760
    %4010 = vmatpush2.msra.mxu0 %v4009
    %v4011 = vand.u32 %v1483, 4294901760
    %4012 = vmatprep.subr.mxu0 %v4011
    %v4013 = vand.u32 %v1482, 4294901760
    %4014 = vmatpush2.msra.mxu0 %v4013
    %v4015 = vand.u32 %v1479, 4294901760
    %4016 = vmatprep.subr.mxu0 %v4015
    %v4017 = vand.u32 %v1478, 4294901760
    %4018 = vmatpush2.msra.mxu0 %v4017
    %v4019 = vand.u32 %v1475, 4294901760
    %4020 = vmatprep.subr.mxu0 %v4019
    %v4021 = vand.u32 %v1474, 4294901760
    %4022 = vmatpush2.msra.mxu0 %v4021
    %v4023 = vand.u32 %v1471, 4294901760
    %4024 = vmatprep.subr.mxu0 %v4023
    %v4025 = vand.u32 %v1470, 4294901760
    %4026 = vmatpush2.msra.mxu0 %v4025
    %v4027 = vand.u32 %v1467, 4294901760
    %4028 = vmatprep.subr.mxu0 %v4027
    %v4029 = vand.u32 %v1466, 4294901760
    %4030 = vmatpush2.msra.mxu0 %v4029
    %v4031 = vand.u32 %v1463, 4294901760
    %4032 = vmatprep.subr.mxu0 %v4031
    %v4033 = vand.u32 %v1462, 4294901760
    %4034 = vmatpush2.msra.mxu0 %v4033
    %v4035 = vand.u32 %v1459, 4294901760
    %4036 = vmatprep.subr.mxu0 %v4035
    %v4037 = vand.u32 %v1458, 4294901760
    %4038 = vmatpush2.msra.mxu0 %v4037
    %v4039 = vand.u32 %v1455, 4294901760
    %4040 = vmatprep.subr.mxu0 %v4039
    %v4041 = vand.u32 %v1454, 4294901760
    %4042 = vmatpush2.msra.mxu0 %v4041
    %v4043 = vand.u32 %v1451, 4294901760
    %4044 = vmatprep.subr.mxu0 %v4043
    %v4045 = vand.u32 %v1450, 4294901760
    %4046 = vmatpush2.msra.mxu0 %v4045
    %v4047 = vand.u32 %v1447, 4294901760
    %4048 = vmatprep.subr.mxu0 %v4047
    %v4049 = vand.u32 %v1446, 4294901760
    %4050 = vmatpush2.msra.mxu0 %v4049
    %v4051 = vand.u32 %v1443, 4294901760
    %4052 = vmatprep.subr.mxu0 %v4051
    %v4053 = vand.u32 %v1442, 4294901760
    %4054 = vmatpush2.msra.mxu0 %v4053
    %v4055 = vand.u32 %v1439, 4294901760
    %4056 = vmatprep.subr.mxu0 %v4055
    %v4057 = vand.u32 %v1438, 4294901760
    %4058 = vmatpush2.msra.mxu0 %v4057
    %v4059 = vand.u32 %v1435, 4294901760
    %4060 = vmatprep.subr.mxu0 %v4059
    %v4061 = vand.u32 %v1434, 4294901760
    %4062 = vmatpush2.msra.mxu0 %v4061
    %v4063 = vand.u32 %v1431, 4294901760
    %4064 = vmatprep.subr.mxu0 %v4063
    %v4065 = vand.u32 %v1430, 4294901760
    %4066 = vmatpush2.msra.mxu0 %v4065
    %v4067 = vand.u32 %v1427, 4294901760
    %4068 = vmatprep.subr.mxu0 %v4067
    %v4069 = vand.u32 %v1426, 4294901760
    %4070 = vmatpush2.msra.mxu0 %v4069
    %v4071 = vand.u32 %v1233, 4294901760
    %4072 = vmatprep.mubr.f32.mxu0 %v4071
    %v4073 = vand.u32 %v1232, 4294901760
    %4074 = vmatmul.mubr.f32.gmra.mxu0 %v4073
    %v4075 = vpop.f32.mrf.mxu0
    %v4076 = vadd.f32 %v3939, %v4075
    %v4077 = vpop.f32.mrf.mxu0
    %v4078 = vadd.f32 %v3941, %v4077
    %4079 = vdwg.mxu0
    %v4080 = vand.u32 %v1297, 4294901760
    %4081 = vmatprep.subr.mxu0 %v4080
    %v4082 = vand.u32 %v1296, 4294901760
    %4083 = vmatpush1.msra.mxu0 %v4082
    %v4084 = vand.u32 %v1293, 4294901760
    %4085 = vmatprep.subr.mxu0 %v4084
    %v4086 = vand.u32 %v1292, 4294901760
    %4087 = vmatpush1.msra.mxu0 %v4086
    %v4088 = vand.u32 %v1289, 4294901760
    %4089 = vmatprep.subr.mxu0 %v4088
    %v4090 = vand.u32 %v1288, 4294901760
    %4091 = vmatpush1.msra.mxu0 %v4090
    %v4092 = vand.u32 %v1285, 4294901760
    %4093 = vmatprep.subr.mxu0 %v4092
    %v4094 = vand.u32 %v1284, 4294901760
    %4095 = vmatpush1.msra.mxu0 %v4094
    %v4096 = vand.u32 %v1281, 4294901760
    %4097 = vmatprep.subr.mxu0 %v4096
    %v4098 = vand.u32 %v1280, 4294901760
    %4099 = vmatpush1.msra.mxu0 %v4098
    %v4100 = vand.u32 %v1277, 4294901760
    %4101 = vmatprep.subr.mxu0 %v4100
    %v4102 = vand.u32 %v1276, 4294901760
    %4103 = vmatpush1.msra.mxu0 %v4102
    %v4104 = vand.u32 %v1273, 4294901760
    %4105 = vmatprep.subr.mxu0 %v4104
    %v4106 = vand.u32 %v1272, 4294901760
    %4107 = vmatpush1.msra.mxu0 %v4106
    %v4108 = vand.u32 %v1269, 4294901760
    %4109 = vmatprep.subr.mxu0 %v4108
    %v4110 = vand.u32 %v1268, 4294901760
    %4111 = vmatpush1.msra.mxu0 %v4110
    %v4112 = vand.u32 %v1265, 4294901760
    %4113 = vmatprep.subr.mxu0 %v4112
    %v4114 = vand.u32 %v1264, 4294901760
    %4115 = vmatpush1.msra.mxu0 %v4114
    %v4116 = vand.u32 %v1261, 4294901760
    %4117 = vmatprep.subr.mxu0 %v4116
    %v4118 = vand.u32 %v1260, 4294901760
    %4119 = vmatpush1.msra.mxu0 %v4118
    %v4120 = vand.u32 %v1257, 4294901760
    %4121 = vmatprep.subr.mxu0 %v4120
    %v4122 = vand.u32 %v1256, 4294901760
    %4123 = vmatpush1.msra.mxu0 %v4122
    %v4124 = vand.u32 %v1253, 4294901760
    %4125 = vmatprep.subr.mxu0 %v4124
    %v4126 = vand.u32 %v1252, 4294901760
    %4127 = vmatpush1.msra.mxu0 %v4126
    %v4128 = vand.u32 %v1249, 4294901760
    %4129 = vmatprep.subr.mxu0 %v4128
    %v4130 = vand.u32 %v1248, 4294901760
    %4131 = vmatpush1.msra.mxu0 %v4130
    %v4132 = vand.u32 %v1245, 4294901760
    %4133 = vmatprep.subr.mxu0 %v4132
    %v4134 = vand.u32 %v1244, 4294901760
    %4135 = vmatpush1.msra.mxu0 %v4134
    %v4136 = vand.u32 %v1241, 4294901760
    %4137 = vmatprep.subr.mxu0 %v4136
    %v4138 = vand.u32 %v1240, 4294901760
    %4139 = vmatpush1.msra.mxu0 %v4138
    %v4140 = vand.u32 %v1237, 4294901760
    %4141 = vmatprep.subr.mxu0 %v4140
    %v4142 = vand.u32 %v1236, 4294901760
    %4143 = vmatpush1.msra.mxu0 %v4142
    %v4144 = vand.u32 %v1361, 4294901760
    %4145 = vmatprep.subr.mxu0 %v4144
    %v4146 = vand.u32 %v1360, 4294901760
    %4147 = vmatpush2.msra.mxu0 %v4146
    %v4148 = vand.u32 %v1357, 4294901760
    %4149 = vmatprep.subr.mxu0 %v4148
    %v4150 = vand.u32 %v1356, 4294901760
    %4151 = vmatpush2.msra.mxu0 %v4150
    %v4152 = vand.u32 %v1353, 4294901760
    %4153 = vmatprep.subr.mxu0 %v4152
    %v4154 = vand.u32 %v1352, 4294901760
    %4155 = vmatpush2.msra.mxu0 %v4154
    %v4156 = vand.u32 %v1349, 4294901760
    %4157 = vmatprep.subr.mxu0 %v4156
    %v4158 = vand.u32 %v1348, 4294901760
    %4159 = vmatpush2.msra.mxu0 %v4158
    %v4160 = vand.u32 %v1345, 4294901760
    %4161 = vmatprep.subr.mxu0 %v4160
    %v4162 = vand.u32 %v1344, 4294901760
    %4163 = vmatpush2.msra.mxu0 %v4162
    %v4164 = vand.u32 %v1341, 4294901760
    %4165 = vmatprep.subr.mxu0 %v4164
    %v4166 = vand.u32 %v1340, 4294901760
    %4167 = vmatpush2.msra.mxu0 %v4166
    %v4168 = vand.u32 %v1337, 4294901760
    %4169 = vmatprep.subr.mxu0 %v4168
    %v4170 = vand.u32 %v1336, 4294901760
    %4171 = vmatpush2.msra.mxu0 %v4170
    %v4172 = vand.u32 %v1333, 4294901760
    %4173 = vmatprep.subr.mxu0 %v4172
    %v4174 = vand.u32 %v1332, 4294901760
    %4175 = vmatpush2.msra.mxu0 %v4174
    %v4176 = vand.u32 %v1329, 4294901760
    %4177 = vmatprep.subr.mxu0 %v4176
    %v4178 = vand.u32 %v1328, 4294901760
    %4179 = vmatpush2.msra.mxu0 %v4178
    %v4180 = vand.u32 %v1325, 4294901760
    %4181 = vmatprep.subr.mxu0 %v4180
    %v4182 = vand.u32 %v1324, 4294901760
    %4183 = vmatpush2.msra.mxu0 %v4182
    %v4184 = vand.u32 %v1321, 4294901760
    %4185 = vmatprep.subr.mxu0 %v4184
    %v4186 = vand.u32 %v1320, 4294901760
    %4187 = vmatpush2.msra.mxu0 %v4186
    %v4188 = vand.u32 %v1317, 4294901760
    %4189 = vmatprep.subr.mxu0 %v4188
    %v4190 = vand.u32 %v1316, 4294901760
    %4191 = vmatpush2.msra.mxu0 %v4190
    %v4192 = vand.u32 %v1313, 4294901760
    %4193 = vmatprep.subr.mxu0 %v4192
    %v4194 = vand.u32 %v1312, 4294901760
    %4195 = vmatpush2.msra.mxu0 %v4194
    %v4196 = vand.u32 %v1309, 4294901760
    %4197 = vmatprep.subr.mxu0 %v4196
    %v4198 = vand.u32 %v1308, 4294901760
    %4199 = vmatpush2.msra.mxu0 %v4198
    %v4200 = vand.u32 %v1305, 4294901760
    %4201 = vmatprep.subr.mxu0 %v4200
    %v4202 = vand.u32 %v1304, 4294901760
    %4203 = vmatpush2.msra.mxu0 %v4202
    %v4204 = vand.u32 %v1301, 4294901760
    %4205 = vmatprep.subr.mxu0 %v4204
    %v4206 = vand.u32 %v1300, 4294901760
    %4207 = vmatpush2.msra.mxu0 %v4206
    %v4208 = vand.u32 %v1231, 4294901760
    %v4209 = vsub.f32 %v1231, %v4208
    %v4210 = vand.u32 %v4209, 4294901760
    %v4211 = vsub.f32 %v4209, %v4210
    %v4212 = vand.u32 %v4211, 4294901760
    %4213 = vmatprep.mubr.f32.mxu0 %v4212
    %v4214 = vand.u32 %v1230, 4294901760
    %v4215 = vsub.f32 %v1230, %v4214
    %v4216 = vand.u32 %v4215, 4294901760
    %v4217 = vsub.f32 %v4215, %v4216
    %v4218 = vand.u32 %v4217, 4294901760
    %4219 = vmatmul.mubr.f32.gmra.mxu0 %v4218
    %v4220 = vpop.f32.mrf.mxu0
    %v4221 = vadd.f32 %v1503, %v4220
    %v4222 = vpop.f32.mrf.mxu0
    %v4223 = vadd.f32 %v1507, %v4222
    %4224 = vdwg.mxu0
    %v4225 = vand.u32 %v1297, 4294901760
    %v4226 = vsub.f32 %v1297, %v4225
    %v4227 = vand.u32 %v4226, 4294901760
    %v4228 = vsub.f32 %v4226, %v4227
    %v4229 = vand.u32 %v4228, 4294901760
    %4230 = vmatprep.subr.mxu0 %v4229
    %v4231 = vand.u32 %v1296, 4294901760
    %v4232 = vsub.f32 %v1296, %v4231
    %v4233 = vand.u32 %v4232, 4294901760
    %v4234 = vsub.f32 %v4232, %v4233
    %v4235 = vand.u32 %v4234, 4294901760
    %4236 = vmatpush1.msra.mxu0 %v4235
    %v4237 = vand.u32 %v1293, 4294901760
    %v4238 = vsub.f32 %v1293, %v4237
    %v4239 = vand.u32 %v4238, 4294901760
    %v4240 = vsub.f32 %v4238, %v4239
    %v4241 = vand.u32 %v4240, 4294901760
    %4242 = vmatprep.subr.mxu0 %v4241
    %v4243 = vand.u32 %v1292, 4294901760
    %v4244 = vsub.f32 %v1292, %v4243
    %v4245 = vand.u32 %v4244, 4294901760
    %v4246 = vsub.f32 %v4244, %v4245
    %v4247 = vand.u32 %v4246, 4294901760
    %4248 = vmatpush1.msra.mxu0 %v4247
    %v4249 = vand.u32 %v1289, 4294901760
    %v4250 = vsub.f32 %v1289, %v4249
    %v4251 = vand.u32 %v4250, 4294901760
    %v4252 = vsub.f32 %v4250, %v4251
    %v4253 = vand.u32 %v4252, 4294901760
    %4254 = vmatprep.subr.mxu0 %v4253
    %v4255 = vand.u32 %v1288, 4294901760
    %v4256 = vsub.f32 %v1288, %v4255
    %v4257 = vand.u32 %v4256, 4294901760
    %v4258 = vsub.f32 %v4256, %v4257
    %v4259 = vand.u32 %v4258, 4294901760
    %4260 = vmatpush1.msra.mxu0 %v4259
    %v4261 = vand.u32 %v1285, 4294901760
    %v4262 = vsub.f32 %v1285, %v4261
    %v4263 = vand.u32 %v4262, 4294901760
    %v4264 = vsub.f32 %v4262, %v4263
    %v4265 = vand.u32 %v4264, 4294901760
    %4266 = vmatprep.subr.mxu0 %v4265
    %v4267 = vand.u32 %v1284, 4294901760
    %v4268 = vsub.f32 %v1284, %v4267
    %v4269 = vand.u32 %v4268, 4294901760
    %v4270 = vsub.f32 %v4268, %v4269
    %v4271 = vand.u32 %v4270, 4294901760
    %4272 = vmatpush1.msra.mxu0 %v4271
    %v4273 = vand.u32 %v1281, 4294901760
    %v4274 = vsub.f32 %v1281, %v4273
    %v4275 = vand.u32 %v4274, 4294901760
    %v4276 = vsub.f32 %v4274, %v4275
    %v4277 = vand.u32 %v4276, 4294901760
    %4278 = vmatprep.subr.mxu0 %v4277
    %v4279 = vand.u32 %v1280, 4294901760
    %v4280 = vsub.f32 %v1280, %v4279
    %v4281 = vand.u32 %v4280, 4294901760
    %v4282 = vsub.f32 %v4280, %v4281
    %v4283 = vand.u32 %v4282, 4294901760
    %4284 = vmatpush1.msra.mxu0 %v4283
    %v4285 = vand.u32 %v1277, 4294901760
    %v4286 = vsub.f32 %v1277, %v4285
    %v4287 = vand.u32 %v4286, 4294901760
    %v4288 = vsub.f32 %v4286, %v4287
    %v4289 = vand.u32 %v4288, 4294901760
    %4290 = vmatprep.subr.mxu0 %v4289
    %v4291 = vand.u32 %v1276, 4294901760
    %v4292 = vsub.f32 %v1276, %v4291
    %v4293 = vand.u32 %v4292, 4294901760
    %v4294 = vsub.f32 %v4292, %v4293
    %v4295 = vand.u32 %v4294, 4294901760
    %4296 = vmatpush1.msra.mxu0 %v4295
    %v4297 = vand.u32 %v1273, 4294901760
    %v4298 = vsub.f32 %v1273, %v4297
    %v4299 = vand.u32 %v4298, 4294901760
    %v4300 = vsub.f32 %v4298, %v4299
    %v4301 = vand.u32 %v4300, 4294901760
    %4302 = vmatprep.subr.mxu0 %v4301
    %v4303 = vand.u32 %v1272, 4294901760
    %v4304 = vsub.f32 %v1272, %v4303
    %v4305 = vand.u32 %v4304, 4294901760
    %v4306 = vsub.f32 %v4304, %v4305
    %v4307 = vand.u32 %v4306, 4294901760
    %4308 = vmatpush1.msra.mxu0 %v4307
    %v4309 = vand.u32 %v1269, 4294901760
    %v4310 = vsub.f32 %v1269, %v4309
    %v4311 = vand.u32 %v4310, 4294901760
    %v4312 = vsub.f32 %v4310, %v4311
    %v4313 = vand.u32 %v4312, 4294901760
    %4314 = vmatprep.subr.mxu0 %v4313
    %v4315 = vand.u32 %v1268, 4294901760
    %v4316 = vsub.f32 %v1268, %v4315
    %v4317 = vand.u32 %v4316, 4294901760
    %v4318 = vsub.f32 %v4316, %v4317
    %v4319 = vand.u32 %v4318, 4294901760
    %4320 = vmatpush1.msra.mxu0 %v4319
    %v4321 = vand.u32 %v1265, 4294901760
    %v4322 = vsub.f32 %v1265, %v4321
    %v4323 = vand.u32 %v4322, 4294901760
    %v4324 = vsub.f32 %v4322, %v4323
    %v4325 = vand.u32 %v4324, 4294901760
    %4326 = vmatprep.subr.mxu0 %v4325
    %v4327 = vand.u32 %v1264, 4294901760
    %v4328 = vsub.f32 %v1264, %v4327
    %v4329 = vand.u32 %v4328, 4294901760
    %v4330 = vsub.f32 %v4328, %v4329
    %v4331 = vand.u32 %v4330, 4294901760
    %4332 = vmatpush1.msra.mxu0 %v4331
    %v4333 = vand.u32 %v1261, 4294901760
    %v4334 = vsub.f32 %v1261, %v4333
    %v4335 = vand.u32 %v4334, 4294901760
    %v4336 = vsub.f32 %v4334, %v4335
    %v4337 = vand.u32 %v4336, 4294901760
    %4338 = vmatprep.subr.mxu0 %v4337
    %v4339 = vand.u32 %v1260, 4294901760
    %v4340 = vsub.f32 %v1260, %v4339
    %v4341 = vand.u32 %v4340, 4294901760
    %v4342 = vsub.f32 %v4340, %v4341
    %v4343 = vand.u32 %v4342, 4294901760
    %4344 = vmatpush1.msra.mxu0 %v4343
    %v4345 = vand.u32 %v1257, 4294901760
    %v4346 = vsub.f32 %v1257, %v4345
    %v4347 = vand.u32 %v4346, 4294901760
    %v4348 = vsub.f32 %v4346, %v4347
    %v4349 = vand.u32 %v4348, 4294901760
    %4350 = vmatprep.subr.mxu0 %v4349
    %v4351 = vand.u32 %v1256, 4294901760
    %v4352 = vsub.f32 %v1256, %v4351
    %v4353 = vand.u32 %v4352, 4294901760
    %v4354 = vsub.f32 %v4352, %v4353
    %v4355 = vand.u32 %v4354, 4294901760
    %4356 = vmatpush1.msra.mxu0 %v4355
    %v4357 = vand.u32 %v1253, 4294901760
    %v4358 = vsub.f32 %v1253, %v4357
    %v4359 = vand.u32 %v4358, 4294901760
    %v4360 = vsub.f32 %v4358, %v4359
    %v4361 = vand.u32 %v4360, 4294901760
    %4362 = vmatprep.subr.mxu0 %v4361
    %v4363 = vand.u32 %v1252, 4294901760
    %v4364 = vsub.f32 %v1252, %v4363
    %v4365 = vand.u32 %v4364, 4294901760
    %v4366 = vsub.f32 %v4364, %v4365
    %v4367 = vand.u32 %v4366, 4294901760
    %4368 = vmatpush1.msra.mxu0 %v4367
    %v4369 = vand.u32 %v1249, 4294901760
    %v4370 = vsub.f32 %v1249, %v4369
    %v4371 = vand.u32 %v4370, 4294901760
    %v4372 = vsub.f32 %v4370, %v4371
    %v4373 = vand.u32 %v4372, 4294901760
    %4374 = vmatprep.subr.mxu0 %v4373
    %v4375 = vand.u32 %v1248, 4294901760
    %v4376 = vsub.f32 %v1248, %v4375
    %v4377 = vand.u32 %v4376, 4294901760
    %v4378 = vsub.f32 %v4376, %v4377
    %v4379 = vand.u32 %v4378, 4294901760
    %4380 = vmatpush1.msra.mxu0 %v4379
    %v4381 = vand.u32 %v1245, 4294901760
    %v4382 = vsub.f32 %v1245, %v4381
    %v4383 = vand.u32 %v4382, 4294901760
    %v4384 = vsub.f32 %v4382, %v4383
    %v4385 = vand.u32 %v4384, 4294901760
    %4386 = vmatprep.subr.mxu0 %v4385
    %v4387 = vand.u32 %v1244, 4294901760
    %v4388 = vsub.f32 %v1244, %v4387
    %v4389 = vand.u32 %v4388, 4294901760
    %v4390 = vsub.f32 %v4388, %v4389
    %v4391 = vand.u32 %v4390, 4294901760
    %4392 = vmatpush1.msra.mxu0 %v4391
    %v4393 = vand.u32 %v1241, 4294901760
    %v4394 = vsub.f32 %v1241, %v4393
    %v4395 = vand.u32 %v4394, 4294901760
    %v4396 = vsub.f32 %v4394, %v4395
    %v4397 = vand.u32 %v4396, 4294901760
    %4398 = vmatprep.subr.mxu0 %v4397
    %v4399 = vand.u32 %v1240, 4294901760
    %v4400 = vsub.f32 %v1240, %v4399
    %v4401 = vand.u32 %v4400, 4294901760
    %v4402 = vsub.f32 %v4400, %v4401
    %v4403 = vand.u32 %v4402, 4294901760
    %4404 = vmatpush1.msra.mxu0 %v4403
    %v4405 = vand.u32 %v1237, 4294901760
    %v4406 = vsub.f32 %v1237, %v4405
    %v4407 = vand.u32 %v4406, 4294901760
    %v4408 = vsub.f32 %v4406, %v4407
    %v4409 = vand.u32 %v4408, 4294901760
    %4410 = vmatprep.subr.mxu0 %v4409
    %v4411 = vand.u32 %v1236, 4294901760
    %v4412 = vsub.f32 %v1236, %v4411
    %v4413 = vand.u32 %v4412, 4294901760
    %v4414 = vsub.f32 %v4412, %v4413
    %v4415 = vand.u32 %v4414, 4294901760
    %4416 = vmatpush1.msra.mxu0 %v4415
    %v4417 = vand.u32 %v1361, 4294901760
    %v4418 = vsub.f32 %v1361, %v4417
    %v4419 = vand.u32 %v4418, 4294901760
    %v4420 = vsub.f32 %v4418, %v4419
    %v4421 = vand.u32 %v4420, 4294901760
    %4422 = vmatprep.subr.mxu0 %v4421
    %v4423 = vand.u32 %v1360, 4294901760
    %v4424 = vsub.f32 %v1360, %v4423
    %v4425 = vand.u32 %v4424, 4294901760
    %v4426 = vsub.f32 %v4424, %v4425
    %v4427 = vand.u32 %v4426, 4294901760
    %4428 = vmatpush2.msra.mxu0 %v4427
    %v4429 = vand.u32 %v1357, 4294901760
    %v4430 = vsub.f32 %v1357, %v4429
    %v4431 = vand.u32 %v4430, 4294901760
    %v4432 = vsub.f32 %v4430, %v4431
    %v4433 = vand.u32 %v4432, 4294901760
    %4434 = vmatprep.subr.mxu0 %v4433
    %v4435 = vand.u32 %v1356, 4294901760
    %v4436 = vsub.f32 %v1356, %v4435
    %v4437 = vand.u32 %v4436, 4294901760
    %v4438 = vsub.f32 %v4436, %v4437
    %v4439 = vand.u32 %v4438, 4294901760
    %4440 = vmatpush2.msra.mxu0 %v4439
    %v4441 = vand.u32 %v1353, 4294901760
    %v4442 = vsub.f32 %v1353, %v4441
    %v4443 = vand.u32 %v4442, 4294901760
    %v4444 = vsub.f32 %v4442, %v4443
    %v4445 = vand.u32 %v4444, 4294901760
    %4446 = vmatprep.subr.mxu0 %v4445
    %v4447 = vand.u32 %v1352, 4294901760
    %v4448 = vsub.f32 %v1352, %v4447
    %v4449 = vand.u32 %v4448, 4294901760
    %v4450 = vsub.f32 %v4448, %v4449
    %v4451 = vand.u32 %v4450, 4294901760
    %4452 = vmatpush2.msra.mxu0 %v4451
    %v4453 = vand.u32 %v1349, 4294901760
    %v4454 = vsub.f32 %v1349, %v4453
    %v4455 = vand.u32 %v4454, 4294901760
    %v4456 = vsub.f32 %v4454, %v4455
    %v4457 = vand.u32 %v4456, 4294901760
    %4458 = vmatprep.subr.mxu0 %v4457
    %v4459 = vand.u32 %v1348, 4294901760
    %v4460 = vsub.f32 %v1348, %v4459
    %v4461 = vand.u32 %v4460, 4294901760
    %v4462 = vsub.f32 %v4460, %v4461
    %v4463 = vand.u32 %v4462, 4294901760
    %4464 = vmatpush2.msra.mxu0 %v4463
    %v4465 = vand.u32 %v1345, 4294901760
    %v4466 = vsub.f32 %v1345, %v4465
    %v4467 = vand.u32 %v4466, 4294901760
    %v4468 = vsub.f32 %v4466, %v4467
    %v4469 = vand.u32 %v4468, 4294901760
    %4470 = vmatprep.subr.mxu0 %v4469
    %v4471 = vand.u32 %v1344, 4294901760
    %v4472 = vsub.f32 %v1344, %v4471
    %v4473 = vand.u32 %v4472, 4294901760
    %v4474 = vsub.f32 %v4472, %v4473
    %v4475 = vand.u32 %v4474, 4294901760
    %4476 = vmatpush2.msra.mxu0 %v4475
    %v4477 = vand.u32 %v1341, 4294901760
    %v4478 = vsub.f32 %v1341, %v4477
    %v4479 = vand.u32 %v4478, 4294901760
    %v4480 = vsub.f32 %v4478, %v4479
    %v4481 = vand.u32 %v4480, 4294901760
    %4482 = vmatprep.subr.mxu0 %v4481
    %v4483 = vand.u32 %v1340, 4294901760
    %v4484 = vsub.f32 %v1340, %v4483
    %v4485 = vand.u32 %v4484, 4294901760
    %v4486 = vsub.f32 %v4484, %v4485
    %v4487 = vand.u32 %v4486, 4294901760
    %4488 = vmatpush2.msra.mxu0 %v4487
    %v4489 = vand.u32 %v1337, 4294901760
    %v4490 = vsub.f32 %v1337, %v4489
    %v4491 = vand.u32 %v4490, 4294901760
    %v4492 = vsub.f32 %v4490, %v4491
    %v4493 = vand.u32 %v4492, 4294901760
    %4494 = vmatprep.subr.mxu0 %v4493
    %v4495 = vand.u32 %v1336, 4294901760
    %v4496 = vsub.f32 %v1336, %v4495
    %v4497 = vand.u32 %v4496, 4294901760
    %v4498 = vsub.f32 %v4496, %v4497
    %v4499 = vand.u32 %v4498, 4294901760
    %4500 = vmatpush2.msra.mxu0 %v4499
    %v4501 = vand.u32 %v1333, 4294901760
    %v4502 = vsub.f32 %v1333, %v4501
    %v4503 = vand.u32 %v4502, 4294901760
    %v4504 = vsub.f32 %v4502, %v4503
    %v4505 = vand.u32 %v4504, 4294901760
    %4506 = vmatprep.subr.mxu0 %v4505
    %v4507 = vand.u32 %v1332, 4294901760
    %v4508 = vsub.f32 %v1332, %v4507
    %v4509 = vand.u32 %v4508, 4294901760
    %v4510 = vsub.f32 %v4508, %v4509
    %v4511 = vand.u32 %v4510, 4294901760
    %4512 = vmatpush2.msra.mxu0 %v4511
    %v4513 = vand.u32 %v1329, 4294901760
    %v4514 = vsub.f32 %v1329, %v4513
    %v4515 = vand.u32 %v4514, 4294901760
    %v4516 = vsub.f32 %v4514, %v4515
    %v4517 = vand.u32 %v4516, 4294901760
    %4518 = vmatprep.subr.mxu0 %v4517
    %v4519 = vand.u32 %v1328, 4294901760
    %v4520 = vsub.f32 %v1328, %v4519
    %v4521 = vand.u32 %v4520, 4294901760
    %v4522 = vsub.f32 %v4520, %v4521
    %v4523 = vand.u32 %v4522, 4294901760
    %4524 = vmatpush2.msra.mxu0 %v4523
    %v4525 = vand.u32 %v1325, 4294901760
    %v4526 = vsub.f32 %v1325, %v4525
    %v4527 = vand.u32 %v4526, 4294901760
    %v4528 = vsub.f32 %v4526, %v4527
    %v4529 = vand.u32 %v4528, 4294901760
    %4530 = vmatprep.subr.mxu0 %v4529
    %v4531 = vand.u32 %v1324, 4294901760
    %v4532 = vsub.f32 %v1324, %v4531
    %v4533 = vand.u32 %v4532, 4294901760
    %v4534 = vsub.f32 %v4532, %v4533
    %v4535 = vand.u32 %v4534, 4294901760
    %4536 = vmatpush2.msra.mxu0 %v4535
    %v4537 = vand.u32 %v1321, 4294901760
    %v4538 = vsub.f32 %v1321, %v4537
    %v4539 = vand.u32 %v4538, 4294901760
    %v4540 = vsub.f32 %v4538, %v4539
    %v4541 = vand.u32 %v4540, 4294901760
    %4542 = vmatprep.subr.mxu0 %v4541
    %v4543 = vand.u32 %v1320, 4294901760
    %v4544 = vsub.f32 %v1320, %v4543
    %v4545 = vand.u32 %v4544, 4294901760
    %v4546 = vsub.f32 %v4544, %v4545
    %v4547 = vand.u32 %v4546, 4294901760
    %4548 = vmatpush2.msra.mxu0 %v4547
    %v4549 = vand.u32 %v1317, 4294901760
    %v4550 = vsub.f32 %v1317, %v4549
    %v4551 = vand.u32 %v4550, 4294901760
    %v4552 = vsub.f32 %v4550, %v4551
    %v4553 = vand.u32 %v4552, 4294901760
    %4554 = vmatprep.subr.mxu0 %v4553
    %v4555 = vand.u32 %v1316, 4294901760
    %v4556 = vsub.f32 %v1316, %v4555
    %v4557 = vand.u32 %v4556, 4294901760
    %v4558 = vsub.f32 %v4556, %v4557
    %v4559 = vand.u32 %v4558, 4294901760
    %4560 = vmatpush2.msra.mxu0 %v4559
    %v4561 = vand.u32 %v1313, 4294901760
    %v4562 = vsub.f32 %v1313, %v4561
    %v4563 = vand.u32 %v4562, 4294901760
    %v4564 = vsub.f32 %v4562, %v4563
    %v4565 = vand.u32 %v4564, 4294901760
    %4566 = vmatprep.subr.mxu0 %v4565
    %v4567 = vand.u32 %v1312, 4294901760
    %v4568 = vsub.f32 %v1312, %v4567
    %v4569 = vand.u32 %v4568, 4294901760
    %v4570 = vsub.f32 %v4568, %v4569
    %v4571 = vand.u32 %v4570, 4294901760
    %4572 = vmatpush2.msra.mxu0 %v4571
    %v4573 = vand.u32 %v1309, 4294901760
    %v4574 = vsub.f32 %v1309, %v4573
    %v4575 = vand.u32 %v4574, 4294901760
    %v4576 = vsub.f32 %v4574, %v4575
    %v4577 = vand.u32 %v4576, 4294901760
    %4578 = vmatprep.subr.mxu0 %v4577
    %v4579 = vand.u32 %v1308, 4294901760
    %v4580 = vsub.f32 %v1308, %v4579
    %v4581 = vand.u32 %v4580, 4294901760
    %v4582 = vsub.f32 %v4580, %v4581
    %v4583 = vand.u32 %v4582, 4294901760
    %4584 = vmatpush2.msra.mxu0 %v4583
    %v4585 = vand.u32 %v1305, 4294901760
    %v4586 = vsub.f32 %v1305, %v4585
    %v4587 = vand.u32 %v4586, 4294901760
    %v4588 = vsub.f32 %v4586, %v4587
    %v4589 = vand.u32 %v4588, 4294901760
    %4590 = vmatprep.subr.mxu0 %v4589
    %v4591 = vand.u32 %v1304, 4294901760
    %v4592 = vsub.f32 %v1304, %v4591
    %v4593 = vand.u32 %v4592, 4294901760
    %v4594 = vsub.f32 %v4592, %v4593
    %v4595 = vand.u32 %v4594, 4294901760
    %4596 = vmatpush2.msra.mxu0 %v4595
    %v4597 = vand.u32 %v1301, 4294901760
    %v4598 = vsub.f32 %v1301, %v4597
    %v4599 = vand.u32 %v4598, 4294901760
    %v4600 = vsub.f32 %v4598, %v4599
    %v4601 = vand.u32 %v4600, 4294901760
    %4602 = vmatprep.subr.mxu0 %v4601
    %v4603 = vand.u32 %v1300, 4294901760
    %v4604 = vsub.f32 %v1300, %v4603
    %v4605 = vand.u32 %v4604, 4294901760
    %v4606 = vsub.f32 %v4604, %v4605
    %v4607 = vand.u32 %v4606, 4294901760
    %4608 = vmatpush2.msra.mxu0 %v4607
    %v4609 = vand.u32 %v1231, 4294901760
    %4610 = vmatprep.mubr.f32.mxu0 %v4609
    %v4611 = vand.u32 %v1230, 4294901760
    %4612 = vmatmul.mubr.f32.gmra.mxu0 %v4611
    %v4613 = vpop.f32.mrf.mxu0
    %v4614 = vadd.f32 %v4221, %v4613
    %v4615 = vpop.f32.mrf.mxu0
    %v4616 = vadd.f32 %v4223, %v4615
    %4617 = vdwg.mxu0
    %v4618 = vand.u32 %v1297, 4294901760
    %v4619 = vsub.f32 %v1297, %v4618
    %4620 = vmatprep.subr.mxu0 %v4619
    %v4621 = vand.u32 %v1296, 4294901760
    %v4622 = vsub.f32 %v1296, %v4621
    %4623 = vmatpush1.msra.mxu0 %v4622
    %v4624 = vand.u32 %v1293, 4294901760
    %v4625 = vsub.f32 %v1293, %v4624
    %4626 = vmatprep.subr.mxu0 %v4625
    %v4627 = vand.u32 %v1292, 4294901760
    %v4628 = vsub.f32 %v1292, %v4627
    %4629 = vmatpush1.msra.mxu0 %v4628
    %v4630 = vand.u32 %v1289, 4294901760
    %v4631 = vsub.f32 %v1289, %v4630
    %4632 = vmatprep.subr.mxu0 %v4631
    %v4633 = vand.u32 %v1288, 4294901760
    %v4634 = vsub.f32 %v1288, %v4633
    %4635 = vmatpush1.msra.mxu0 %v4634
    %v4636 = vand.u32 %v1285, 4294901760
    %v4637 = vsub.f32 %v1285, %v4636
    %4638 = vmatprep.subr.mxu0 %v4637
    %v4639 = vand.u32 %v1284, 4294901760
    %v4640 = vsub.f32 %v1284, %v4639
    %4641 = vmatpush1.msra.mxu0 %v4640
    %v4642 = vand.u32 %v1281, 4294901760
    %v4643 = vsub.f32 %v1281, %v4642
    %4644 = vmatprep.subr.mxu0 %v4643
    %v4645 = vand.u32 %v1280, 4294901760
    %v4646 = vsub.f32 %v1280, %v4645
    %4647 = vmatpush1.msra.mxu0 %v4646
    %v4648 = vand.u32 %v1277, 4294901760
    %v4649 = vsub.f32 %v1277, %v4648
    %4650 = vmatprep.subr.mxu0 %v4649
    %v4651 = vand.u32 %v1276, 4294901760
    %v4652 = vsub.f32 %v1276, %v4651
    %4653 = vmatpush1.msra.mxu0 %v4652
    %v4654 = vand.u32 %v1273, 4294901760
    %v4655 = vsub.f32 %v1273, %v4654
    %4656 = vmatprep.subr.mxu0 %v4655
    %v4657 = vand.u32 %v1272, 4294901760
    %v4658 = vsub.f32 %v1272, %v4657
    %4659 = vmatpush1.msra.mxu0 %v4658
    %v4660 = vand.u32 %v1269, 4294901760
    %v4661 = vsub.f32 %v1269, %v4660
    %4662 = vmatprep.subr.mxu0 %v4661
    %v4663 = vand.u32 %v1268, 4294901760
    %v4664 = vsub.f32 %v1268, %v4663
    %4665 = vmatpush1.msra.mxu0 %v4664
    %v4666 = vand.u32 %v1265, 4294901760
    %v4667 = vsub.f32 %v1265, %v4666
    %4668 = vmatprep.subr.mxu0 %v4667
    %v4669 = vand.u32 %v1264, 4294901760
    %v4670 = vsub.f32 %v1264, %v4669
    %4671 = vmatpush1.msra.mxu0 %v4670
    %v4672 = vand.u32 %v1261, 4294901760
    %v4673 = vsub.f32 %v1261, %v4672
    %4674 = vmatprep.subr.mxu0 %v4673
    %v4675 = vand.u32 %v1260, 4294901760
    %v4676 = vsub.f32 %v1260, %v4675
    %4677 = vmatpush1.msra.mxu0 %v4676
    %v4678 = vand.u32 %v1257, 4294901760
    %v4679 = vsub.f32 %v1257, %v4678
    %4680 = vmatprep.subr.mxu0 %v4679
    %v4681 = vand.u32 %v1256, 4294901760
    %v4682 = vsub.f32 %v1256, %v4681
    %4683 = vmatpush1.msra.mxu0 %v4682
    %v4684 = vand.u32 %v1253, 4294901760
    %v4685 = vsub.f32 %v1253, %v4684
    %4686 = vmatprep.subr.mxu0 %v4685
    %v4687 = vand.u32 %v1252, 4294901760
    %v4688 = vsub.f32 %v1252, %v4687
    %4689 = vmatpush1.msra.mxu0 %v4688
    %v4690 = vand.u32 %v1249, 4294901760
    %v4691 = vsub.f32 %v1249, %v4690
    %4692 = vmatprep.subr.mxu0 %v4691
    %v4693 = vand.u32 %v1248, 4294901760
    %v4694 = vsub.f32 %v1248, %v4693
    %4695 = vmatpush1.msra.mxu0 %v4694
    %v4696 = vand.u32 %v1245, 4294901760
    %v4697 = vsub.f32 %v1245, %v4696
    %4698 = vmatprep.subr.mxu0 %v4697
    %v4699 = vand.u32 %v1244, 4294901760
    %v4700 = vsub.f32 %v1244, %v4699
    %4701 = vmatpush1.msra.mxu0 %v4700
    %v4702 = vand.u32 %v1241, 4294901760
    %v4703 = vsub.f32 %v1241, %v4702
    %4704 = vmatprep.subr.mxu0 %v4703
    %v4705 = vand.u32 %v1240, 4294901760
    %v4706 = vsub.f32 %v1240, %v4705
    %4707 = vmatpush1.msra.mxu0 %v4706
    %v4708 = vand.u32 %v1237, 4294901760
    %v4709 = vsub.f32 %v1237, %v4708
    %4710 = vmatprep.subr.mxu0 %v4709
    %v4711 = vand.u32 %v1236, 4294901760
    %v4712 = vsub.f32 %v1236, %v4711
    %4713 = vmatpush1.msra.mxu0 %v4712
    %v4714 = vand.u32 %v1361, 4294901760
    %v4715 = vsub.f32 %v1361, %v4714
    %4716 = vmatprep.subr.mxu0 %v4715
    %v4717 = vand.u32 %v1360, 4294901760
    %v4718 = vsub.f32 %v1360, %v4717
    %4719 = vmatpush2.msra.mxu0 %v4718
    %v4720 = vand.u32 %v1357, 4294901760
    %v4721 = vsub.f32 %v1357, %v4720
    %4722 = vmatprep.subr.mxu0 %v4721
    %v4723 = vand.u32 %v1356, 4294901760
    %v4724 = vsub.f32 %v1356, %v4723
    %4725 = vmatpush2.msra.mxu0 %v4724
    %v4726 = vand.u32 %v1353, 4294901760
    %v4727 = vsub.f32 %v1353, %v4726
    %4728 = vmatprep.subr.mxu0 %v4727
    %v4729 = vand.u32 %v1352, 4294901760
    %v4730 = vsub.f32 %v1352, %v4729
    %4731 = vmatpush2.msra.mxu0 %v4730
    %v4732 = vand.u32 %v1349, 4294901760
    %v4733 = vsub.f32 %v1349, %v4732
    %4734 = vmatprep.subr.mxu0 %v4733
    %v4735 = vand.u32 %v1348, 4294901760
    %v4736 = vsub.f32 %v1348, %v4735
    %4737 = vmatpush2.msra.mxu0 %v4736
    %v4738 = vand.u32 %v1345, 4294901760
    %v4739 = vsub.f32 %v1345, %v4738
    %4740 = vmatprep.subr.mxu0 %v4739
    %v4741 = vand.u32 %v1344, 4294901760
    %v4742 = vsub.f32 %v1344, %v4741
    %4743 = vmatpush2.msra.mxu0 %v4742
    %v4744 = vand.u32 %v1341, 4294901760
    %v4745 = vsub.f32 %v1341, %v4744
    %4746 = vmatprep.subr.mxu0 %v4745
    %v4747 = vand.u32 %v1340, 4294901760
    %v4748 = vsub.f32 %v1340, %v4747
    %4749 = vmatpush2.msra.mxu0 %v4748
    %v4750 = vand.u32 %v1337, 4294901760
    %v4751 = vsub.f32 %v1337, %v4750
    %4752 = vmatprep.subr.mxu0 %v4751
    %v4753 = vand.u32 %v1336, 4294901760
    %v4754 = vsub.f32 %v1336, %v4753
    %4755 = vmatpush2.msra.mxu0 %v4754
    %v4756 = vand.u32 %v1333, 4294901760
    %v4757 = vsub.f32 %v1333, %v4756
    %4758 = vmatprep.subr.mxu0 %v4757
    %v4759 = vand.u32 %v1332, 4294901760
    %v4760 = vsub.f32 %v1332, %v4759
    %4761 = vmatpush2.msra.mxu0 %v4760
    %v4762 = vand.u32 %v1329, 4294901760
    %v4763 = vsub.f32 %v1329, %v4762
    %4764 = vmatprep.subr.mxu0 %v4763
    %v4765 = vand.u32 %v1328, 4294901760
    %v4766 = vsub.f32 %v1328, %v4765
    %4767 = vmatpush2.msra.mxu0 %v4766
    %v4768 = vand.u32 %v1325, 4294901760
    %v4769 = vsub.f32 %v1325, %v4768
    %4770 = vmatprep.subr.mxu0 %v4769
    %v4771 = vand.u32 %v1324, 4294901760
    %v4772 = vsub.f32 %v1324, %v4771
    %4773 = vmatpush2.msra.mxu0 %v4772
    %v4774 = vand.u32 %v1321, 4294901760
    %v4775 = vsub.f32 %v1321, %v4774
    %4776 = vmatprep.subr.mxu0 %v4775
    %v4777 = vand.u32 %v1320, 4294901760
    %v4778 = vsub.f32 %v1320, %v4777
    %4779 = vmatpush2.msra.mxu0 %v4778
    %v4780 = vand.u32 %v1317, 4294901760
    %v4781 = vsub.f32 %v1317, %v4780
    %4782 = vmatprep.subr.mxu0 %v4781
    %v4783 = vand.u32 %v1316, 4294901760
    %v4784 = vsub.f32 %v1316, %v4783
    %4785 = vmatpush2.msra.mxu0 %v4784
    %v4786 = vand.u32 %v1313, 4294901760
    %v4787 = vsub.f32 %v1313, %v4786
    %4788 = vmatprep.subr.mxu0 %v4787
    %v4789 = vand.u32 %v1312, 4294901760
    %v4790 = vsub.f32 %v1312, %v4789
    %4791 = vmatpush2.msra.mxu0 %v4790
    %v4792 = vand.u32 %v1309, 4294901760
    %v4793 = vsub.f32 %v1309, %v4792
    %4794 = vmatprep.subr.mxu0 %v4793
    %v4795 = vand.u32 %v1308, 4294901760
    %v4796 = vsub.f32 %v1308, %v4795
    %4797 = vmatpush2.msra.mxu0 %v4796
    %v4798 = vand.u32 %v1305, 4294901760
    %v4799 = vsub.f32 %v1305, %v4798
    %4800 = vmatprep.subr.mxu0 %v4799
    %v4801 = vand.u32 %v1304, 4294901760
    %v4802 = vsub.f32 %v1304, %v4801
    %4803 = vmatpush2.msra.mxu0 %v4802
    %v4804 = vand.u32 %v1301, 4294901760
    %v4805 = vsub.f32 %v1301, %v4804
    %4806 = vmatprep.subr.mxu0 %v4805
    %v4807 = vand.u32 %v1300, 4294901760
    %v4808 = vsub.f32 %v1300, %v4807
    %4809 = vmatpush2.msra.mxu0 %v4808
    %v4810 = vand.u32 %v1231, 4294901760
    %v4811 = vsub.f32 %v1231, %v4810
    %4812 = vmatprep.mubr.f32.mxu0 %v4811
    %v4813 = vand.u32 %v1230, 4294901760
    %v4814 = vsub.f32 %v1230, %v4813
    %4815 = vmatmul.mubr.f32.gmra.mxu0 %v4814
    %v4816 = vpop.f32.mrf.mxu0
    %v4817 = vadd.f32 %v4614, %v4816
    %v4818 = vpop.f32.mrf.mxu0
    %v4819 = vadd.f32 %v4616, %v4818
    %4820 = vdwg.mxu0
    %v4821 = vand.u32 %v1297, 4294901760
    %4822 = vmatprep.subr.mxu0 %v4821
    %v4823 = vand.u32 %v1296, 4294901760
    %4824 = vmatpush1.msra.mxu0 %v4823
    %v4825 = vand.u32 %v1293, 4294901760
    %4826 = vmatprep.subr.mxu0 %v4825
    %v4827 = vand.u32 %v1292, 4294901760
    %4828 = vmatpush1.msra.mxu0 %v4827
    %v4829 = vand.u32 %v1289, 4294901760
    %4830 = vmatprep.subr.mxu0 %v4829
    %v4831 = vand.u32 %v1288, 4294901760
    %4832 = vmatpush1.msra.mxu0 %v4831
    %v4833 = vand.u32 %v1285, 4294901760
    %4834 = vmatprep.subr.mxu0 %v4833
    %v4835 = vand.u32 %v1284, 4294901760
    %4836 = vmatpush1.msra.mxu0 %v4835
    %v4837 = vand.u32 %v1281, 4294901760
    %4838 = vmatprep.subr.mxu0 %v4837
    %v4839 = vand.u32 %v1280, 4294901760
    %4840 = vmatpush1.msra.mxu0 %v4839
    %v4841 = vand.u32 %v1277, 4294901760
    %4842 = vmatprep.subr.mxu0 %v4841
    %v4843 = vand.u32 %v1276, 4294901760
    %4844 = vmatpush1.msra.mxu0 %v4843
    %v4845 = vand.u32 %v1273, 4294901760
    %4846 = vmatprep.subr.mxu0 %v4845
    %v4847 = vand.u32 %v1272, 4294901760
    %4848 = vmatpush1.msra.mxu0 %v4847
    %v4849 = vand.u32 %v1269, 4294901760
    %4850 = vmatprep.subr.mxu0 %v4849
    %v4851 = vand.u32 %v1268, 4294901760
    %4852 = vmatpush1.msra.mxu0 %v4851
    %v4853 = vand.u32 %v1265, 4294901760
    %4854 = vmatprep.subr.mxu0 %v4853
    %v4855 = vand.u32 %v1264, 4294901760
    %4856 = vmatpush1.msra.mxu0 %v4855
    %v4857 = vand.u32 %v1261, 4294901760
    %4858 = vmatprep.subr.mxu0 %v4857
    %v4859 = vand.u32 %v1260, 4294901760
    %4860 = vmatpush1.msra.mxu0 %v4859
    %v4861 = vand.u32 %v1257, 4294901760
    %4862 = vmatprep.subr.mxu0 %v4861
    %v4863 = vand.u32 %v1256, 4294901760
    %4864 = vmatpush1.msra.mxu0 %v4863
    %v4865 = vand.u32 %v1253, 4294901760
    %4866 = vmatprep.subr.mxu0 %v4865
    %v4867 = vand.u32 %v1252, 4294901760
    %4868 = vmatpush1.msra.mxu0 %v4867
    %v4869 = vand.u32 %v1249, 4294901760
    %4870 = vmatprep.subr.mxu0 %v4869
    %v4871 = vand.u32 %v1248, 4294901760
    %4872 = vmatpush1.msra.mxu0 %v4871
    %v4873 = vand.u32 %v1245, 4294901760
    %4874 = vmatprep.subr.mxu0 %v4873
    %v4875 = vand.u32 %v1244, 4294901760
    %4876 = vmatpush1.msra.mxu0 %v4875
    %v4877 = vand.u32 %v1241, 4294901760
    %4878 = vmatprep.subr.mxu0 %v4877
    %v4879 = vand.u32 %v1240, 4294901760
    %4880 = vmatpush1.msra.mxu0 %v4879
    %v4881 = vand.u32 %v1237, 4294901760
    %4882 = vmatprep.subr.mxu0 %v4881
    %v4883 = vand.u32 %v1236, 4294901760
    %4884 = vmatpush1.msra.mxu0 %v4883
    %v4885 = vand.u32 %v1361, 4294901760
    %4886 = vmatprep.subr.mxu0 %v4885
    %v4887 = vand.u32 %v1360, 4294901760
    %4888 = vmatpush2.msra.mxu0 %v4887
    %v4889 = vand.u32 %v1357, 4294901760
    %4890 = vmatprep.subr.mxu0 %v4889
    %v4891 = vand.u32 %v1356, 4294901760
    %4892 = vmatpush2.msra.mxu0 %v4891
    %v4893 = vand.u32 %v1353, 4294901760
    %4894 = vmatprep.subr.mxu0 %v4893
    %v4895 = vand.u32 %v1352, 4294901760
    %4896 = vmatpush2.msra.mxu0 %v4895
    %v4897 = vand.u32 %v1349, 4294901760
    %4898 = vmatprep.subr.mxu0 %v4897
    %v4899 = vand.u32 %v1348, 4294901760
    %4900 = vmatpush2.msra.mxu0 %v4899
    %v4901 = vand.u32 %v1345, 4294901760
    %4902 = vmatprep.subr.mxu0 %v4901
    %v4903 = vand.u32 %v1344, 4294901760
    %4904 = vmatpush2.msra.mxu0 %v4903
    %v4905 = vand.u32 %v1341, 4294901760
    %4906 = vmatprep.subr.mxu0 %v4905
    %v4907 = vand.u32 %v1340, 4294901760
    %4908 = vmatpush2.msra.mxu0 %v4907
    %v4909 = vand.u32 %v1337, 4294901760
    %4910 = vmatprep.subr.mxu0 %v4909
    %v4911 = vand.u32 %v1336, 4294901760
    %4912 = vmatpush2.msra.mxu0 %v4911
    %v4913 = vand.u32 %v1333, 4294901760
    %4914 = vmatprep.subr.mxu0 %v4913
    %v4915 = vand.u32 %v1332, 4294901760
    %4916 = vmatpush2.msra.mxu0 %v4915
    %v4917 = vand.u32 %v1329, 4294901760
    %4918 = vmatprep.subr.mxu0 %v4917
    %v4919 = vand.u32 %v1328, 4294901760
    %4920 = vmatpush2.msra.mxu0 %v4919
    %v4921 = vand.u32 %v1325, 4294901760
    %4922 = vmatprep.subr.mxu0 %v4921
    %v4923 = vand.u32 %v1324, 4294901760
    %4924 = vmatpush2.msra.mxu0 %v4923
    %v4925 = vand.u32 %v1321, 4294901760
    %4926 = vmatprep.subr.mxu0 %v4925
    %v4927 = vand.u32 %v1320, 4294901760
    %4928 = vmatpush2.msra.mxu0 %v4927
    %v4929 = vand.u32 %v1317, 4294901760
    %4930 = vmatprep.subr.mxu0 %v4929
    %v4931 = vand.u32 %v1316, 4294901760
    %4932 = vmatpush2.msra.mxu0 %v4931
    %v4933 = vand.u32 %v1313, 4294901760
    %4934 = vmatprep.subr.mxu0 %v4933
    %v4935 = vand.u32 %v1312, 4294901760
    %4936 = vmatpush2.msra.mxu0 %v4935
    %v4937 = vand.u32 %v1309, 4294901760
    %4938 = vmatprep.subr.mxu0 %v4937
    %v4939 = vand.u32 %v1308, 4294901760
    %4940 = vmatpush2.msra.mxu0 %v4939
    %v4941 = vand.u32 %v1305, 4294901760
    %4942 = vmatprep.subr.mxu0 %v4941
    %v4943 = vand.u32 %v1304, 4294901760
    %4944 = vmatpush2.msra.mxu0 %v4943
    %v4945 = vand.u32 %v1301, 4294901760
    %4946 = vmatprep.subr.mxu0 %v4945
    %v4947 = vand.u32 %v1300, 4294901760
    %4948 = vmatpush2.msra.mxu0 %v4947
    %v4949 = vand.u32 %v1231, 4294901760
    %v4950 = vsub.f32 %v1231, %v4949
    %v4951 = vand.u32 %v4950, 4294901760
    %4952 = vmatprep.mubr.f32.mxu0 %v4951
    %v4953 = vand.u32 %v1230, 4294901760
    %v4954 = vsub.f32 %v1230, %v4953
    %v4955 = vand.u32 %v4954, 4294901760
    %4956 = vmatmul.mubr.f32.gmra.mxu0 %v4955
    %v4957 = vpop.f32.mrf.mxu0
    %v4958 = vadd.f32 %v4817, %v4957
    %v4959 = vpop.f32.mrf.mxu0
    %v4960 = vadd.f32 %v4819, %v4959
    %4961 = vdwg.mxu0
    %v4962 = vand.u32 %v1297, 4294901760
    %v4963 = vsub.f32 %v1297, %v4962
    %v4964 = vand.u32 %v4963, 4294901760
    %4965 = vmatprep.subr.mxu0 %v4964
    %v4966 = vand.u32 %v1296, 4294901760
    %v4967 = vsub.f32 %v1296, %v4966
    %v4968 = vand.u32 %v4967, 4294901760
    %4969 = vmatpush1.msra.mxu0 %v4968
    %v4970 = vand.u32 %v1293, 4294901760
    %v4971 = vsub.f32 %v1293, %v4970
    %v4972 = vand.u32 %v4971, 4294901760
    %4973 = vmatprep.subr.mxu0 %v4972
    %v4974 = vand.u32 %v1292, 4294901760
    %v4975 = vsub.f32 %v1292, %v4974
    %v4976 = vand.u32 %v4975, 4294901760
    %4977 = vmatpush1.msra.mxu0 %v4976
    %v4978 = vand.u32 %v1289, 4294901760
    %v4979 = vsub.f32 %v1289, %v4978
    %v4980 = vand.u32 %v4979, 4294901760
    %4981 = vmatprep.subr.mxu0 %v4980
    %v4982 = vand.u32 %v1288, 4294901760
    %v4983 = vsub.f32 %v1288, %v4982
    %v4984 = vand.u32 %v4983, 4294901760
    %4985 = vmatpush1.msra.mxu0 %v4984
    %v4986 = vand.u32 %v1285, 4294901760
    %v4987 = vsub.f32 %v1285, %v4986
    %v4988 = vand.u32 %v4987, 4294901760
    %4989 = vmatprep.subr.mxu0 %v4988
    %v4990 = vand.u32 %v1284, 4294901760
    %v4991 = vsub.f32 %v1284, %v4990
    %v4992 = vand.u32 %v4991, 4294901760
    %4993 = vmatpush1.msra.mxu0 %v4992
    %v4994 = vand.u32 %v1281, 4294901760
    %v4995 = vsub.f32 %v1281, %v4994
    %v4996 = vand.u32 %v4995, 4294901760
    %4997 = vmatprep.subr.mxu0 %v4996
    %v4998 = vand.u32 %v1280, 4294901760
    %v4999 = vsub.f32 %v1280, %v4998
    %v5000 = vand.u32 %v4999, 4294901760
    %5001 = vmatpush1.msra.mxu0 %v5000
    %v5002 = vand.u32 %v1277, 4294901760
    %v5003 = vsub.f32 %v1277, %v5002
    %v5004 = vand.u32 %v5003, 4294901760
    %5005 = vmatprep.subr.mxu0 %v5004
    %v5006 = vand.u32 %v1276, 4294901760
    %v5007 = vsub.f32 %v1276, %v5006
    %v5008 = vand.u32 %v5007, 4294901760
    %5009 = vmatpush1.msra.mxu0 %v5008
    %v5010 = vand.u32 %v1273, 4294901760
    %v5011 = vsub.f32 %v1273, %v5010
    %v5012 = vand.u32 %v5011, 4294901760
    %5013 = vmatprep.subr.mxu0 %v5012
    %v5014 = vand.u32 %v1272, 4294901760
    %v5015 = vsub.f32 %v1272, %v5014
    %v5016 = vand.u32 %v5015, 4294901760
    %5017 = vmatpush1.msra.mxu0 %v5016
    %v5018 = vand.u32 %v1269, 4294901760
    %v5019 = vsub.f32 %v1269, %v5018
    %v5020 = vand.u32 %v5019, 4294901760
    %5021 = vmatprep.subr.mxu0 %v5020
    %v5022 = vand.u32 %v1268, 4294901760
    %v5023 = vsub.f32 %v1268, %v5022
    %v5024 = vand.u32 %v5023, 4294901760
    %5025 = vmatpush1.msra.mxu0 %v5024
    %v5026 = vand.u32 %v1265, 4294901760
    %v5027 = vsub.f32 %v1265, %v5026
    %v5028 = vand.u32 %v5027, 4294901760
    %5029 = vmatprep.subr.mxu0 %v5028
    %v5030 = vand.u32 %v1264, 4294901760
    %v5031 = vsub.f32 %v1264, %v5030
    %v5032 = vand.u32 %v5031, 4294901760
    %5033 = vmatpush1.msra.mxu0 %v5032
    %v5034 = vand.u32 %v1261, 4294901760
    %v5035 = vsub.f32 %v1261, %v5034
    %v5036 = vand.u32 %v5035, 4294901760
    %5037 = vmatprep.subr.mxu0 %v5036
    %v5038 = vand.u32 %v1260, 4294901760
    %v5039 = vsub.f32 %v1260, %v5038
    %v5040 = vand.u32 %v5039, 4294901760
    %5041 = vmatpush1.msra.mxu0 %v5040
    %v5042 = vand.u32 %v1257, 4294901760
    %v5043 = vsub.f32 %v1257, %v5042
    %v5044 = vand.u32 %v5043, 4294901760
    %5045 = vmatprep.subr.mxu0 %v5044
    %v5046 = vand.u32 %v1256, 4294901760
    %v5047 = vsub.f32 %v1256, %v5046
    %v5048 = vand.u32 %v5047, 4294901760
    %5049 = vmatpush1.msra.mxu0 %v5048
    %v5050 = vand.u32 %v1253, 4294901760
    %v5051 = vsub.f32 %v1253, %v5050
    %v5052 = vand.u32 %v5051, 4294901760
    %5053 = vmatprep.subr.mxu0 %v5052
    %v5054 = vand.u32 %v1252, 4294901760
    %v5055 = vsub.f32 %v1252, %v5054
    %v5056 = vand.u32 %v5055, 4294901760
    %5057 = vmatpush1.msra.mxu0 %v5056
    %v5058 = vand.u32 %v1249, 4294901760
    %v5059 = vsub.f32 %v1249, %v5058
    %v5060 = vand.u32 %v5059, 4294901760
    %5061 = vmatprep.subr.mxu0 %v5060
    %v5062 = vand.u32 %v1248, 4294901760
    %v5063 = vsub.f32 %v1248, %v5062
    %v5064 = vand.u32 %v5063, 4294901760
    %5065 = vmatpush1.msra.mxu0 %v5064
    %v5066 = vand.u32 %v1245, 4294901760
    %v5067 = vsub.f32 %v1245, %v5066
    %v5068 = vand.u32 %v5067, 4294901760
    %5069 = vmatprep.subr.mxu0 %v5068
    %v5070 = vand.u32 %v1244, 4294901760
    %v5071 = vsub.f32 %v1244, %v5070
    %v5072 = vand.u32 %v5071, 4294901760
    %5073 = vmatpush1.msra.mxu0 %v5072
    %v5074 = vand.u32 %v1241, 4294901760
    %v5075 = vsub.f32 %v1241, %v5074
    %v5076 = vand.u32 %v5075, 4294901760
    %5077 = vmatprep.subr.mxu0 %v5076
    %v5078 = vand.u32 %v1240, 4294901760
    %v5079 = vsub.f32 %v1240, %v5078
    %v5080 = vand.u32 %v5079, 4294901760
    %5081 = vmatpush1.msra.mxu0 %v5080
    %v5082 = vand.u32 %v1237, 4294901760
    %v5083 = vsub.f32 %v1237, %v5082
    %v5084 = vand.u32 %v5083, 4294901760
    %5085 = vmatprep.subr.mxu0 %v5084
    %v5086 = vand.u32 %v1236, 4294901760
    %v5087 = vsub.f32 %v1236, %v5086
    %v5088 = vand.u32 %v5087, 4294901760
    %5089 = vmatpush1.msra.mxu0 %v5088
    %v5090 = vand.u32 %v1361, 4294901760
    %v5091 = vsub.f32 %v1361, %v5090
    %v5092 = vand.u32 %v5091, 4294901760
    %5093 = vmatprep.subr.mxu0 %v5092
    %v5094 = vand.u32 %v1360, 4294901760
    %v5095 = vsub.f32 %v1360, %v5094
    %v5096 = vand.u32 %v5095, 4294901760
    %5097 = vmatpush2.msra.mxu0 %v5096
    %v5098 = vand.u32 %v1357, 4294901760
    %v5099 = vsub.f32 %v1357, %v5098
    %v5100 = vand.u32 %v5099, 4294901760
    %5101 = vmatprep.subr.mxu0 %v5100
    %v5102 = vand.u32 %v1356, 4294901760
    %v5103 = vsub.f32 %v1356, %v5102
    %v5104 = vand.u32 %v5103, 4294901760
    %5105 = vmatpush2.msra.mxu0 %v5104
    %v5106 = vand.u32 %v1353, 4294901760
    %v5107 = vsub.f32 %v1353, %v5106
    %v5108 = vand.u32 %v5107, 4294901760
    %5109 = vmatprep.subr.mxu0 %v5108
    %v5110 = vand.u32 %v1352, 4294901760
    %v5111 = vsub.f32 %v1352, %v5110
    %v5112 = vand.u32 %v5111, 4294901760
    %5113 = vmatpush2.msra.mxu0 %v5112
    %v5114 = vand.u32 %v1349, 4294901760
    %v5115 = vsub.f32 %v1349, %v5114
    %v5116 = vand.u32 %v5115, 4294901760
    %5117 = vmatprep.subr.mxu0 %v5116
    %v5118 = vand.u32 %v1348, 4294901760
    %v5119 = vsub.f32 %v1348, %v5118
    %v5120 = vand.u32 %v5119, 4294901760
    %5121 = vmatpush2.msra.mxu0 %v5120
    %v5122 = vand.u32 %v1345, 4294901760
    %v5123 = vsub.f32 %v1345, %v5122
    %v5124 = vand.u32 %v5123, 4294901760
    %5125 = vmatprep.subr.mxu0 %v5124
    %v5126 = vand.u32 %v1344, 4294901760
    %v5127 = vsub.f32 %v1344, %v5126
    %v5128 = vand.u32 %v5127, 4294901760
    %5129 = vmatpush2.msra.mxu0 %v5128
    %v5130 = vand.u32 %v1341, 4294901760
    %v5131 = vsub.f32 %v1341, %v5130
    %v5132 = vand.u32 %v5131, 4294901760
    %5133 = vmatprep.subr.mxu0 %v5132
    %v5134 = vand.u32 %v1340, 4294901760
    %v5135 = vsub.f32 %v1340, %v5134
    %v5136 = vand.u32 %v5135, 4294901760
    %5137 = vmatpush2.msra.mxu0 %v5136
    %v5138 = vand.u32 %v1337, 4294901760
    %v5139 = vsub.f32 %v1337, %v5138
    %v5140 = vand.u32 %v5139, 4294901760
    %5141 = vmatprep.subr.mxu0 %v5140
    %v5142 = vand.u32 %v1336, 4294901760
    %v5143 = vsub.f32 %v1336, %v5142
    %v5144 = vand.u32 %v5143, 4294901760
    %5145 = vmatpush2.msra.mxu0 %v5144
    %v5146 = vand.u32 %v1333, 4294901760
    %v5147 = vsub.f32 %v1333, %v5146
    %v5148 = vand.u32 %v5147, 4294901760
    %5149 = vmatprep.subr.mxu0 %v5148
    %v5150 = vand.u32 %v1332, 4294901760
    %v5151 = vsub.f32 %v1332, %v5150
    %v5152 = vand.u32 %v5151, 4294901760
    %5153 = vmatpush2.msra.mxu0 %v5152
    %v5154 = vand.u32 %v1329, 4294901760
    %v5155 = vsub.f32 %v1329, %v5154
    %v5156 = vand.u32 %v5155, 4294901760
    %5157 = vmatprep.subr.mxu0 %v5156
    %v5158 = vand.u32 %v1328, 4294901760
    %v5159 = vsub.f32 %v1328, %v5158
    %v5160 = vand.u32 %v5159, 4294901760
    %5161 = vmatpush2.msra.mxu0 %v5160
    %v5162 = vand.u32 %v1325, 4294901760
    %v5163 = vsub.f32 %v1325, %v5162
    %v5164 = vand.u32 %v5163, 4294901760
    %5165 = vmatprep.subr.mxu0 %v5164
    %v5166 = vand.u32 %v1324, 4294901760
    %v5167 = vsub.f32 %v1324, %v5166
    %v5168 = vand.u32 %v5167, 4294901760
    %5169 = vmatpush2.msra.mxu0 %v5168
    %v5170 = vand.u32 %v1321, 4294901760
    %v5171 = vsub.f32 %v1321, %v5170
    %v5172 = vand.u32 %v5171, 4294901760
    %5173 = vmatprep.subr.mxu0 %v5172
    %v5174 = vand.u32 %v1320, 4294901760
    %v5175 = vsub.f32 %v1320, %v5174
    %v5176 = vand.u32 %v5175, 4294901760
    %5177 = vmatpush2.msra.mxu0 %v5176
    %v5178 = vand.u32 %v1317, 4294901760
    %v5179 = vsub.f32 %v1317, %v5178
    %v5180 = vand.u32 %v5179, 4294901760
    %5181 = vmatprep.subr.mxu0 %v5180
    %v5182 = vand.u32 %v1316, 4294901760
    %v5183 = vsub.f32 %v1316, %v5182
    %v5184 = vand.u32 %v5183, 4294901760
    %5185 = vmatpush2.msra.mxu0 %v5184
    %v5186 = vand.u32 %v1313, 4294901760
    %v5187 = vsub.f32 %v1313, %v5186
    %v5188 = vand.u32 %v5187, 4294901760
    %5189 = vmatprep.subr.mxu0 %v5188
    %v5190 = vand.u32 %v1312, 4294901760
    %v5191 = vsub.f32 %v1312, %v5190
    %v5192 = vand.u32 %v5191, 4294901760
    %5193 = vmatpush2.msra.mxu0 %v5192
    %v5194 = vand.u32 %v1309, 4294901760
    %v5195 = vsub.f32 %v1309, %v5194
    %v5196 = vand.u32 %v5195, 4294901760
    %5197 = vmatprep.subr.mxu0 %v5196
    %v5198 = vand.u32 %v1308, 4294901760
    %v5199 = vsub.f32 %v1308, %v5198
    %v5200 = vand.u32 %v5199, 4294901760
    %5201 = vmatpush2.msra.mxu0 %v5200
    %v5202 = vand.u32 %v1305, 4294901760
    %v5203 = vsub.f32 %v1305, %v5202
    %v5204 = vand.u32 %v5203, 4294901760
    %5205 = vmatprep.subr.mxu0 %v5204
    %v5206 = vand.u32 %v1304, 4294901760
    %v5207 = vsub.f32 %v1304, %v5206
    %v5208 = vand.u32 %v5207, 4294901760
    %5209 = vmatpush2.msra.mxu0 %v5208
    %v5210 = vand.u32 %v1301, 4294901760
    %v5211 = vsub.f32 %v1301, %v5210
    %v5212 = vand.u32 %v5211, 4294901760
    %5213 = vmatprep.subr.mxu0 %v5212
    %v5214 = vand.u32 %v1300, 4294901760
    %v5215 = vsub.f32 %v1300, %v5214
    %v5216 = vand.u32 %v5215, 4294901760
    %5217 = vmatpush2.msra.mxu0 %v5216
    %v5218 = vand.u32 %v1231, 4294901760
    %5219 = vmatprep.mubr.f32.mxu0 %v5218
    %v5220 = vand.u32 %v1230, 4294901760
    %5221 = vmatmul.mubr.f32.gmra.mxu0 %v5220
    %v5222 = vpop.f32.mrf.mxu0
    %v5223 = vadd.f32 %v4958, %v5222
    %v5224 = vpop.f32.mrf.mxu0
    %v5225 = vadd.f32 %v4960, %v5224
    %5226 = vdwg.mxu0
    %v5227 = vand.u32 %v1297, 4294901760
    %5228 = vmatprep.subr.mxu0 %v5227
    %v5229 = vand.u32 %v1296, 4294901760
    %5230 = vmatpush1.msra.mxu0 %v5229
    %v5231 = vand.u32 %v1293, 4294901760
    %5232 = vmatprep.subr.mxu0 %v5231
    %v5233 = vand.u32 %v1292, 4294901760
    %5234 = vmatpush1.msra.mxu0 %v5233
    %v5235 = vand.u32 %v1289, 4294901760
    %5236 = vmatprep.subr.mxu0 %v5235
    %v5237 = vand.u32 %v1288, 4294901760
    %5238 = vmatpush1.msra.mxu0 %v5237
    %v5239 = vand.u32 %v1285, 4294901760
    %5240 = vmatprep.subr.mxu0 %v5239
    %v5241 = vand.u32 %v1284, 4294901760
    %5242 = vmatpush1.msra.mxu0 %v5241
    %v5243 = vand.u32 %v1281, 4294901760
    %5244 = vmatprep.subr.mxu0 %v5243
    %v5245 = vand.u32 %v1280, 4294901760
    %5246 = vmatpush1.msra.mxu0 %v5245
    %v5247 = vand.u32 %v1277, 4294901760
    %5248 = vmatprep.subr.mxu0 %v5247
    %v5249 = vand.u32 %v1276, 4294901760
    %5250 = vmatpush1.msra.mxu0 %v5249
    %v5251 = vand.u32 %v1273, 4294901760
    %5252 = vmatprep.subr.mxu0 %v5251
    %v5253 = vand.u32 %v1272, 4294901760
    %5254 = vmatpush1.msra.mxu0 %v5253
    %v5255 = vand.u32 %v1269, 4294901760
    %5256 = vmatprep.subr.mxu0 %v5255
    %v5257 = vand.u32 %v1268, 4294901760
    %5258 = vmatpush1.msra.mxu0 %v5257
    %v5259 = vand.u32 %v1265, 4294901760
    %5260 = vmatprep.subr.mxu0 %v5259
    %v5261 = vand.u32 %v1264, 4294901760
    %5262 = vmatpush1.msra.mxu0 %v5261
    %v5263 = vand.u32 %v1261, 4294901760
    %5264 = vmatprep.subr.mxu0 %v5263
    %v5265 = vand.u32 %v1260, 4294901760
    %5266 = vmatpush1.msra.mxu0 %v5265
    %v5267 = vand.u32 %v1257, 4294901760
    %5268 = vmatprep.subr.mxu0 %v5267
    %v5269 = vand.u32 %v1256, 4294901760
    %5270 = vmatpush1.msra.mxu0 %v5269
    %v5271 = vand.u32 %v1253, 4294901760
    %5272 = vmatprep.subr.mxu0 %v5271
    %v5273 = vand.u32 %v1252, 4294901760
    %5274 = vmatpush1.msra.mxu0 %v5273
    %v5275 = vand.u32 %v1249, 4294901760
    %5276 = vmatprep.subr.mxu0 %v5275
    %v5277 = vand.u32 %v1248, 4294901760
    %5278 = vmatpush1.msra.mxu0 %v5277
    %v5279 = vand.u32 %v1245, 4294901760
    %5280 = vmatprep.subr.mxu0 %v5279
    %v5281 = vand.u32 %v1244, 4294901760
    %5282 = vmatpush1.msra.mxu0 %v5281
    %v5283 = vand.u32 %v1241, 4294901760
    %5284 = vmatprep.subr.mxu0 %v5283
    %v5285 = vand.u32 %v1240, 4294901760
    %5286 = vmatpush1.msra.mxu0 %v5285
    %v5287 = vand.u32 %v1237, 4294901760
    %5288 = vmatprep.subr.mxu0 %v5287
    %v5289 = vand.u32 %v1236, 4294901760
    %5290 = vmatpush1.msra.mxu0 %v5289
    %v5291 = vand.u32 %v1361, 4294901760
    %5292 = vmatprep.subr.mxu0 %v5291
    %v5293 = vand.u32 %v1360, 4294901760
    %5294 = vmatpush2.msra.mxu0 %v5293
    %v5295 = vand.u32 %v1357, 4294901760
    %5296 = vmatprep.subr.mxu0 %v5295
    %v5297 = vand.u32 %v1356, 4294901760
    %5298 = vmatpush2.msra.mxu0 %v5297
    %v5299 = vand.u32 %v1353, 4294901760
    %5300 = vmatprep.subr.mxu0 %v5299
    %v5301 = vand.u32 %v1352, 4294901760
    %5302 = vmatpush2.msra.mxu0 %v5301
    %v5303 = vand.u32 %v1349, 4294901760
    %5304 = vmatprep.subr.mxu0 %v5303
    %v5305 = vand.u32 %v1348, 4294901760
    %5306 = vmatpush2.msra.mxu0 %v5305
    %v5307 = vand.u32 %v1345, 4294901760
    %5308 = vmatprep.subr.mxu0 %v5307
    %v5309 = vand.u32 %v1344, 4294901760
    %5310 = vmatpush2.msra.mxu0 %v5309
    %v5311 = vand.u32 %v1341, 4294901760
    %5312 = vmatprep.subr.mxu0 %v5311
    %v5313 = vand.u32 %v1340, 4294901760
    %5314 = vmatpush2.msra.mxu0 %v5313
    %v5315 = vand.u32 %v1337, 4294901760
    %5316 = vmatprep.subr.mxu0 %v5315
    %v5317 = vand.u32 %v1336, 4294901760
    %5318 = vmatpush2.msra.mxu0 %v5317
    %v5319 = vand.u32 %v1333, 4294901760
    %5320 = vmatprep.subr.mxu0 %v5319
    %v5321 = vand.u32 %v1332, 4294901760
    %5322 = vmatpush2.msra.mxu0 %v5321
    %v5323 = vand.u32 %v1329, 4294901760
    %5324 = vmatprep.subr.mxu0 %v5323
    %v5325 = vand.u32 %v1328, 4294901760
    %5326 = vmatpush2.msra.mxu0 %v5325
    %v5327 = vand.u32 %v1325, 4294901760
    %5328 = vmatprep.subr.mxu0 %v5327
    %v5329 = vand.u32 %v1324, 4294901760
    %5330 = vmatpush2.msra.mxu0 %v5329
    %v5331 = vand.u32 %v1321, 4294901760
    %5332 = vmatprep.subr.mxu0 %v5331
    %v5333 = vand.u32 %v1320, 4294901760
    %5334 = vmatpush2.msra.mxu0 %v5333
    %v5335 = vand.u32 %v1317, 4294901760
    %5336 = vmatprep.subr.mxu0 %v5335
    %v5337 = vand.u32 %v1316, 4294901760
    %5338 = vmatpush2.msra.mxu0 %v5337
    %v5339 = vand.u32 %v1313, 4294901760
    %5340 = vmatprep.subr.mxu0 %v5339
    %v5341 = vand.u32 %v1312, 4294901760
    %5342 = vmatpush2.msra.mxu0 %v5341
    %v5343 = vand.u32 %v1309, 4294901760
    %5344 = vmatprep.subr.mxu0 %v5343
    %v5345 = vand.u32 %v1308, 4294901760
    %5346 = vmatpush2.msra.mxu0 %v5345
    %v5347 = vand.u32 %v1305, 4294901760
    %5348 = vmatprep.subr.mxu0 %v5347
    %v5349 = vand.u32 %v1304, 4294901760
    %5350 = vmatpush2.msra.mxu0 %v5349
    %v5351 = vand.u32 %v1301, 4294901760
    %5352 = vmatprep.subr.mxu0 %v5351
    %v5353 = vand.u32 %v1300, 4294901760
    %5354 = vmatpush2.msra.mxu0 %v5353
    %v5355 = vand.u32 %v1231, 4294901760
    %5356 = vmatprep.mubr.f32.mxu0 %v5355
    %v5357 = vand.u32 %v1230, 4294901760
    %5358 = vmatmul.mubr.f32.gmra.mxu0 %v5357
    %v5359 = vpop.f32.mrf.mxu0
    %v5360 = vadd.f32 %v5223, %v5359
    %v5361 = vpop.f32.mrf.mxu0
    %v5362 = vadd.f32 %v5225, %v5361
    %5363 = vdwg.mxu0
    %v5364 = vand.u32 %v1425, 4294901760
    %5365 = vmatprep.subr.mxu0 %v5364
    %v5366 = vand.u32 %v1424, 4294901760
    %5367 = vmatpush1.msra.mxu0 %v5366
    %v5368 = vand.u32 %v1421, 4294901760
    %5369 = vmatprep.subr.mxu0 %v5368
    %v5370 = vand.u32 %v1420, 4294901760
    %5371 = vmatpush1.msra.mxu0 %v5370
    %v5372 = vand.u32 %v1417, 4294901760
    %5373 = vmatprep.subr.mxu0 %v5372
    %v5374 = vand.u32 %v1416, 4294901760
    %5375 = vmatpush1.msra.mxu0 %v5374
    %v5376 = vand.u32 %v1413, 4294901760
    %5377 = vmatprep.subr.mxu0 %v5376
    %v5378 = vand.u32 %v1412, 4294901760
    %5379 = vmatpush1.msra.mxu0 %v5378
    %v5380 = vand.u32 %v1409, 4294901760
    %5381 = vmatprep.subr.mxu0 %v5380
    %v5382 = vand.u32 %v1408, 4294901760
    %5383 = vmatpush1.msra.mxu0 %v5382
    %v5384 = vand.u32 %v1405, 4294901760
    %5385 = vmatprep.subr.mxu0 %v5384
    %v5386 = vand.u32 %v1404, 4294901760
    %5387 = vmatpush1.msra.mxu0 %v5386
    %v5388 = vand.u32 %v1401, 4294901760
    %5389 = vmatprep.subr.mxu0 %v5388
    %v5390 = vand.u32 %v1400, 4294901760
    %5391 = vmatpush1.msra.mxu0 %v5390
    %v5392 = vand.u32 %v1397, 4294901760
    %5393 = vmatprep.subr.mxu0 %v5392
    %v5394 = vand.u32 %v1396, 4294901760
    %5395 = vmatpush1.msra.mxu0 %v5394
    %v5396 = vand.u32 %v1393, 4294901760
    %5397 = vmatprep.subr.mxu0 %v5396
    %v5398 = vand.u32 %v1392, 4294901760
    %5399 = vmatpush1.msra.mxu0 %v5398
    %v5400 = vand.u32 %v1389, 4294901760
    %5401 = vmatprep.subr.mxu0 %v5400
    %v5402 = vand.u32 %v1388, 4294901760
    %5403 = vmatpush1.msra.mxu0 %v5402
    %v5404 = vand.u32 %v1385, 4294901760
    %5405 = vmatprep.subr.mxu0 %v5404
    %v5406 = vand.u32 %v1384, 4294901760
    %5407 = vmatpush1.msra.mxu0 %v5406
    %v5408 = vand.u32 %v1381, 4294901760
    %5409 = vmatprep.subr.mxu0 %v5408
    %v5410 = vand.u32 %v1380, 4294901760
    %5411 = vmatpush1.msra.mxu0 %v5410
    %v5412 = vand.u32 %v1377, 4294901760
    %5413 = vmatprep.subr.mxu0 %v5412
    %v5414 = vand.u32 %v1376, 4294901760
    %5415 = vmatpush1.msra.mxu0 %v5414
    %v5416 = vand.u32 %v1373, 4294901760
    %5417 = vmatprep.subr.mxu0 %v5416
    %v5418 = vand.u32 %v1372, 4294901760
    %5419 = vmatpush1.msra.mxu0 %v5418
    %v5420 = vand.u32 %v1369, 4294901760
    %5421 = vmatprep.subr.mxu0 %v5420
    %v5422 = vand.u32 %v1368, 4294901760
    %5423 = vmatpush1.msra.mxu0 %v5422
    %v5424 = vand.u32 %v1365, 4294901760
    %5425 = vmatprep.subr.mxu0 %v5424
    %v5426 = vand.u32 %v1364, 4294901760
    %5427 = vmatpush1.msra.mxu0 %v5426
    %v5428 = vand.u32 %v1489, 4294901760
    %5429 = vmatprep.subr.mxu0 %v5428
    %v5430 = vand.u32 %v1488, 4294901760
    %5431 = vmatpush2.msra.mxu0 %v5430
    %v5432 = vand.u32 %v1485, 4294901760
    %5433 = vmatprep.subr.mxu0 %v5432
    %v5434 = vand.u32 %v1484, 4294901760
    %5435 = vmatpush2.msra.mxu0 %v5434
    %v5436 = vand.u32 %v1481, 4294901760
    %5437 = vmatprep.subr.mxu0 %v5436
    %v5438 = vand.u32 %v1480, 4294901760
    %5439 = vmatpush2.msra.mxu0 %v5438
    %v5440 = vand.u32 %v1477, 4294901760
    %5441 = vmatprep.subr.mxu0 %v5440
    %v5442 = vand.u32 %v1476, 4294901760
    %5443 = vmatpush2.msra.mxu0 %v5442
    %v5444 = vand.u32 %v1473, 4294901760
    %5445 = vmatprep.subr.mxu0 %v5444
    %v5446 = vand.u32 %v1472, 4294901760
    %5447 = vmatpush2.msra.mxu0 %v5446
    %v5448 = vand.u32 %v1469, 4294901760
    %5449 = vmatprep.subr.mxu0 %v5448
    %v5450 = vand.u32 %v1468, 4294901760
    %5451 = vmatpush2.msra.mxu0 %v5450
    %v5452 = vand.u32 %v1465, 4294901760
    %5453 = vmatprep.subr.mxu0 %v5452
    %v5454 = vand.u32 %v1464, 4294901760
    %5455 = vmatpush2.msra.mxu0 %v5454
    %v5456 = vand.u32 %v1461, 4294901760
    %5457 = vmatprep.subr.mxu0 %v5456
    %v5458 = vand.u32 %v1460, 4294901760
    %5459 = vmatpush2.msra.mxu0 %v5458
    %v5460 = vand.u32 %v1457, 4294901760
    %5461 = vmatprep.subr.mxu0 %v5460
    %v5462 = vand.u32 %v1456, 4294901760
    %5463 = vmatpush2.msra.mxu0 %v5462
    %v5464 = vand.u32 %v1453, 4294901760
    %5465 = vmatprep.subr.mxu0 %v5464
    %v5466 = vand.u32 %v1452, 4294901760
    %5467 = vmatpush2.msra.mxu0 %v5466
    %v5468 = vand.u32 %v1449, 4294901760
    %5469 = vmatprep.subr.mxu0 %v5468
    %v5470 = vand.u32 %v1448, 4294901760
    %5471 = vmatpush2.msra.mxu0 %v5470
    %v5472 = vand.u32 %v1445, 4294901760
    %5473 = vmatprep.subr.mxu0 %v5472
    %v5474 = vand.u32 %v1444, 4294901760
    %5475 = vmatpush2.msra.mxu0 %v5474
    %v5476 = vand.u32 %v1441, 4294901760
    %5477 = vmatprep.subr.mxu0 %v5476
    %v5478 = vand.u32 %v1440, 4294901760
    %5479 = vmatpush2.msra.mxu0 %v5478
    %v5480 = vand.u32 %v1437, 4294901760
    %5481 = vmatprep.subr.mxu0 %v5480
    %v5482 = vand.u32 %v1436, 4294901760
    %5483 = vmatpush2.msra.mxu0 %v5482
    %v5484 = vand.u32 %v1433, 4294901760
    %5485 = vmatprep.subr.mxu0 %v5484
    %v5486 = vand.u32 %v1432, 4294901760
    %5487 = vmatpush2.msra.mxu0 %v5486
    %v5488 = vand.u32 %v1429, 4294901760
    %5489 = vmatprep.subr.mxu0 %v5488
    %v5490 = vand.u32 %v1428, 4294901760
    %5491 = vmatpush2.msra.mxu0 %v5490
    %v5492 = vand.u32 %v1233, 4294901760
    %v5493 = vsub.f32 %v1233, %v5492
    %v5494 = vand.u32 %v5493, 4294901760
    %v5495 = vsub.f32 %v5493, %v5494
    %v5496 = vand.u32 %v5495, 4294901760
    %5497 = vmatprep.mubr.f32.mxu0 %v5496
    %v5498 = vand.u32 %v1232, 4294901760
    %v5499 = vsub.f32 %v1232, %v5498
    %v5500 = vand.u32 %v5499, 4294901760
    %v5501 = vsub.f32 %v5499, %v5500
    %v5502 = vand.u32 %v5501, 4294901760
    %5503 = vmatmul.mubr.f32.gmra.mxu0 %v5502
    %v5504 = vpop.f32.mrf.mxu0
    %v5505 = vadd.f32 %v5360, %v5504
    %v5506 = vpop.f32.mrf.mxu0
    %v5507 = vadd.f32 %v5362, %v5506
    %5508 = vdwg.mxu0
    %v5509 = vand.u32 %v1425, 4294901760
    %v5510 = vsub.f32 %v1425, %v5509
    %v5511 = vand.u32 %v5510, 4294901760
    %v5512 = vsub.f32 %v5510, %v5511
    %v5513 = vand.u32 %v5512, 4294901760
    %5514 = vmatprep.subr.mxu0 %v5513
    %v5515 = vand.u32 %v1424, 4294901760
    %v5516 = vsub.f32 %v1424, %v5515
    %v5517 = vand.u32 %v5516, 4294901760
    %v5518 = vsub.f32 %v5516, %v5517
    %v5519 = vand.u32 %v5518, 4294901760
    %5520 = vmatpush1.msra.mxu0 %v5519
    %v5521 = vand.u32 %v1421, 4294901760
    %v5522 = vsub.f32 %v1421, %v5521
    %v5523 = vand.u32 %v5522, 4294901760
    %v5524 = vsub.f32 %v5522, %v5523
    %v5525 = vand.u32 %v5524, 4294901760
    %5526 = vmatprep.subr.mxu0 %v5525
    %v5527 = vand.u32 %v1420, 4294901760
    %v5528 = vsub.f32 %v1420, %v5527
    %v5529 = vand.u32 %v5528, 4294901760
    %v5530 = vsub.f32 %v5528, %v5529
    %v5531 = vand.u32 %v5530, 4294901760
    %5532 = vmatpush1.msra.mxu0 %v5531
    %v5533 = vand.u32 %v1417, 4294901760
    %v5534 = vsub.f32 %v1417, %v5533
    %v5535 = vand.u32 %v5534, 4294901760
    %v5536 = vsub.f32 %v5534, %v5535
    %v5537 = vand.u32 %v5536, 4294901760
    %5538 = vmatprep.subr.mxu0 %v5537
    %v5539 = vand.u32 %v1416, 4294901760
    %v5540 = vsub.f32 %v1416, %v5539
    %v5541 = vand.u32 %v5540, 4294901760
    %v5542 = vsub.f32 %v5540, %v5541
    %v5543 = vand.u32 %v5542, 4294901760
    %5544 = vmatpush1.msra.mxu0 %v5543
    %v5545 = vand.u32 %v1413, 4294901760
    %v5546 = vsub.f32 %v1413, %v5545
    %v5547 = vand.u32 %v5546, 4294901760
    %v5548 = vsub.f32 %v5546, %v5547
    %v5549 = vand.u32 %v5548, 4294901760
    %5550 = vmatprep.subr.mxu0 %v5549
    %v5551 = vand.u32 %v1412, 4294901760
    %v5552 = vsub.f32 %v1412, %v5551
    %v5553 = vand.u32 %v5552, 4294901760
    %v5554 = vsub.f32 %v5552, %v5553
    %v5555 = vand.u32 %v5554, 4294901760
    %5556 = vmatpush1.msra.mxu0 %v5555
    %v5557 = vand.u32 %v1409, 4294901760
    %v5558 = vsub.f32 %v1409, %v5557
    %v5559 = vand.u32 %v5558, 4294901760
    %v5560 = vsub.f32 %v5558, %v5559
    %v5561 = vand.u32 %v5560, 4294901760
    %5562 = vmatprep.subr.mxu0 %v5561
    %v5563 = vand.u32 %v1408, 4294901760
    %v5564 = vsub.f32 %v1408, %v5563
    %v5565 = vand.u32 %v5564, 4294901760
    %v5566 = vsub.f32 %v5564, %v5565
    %v5567 = vand.u32 %v5566, 4294901760
    %5568 = vmatpush1.msra.mxu0 %v5567
    %v5569 = vand.u32 %v1405, 4294901760
    %v5570 = vsub.f32 %v1405, %v5569
    %v5571 = vand.u32 %v5570, 4294901760
    %v5572 = vsub.f32 %v5570, %v5571
    %v5573 = vand.u32 %v5572, 4294901760
    %5574 = vmatprep.subr.mxu0 %v5573
    %v5575 = vand.u32 %v1404, 4294901760
    %v5576 = vsub.f32 %v1404, %v5575
    %v5577 = vand.u32 %v5576, 4294901760
    %v5578 = vsub.f32 %v5576, %v5577
    %v5579 = vand.u32 %v5578, 4294901760
    %5580 = vmatpush1.msra.mxu0 %v5579
    %v5581 = vand.u32 %v1401, 4294901760
    %v5582 = vsub.f32 %v1401, %v5581
    %v5583 = vand.u32 %v5582, 4294901760
    %v5584 = vsub.f32 %v5582, %v5583
    %v5585 = vand.u32 %v5584, 4294901760
    %5586 = vmatprep.subr.mxu0 %v5585
    %v5587 = vand.u32 %v1400, 4294901760
    %v5588 = vsub.f32 %v1400, %v5587
    %v5589 = vand.u32 %v5588, 4294901760
    %v5590 = vsub.f32 %v5588, %v5589
    %v5591 = vand.u32 %v5590, 4294901760
    %5592 = vmatpush1.msra.mxu0 %v5591
    %v5593 = vand.u32 %v1397, 4294901760
    %v5594 = vsub.f32 %v1397, %v5593
    %v5595 = vand.u32 %v5594, 4294901760
    %v5596 = vsub.f32 %v5594, %v5595
    %v5597 = vand.u32 %v5596, 4294901760
    %5598 = vmatprep.subr.mxu0 %v5597
    %v5599 = vand.u32 %v1396, 4294901760
    %v5600 = vsub.f32 %v1396, %v5599
    %v5601 = vand.u32 %v5600, 4294901760
    %v5602 = vsub.f32 %v5600, %v5601
    %v5603 = vand.u32 %v5602, 4294901760
    %5604 = vmatpush1.msra.mxu0 %v5603
    %v5605 = vand.u32 %v1393, 4294901760
    %v5606 = vsub.f32 %v1393, %v5605
    %v5607 = vand.u32 %v5606, 4294901760
    %v5608 = vsub.f32 %v5606, %v5607
    %v5609 = vand.u32 %v5608, 4294901760
    %5610 = vmatprep.subr.mxu0 %v5609
    %v5611 = vand.u32 %v1392, 4294901760
    %v5612 = vsub.f32 %v1392, %v5611
    %v5613 = vand.u32 %v5612, 4294901760
    %v5614 = vsub.f32 %v5612, %v5613
    %v5615 = vand.u32 %v5614, 4294901760
    %5616 = vmatpush1.msra.mxu0 %v5615
    %v5617 = vand.u32 %v1389, 4294901760
    %v5618 = vsub.f32 %v1389, %v5617
    %v5619 = vand.u32 %v5618, 4294901760
    %v5620 = vsub.f32 %v5618, %v5619
    %v5621 = vand.u32 %v5620, 4294901760
    %5622 = vmatprep.subr.mxu0 %v5621
    %v5623 = vand.u32 %v1388, 4294901760
    %v5624 = vsub.f32 %v1388, %v5623
    %v5625 = vand.u32 %v5624, 4294901760
    %v5626 = vsub.f32 %v5624, %v5625
    %v5627 = vand.u32 %v5626, 4294901760
    %5628 = vmatpush1.msra.mxu0 %v5627
    %v5629 = vand.u32 %v1385, 4294901760
    %v5630 = vsub.f32 %v1385, %v5629
    %v5631 = vand.u32 %v5630, 4294901760
    %v5632 = vsub.f32 %v5630, %v5631
    %v5633 = vand.u32 %v5632, 4294901760
    %5634 = vmatprep.subr.mxu0 %v5633
    %v5635 = vand.u32 %v1384, 4294901760
    %v5636 = vsub.f32 %v1384, %v5635
    %v5637 = vand.u32 %v5636, 4294901760
    %v5638 = vsub.f32 %v5636, %v5637
    %v5639 = vand.u32 %v5638, 4294901760
    %5640 = vmatpush1.msra.mxu0 %v5639
    %v5641 = vand.u32 %v1381, 4294901760
    %v5642 = vsub.f32 %v1381, %v5641
    %v5643 = vand.u32 %v5642, 4294901760
    %v5644 = vsub.f32 %v5642, %v5643
    %v5645 = vand.u32 %v5644, 4294901760
    %5646 = vmatprep.subr.mxu0 %v5645
    %v5647 = vand.u32 %v1380, 4294901760
    %v5648 = vsub.f32 %v1380, %v5647
    %v5649 = vand.u32 %v5648, 4294901760
    %v5650 = vsub.f32 %v5648, %v5649
    %v5651 = vand.u32 %v5650, 4294901760
    %5652 = vmatpush1.msra.mxu0 %v5651
    %v5653 = vand.u32 %v1377, 4294901760
    %v5654 = vsub.f32 %v1377, %v5653
    %v5655 = vand.u32 %v5654, 4294901760
    %v5656 = vsub.f32 %v5654, %v5655
    %v5657 = vand.u32 %v5656, 4294901760
    %5658 = vmatprep.subr.mxu0 %v5657
    %v5659 = vand.u32 %v1376, 4294901760
    %v5660 = vsub.f32 %v1376, %v5659
    %v5661 = vand.u32 %v5660, 4294901760
    %v5662 = vsub.f32 %v5660, %v5661
    %v5663 = vand.u32 %v5662, 4294901760
    %5664 = vmatpush1.msra.mxu0 %v5663
    %v5665 = vand.u32 %v1373, 4294901760
    %v5666 = vsub.f32 %v1373, %v5665
    %v5667 = vand.u32 %v5666, 4294901760
    %v5668 = vsub.f32 %v5666, %v5667
    %v5669 = vand.u32 %v5668, 4294901760
    %5670 = vmatprep.subr.mxu0 %v5669
    %v5671 = vand.u32 %v1372, 4294901760
    %v5672 = vsub.f32 %v1372, %v5671
    %v5673 = vand.u32 %v5672, 4294901760
    %v5674 = vsub.f32 %v5672, %v5673
    %v5675 = vand.u32 %v5674, 4294901760
    %5676 = vmatpush1.msra.mxu0 %v5675
    %v5677 = vand.u32 %v1369, 4294901760
    %v5678 = vsub.f32 %v1369, %v5677
    %v5679 = vand.u32 %v5678, 4294901760
    %v5680 = vsub.f32 %v5678, %v5679
    %v5681 = vand.u32 %v5680, 4294901760
    %5682 = vmatprep.subr.mxu0 %v5681
    %v5683 = vand.u32 %v1368, 4294901760
    %v5684 = vsub.f32 %v1368, %v5683
    %v5685 = vand.u32 %v5684, 4294901760
    %v5686 = vsub.f32 %v5684, %v5685
    %v5687 = vand.u32 %v5686, 4294901760
    %5688 = vmatpush1.msra.mxu0 %v5687
    %v5689 = vand.u32 %v1365, 4294901760
    %v5690 = vsub.f32 %v1365, %v5689
    %v5691 = vand.u32 %v5690, 4294901760
    %v5692 = vsub.f32 %v5690, %v5691
    %v5693 = vand.u32 %v5692, 4294901760
    %5694 = vmatprep.subr.mxu0 %v5693
    %v5695 = vand.u32 %v1364, 4294901760
    %v5696 = vsub.f32 %v1364, %v5695
    %v5697 = vand.u32 %v5696, 4294901760
    %v5698 = vsub.f32 %v5696, %v5697
    %v5699 = vand.u32 %v5698, 4294901760
    %5700 = vmatpush1.msra.mxu0 %v5699
    %v5701 = vand.u32 %v1489, 4294901760
    %v5702 = vsub.f32 %v1489, %v5701
    %v5703 = vand.u32 %v5702, 4294901760
    %v5704 = vsub.f32 %v5702, %v5703
    %v5705 = vand.u32 %v5704, 4294901760
    %5706 = vmatprep.subr.mxu0 %v5705
    %v5707 = vand.u32 %v1488, 4294901760
    %v5708 = vsub.f32 %v1488, %v5707
    %v5709 = vand.u32 %v5708, 4294901760
    %v5710 = vsub.f32 %v5708, %v5709
    %v5711 = vand.u32 %v5710, 4294901760
    %5712 = vmatpush2.msra.mxu0 %v5711
    %v5713 = vand.u32 %v1485, 4294901760
    %v5714 = vsub.f32 %v1485, %v5713
    %v5715 = vand.u32 %v5714, 4294901760
    %v5716 = vsub.f32 %v5714, %v5715
    %v5717 = vand.u32 %v5716, 4294901760
    %5718 = vmatprep.subr.mxu0 %v5717
    %v5719 = vand.u32 %v1484, 4294901760
    %v5720 = vsub.f32 %v1484, %v5719
    %v5721 = vand.u32 %v5720, 4294901760
    %v5722 = vsub.f32 %v5720, %v5721
    %v5723 = vand.u32 %v5722, 4294901760
    %5724 = vmatpush2.msra.mxu0 %v5723
    %v5725 = vand.u32 %v1481, 4294901760
    %v5726 = vsub.f32 %v1481, %v5725
    %v5727 = vand.u32 %v5726, 4294901760
    %v5728 = vsub.f32 %v5726, %v5727
    %v5729 = vand.u32 %v5728, 4294901760
    %5730 = vmatprep.subr.mxu0 %v5729
    %v5731 = vand.u32 %v1480, 4294901760
    %v5732 = vsub.f32 %v1480, %v5731
    %v5733 = vand.u32 %v5732, 4294901760
    %v5734 = vsub.f32 %v5732, %v5733
    %v5735 = vand.u32 %v5734, 4294901760
    %5736 = vmatpush2.msra.mxu0 %v5735
    %v5737 = vand.u32 %v1477, 4294901760
    %v5738 = vsub.f32 %v1477, %v5737
    %v5739 = vand.u32 %v5738, 4294901760
    %v5740 = vsub.f32 %v5738, %v5739
    %v5741 = vand.u32 %v5740, 4294901760
    %5742 = vmatprep.subr.mxu0 %v5741
    %v5743 = vand.u32 %v1476, 4294901760
    %v5744 = vsub.f32 %v1476, %v5743
    %v5745 = vand.u32 %v5744, 4294901760
    %v5746 = vsub.f32 %v5744, %v5745
    %v5747 = vand.u32 %v5746, 4294901760
    %5748 = vmatpush2.msra.mxu0 %v5747
    %v5749 = vand.u32 %v1473, 4294901760
    %v5750 = vsub.f32 %v1473, %v5749
    %v5751 = vand.u32 %v5750, 4294901760
    %v5752 = vsub.f32 %v5750, %v5751
    %v5753 = vand.u32 %v5752, 4294901760
    %5754 = vmatprep.subr.mxu0 %v5753
    %v5755 = vand.u32 %v1472, 4294901760
    %v5756 = vsub.f32 %v1472, %v5755
    %v5757 = vand.u32 %v5756, 4294901760
    %v5758 = vsub.f32 %v5756, %v5757
    %v5759 = vand.u32 %v5758, 4294901760
    %5760 = vmatpush2.msra.mxu0 %v5759
    %v5761 = vand.u32 %v1469, 4294901760
    %v5762 = vsub.f32 %v1469, %v5761
    %v5763 = vand.u32 %v5762, 4294901760
    %v5764 = vsub.f32 %v5762, %v5763
    %v5765 = vand.u32 %v5764, 4294901760
    %5766 = vmatprep.subr.mxu0 %v5765
    %v5767 = vand.u32 %v1468, 4294901760
    %v5768 = vsub.f32 %v1468, %v5767
    %v5769 = vand.u32 %v5768, 4294901760
    %v5770 = vsub.f32 %v5768, %v5769
    %v5771 = vand.u32 %v5770, 4294901760
    %5772 = vmatpush2.msra.mxu0 %v5771
    %v5773 = vand.u32 %v1465, 4294901760
    %v5774 = vsub.f32 %v1465, %v5773
    %v5775 = vand.u32 %v5774, 4294901760
    %v5776 = vsub.f32 %v5774, %v5775
    %v5777 = vand.u32 %v5776, 4294901760
    %5778 = vmatprep.subr.mxu0 %v5777
    %v5779 = vand.u32 %v1464, 4294901760
    %v5780 = vsub.f32 %v1464, %v5779
    %v5781 = vand.u32 %v5780, 4294901760
    %v5782 = vsub.f32 %v5780, %v5781
    %v5783 = vand.u32 %v5782, 4294901760
    %5784 = vmatpush2.msra.mxu0 %v5783
    %v5785 = vand.u32 %v1461, 4294901760
    %v5786 = vsub.f32 %v1461, %v5785
    %v5787 = vand.u32 %v5786, 4294901760
    %v5788 = vsub.f32 %v5786, %v5787
    %v5789 = vand.u32 %v5788, 4294901760
    %5790 = vmatprep.subr.mxu0 %v5789
    %v5791 = vand.u32 %v1460, 4294901760
    %v5792 = vsub.f32 %v1460, %v5791
    %v5793 = vand.u32 %v5792, 4294901760
    %v5794 = vsub.f32 %v5792, %v5793
    %v5795 = vand.u32 %v5794, 4294901760
    %5796 = vmatpush2.msra.mxu0 %v5795
    %v5797 = vand.u32 %v1457, 4294901760
    %v5798 = vsub.f32 %v1457, %v5797
    %v5799 = vand.u32 %v5798, 4294901760
    %v5800 = vsub.f32 %v5798, %v5799
    %v5801 = vand.u32 %v5800, 4294901760
    %5802 = vmatprep.subr.mxu0 %v5801
    %v5803 = vand.u32 %v1456, 4294901760
    %v5804 = vsub.f32 %v1456, %v5803
    %v5805 = vand.u32 %v5804, 4294901760
    %v5806 = vsub.f32 %v5804, %v5805
    %v5807 = vand.u32 %v5806, 4294901760
    %5808 = vmatpush2.msra.mxu0 %v5807
    %v5809 = vand.u32 %v1453, 4294901760
    %v5810 = vsub.f32 %v1453, %v5809
    %v5811 = vand.u32 %v5810, 4294901760
    %v5812 = vsub.f32 %v5810, %v5811
    %v5813 = vand.u32 %v5812, 4294901760
    %5814 = vmatprep.subr.mxu0 %v5813
    %v5815 = vand.u32 %v1452, 4294901760
    %v5816 = vsub.f32 %v1452, %v5815
    %v5817 = vand.u32 %v5816, 4294901760
    %v5818 = vsub.f32 %v5816, %v5817
    %v5819 = vand.u32 %v5818, 4294901760
    %5820 = vmatpush2.msra.mxu0 %v5819
    %v5821 = vand.u32 %v1449, 4294901760
    %v5822 = vsub.f32 %v1449, %v5821
    %v5823 = vand.u32 %v5822, 4294901760
    %v5824 = vsub.f32 %v5822, %v5823
    %v5825 = vand.u32 %v5824, 4294901760
    %5826 = vmatprep.subr.mxu0 %v5825
    %v5827 = vand.u32 %v1448, 4294901760
    %v5828 = vsub.f32 %v1448, %v5827
    %v5829 = vand.u32 %v5828, 4294901760
    %v5830 = vsub.f32 %v5828, %v5829
    %v5831 = vand.u32 %v5830, 4294901760
    %5832 = vmatpush2.msra.mxu0 %v5831
    %v5833 = vand.u32 %v1445, 4294901760
    %v5834 = vsub.f32 %v1445, %v5833
    %v5835 = vand.u32 %v5834, 4294901760
    %v5836 = vsub.f32 %v5834, %v5835
    %v5837 = vand.u32 %v5836, 4294901760
    %5838 = vmatprep.subr.mxu0 %v5837
    %v5839 = vand.u32 %v1444, 4294901760
    %v5840 = vsub.f32 %v1444, %v5839
    %v5841 = vand.u32 %v5840, 4294901760
    %v5842 = vsub.f32 %v5840, %v5841
    %v5843 = vand.u32 %v5842, 4294901760
    %5844 = vmatpush2.msra.mxu0 %v5843
    %v5845 = vand.u32 %v1441, 4294901760
    %v5846 = vsub.f32 %v1441, %v5845
    %v5847 = vand.u32 %v5846, 4294901760
    %v5848 = vsub.f32 %v5846, %v5847
    %v5849 = vand.u32 %v5848, 4294901760
    %5850 = vmatprep.subr.mxu0 %v5849
    %v5851 = vand.u32 %v1440, 4294901760
    %v5852 = vsub.f32 %v1440, %v5851
    %v5853 = vand.u32 %v5852, 4294901760
    %v5854 = vsub.f32 %v5852, %v5853
    %v5855 = vand.u32 %v5854, 4294901760
    %5856 = vmatpush2.msra.mxu0 %v5855
    %v5857 = vand.u32 %v1437, 4294901760
    %v5858 = vsub.f32 %v1437, %v5857
    %v5859 = vand.u32 %v5858, 4294901760
    %v5860 = vsub.f32 %v5858, %v5859
    %v5861 = vand.u32 %v5860, 4294901760
    %5862 = vmatprep.subr.mxu0 %v5861
    %v5863 = vand.u32 %v1436, 4294901760
    %v5864 = vsub.f32 %v1436, %v5863
    %v5865 = vand.u32 %v5864, 4294901760
    %v5866 = vsub.f32 %v5864, %v5865
    %v5867 = vand.u32 %v5866, 4294901760
    %5868 = vmatpush2.msra.mxu0 %v5867
    %v5869 = vand.u32 %v1433, 4294901760
    %v5870 = vsub.f32 %v1433, %v5869
    %v5871 = vand.u32 %v5870, 4294901760
    %v5872 = vsub.f32 %v5870, %v5871
    %v5873 = vand.u32 %v5872, 4294901760
    %5874 = vmatprep.subr.mxu0 %v5873
    %v5875 = vand.u32 %v1432, 4294901760
    %v5876 = vsub.f32 %v1432, %v5875
    %v5877 = vand.u32 %v5876, 4294901760
    %v5878 = vsub.f32 %v5876, %v5877
    %v5879 = vand.u32 %v5878, 4294901760
    %5880 = vmatpush2.msra.mxu0 %v5879
    %v5881 = vand.u32 %v1429, 4294901760
    %v5882 = vsub.f32 %v1429, %v5881
    %v5883 = vand.u32 %v5882, 4294901760
    %v5884 = vsub.f32 %v5882, %v5883
    %v5885 = vand.u32 %v5884, 4294901760
    %5886 = vmatprep.subr.mxu0 %v5885
    %v5887 = vand.u32 %v1428, 4294901760
    %v5888 = vsub.f32 %v1428, %v5887
    %v5889 = vand.u32 %v5888, 4294901760
    %v5890 = vsub.f32 %v5888, %v5889
    %v5891 = vand.u32 %v5890, 4294901760
    %5892 = vmatpush2.msra.mxu0 %v5891
    %v5893 = vand.u32 %v1233, 4294901760
    %5894 = vmatprep.mubr.f32.mxu0 %v5893
    %v5895 = vand.u32 %v1232, 4294901760
    %5896 = vmatmul.mubr.f32.gmra.mxu0 %v5895
    %v5897 = vpop.f32.mrf.mxu0
    %v5898 = vadd.f32 %v5505, %v5897
    %v5899 = vpop.f32.mrf.mxu0
    %v5900 = vadd.f32 %v5507, %v5899
    %5901 = vdwg.mxu0
    %v5902 = vand.u32 %v1425, 4294901760
    %v5903 = vsub.f32 %v1425, %v5902
    %5904 = vmatprep.subr.mxu0 %v5903
    %v5905 = vand.u32 %v1424, 4294901760
    %v5906 = vsub.f32 %v1424, %v5905
    %5907 = vmatpush1.msra.mxu0 %v5906
    %v5908 = vand.u32 %v1421, 4294901760
    %v5909 = vsub.f32 %v1421, %v5908
    %5910 = vmatprep.subr.mxu0 %v5909
    %v5911 = vand.u32 %v1420, 4294901760
    %v5912 = vsub.f32 %v1420, %v5911
    %5913 = vmatpush1.msra.mxu0 %v5912
    %v5914 = vand.u32 %v1417, 4294901760
    %v5915 = vsub.f32 %v1417, %v5914
    %5916 = vmatprep.subr.mxu0 %v5915
    %v5917 = vand.u32 %v1416, 4294901760
    %v5918 = vsub.f32 %v1416, %v5917
    %5919 = vmatpush1.msra.mxu0 %v5918
    %v5920 = vand.u32 %v1413, 4294901760
    %v5921 = vsub.f32 %v1413, %v5920
    %5922 = vmatprep.subr.mxu0 %v5921
    %v5923 = vand.u32 %v1412, 4294901760
    %v5924 = vsub.f32 %v1412, %v5923
    %5925 = vmatpush1.msra.mxu0 %v5924
    %v5926 = vand.u32 %v1409, 4294901760
    %v5927 = vsub.f32 %v1409, %v5926
    %5928 = vmatprep.subr.mxu0 %v5927
    %v5929 = vand.u32 %v1408, 4294901760
    %v5930 = vsub.f32 %v1408, %v5929
    %5931 = vmatpush1.msra.mxu0 %v5930
    %v5932 = vand.u32 %v1405, 4294901760
    %v5933 = vsub.f32 %v1405, %v5932
    %5934 = vmatprep.subr.mxu0 %v5933
    %v5935 = vand.u32 %v1404, 4294901760
    %v5936 = vsub.f32 %v1404, %v5935
    %5937 = vmatpush1.msra.mxu0 %v5936
    %v5938 = vand.u32 %v1401, 4294901760
    %v5939 = vsub.f32 %v1401, %v5938
    %5940 = vmatprep.subr.mxu0 %v5939
    %v5941 = vand.u32 %v1400, 4294901760
    %v5942 = vsub.f32 %v1400, %v5941
    %5943 = vmatpush1.msra.mxu0 %v5942
    %v5944 = vand.u32 %v1397, 4294901760
    %v5945 = vsub.f32 %v1397, %v5944
    %5946 = vmatprep.subr.mxu0 %v5945
    %v5947 = vand.u32 %v1396, 4294901760
    %v5948 = vsub.f32 %v1396, %v5947
    %5949 = vmatpush1.msra.mxu0 %v5948
    %v5950 = vand.u32 %v1393, 4294901760
    %v5951 = vsub.f32 %v1393, %v5950
    %5952 = vmatprep.subr.mxu0 %v5951
    %v5953 = vand.u32 %v1392, 4294901760
    %v5954 = vsub.f32 %v1392, %v5953
    %5955 = vmatpush1.msra.mxu0 %v5954
    %v5956 = vand.u32 %v1389, 4294901760
    %v5957 = vsub.f32 %v1389, %v5956
    %5958 = vmatprep.subr.mxu0 %v5957
    %v5959 = vand.u32 %v1388, 4294901760
    %v5960 = vsub.f32 %v1388, %v5959
    %5961 = vmatpush1.msra.mxu0 %v5960
    %v5962 = vand.u32 %v1385, 4294901760
    %v5963 = vsub.f32 %v1385, %v5962
    %5964 = vmatprep.subr.mxu0 %v5963
    %v5965 = vand.u32 %v1384, 4294901760
    %v5966 = vsub.f32 %v1384, %v5965
    %5967 = vmatpush1.msra.mxu0 %v5966
    %v5968 = vand.u32 %v1381, 4294901760
    %v5969 = vsub.f32 %v1381, %v5968
    %5970 = vmatprep.subr.mxu0 %v5969
    %v5971 = vand.u32 %v1380, 4294901760
    %v5972 = vsub.f32 %v1380, %v5971
    %5973 = vmatpush1.msra.mxu0 %v5972
    %v5974 = vand.u32 %v1377, 4294901760
    %v5975 = vsub.f32 %v1377, %v5974
    %5976 = vmatprep.subr.mxu0 %v5975
    %v5977 = vand.u32 %v1376, 4294901760
    %v5978 = vsub.f32 %v1376, %v5977
    %5979 = vmatpush1.msra.mxu0 %v5978
    %v5980 = vand.u32 %v1373, 4294901760
    %v5981 = vsub.f32 %v1373, %v5980
    %5982 = vmatprep.subr.mxu0 %v5981
    %v5983 = vand.u32 %v1372, 4294901760
    %v5984 = vsub.f32 %v1372, %v5983
    %5985 = vmatpush1.msra.mxu0 %v5984
    %v5986 = vand.u32 %v1369, 4294901760
    %v5987 = vsub.f32 %v1369, %v5986
    %5988 = vmatprep.subr.mxu0 %v5987
    %v5989 = vand.u32 %v1368, 4294901760
    %v5990 = vsub.f32 %v1368, %v5989
    %5991 = vmatpush1.msra.mxu0 %v5990
    %v5992 = vand.u32 %v1365, 4294901760
    %v5993 = vsub.f32 %v1365, %v5992
    %5994 = vmatprep.subr.mxu0 %v5993
    %v5995 = vand.u32 %v1364, 4294901760
    %v5996 = vsub.f32 %v1364, %v5995
    %5997 = vmatpush1.msra.mxu0 %v5996
    %v5998 = vand.u32 %v1489, 4294901760
    %v5999 = vsub.f32 %v1489, %v5998
    %6000 = vmatprep.subr.mxu0 %v5999
    %v6001 = vand.u32 %v1488, 4294901760
    %v6002 = vsub.f32 %v1488, %v6001
    %6003 = vmatpush2.msra.mxu0 %v6002
    %v6004 = vand.u32 %v1485, 4294901760
    %v6005 = vsub.f32 %v1485, %v6004
    %6006 = vmatprep.subr.mxu0 %v6005
    %v6007 = vand.u32 %v1484, 4294901760
    %v6008 = vsub.f32 %v1484, %v6007
    %6009 = vmatpush2.msra.mxu0 %v6008
    %v6010 = vand.u32 %v1481, 4294901760
    %v6011 = vsub.f32 %v1481, %v6010
    %6012 = vmatprep.subr.mxu0 %v6011
    %v6013 = vand.u32 %v1480, 4294901760
    %v6014 = vsub.f32 %v1480, %v6013
    %6015 = vmatpush2.msra.mxu0 %v6014
    %v6016 = vand.u32 %v1477, 4294901760
    %v6017 = vsub.f32 %v1477, %v6016
    %6018 = vmatprep.subr.mxu0 %v6017
    %v6019 = vand.u32 %v1476, 4294901760
    %v6020 = vsub.f32 %v1476, %v6019
    %6021 = vmatpush2.msra.mxu0 %v6020
    %v6022 = vand.u32 %v1473, 4294901760
    %v6023 = vsub.f32 %v1473, %v6022
    %6024 = vmatprep.subr.mxu0 %v6023
    %v6025 = vand.u32 %v1472, 4294901760
    %v6026 = vsub.f32 %v1472, %v6025
    %6027 = vmatpush2.msra.mxu0 %v6026
    %v6028 = vand.u32 %v1469, 4294901760
    %v6029 = vsub.f32 %v1469, %v6028
    %6030 = vmatprep.subr.mxu0 %v6029
    %v6031 = vand.u32 %v1468, 4294901760
    %v6032 = vsub.f32 %v1468, %v6031
    %6033 = vmatpush2.msra.mxu0 %v6032
    %v6034 = vand.u32 %v1465, 4294901760
    %v6035 = vsub.f32 %v1465, %v6034
    %6036 = vmatprep.subr.mxu0 %v6035
    %v6037 = vand.u32 %v1464, 4294901760
    %v6038 = vsub.f32 %v1464, %v6037
    %6039 = vmatpush2.msra.mxu0 %v6038
    %v6040 = vand.u32 %v1461, 4294901760
    %v6041 = vsub.f32 %v1461, %v6040
    %6042 = vmatprep.subr.mxu0 %v6041
    %v6043 = vand.u32 %v1460, 4294901760
    %v6044 = vsub.f32 %v1460, %v6043
    %6045 = vmatpush2.msra.mxu0 %v6044
    %v6046 = vand.u32 %v1457, 4294901760
    %v6047 = vsub.f32 %v1457, %v6046
    %6048 = vmatprep.subr.mxu0 %v6047
    %v6049 = vand.u32 %v1456, 4294901760
    %v6050 = vsub.f32 %v1456, %v6049
    %6051 = vmatpush2.msra.mxu0 %v6050
    %v6052 = vand.u32 %v1453, 4294901760
    %v6053 = vsub.f32 %v1453, %v6052
    %6054 = vmatprep.subr.mxu0 %v6053
    %v6055 = vand.u32 %v1452, 4294901760
    %v6056 = vsub.f32 %v1452, %v6055
    %6057 = vmatpush2.msra.mxu0 %v6056
    %v6058 = vand.u32 %v1449, 4294901760
    %v6059 = vsub.f32 %v1449, %v6058
    %6060 = vmatprep.subr.mxu0 %v6059
    %v6061 = vand.u32 %v1448, 4294901760
    %v6062 = vsub.f32 %v1448, %v6061
    %6063 = vmatpush2.msra.mxu0 %v6062
    %v6064 = vand.u32 %v1445, 4294901760
    %v6065 = vsub.f32 %v1445, %v6064
    %6066 = vmatprep.subr.mxu0 %v6065
    %v6067 = vand.u32 %v1444, 4294901760
    %v6068 = vsub.f32 %v1444, %v6067
    %6069 = vmatpush2.msra.mxu0 %v6068
    %v6070 = vand.u32 %v1441, 4294901760
    %v6071 = vsub.f32 %v1441, %v6070
    %6072 = vmatprep.subr.mxu0 %v6071
    %v6073 = vand.u32 %v1440, 4294901760
    %v6074 = vsub.f32 %v1440, %v6073
    %6075 = vmatpush2.msra.mxu0 %v6074
    %v6076 = vand.u32 %v1437, 4294901760
    %v6077 = vsub.f32 %v1437, %v6076
    %6078 = vmatprep.subr.mxu0 %v6077
    %v6079 = vand.u32 %v1436, 4294901760
    %v6080 = vsub.f32 %v1436, %v6079
    %6081 = vmatpush2.msra.mxu0 %v6080
    %v6082 = vand.u32 %v1433, 4294901760
    %v6083 = vsub.f32 %v1433, %v6082
    %6084 = vmatprep.subr.mxu0 %v6083
    %v6085 = vand.u32 %v1432, 4294901760
    %v6086 = vsub.f32 %v1432, %v6085
    %6087 = vmatpush2.msra.mxu0 %v6086
    %v6088 = vand.u32 %v1429, 4294901760
    %v6089 = vsub.f32 %v1429, %v6088
    %6090 = vmatprep.subr.mxu0 %v6089
    %v6091 = vand.u32 %v1428, 4294901760
    %v6092 = vsub.f32 %v1428, %v6091
    %6093 = vmatpush2.msra.mxu0 %v6092
    %v6094 = vand.u32 %v1233, 4294901760
    %v6095 = vsub.f32 %v1233, %v6094
    %6096 = vmatprep.mubr.f32.mxu0 %v6095
    %v6097 = vand.u32 %v1232, 4294901760
    %v6098 = vsub.f32 %v1232, %v6097
    %6099 = vmatmul.mubr.f32.gmra.mxu0 %v6098
    %v6100 = vpop.f32.mrf.mxu0
    %v6101 = vadd.f32 %v5898, %v6100
    %v6102 = vpop.f32.mrf.mxu0
    %v6103 = vadd.f32 %v5900, %v6102
    %6104 = vdwg.mxu0
    %v6105 = vand.u32 %v1425, 4294901760
    %6106 = vmatprep.subr.mxu0 %v6105
    %v6107 = vand.u32 %v1424, 4294901760
    %6108 = vmatpush1.msra.mxu0 %v6107
    %v6109 = vand.u32 %v1421, 4294901760
    %6110 = vmatprep.subr.mxu0 %v6109
    %v6111 = vand.u32 %v1420, 4294901760
    %6112 = vmatpush1.msra.mxu0 %v6111
    %v6113 = vand.u32 %v1417, 4294901760
    %6114 = vmatprep.subr.mxu0 %v6113
    %v6115 = vand.u32 %v1416, 4294901760
    %6116 = vmatpush1.msra.mxu0 %v6115
    %v6117 = vand.u32 %v1413, 4294901760
    %6118 = vmatprep.subr.mxu0 %v6117
    %v6119 = vand.u32 %v1412, 4294901760
    %6120 = vmatpush1.msra.mxu0 %v6119
    %v6121 = vand.u32 %v1409, 4294901760
    %6122 = vmatprep.subr.mxu0 %v6121
    %v6123 = vand.u32 %v1408, 4294901760
    %6124 = vmatpush1.msra.mxu0 %v6123
    %v6125 = vand.u32 %v1405, 4294901760
    %6126 = vmatprep.subr.mxu0 %v6125
    %v6127 = vand.u32 %v1404, 4294901760
    %6128 = vmatpush1.msra.mxu0 %v6127
    %v6129 = vand.u32 %v1401, 4294901760
    %6130 = vmatprep.subr.mxu0 %v6129
    %v6131 = vand.u32 %v1400, 4294901760
    %6132 = vmatpush1.msra.mxu0 %v6131
    %v6133 = vand.u32 %v1397, 4294901760
    %6134 = vmatprep.subr.mxu0 %v6133
    %v6135 = vand.u32 %v1396, 4294901760
    %6136 = vmatpush1.msra.mxu0 %v6135
    %v6137 = vand.u32 %v1393, 4294901760
    %6138 = vmatprep.subr.mxu0 %v6137
    %v6139 = vand.u32 %v1392, 4294901760
    %6140 = vmatpush1.msra.mxu0 %v6139
    %v6141 = vand.u32 %v1389, 4294901760
    %6142 = vmatprep.subr.mxu0 %v6141
    %v6143 = vand.u32 %v1388, 4294901760
    %6144 = vmatpush1.msra.mxu0 %v6143
    %v6145 = vand.u32 %v1385, 4294901760
    %6146 = vmatprep.subr.mxu0 %v6145
    %v6147 = vand.u32 %v1384, 4294901760
    %6148 = vmatpush1.msra.mxu0 %v6147
    %v6149 = vand.u32 %v1381, 4294901760
    %6150 = vmatprep.subr.mxu0 %v6149
    %v6151 = vand.u32 %v1380, 4294901760
    %6152 = vmatpush1.msra.mxu0 %v6151
    %v6153 = vand.u32 %v1377, 4294901760
    %6154 = vmatprep.subr.mxu0 %v6153
    %v6155 = vand.u32 %v1376, 4294901760
    %6156 = vmatpush1.msra.mxu0 %v6155
    %v6157 = vand.u32 %v1373, 4294901760
    %6158 = vmatprep.subr.mxu0 %v6157
    %v6159 = vand.u32 %v1372, 4294901760
    %6160 = vmatpush1.msra.mxu0 %v6159
    %v6161 = vand.u32 %v1369, 4294901760
    %6162 = vmatprep.subr.mxu0 %v6161
    %v6163 = vand.u32 %v1368, 4294901760
    %6164 = vmatpush1.msra.mxu0 %v6163
    %v6165 = vand.u32 %v1365, 4294901760
    %6166 = vmatprep.subr.mxu0 %v6165
    %v6167 = vand.u32 %v1364, 4294901760
    %6168 = vmatpush1.msra.mxu0 %v6167
    %v6169 = vand.u32 %v1489, 4294901760
    %6170 = vmatprep.subr.mxu0 %v6169
    %v6171 = vand.u32 %v1488, 4294901760
    %6172 = vmatpush2.msra.mxu0 %v6171
    %v6173 = vand.u32 %v1485, 4294901760
    %6174 = vmatprep.subr.mxu0 %v6173
    %v6175 = vand.u32 %v1484, 4294901760
    %6176 = vmatpush2.msra.mxu0 %v6175
    %v6177 = vand.u32 %v1481, 4294901760
    %6178 = vmatprep.subr.mxu0 %v6177
    %v6179 = vand.u32 %v1480, 4294901760
    %6180 = vmatpush2.msra.mxu0 %v6179
    %v6181 = vand.u32 %v1477, 4294901760
    %6182 = vmatprep.subr.mxu0 %v6181
    %v6183 = vand.u32 %v1476, 4294901760
    %6184 = vmatpush2.msra.mxu0 %v6183
    %v6185 = vand.u32 %v1473, 4294901760
    %6186 = vmatprep.subr.mxu0 %v6185
    %v6187 = vand.u32 %v1472, 4294901760
    %6188 = vmatpush2.msra.mxu0 %v6187
    %v6189 = vand.u32 %v1469, 4294901760
    %6190 = vmatprep.subr.mxu0 %v6189
    %v6191 = vand.u32 %v1468, 4294901760
    %6192 = vmatpush2.msra.mxu0 %v6191
    %v6193 = vand.u32 %v1465, 4294901760
    %6194 = vmatprep.subr.mxu0 %v6193
    %v6195 = vand.u32 %v1464, 4294901760
    %6196 = vmatpush2.msra.mxu0 %v6195
    %v6197 = vand.u32 %v1461, 4294901760
    %6198 = vmatprep.subr.mxu0 %v6197
    %v6199 = vand.u32 %v1460, 4294901760
    %6200 = vmatpush2.msra.mxu0 %v6199
    %v6201 = vand.u32 %v1457, 4294901760
    %6202 = vmatprep.subr.mxu0 %v6201
    %v6203 = vand.u32 %v1456, 4294901760
    %6204 = vmatpush2.msra.mxu0 %v6203
    %v6205 = vand.u32 %v1453, 4294901760
    %6206 = vmatprep.subr.mxu0 %v6205
    %v6207 = vand.u32 %v1452, 4294901760
    %6208 = vmatpush2.msra.mxu0 %v6207
    %v6209 = vand.u32 %v1449, 4294901760
    %6210 = vmatprep.subr.mxu0 %v6209
    %v6211 = vand.u32 %v1448, 4294901760
    %6212 = vmatpush2.msra.mxu0 %v6211
    %v6213 = vand.u32 %v1445, 4294901760
    %6214 = vmatprep.subr.mxu0 %v6213
    %v6215 = vand.u32 %v1444, 4294901760
    %6216 = vmatpush2.msra.mxu0 %v6215
    %v6217 = vand.u32 %v1441, 4294901760
    %6218 = vmatprep.subr.mxu0 %v6217
    %v6219 = vand.u32 %v1440, 4294901760
    %6220 = vmatpush2.msra.mxu0 %v6219
    %v6221 = vand.u32 %v1437, 4294901760
    %6222 = vmatprep.subr.mxu0 %v6221
    %v6223 = vand.u32 %v1436, 4294901760
    %6224 = vmatpush2.msra.mxu0 %v6223
    %v6225 = vand.u32 %v1433, 4294901760
    %6226 = vmatprep.subr.mxu0 %v6225
    %v6227 = vand.u32 %v1432, 4294901760
    %6228 = vmatpush2.msra.mxu0 %v6227
    %v6229 = vand.u32 %v1429, 4294901760
    %6230 = vmatprep.subr.mxu0 %v6229
    %v6231 = vand.u32 %v1428, 4294901760
    %6232 = vmatpush2.msra.mxu0 %v6231
    %v6233 = vand.u32 %v1233, 4294901760
    %v6234 = vsub.f32 %v1233, %v6233
    %v6235 = vand.u32 %v6234, 4294901760
    %6236 = vmatprep.mubr.f32.mxu0 %v6235
    %v6237 = vand.u32 %v1232, 4294901760
    %v6238 = vsub.f32 %v1232, %v6237
    %v6239 = vand.u32 %v6238, 4294901760
    %6240 = vmatmul.mubr.f32.gmra.mxu0 %v6239
    %v6241 = vpop.f32.mrf.mxu0
    %v6242 = vadd.f32 %v6101, %v6241
    %v6243 = vpop.f32.mrf.mxu0
    %v6244 = vadd.f32 %v6103, %v6243
    %6245 = vdwg.mxu0
    %v6246 = vand.u32 %v1425, 4294901760
    %v6247 = vsub.f32 %v1425, %v6246
    %v6248 = vand.u32 %v6247, 4294901760
    %6249 = vmatprep.subr.mxu0 %v6248
    %v6250 = vand.u32 %v1424, 4294901760
    %v6251 = vsub.f32 %v1424, %v6250
    %v6252 = vand.u32 %v6251, 4294901760
    %6253 = vmatpush1.msra.mxu0 %v6252
    %v6254 = vand.u32 %v1421, 4294901760
    %v6255 = vsub.f32 %v1421, %v6254
    %v6256 = vand.u32 %v6255, 4294901760
    %6257 = vmatprep.subr.mxu0 %v6256
    %v6258 = vand.u32 %v1420, 4294901760
    %v6259 = vsub.f32 %v1420, %v6258
    %v6260 = vand.u32 %v6259, 4294901760
    %6261 = vmatpush1.msra.mxu0 %v6260
    %v6262 = vand.u32 %v1417, 4294901760
    %v6263 = vsub.f32 %v1417, %v6262
    %v6264 = vand.u32 %v6263, 4294901760
    %6265 = vmatprep.subr.mxu0 %v6264
    %v6266 = vand.u32 %v1416, 4294901760
    %v6267 = vsub.f32 %v1416, %v6266
    %v6268 = vand.u32 %v6267, 4294901760
    %6269 = vmatpush1.msra.mxu0 %v6268
    %v6270 = vand.u32 %v1413, 4294901760
    %v6271 = vsub.f32 %v1413, %v6270
    %v6272 = vand.u32 %v6271, 4294901760
    %6273 = vmatprep.subr.mxu0 %v6272
    %v6274 = vand.u32 %v1412, 4294901760
    %v6275 = vsub.f32 %v1412, %v6274
    %v6276 = vand.u32 %v6275, 4294901760
    %6277 = vmatpush1.msra.mxu0 %v6276
    %v6278 = vand.u32 %v1409, 4294901760
    %v6279 = vsub.f32 %v1409, %v6278
    %v6280 = vand.u32 %v6279, 4294901760
    %6281 = vmatprep.subr.mxu0 %v6280
    %v6282 = vand.u32 %v1408, 4294901760
    %v6283 = vsub.f32 %v1408, %v6282
    %v6284 = vand.u32 %v6283, 4294901760
    %6285 = vmatpush1.msra.mxu0 %v6284
    %v6286 = vand.u32 %v1405, 4294901760
    %v6287 = vsub.f32 %v1405, %v6286
    %v6288 = vand.u32 %v6287, 4294901760
    %6289 = vmatprep.subr.mxu0 %v6288
    %v6290 = vand.u32 %v1404, 4294901760
    %v6291 = vsub.f32 %v1404, %v6290
    %v6292 = vand.u32 %v6291, 4294901760
    %6293 = vmatpush1.msra.mxu0 %v6292
    %v6294 = vand.u32 %v1401, 4294901760
    %v6295 = vsub.f32 %v1401, %v6294
    %v6296 = vand.u32 %v6295, 4294901760
    %6297 = vmatprep.subr.mxu0 %v6296
    %v6298 = vand.u32 %v1400, 4294901760
    %v6299 = vsub.f32 %v1400, %v6298
    %v6300 = vand.u32 %v6299, 4294901760
    %6301 = vmatpush1.msra.mxu0 %v6300
    %v6302 = vand.u32 %v1397, 4294901760
    %v6303 = vsub.f32 %v1397, %v6302
    %v6304 = vand.u32 %v6303, 4294901760
    %6305 = vmatprep.subr.mxu0 %v6304
    %v6306 = vand.u32 %v1396, 4294901760
    %v6307 = vsub.f32 %v1396, %v6306
    %v6308 = vand.u32 %v6307, 4294901760
    %6309 = vmatpush1.msra.mxu0 %v6308
    %v6310 = vand.u32 %v1393, 4294901760
    %v6311 = vsub.f32 %v1393, %v6310
    %v6312 = vand.u32 %v6311, 4294901760
    %6313 = vmatprep.subr.mxu0 %v6312
    %v6314 = vand.u32 %v1392, 4294901760
    %v6315 = vsub.f32 %v1392, %v6314
    %v6316 = vand.u32 %v6315, 4294901760
    %6317 = vmatpush1.msra.mxu0 %v6316
    %v6318 = vand.u32 %v1389, 4294901760
    %v6319 = vsub.f32 %v1389, %v6318
    %v6320 = vand.u32 %v6319, 4294901760
    %6321 = vmatprep.subr.mxu0 %v6320
    %v6322 = vand.u32 %v1388, 4294901760
    %v6323 = vsub.f32 %v1388, %v6322
    %v6324 = vand.u32 %v6323, 4294901760
    %6325 = vmatpush1.msra.mxu0 %v6324
    %v6326 = vand.u32 %v1385, 4294901760
    %v6327 = vsub.f32 %v1385, %v6326
    %v6328 = vand.u32 %v6327, 4294901760
    %6329 = vmatprep.subr.mxu0 %v6328
    %v6330 = vand.u32 %v1384, 4294901760
    %v6331 = vsub.f32 %v1384, %v6330
    %v6332 = vand.u32 %v6331, 4294901760
    %6333 = vmatpush1.msra.mxu0 %v6332
    %v6334 = vand.u32 %v1381, 4294901760
    %v6335 = vsub.f32 %v1381, %v6334
    %v6336 = vand.u32 %v6335, 4294901760
    %6337 = vmatprep.subr.mxu0 %v6336
    %v6338 = vand.u32 %v1380, 4294901760
    %v6339 = vsub.f32 %v1380, %v6338
    %v6340 = vand.u32 %v6339, 4294901760
    %6341 = vmatpush1.msra.mxu0 %v6340
    %v6342 = vand.u32 %v1377, 4294901760
    %v6343 = vsub.f32 %v1377, %v6342
    %v6344 = vand.u32 %v6343, 4294901760
    %6345 = vmatprep.subr.mxu0 %v6344
    %v6346 = vand.u32 %v1376, 4294901760
    %v6347 = vsub.f32 %v1376, %v6346
    %v6348 = vand.u32 %v6347, 4294901760
    %6349 = vmatpush1.msra.mxu0 %v6348
    %v6350 = vand.u32 %v1373, 4294901760
    %v6351 = vsub.f32 %v1373, %v6350
    %v6352 = vand.u32 %v6351, 4294901760
    %6353 = vmatprep.subr.mxu0 %v6352
    %v6354 = vand.u32 %v1372, 4294901760
    %v6355 = vsub.f32 %v1372, %v6354
    %v6356 = vand.u32 %v6355, 4294901760
    %6357 = vmatpush1.msra.mxu0 %v6356
    %v6358 = vand.u32 %v1369, 4294901760
    %v6359 = vsub.f32 %v1369, %v6358
    %v6360 = vand.u32 %v6359, 4294901760
    %6361 = vmatprep.subr.mxu0 %v6360
    %v6362 = vand.u32 %v1368, 4294901760
    %v6363 = vsub.f32 %v1368, %v6362
    %v6364 = vand.u32 %v6363, 4294901760
    %6365 = vmatpush1.msra.mxu0 %v6364
    %v6366 = vand.u32 %v1365, 4294901760
    %v6367 = vsub.f32 %v1365, %v6366
    %v6368 = vand.u32 %v6367, 4294901760
    %6369 = vmatprep.subr.mxu0 %v6368
    %v6370 = vand.u32 %v1364, 4294901760
    %v6371 = vsub.f32 %v1364, %v6370
    %v6372 = vand.u32 %v6371, 4294901760
    %6373 = vmatpush1.msra.mxu0 %v6372
    %v6374 = vand.u32 %v1489, 4294901760
    %v6375 = vsub.f32 %v1489, %v6374
    %v6376 = vand.u32 %v6375, 4294901760
    %6377 = vmatprep.subr.mxu0 %v6376
    %v6378 = vand.u32 %v1488, 4294901760
    %v6379 = vsub.f32 %v1488, %v6378
    %v6380 = vand.u32 %v6379, 4294901760
    %6381 = vmatpush2.msra.mxu0 %v6380
    %v6382 = vand.u32 %v1485, 4294901760
    %v6383 = vsub.f32 %v1485, %v6382
    %v6384 = vand.u32 %v6383, 4294901760
    %6385 = vmatprep.subr.mxu0 %v6384
    %v6386 = vand.u32 %v1484, 4294901760
    %v6387 = vsub.f32 %v1484, %v6386
    %v6388 = vand.u32 %v6387, 4294901760
    %6389 = vmatpush2.msra.mxu0 %v6388
    %v6390 = vand.u32 %v1481, 4294901760
    %v6391 = vsub.f32 %v1481, %v6390
    %v6392 = vand.u32 %v6391, 4294901760
    %6393 = vmatprep.subr.mxu0 %v6392
    %v6394 = vand.u32 %v1480, 4294901760
    %v6395 = vsub.f32 %v1480, %v6394
    %v6396 = vand.u32 %v6395, 4294901760
    %6397 = vmatpush2.msra.mxu0 %v6396
    %v6398 = vand.u32 %v1477, 4294901760
    %v6399 = vsub.f32 %v1477, %v6398
    %v6400 = vand.u32 %v6399, 4294901760
    %6401 = vmatprep.subr.mxu0 %v6400
    %v6402 = vand.u32 %v1476, 4294901760
    %v6403 = vsub.f32 %v1476, %v6402
    %v6404 = vand.u32 %v6403, 4294901760
    %6405 = vmatpush2.msra.mxu0 %v6404
    %v6406 = vand.u32 %v1473, 4294901760
    %v6407 = vsub.f32 %v1473, %v6406
    %v6408 = vand.u32 %v6407, 4294901760
    %6409 = vmatprep.subr.mxu0 %v6408
    %v6410 = vand.u32 %v1472, 4294901760
    %v6411 = vsub.f32 %v1472, %v6410
    %v6412 = vand.u32 %v6411, 4294901760
    %6413 = vmatpush2.msra.mxu0 %v6412
    %v6414 = vand.u32 %v1469, 4294901760
    %v6415 = vsub.f32 %v1469, %v6414
    %v6416 = vand.u32 %v6415, 4294901760
    %6417 = vmatprep.subr.mxu0 %v6416
    %v6418 = vand.u32 %v1468, 4294901760
    %v6419 = vsub.f32 %v1468, %v6418
    %v6420 = vand.u32 %v6419, 4294901760
    %6421 = vmatpush2.msra.mxu0 %v6420
    %v6422 = vand.u32 %v1465, 4294901760
    %v6423 = vsub.f32 %v1465, %v6422
    %v6424 = vand.u32 %v6423, 4294901760
    %6425 = vmatprep.subr.mxu0 %v6424
    %v6426 = vand.u32 %v1464, 4294901760
    %v6427 = vsub.f32 %v1464, %v6426
    %v6428 = vand.u32 %v6427, 4294901760
    %6429 = vmatpush2.msra.mxu0 %v6428
    %v6430 = vand.u32 %v1461, 4294901760
    %v6431 = vsub.f32 %v1461, %v6430
    %v6432 = vand.u32 %v6431, 4294901760
    %6433 = vmatprep.subr.mxu0 %v6432
    %v6434 = vand.u32 %v1460, 4294901760
    %v6435 = vsub.f32 %v1460, %v6434
    %v6436 = vand.u32 %v6435, 4294901760
    %6437 = vmatpush2.msra.mxu0 %v6436
    %v6438 = vand.u32 %v1457, 4294901760
    %v6439 = vsub.f32 %v1457, %v6438
    %v6440 = vand.u32 %v6439, 4294901760
    %6441 = vmatprep.subr.mxu0 %v6440
    %v6442 = vand.u32 %v1456, 4294901760
    %v6443 = vsub.f32 %v1456, %v6442
    %v6444 = vand.u32 %v6443, 4294901760
    %6445 = vmatpush2.msra.mxu0 %v6444
    %v6446 = vand.u32 %v1453, 4294901760
    %v6447 = vsub.f32 %v1453, %v6446
    %v6448 = vand.u32 %v6447, 4294901760
    %6449 = vmatprep.subr.mxu0 %v6448
    %v6450 = vand.u32 %v1452, 4294901760
    %v6451 = vsub.f32 %v1452, %v6450
    %v6452 = vand.u32 %v6451, 4294901760
    %6453 = vmatpush2.msra.mxu0 %v6452
    %v6454 = vand.u32 %v1449, 4294901760
    %v6455 = vsub.f32 %v1449, %v6454
    %v6456 = vand.u32 %v6455, 4294901760
    %6457 = vmatprep.subr.mxu0 %v6456
    %v6458 = vand.u32 %v1448, 4294901760
    %v6459 = vsub.f32 %v1448, %v6458
    %v6460 = vand.u32 %v6459, 4294901760
    %6461 = vmatpush2.msra.mxu0 %v6460
    %v6462 = vand.u32 %v1445, 4294901760
    %v6463 = vsub.f32 %v1445, %v6462
    %v6464 = vand.u32 %v6463, 4294901760
    %6465 = vmatprep.subr.mxu0 %v6464
    %v6466 = vand.u32 %v1444, 4294901760
    %v6467 = vsub.f32 %v1444, %v6466
    %v6468 = vand.u32 %v6467, 4294901760
    %6469 = vmatpush2.msra.mxu0 %v6468
    %v6470 = vand.u32 %v1441, 4294901760
    %v6471 = vsub.f32 %v1441, %v6470
    %v6472 = vand.u32 %v6471, 4294901760
    %6473 = vmatprep.subr.mxu0 %v6472
    %v6474 = vand.u32 %v1440, 4294901760
    %v6475 = vsub.f32 %v1440, %v6474
    %v6476 = vand.u32 %v6475, 4294901760
    %6477 = vmatpush2.msra.mxu0 %v6476
    %v6478 = vand.u32 %v1437, 4294901760
    %v6479 = vsub.f32 %v1437, %v6478
    %v6480 = vand.u32 %v6479, 4294901760
    %6481 = vmatprep.subr.mxu0 %v6480
    %v6482 = vand.u32 %v1436, 4294901760
    %v6483 = vsub.f32 %v1436, %v6482
    %v6484 = vand.u32 %v6483, 4294901760
    %6485 = vmatpush2.msra.mxu0 %v6484
    %v6486 = vand.u32 %v1433, 4294901760
    %v6487 = vsub.f32 %v1433, %v6486
    %v6488 = vand.u32 %v6487, 4294901760
    %6489 = vmatprep.subr.mxu0 %v6488
    %v6490 = vand.u32 %v1432, 4294901760
    %v6491 = vsub.f32 %v1432, %v6490
    %v6492 = vand.u32 %v6491, 4294901760
    %6493 = vmatpush2.msra.mxu0 %v6492
    %v6494 = vand.u32 %v1429, 4294901760
    %v6495 = vsub.f32 %v1429, %v6494
    %v6496 = vand.u32 %v6495, 4294901760
    %6497 = vmatprep.subr.mxu0 %v6496
    %v6498 = vand.u32 %v1428, 4294901760
    %v6499 = vsub.f32 %v1428, %v6498
    %v6500 = vand.u32 %v6499, 4294901760
    %6501 = vmatpush2.msra.mxu0 %v6500
    %v6502 = vand.u32 %v1233, 4294901760
    %6503 = vmatprep.mubr.f32.mxu0 %v6502
    %v6504 = vand.u32 %v1232, 4294901760
    %6505 = vmatmul.mubr.f32.gmra.mxu0 %v6504
    %v6506 = vpop.f32.mrf.mxu0
    %v6507 = vadd.f32 %v6242, %v6506
    %v6508 = vpop.f32.mrf.mxu0
    %v6509 = vadd.f32 %v6244, %v6508
    %6510 = vdwg.mxu0
    %v6511 = vand.u32 %v1425, 4294901760
    %6512 = vmatprep.subr.mxu0 %v6511
    %v6513 = vand.u32 %v1424, 4294901760
    %6514 = vmatpush1.msra.mxu0 %v6513
    %v6515 = vand.u32 %v1421, 4294901760
    %6516 = vmatprep.subr.mxu0 %v6515
    %v6517 = vand.u32 %v1420, 4294901760
    %6518 = vmatpush1.msra.mxu0 %v6517
    %v6519 = vand.u32 %v1417, 4294901760
    %6520 = vmatprep.subr.mxu0 %v6519
    %v6521 = vand.u32 %v1416, 4294901760
    %6522 = vmatpush1.msra.mxu0 %v6521
    %v6523 = vand.u32 %v1413, 4294901760
    %6524 = vmatprep.subr.mxu0 %v6523
    %v6525 = vand.u32 %v1412, 4294901760
    %6526 = vmatpush1.msra.mxu0 %v6525
    %v6527 = vand.u32 %v1409, 4294901760
    %6528 = vmatprep.subr.mxu0 %v6527
    %v6529 = vand.u32 %v1408, 4294901760
    %6530 = vmatpush1.msra.mxu0 %v6529
    %v6531 = vand.u32 %v1405, 4294901760
    %6532 = vmatprep.subr.mxu0 %v6531
    %v6533 = vand.u32 %v1404, 4294901760
    %6534 = vmatpush1.msra.mxu0 %v6533
    %v6535 = vand.u32 %v1401, 4294901760
    %6536 = vmatprep.subr.mxu0 %v6535
    %v6537 = vand.u32 %v1400, 4294901760
    %6538 = vmatpush1.msra.mxu0 %v6537
    %v6539 = vand.u32 %v1397, 4294901760
    %6540 = vmatprep.subr.mxu0 %v6539
    %v6541 = vand.u32 %v1396, 4294901760
    %6542 = vmatpush1.msra.mxu0 %v6541
    %v6543 = vand.u32 %v1393, 4294901760
    %6544 = vmatprep.subr.mxu0 %v6543
    %v6545 = vand.u32 %v1392, 4294901760
    %6546 = vmatpush1.msra.mxu0 %v6545
    %v6547 = vand.u32 %v1389, 4294901760
    %6548 = vmatprep.subr.mxu0 %v6547
    %v6549 = vand.u32 %v1388, 4294901760
    %6550 = vmatpush1.msra.mxu0 %v6549
    %v6551 = vand.u32 %v1385, 4294901760
    %6552 = vmatprep.subr.mxu0 %v6551
    %v6553 = vand.u32 %v1384, 4294901760
    %6554 = vmatpush1.msra.mxu0 %v6553
    %v6555 = vand.u32 %v1381, 4294901760
    %6556 = vmatprep.subr.mxu0 %v6555
    %v6557 = vand.u32 %v1380, 4294901760
    %6558 = vmatpush1.msra.mxu0 %v6557
    %v6559 = vand.u32 %v1377, 4294901760
    %6560 = vmatprep.subr.mxu0 %v6559
    %v6561 = vand.u32 %v1376, 4294901760
    %6562 = vmatpush1.msra.mxu0 %v6561
    %v6563 = vand.u32 %v1373, 4294901760
    %6564 = vmatprep.subr.mxu0 %v6563
    %v6565 = vand.u32 %v1372, 4294901760
    %6566 = vmatpush1.msra.mxu0 %v6565
    %v6567 = vand.u32 %v1369, 4294901760
    %6568 = vmatprep.subr.mxu0 %v6567
    %v6569 = vand.u32 %v1368, 4294901760
    %6570 = vmatpush1.msra.mxu0 %v6569
    %v6571 = vand.u32 %v1365, 4294901760
    %6572 = vmatprep.subr.mxu0 %v6571
    %v6573 = vand.u32 %v1364, 4294901760
    %6574 = vmatpush1.msra.mxu0 %v6573
    %v6575 = vand.u32 %v1489, 4294901760
    %6576 = vmatprep.subr.mxu0 %v6575
    %v6577 = vand.u32 %v1488, 4294901760
    %6578 = vmatpush2.msra.mxu0 %v6577
    %v6579 = vand.u32 %v1485, 4294901760
    %6580 = vmatprep.subr.mxu0 %v6579
    %v6581 = vand.u32 %v1484, 4294901760
    %6582 = vmatpush2.msra.mxu0 %v6581
    %v6583 = vand.u32 %v1481, 4294901760
    %6584 = vmatprep.subr.mxu0 %v6583
    %v6585 = vand.u32 %v1480, 4294901760
    %6586 = vmatpush2.msra.mxu0 %v6585
    %v6587 = vand.u32 %v1477, 4294901760
    %6588 = vmatprep.subr.mxu0 %v6587
    %v6589 = vand.u32 %v1476, 4294901760
    %6590 = vmatpush2.msra.mxu0 %v6589
    %v6591 = vand.u32 %v1473, 4294901760
    %6592 = vmatprep.subr.mxu0 %v6591
    %v6593 = vand.u32 %v1472, 4294901760
    %6594 = vmatpush2.msra.mxu0 %v6593
    %v6595 = vand.u32 %v1469, 4294901760
    %6596 = vmatprep.subr.mxu0 %v6595
    %v6597 = vand.u32 %v1468, 4294901760
    %6598 = vmatpush2.msra.mxu0 %v6597
    %v6599 = vand.u32 %v1465, 4294901760
    %6600 = vmatprep.subr.mxu0 %v6599
    %v6601 = vand.u32 %v1464, 4294901760
    %6602 = vmatpush2.msra.mxu0 %v6601
    %v6603 = vand.u32 %v1461, 4294901760
    %6604 = vmatprep.subr.mxu0 %v6603
    %v6605 = vand.u32 %v1460, 4294901760
    %6606 = vmatpush2.msra.mxu0 %v6605
    %v6607 = vand.u32 %v1457, 4294901760
    %6608 = vmatprep.subr.mxu0 %v6607
    %v6609 = vand.u32 %v1456, 4294901760
    %6610 = vmatpush2.msra.mxu0 %v6609
    %v6611 = vand.u32 %v1453, 4294901760
    %6612 = vmatprep.subr.mxu0 %v6611
    %v6613 = vand.u32 %v1452, 4294901760
    %6614 = vmatpush2.msra.mxu0 %v6613
    %v6615 = vand.u32 %v1449, 4294901760
    %6616 = vmatprep.subr.mxu0 %v6615
    %v6617 = vand.u32 %v1448, 4294901760
    %6618 = vmatpush2.msra.mxu0 %v6617
    %v6619 = vand.u32 %v1445, 4294901760
    %6620 = vmatprep.subr.mxu0 %v6619
    %v6621 = vand.u32 %v1444, 4294901760
    %6622 = vmatpush2.msra.mxu0 %v6621
    %v6623 = vand.u32 %v1441, 4294901760
    %6624 = vmatprep.subr.mxu0 %v6623
    %v6625 = vand.u32 %v1440, 4294901760
    %6626 = vmatpush2.msra.mxu0 %v6625
    %v6627 = vand.u32 %v1437, 4294901760
    %6628 = vmatprep.subr.mxu0 %v6627
    %v6629 = vand.u32 %v1436, 4294901760
    %6630 = vmatpush2.msra.mxu0 %v6629
    %v6631 = vand.u32 %v1433, 4294901760
    %6632 = vmatprep.subr.mxu0 %v6631
    %v6633 = vand.u32 %v1432, 4294901760
    %6634 = vmatpush2.msra.mxu0 %v6633
    %v6635 = vand.u32 %v1429, 4294901760
    %6636 = vmatprep.subr.mxu0 %v6635
    %v6637 = vand.u32 %v1428, 4294901760
    %6638 = vmatpush2.msra.mxu0 %v6637
    %v6639 = vand.u32 %v1233, 4294901760
    %6640 = vmatprep.mubr.f32.mxu0 %v6639
    %v6641 = vand.u32 %v1232, 4294901760
    %6642 = vmatmul.mubr.f32.gmra.mxu0 %v6641
    %v6643 = vpop.f32.mrf.mxu0
    %v6644 = vadd.f32 %v6507, %v6643
    %v6645 = vpop.f32.mrf.mxu0
    %v6646 = vadd.f32 %v6509, %v6645
    %6647 = vdwg.mxu0
    %v6648 = vmax.f32 %v4076, 0.0
    %v6649 = vmax.f32 %v4078, 0.0
    %v6650 = vmax.f32 %v6644, 0.0
    %v6651 = vmax.f32 %v6646, 0.0
    %v6652 = vld [vmem:[#allocation11] ss:$8 sm:$0xf]
    %v6653 = vld [vmem:[#allocation10] ss:$8 sm:$0xf]
    %v6655 = vlaneseq
    %v6656 = vshrl.u32 %v6655, 7
    %v6657 = vsub.s32 0, %v6656
    %v6658 = vrot.slane %v6652, %v6657
    %v6659 = vlaneseq
    %v6660 = vshrl.u32 %v6659, 7
    %v6661 = vsub.s32 1, %v6660
    %v6662 = vrot.slane %v6652, %v6661
    %v6663 = vlaneseq
    %v6664 = vshrl.u32 %v6663, 7
    %v6665 = vsub.s32 2, %v6664
    %v6666 = vrot.slane %v6652, %v6665
    %v6667 = vlaneseq
    %v6668 = vshrl.u32 %v6667, 7
    %v6669 = vsub.s32 3, %v6668
    %v6670 = vrot.slane %v6652, %v6669
    %v6675 = vadd.f32 %v6648, %v6658
    %v6676 = vadd.f32 %v6649, %v6662
    %v6677 = vadd.f32 %v6650, %v6666
    %v6678 = vadd.f32 %v6651, %v6670
    %v6679 = vmax.f32 %v6675, %v6676
    %v6680 = vmax.f32 %v6677, %v6678
    %v6681 = vmax.f32 %v6679, %v6680
    %6682 = vmax.xlane.f32.xlu0 %v6681
    %v6683 = vpop.xlane.xlu0 %6682
    %v6684 = vsub.f32 %v6675, %v6683
    %v6685 = vsub.f32 %v6676, %v6683
    %v6686 = vsub.f32 %v6677, %v6683
    %v6687 = vsub.f32 %v6678, %v6683
    %v6688 = vmul.f32 %v6684, 1.442695
    %v6689 = vpow.pop %v6688
    %v6690 = vmul.f32 %v6685, 1.442695
    %v6691 = vpow.pop %v6690
    %v6692 = vmul.f32 %v6686, 1.442695
    %v6693 = vpow.pop %v6692
    %v6694 = vmul.f32 %v6687, 1.442695
    %v6695 = vpow.pop %v6694
    %v6696 = vadd.f32 %v6689, %v6691
    %v6697 = vadd.f32 %v6696, %v6693
    %v6698 = vadd.f32 %v6697, %v6695
    %6699 = vadd.xlane.f32.xlu0 %v6698
    %v6700 = vpop.xlane.xlu0 %6699
    %v6701 = vlog2.pop %v6700
    %v6702 = vmul.f32 %v6701, 0.6931472
    %v6703 = vadd.f32 %v6683, %v6702
    %v6705 = vlaneseq
    %v6706 = vshrl.u32 %v6705, 7
    %v6707 = vsub.s32 0, %v6706
    %v6708 = vrot.slane %v6653, %v6707
    %v6709 = vlaneseq
    %v6710 = vshrl.u32 %v6709, 7
    %v6711 = vsub.s32 1, %v6710
    %v6712 = vrot.slane %v6653, %v6711
    %v6713 = vlaneseq
    %v6714 = vshrl.u32 %v6713, 7
    %v6715 = vsub.s32 2, %v6714
    %v6716 = vrot.slane %v6653, %v6715
    %v6717 = vlaneseq
    %v6718 = vshrl.u32 %v6717, 7
    %v6719 = vsub.s32 3, %v6718
    %v6720 = vrot.slane %v6653, %v6719
    %v6725 = vmul.f32 %v6708, %v6703
    %v6726 = vmul.f32 %v6712, %v6703
    %v6727 = vmul.f32 %v6716, %v6703
    %v6728 = vmul.f32 %v6720, %v6703
    %v6729 = vadd.f32 %v6725, 0.0
    %v6730 = vadd.f32 %v6726, 0.0
    %v6731 = vadd.f32 %v6727, 0.0
    %v6732 = vadd.f32 %v6728, 0.0
    %s6733 = scalar_lea.vmem [#allocation11], 1
    %v6734 = vld [vmem:[%s6733] ss:$8 sm:$0xf]
    %s6735 = scalar_lea.vmem [#allocation10], 1
    %v6736 = vld [vmem:[%s6735] ss:$8 sm:$0xf]
    %v6738 = vlaneseq
    %v6739 = vshrl.u32 %v6738, 7
    %v6740 = vsub.s32 0, %v6739
    %v6741 = vrot.slane %v6734, %v6740
    %v6742 = vlaneseq
    %v6743 = vshrl.u32 %v6742, 7
    %v6744 = vsub.s32 1, %v6743
    %v6745 = vrot.slane %v6734, %v6744
    %v6746 = vlaneseq
    %v6747 = vshrl.u32 %v6746, 7
    %v6748 = vsub.s32 2, %v6747
    %v6749 = vrot.slane %v6734, %v6748
    %v6750 = vlaneseq
    %v6751 = vshrl.u32 %v6750, 7
    %v6752 = vsub.s32 3, %v6751
    %v6753 = vrot.slane %v6734, %v6752
    %v6758 = vadd.f32 %v6648, %v6741
    %v6759 = vadd.f32 %v6649, %v6745
    %v6760 = vadd.f32 %v6650, %v6749
    %v6761 = vadd.f32 %v6651, %v6753
    %v6762 = vmax.f32 %v6758, %v6759
    %v6763 = vmax.f32 %v6760, %v6761
    %v6764 = vmax.f32 %v6762, %v6763
    %6765 = vmax.xlane.f32.xlu0 %v6764
    %v6766 = vpop.xlane.xlu0 %6765
    %v6767 = vsub.f32 %v6758, %v6766
    %v6768 = vsub.f32 %v6759, %v6766
    %v6769 = vsub.f32 %v6760, %v6766
    %v6770 = vsub.f32 %v6761, %v6766
    %v6771 = vmul.f32 %v6767, 1.442695
    %v6772 = vpow.pop %v6771
    %v6773 = vmul.f32 %v6768, 1.442695
    %v6774 = vpow.pop %v6773
    %v6775 = vmul.f32 %v6769, 1.442695
    %v6776 = vpow.pop %v6775
    %v6777 = vmul.f32 %v6770, 1.442695
    %v6778 = vpow.pop %v6777
    %v6779 = vadd.f32 %v6772, %v6774
    %v6780 = vadd.f32 %v6779, %v6776
    %v6781 = vadd.f32 %v6780, %v6778
    %6782 = vadd.xlane.f32.xlu0 %v6781
    %v6783 = vpop.xlane.xlu0 %6782
    %v6784 = vlog2.pop %v6783
    %v6785 = vmul.f32 %v6784, 0.6931472
    %v6786 = vadd.f32 %v6766, %v6785
    %v6788 = vlaneseq
    %v6789 = vshrl.u32 %v6788, 7
    %v6790 = vsub.s32 0, %v6789
    %v6791 = vrot.slane %v6736, %v6790
    %v6792 = vlaneseq
    %v6793 = vshrl.u32 %v6792, 7
    %v6794 = vsub.s32 1, %v6793
    %v6795 = vrot.slane %v6736, %v6794
    %v6796 = vlaneseq
    %v6797 = vshrl.u32 %v6796, 7
    %v6798 = vsub.s32 2, %v6797
    %v6799 = vrot.slane %v6736, %v6798
    %v6800 = vlaneseq
    %v6801 = vshrl.u32 %v6800, 7
    %v6802 = vsub.s32 3, %v6801
    %v6803 = vrot.slane %v6736, %v6802
    %v6808 = vmul.f32 %v6791, %v6786
    %v6809 = vmul.f32 %v6795, %v6786
    %v6810 = vmul.f32 %v6799, %v6786
    %v6811 = vmul.f32 %v6803, %v6786
    %v6812 = vadd.f32 %v6729, %v6808
    %v6813 = vadd.f32 %v6730, %v6809
    %v6814 = vadd.f32 %v6731, %v6810
    %v6815 = vadd.f32 %v6732, %v6811
    %s6816 = scalar_lea.vmem [#allocation11], 2
    %v6817 = vld [vmem:[%s6816] ss:$8 sm:$0xf]
    %s6818 = scalar_lea.vmem [#allocation10], 2
    %v6819 = vld [vmem:[%s6818] ss:$8 sm:$0xf]
    %v6821 = vlaneseq
    %v6822 = vshrl.u32 %v6821, 7
    %v6823 = vsub.s32 0, %v6822
    %v6824 = vrot.slane %v6817, %v6823
    %v6825 = vlaneseq
    %v6826 = vshrl.u32 %v6825, 7
    %v6827 = vsub.s32 1, %v6826
    %v6828 = vrot.slane %v6817, %v6827
    %v6829 = vlaneseq
    %v6830 = vshrl.u32 %v6829, 7
    %v6831 = vsub.s32 2, %v6830
    %v6832 = vrot.slane %v6817, %v6831
    %v6833 = vlaneseq
    %v6834 = vshrl.u32 %v6833, 7
    %v6835 = vsub.s32 3, %v6834
    %v6836 = vrot.slane %v6817, %v6835
    %v6841 = vadd.f32 %v6648, %v6824
    %v6842 = vadd.f32 %v6649, %v6828
    %v6843 = vadd.f32 %v6650, %v6832
    %v6844 = vadd.f32 %v6651, %v6836
    %v6845 = vmax.f32 %v6841, %v6842
    %v6846 = vmax.f32 %v6843, %v6844
    %v6847 = vmax.f32 %v6845, %v6846
    %6848 = vmax.xlane.f32.xlu0 %v6847
    %v6849 = vpop.xlane.xlu0 %6848
    %v6850 = vsub.f32 %v6841, %v6849
    %v6851 = vsub.f32 %v6842, %v6849
    %v6852 = vsub.f32 %v6843, %v6849
    %v6853 = vsub.f32 %v6844, %v6849
    %v6854 = vmul.f32 %v6850, 1.442695
    %v6855 = vpow.pop %v6854
    %v6856 = vmul.f32 %v6851, 1.442695
    %v6857 = vpow.pop %v6856
    %v6858 = vmul.f32 %v6852, 1.442695
    %v6859 = vpow.pop %v6858
    %v6860 = vmul.f32 %v6853, 1.442695
    %v6861 = vpow.pop %v6860
    %v6862 = vadd.f32 %v6855, %v6857
    %v6863 = vadd.f32 %v6862, %v6859
    %v6864 = vadd.f32 %v6863, %v6861
    %6865 = vadd.xlane.f32.xlu0 %v6864
    %v6866 = vpop.xlane.xlu0 %6865
    %v6867 = vlog2.pop %v6866
    %v6868 = vmul.f32 %v6867, 0.6931472
    %v6869 = vadd.f32 %v6849, %v6868
    %v6871 = vlaneseq
    %v6872 = vshrl.u32 %v6871, 7
    %v6873 = vsub.s32 0, %v6872
    %v6874 = vrot.slane %v6819, %v6873
    %v6875 = vlaneseq
    %v6876 = vshrl.u32 %v6875, 7
    %v6877 = vsub.s32 1, %v6876
    %v6878 = vrot.slane %v6819, %v6877
    %v6879 = vlaneseq
    %v6880 = vshrl.u32 %v6879, 7
    %v6881 = vsub.s32 2, %v6880
    %v6882 = vrot.slane %v6819, %v6881
    %v6883 = vlaneseq
    %v6884 = vshrl.u32 %v6883, 7
    %v6885 = vsub.s32 3, %v6884
    %v6886 = vrot.slane %v6819, %v6885
    %v6891 = vmul.f32 %v6874, %v6869
    %v6892 = vmul.f32 %v6878, %v6869
    %v6893 = vmul.f32 %v6882, %v6869
    %v6894 = vmul.f32 %v6886, %v6869
    %v6895 = vadd.f32 %v6812, %v6891
    %v6896 = vadd.f32 %v6813, %v6892
    %v6897 = vadd.f32 %v6814, %v6893
    %v6898 = vadd.f32 %v6815, %v6894
    %s6899 = scalar_lea.vmem [#allocation11], 3
    %v6900 = vld [vmem:[%s6899] ss:$8 sm:$0xf]
    %s6901 = scalar_lea.vmem [#allocation10], 3
    %v6902 = vld [vmem:[%s6901] ss:$8 sm:$0xf]
    %v6904 = vlaneseq
    %v6905 = vshrl.u32 %v6904, 7
    %v6906 = vsub.s32 0, %v6905
    %v6907 = vrot.slane %v6900, %v6906
    %v6908 = vlaneseq
    %v6909 = vshrl.u32 %v6908, 7
    %v6910 = vsub.s32 1, %v6909
    %v6911 = vrot.slane %v6900, %v6910
    %v6912 = vlaneseq
    %v6913 = vshrl.u32 %v6912, 7
    %v6914 = vsub.s32 2, %v6913
    %v6915 = vrot.slane %v6900, %v6914
    %v6916 = vlaneseq
    %v6917 = vshrl.u32 %v6916, 7
    %v6918 = vsub.s32 3, %v6917
    %v6919 = vrot.slane %v6900, %v6918
    %v6924 = vadd.f32 %v6648, %v6907
    %v6925 = vadd.f32 %v6649, %v6911
    %v6926 = vadd.f32 %v6650, %v6915
    %v6927 = vadd.f32 %v6651, %v6919
    %v6928 = vmax.f32 %v6924, %v6925
    %v6929 = vmax.f32 %v6926, %v6927
    %v6930 = vmax.f32 %v6928, %v6929
    %6931 = vmax.xlane.f32.xlu0 %v6930
    %v6932 = vpop.xlane.xlu0 %6931
    %v6933 = vsub.f32 %v6924, %v6932
    %v6934 = vsub.f32 %v6925, %v6932
    %v6935 = vsub.f32 %v6926, %v6932
    %v6936 = vsub.f32 %v6927, %v6932
    %v6937 = vmul.f32 %v6933, 1.442695
    %v6938 = vpow.pop %v6937
    %v6939 = vmul.f32 %v6934, 1.442695
    %v6940 = vpow.pop %v6939
    %v6941 = vmul.f32 %v6935, 1.442695
    %v6942 = vpow.pop %v6941
    %v6943 = vmul.f32 %v6936, 1.442695
    %v6944 = vpow.pop %v6943
    %v6945 = vadd.f32 %v6938, %v6940
    %v6946 = vadd.f32 %v6945, %v6942
    %v6947 = vadd.f32 %v6946, %v6944
    %6948 = vadd.xlane.f32.xlu0 %v6947
    %v6949 = vpop.xlane.xlu0 %6948
    %v6950 = vlog2.pop %v6949
    %v6951 = vmul.f32 %v6950, 0.6931472
    %v6952 = vadd.f32 %v6932, %v6951
    %v6954 = vlaneseq
    %v6955 = vshrl.u32 %v6954, 7
    %v6956 = vsub.s32 0, %v6955
    %v6957 = vrot.slane %v6902, %v6956
    %v6958 = vlaneseq
    %v6959 = vshrl.u32 %v6958, 7
    %v6960 = vsub.s32 1, %v6959
    %v6961 = vrot.slane %v6902, %v6960
    %v6962 = vlaneseq
    %v6963 = vshrl.u32 %v6962, 7
    %v6964 = vsub.s32 2, %v6963
    %v6965 = vrot.slane %v6902, %v6964
    %v6966 = vlaneseq
    %v6967 = vshrl.u32 %v6966, 7
    %v6968 = vsub.s32 3, %v6967
    %v6969 = vrot.slane %v6902, %v6968
    %v6974 = vmul.f32 %v6957, %v6952
    %v6975 = vmul.f32 %v6961, %v6952
    %v6976 = vmul.f32 %v6965, %v6952
    %v6977 = vmul.f32 %v6969, %v6952
    %v6978 = vadd.f32 %v6895, %v6974
    %v6979 = vadd.f32 %v6896, %v6975
    %v6980 = vadd.f32 %v6897, %v6976
    %v6981 = vadd.f32 %v6898, %v6977
    %s6982 = scalar_lea.vmem [#allocation11], 4
    %v6983 = vld [vmem:[%s6982] ss:$8 sm:$0xf]
    %s6984 = scalar_lea.vmem [#allocation10], 4
    %v6985 = vld [vmem:[%s6984] ss:$8 sm:$0xf]
    %v6987 = vlaneseq
    %v6988 = vshrl.u32 %v6987, 7
    %v6989 = vsub.s32 0, %v6988
    %v6990 = vrot.slane %v6983, %v6989
    %v6991 = vlaneseq
    %v6992 = vshrl.u32 %v6991, 7
    %v6993 = vsub.s32 1, %v6992
    %v6994 = vrot.slane %v6983, %v6993
    %v6995 = vlaneseq
    %v6996 = vshrl.u32 %v6995, 7
    %v6997 = vsub.s32 2, %v6996
    %v6998 = vrot.slane %v6983, %v6997
    %v6999 = vlaneseq
    %v7000 = vshrl.u32 %v6999, 7
    %v7001 = vsub.s32 3, %v7000
    %v7002 = vrot.slane %v6983, %v7001
    %v7007 = vadd.f32 %v6648, %v6990
    %v7008 = vadd.f32 %v6649, %v6994
    %v7009 = vadd.f32 %v6650, %v6998
    %v7010 = vadd.f32 %v6651, %v7002
    %v7011 = vmax.f32 %v7007, %v7008
    %v7012 = vmax.f32 %v7009, %v7010
    %v7013 = vmax.f32 %v7011, %v7012
    %7014 = vmax.xlane.f32.xlu0 %v7013
    %v7015 = vpop.xlane.xlu0 %7014
    %v7016 = vsub.f32 %v7007, %v7015
    %v7017 = vsub.f32 %v7008, %v7015
    %v7018 = vsub.f32 %v7009, %v7015
    %v7019 = vsub.f32 %v7010, %v7015
    %v7020 = vmul.f32 %v7016, 1.442695
    %v7021 = vpow.pop %v7020
    %v7022 = vmul.f32 %v7017, 1.442695
    %v7023 = vpow.pop %v7022
    %v7024 = vmul.f32 %v7018, 1.442695
    %v7025 = vpow.pop %v7024
    %v7026 = vmul.f32 %v7019, 1.442695
    %v7027 = vpow.pop %v7026
    %v7028 = vadd.f32 %v7021, %v7023
    %v7029 = vadd.f32 %v7028, %v7025
    %v7030 = vadd.f32 %v7029, %v7027
    %7031 = vadd.xlane.f32.xlu0 %v7030
    %v7032 = vpop.xlane.xlu0 %7031
    %v7033 = vlog2.pop %v7032
    %v7034 = vmul.f32 %v7033, 0.6931472
    %v7035 = vadd.f32 %v7015, %v7034
    %v7037 = vlaneseq
    %v7038 = vshrl.u32 %v7037, 7
    %v7039 = vsub.s32 0, %v7038
    %v7040 = vrot.slane %v6985, %v7039
    %v7041 = vlaneseq
    %v7042 = vshrl.u32 %v7041, 7
    %v7043 = vsub.s32 1, %v7042
    %v7044 = vrot.slane %v6985, %v7043
    %v7045 = vlaneseq
    %v7046 = vshrl.u32 %v7045, 7
    %v7047 = vsub.s32 2, %v7046
    %v7048 = vrot.slane %v6985, %v7047
    %v7049 = vlaneseq
    %v7050 = vshrl.u32 %v7049, 7
    %v7051 = vsub.s32 3, %v7050
    %v7052 = vrot.slane %v6985, %v7051
    %v7057 = vmul.f32 %v7040, %v7035
    %v7058 = vmul.f32 %v7044, %v7035
    %v7059 = vmul.f32 %v7048, %v7035
    %v7060 = vmul.f32 %v7052, %v7035
    %v7061 = vadd.f32 %v6978, %v7057
    %v7062 = vadd.f32 %v6979, %v7058
    %v7063 = vadd.f32 %v6980, %v7059
    %v7064 = vadd.f32 %v6981, %v7060
    %v7065 = vsub.f32 %v6648, %v7061
    %v7066 = vsub.f32 %v6649, %v7062
    %v7067 = vsub.f32 %v6650, %v7063
    %v7068 = vsub.f32 %v6651, %v7064
    %7069 = vst [vmem:[#allocation13] sm:$0xff] %v7065
    %7070 = vst [vmem:[#allocation13 + $0x8] sm:$0xff] %v7066
    %7071 = vst [vmem:[#allocation13 + $0x10] sm:$0xff] %v7067
    %vm7072 = vcmask 556032
    %7073 = vst.msk [vmem:[#allocation13 + $0x18] sm:$0xff] %vm7072, %v7068
    // Predicated region
    $region54: #{tpu_custom_call.1} parent=1 // pred_check
      _
    $region55: #{tpu_custom_call.1} parent=1 // pred_check_branch
      %7075 = sbr.rel (0) target = $region57
    $region56: #{tpu_custom_call.1} parent=1 // pred_region
      %s7077 = ssub.s32 512, 512
      %7078 = vsyncadd [#allocation4], %s7077
      %s7080 = sshll.u32 [#allocation13], 4
      %s7081 = int_to_ptr.vmem [resolvable:$true] %s7080
      %7083 = dma.vmem_to_hbm [thread:$0]  %s7081, 512, %s7, [#allocation4]
    $region57: #{tpu_custom_call.1} parent=1 // pred_fallthru
      _
    // Predicated region
    $region58: #{tpu_custom_call.1} parent=1 // pred_check
      _
    $region59: #{tpu_custom_call.1} parent=1 // pred_check_branch
      %7085 = sbr.rel (0) target = $region61
    $region60: #{tpu_custom_call.1} parent=1 // pred_region
      %7086 = dma.done [#allocation4], 512
    $region61: #{tpu_custom_call.1} parent=1 // pred_fallthru
      _
    %7087 = vsyncpa [#allocation3], 1
    %7088 = vsyncpa [#allocation6], 1
    %7089 = vsyncpa [#allocation9], 1
    %7090 = vsyncpa [#allocation12], 1
    %7091 = vsyncpa [#allocation4], 1

</llo_original>
